<compile_context>
chip_gen: v5e
topology: v5e:2x2
jax: 0.10.0
libtpu: 0.0.40
codegen_flags: <defaults>
</compile_context>

<pallas_src>
import functools

import jax
import jax.numpy as jnp
from jax.experimental import pallas as pl
from jax.experimental.pallas import tpu as pltpu

LRELU_SLOPE = 0.2
BN_EPS = 1e-5
LANE = 128
MAX_TM = 2048                      # largest M tile considered
VMEM_BUDGET = 28 * 1024 * 1024     # target VMEM footprint per pallas_call
VMEM_LIMIT = 40 * 1024 * 1024      # explicit scoped-VMEM limit (safe on v5e/v6e/v7x)


def _round_up(x, m):
    return ((x + m - 1) // m) * m


def _pick_tiles(M, K, CP, out_bytes):
    """Pick (padded M, TM, TK) under a VMEM budget.

    Preference: keep the whole (K, CP) weight resident in VMEM (single K block
    -> grid-invariant weight index_map -> the weight is DMA'd once per layer
    instead of once per M tile), then the largest M tile that still fits.
    TM/TK are divisors of the 8-rounded M and of K, so no K padding and at
    most 7 rows of M padding are ever materialized.
    """
    MP = _round_up(M, 8)
    tm_cands = [t for t in (2048, 1024, 512, 256, 128, 64, 32, 16, 8)
                if t <= MAX_TM and MP % t == 0] or [MP]
    tk_cands = [K] + [t for t in (4096, 2048, 1024, 512, 256, 128)
                      if t < K and K % t == 0]

    def vmem_bytes(tm, tk):
        return (2 * tm * tk * 2             # patch block, bf16, double-buffered
                + 2 * tk * CP * 2           # weight block, bf16, double-buffered
                + tm * CP * 4               # f32 accumulator scratch
                + 2 * tm * CP * out_bytes)  # output block, double-buffered

    for tk in tk_cands:                     # prefer resident weight (largest TK)
        for tm in tm_cands:                 # then the largest M tile
            if vmem_bytes(tm, tk) <= VMEM_BUDGET:
                return MP, tm, tk
    return MP, tm_cands[-1], tk_cands[-1]


def _pad_rows(x, MP):
    M = x.shape[0]
    if MP != M:
        x = jnp.pad(x, ((0, MP - M), (0, 0)))
    return x


def _pad_cols(x, CP):
    C = x.shape[-1]
    if CP != C:
        x = jnp.pad(x, ((0, 0),) * (x.ndim - 1) + ((0, CP - C),))
    return x


# -----------------------------------------------------------------------------
# Pallas kernels
# -----------------------------------------------------------------------------
def _mm_bias_act_kernel(p_ref, w_ref, b_ref, o_ref, acc_ref, *, act):
    """Tiled matmul + bias + activation.  grid = (M tiles, K tiles)."""
    @pl.when(pl.program_id(1) == 0)
    def _init():
        acc_ref[...] = jnp.zeros_like(acc_ref)

    acc_ref[...] += jnp.dot(p_ref[...], w_ref[...],
                            preferred_element_type=jnp.float32)

    @pl.when(pl.program_id(1) == pl.num_programs(1) - 1)
    def _fin():
        y = acc_ref[...] + b_ref[...]
        if act == "lrelu":
            y = jnp.where(y >= 0, y, LRELU_SLOPE * y)
        else:  # numerically-safe sigmoid on the EUP (tanh) slot, no VALU divide
            y = 0.5 * (jnp.tanh(0.5 * y) + 1.0)
        o_ref[...] = y.astype(o_ref.dtype)


def _mm_stats_kernel(p_ref, w_ref, y_ref, sum_ref, ssq_ref, acc_ref):
    """BN pass 1: tiled matmul emitting bf16 y plus per-M-tile channel sum/sumsq."""
    @pl.when(pl.program_id(1) == 0)
    def _init():
        acc_ref[...] = jnp.zeros_like(acc_ref)

    acc_ref[...] += jnp.dot(p_ref[...], w_ref[...],
                            preferred_element_type=jnp.float32)

    @pl.when(pl.program_id(1) == pl.num_programs(1) - 1)
    def _fin():
        y = acc_ref[...]                              # f32 accumulator
        y_ref[...] = y.astype(y_ref.dtype)            # bf16 intermediate to HBM
        s = jnp.sum(y, axis=0, keepdims=True)         # (1, CP), f32 stats
        ss = jnp.sum(y * y, axis=0, keepdims=True)    # (1, CP)
        # stats blocks are 8 sublanes tall (layout-friendly); row 0 is the value
        sum_ref[...] = jnp.broadcast_to(s, sum_ref.shape)
        ssq_ref[...] = jnp.broadcast_to(ss, ssq_ref.shape)


def _bn_lrelu_kernel(y_ref, scale_ref, shift_ref, o_ref):
    """BN pass 2: y*scale + shift, then LeakyReLU.  grid = (M tiles,)."""
    y = y_ref[...].astype(jnp.float32) * scale_ref[...] + shift_ref[...]
    o_ref[...] = jnp.where(y >= 0, y, LRELU_SLOPE * y).astype(o_ref.dtype)


# -----------------------------------------------------------------------------
# Tiled pallas_call wrappers
# -----------------------------------------------------------------------------
def _tiled_matmul_bias_act(patches, w2, bias, act, out_dtype):
    M, K = patches.shape
    _, Cout = w2.shape
    CP = _round_up(Cout, LANE)
    out_bytes = jnp.dtype(out_dtype).itemsize
    MP, TM, TK = _pick_tiles(M, K, CP, out_bytes)
    n_m, n_k = MP // TM, K // TK

    p = _pad_rows(patches.astype(jnp.bfloat16), MP)
    w = _pad_cols(w2.astype(jnp.bfloat16), CP)
    b = _pad_cols(bias.reshape(1, Cout).astype(jnp.float32), CP)

    cost = pl.CostEstimate(
        flops=2 * MP * K * CP,
        transcendentals=MP * CP if act == "sigmoid" else 0,
        bytes_accessed=MP * K * 2 + K * CP * 2 + MP * CP * out_bytes)

    y = pl.pallas_call(
        functools.partial(_mm_bias_act_kernel, act=act),
        out_shape=jax.ShapeDtypeStruct((MP, CP), out_dtype),
        grid=(n_m, n_k),
        in_specs=[
            pl.BlockSpec((TM, TK), lambda m, k: (m, k)),
            pl.BlockSpec((TK, CP), lambda m, k: (k, 0)),   # resident when n_k==1
            pl.BlockSpec((1, CP), lambda m, k: (0, 0)),    # grid-invariant bias
        ],
        out_specs=pl.BlockSpec((TM, CP), lambda m, k: (m, 0)),
        scratch_shapes=[pltpu.VMEM((TM, CP), jnp.float32)],
        compiler_params=pltpu.CompilerParams(
            dimension_semantics=("parallel", "arbitrary"),
            vmem_limit_bytes=VMEM_LIMIT),
        cost_estimate=cost,
    )(p, w, b)
    return y[:M, :Cout]


def _tiled_matmul_bn_lrelu(patches, w2, gamma, beta, out_dtype):
    M, K = patches.shape
    _, Cout = w2.shape
    CP = _round_up(Cout, LANE)
    out_bytes = jnp.dtype(out_dtype).itemsize
    MP, TM, TK = _pick_tiles(M, K, CP, 2)   # pass-1 intermediate y is bf16
    n_m, n_k = MP // TM, K // TK

    p = _pad_rows(patches.astype(jnp.bfloat16), MP)
    w = _pad_cols(w2.astype(jnp.bfloat16), CP)

    # ---- pass 1: conv matmul + per-tile partial channel statistics ----------
    cost1 = pl.CostEstimate(
        flops=2 * MP * K * CP, transcendentals=0,
        bytes_accessed=MP * K * 2 + K * CP * 2 + MP * CP * 2 + 2 * 8 * n_m * CP * 4)

    y, psum, pssq = pl.pallas_call(
        _mm_stats_kernel,
        out_shape=(jax.ShapeDtypeStruct((MP, CP), jnp.bfloat16),
                   jax.ShapeDtypeStruct((8 * n_m, CP), jnp.float32),
                   jax.ShapeDtypeStruct((8 * n_m, CP), jnp.float32)),
        grid=(n_m, n_k),
        in_specs=[
            pl.BlockSpec((TM, TK), lambda m, k: (m, k)),
            pl.BlockSpec((TK, CP), lambda m, k: (k, 0)),   # resident when n_k==1
        ],
        out_specs=(pl.BlockSpec((TM, CP), lambda m, k: (m, 0)),
                   pl.BlockSpec((8, CP), lambda m, k: (m, 0)),
                   pl.BlockSpec((8, CP), lambda m, k: (m, 0))),
        scratch_shapes=[pltpu.VMEM((TM, CP), jnp.float32)],
        compiler_params=pltpu.CompilerParams(
            dimension_semantics=("parallel", "arbitrary"),
            vmem_limit_bytes=VMEM_LIMIT),
        cost_estimate=cost1,
    )(p, w)

    # ---- tiny glue: global batch statistics (true M rows; padded rows are 0)
    tile_sum = psum.reshape(n_m, 8, CP)[:, 0, :]
    tile_ssq = pssq.reshape(n_m, 8, CP)[:, 0, :]
    mean = jnp.sum(tile_sum, axis=0) / M
    var = jnp.maximum(jnp.sum(tile_ssq, axis=0) / M - mean * mean, 0.0)
    gamma_p = _pad_cols(gamma.astype(jnp.float32).reshape(1, Cout), CP)[0]
    beta_p = _pad_cols(beta.astype(jnp.float32).reshape(1, Cout), CP)[0]
    scale_v = gamma_p * jax.lax.rsqrt(var + BN_EPS)          # (CP,)
    shift_v = beta_p - mean * scale_v                        # (CP,)
    scale = scale_v.reshape(1, CP)
    shift = shift_v.reshape(1, CP)

    # ---- pass 2: normalize + affine + LeakyReLU, fully parallel over M ------
    cost2 = pl.CostEstimate(
        flops=3 * MP * CP, transcendentals=0,
        bytes_accessed=MP * CP * 2 + MP * CP * out_bytes)

    out = pl.pallas_call(
        _bn_lrelu_kernel,
        out_shape=jax.ShapeDtypeStruct((MP, CP), out_dtype),
        grid=(n_m,),
        in_specs=[
            pl.BlockSpec((TM, CP), lambda m: (m, 0)),
            pl.BlockSpec((1, CP), lambda m: (0, 0)),
            pl.BlockSpec((1, CP), lambda m: (0, 0)),
        ],
        out_specs=pl.BlockSpec((TM, CP), lambda m: (m, 0)),
        compiler_params=pltpu.CompilerParams(
            dimension_semantics=("parallel",),
            vmem_limit_bytes=VMEM_LIMIT),
        cost_estimate=cost2,
    )(y, scale, shift)
    return out[:M, :Cout]


# -----------------------------------------------------------------------------
# One conv layer = im2col (glue, bf16) + fused tiled Pallas kernel(s)
# -----------------------------------------------------------------------------
def _im2col(x_nhwc, kh, kw, stride, pad):
    N, H, W_, C = x_nhwc.shape
    xp = jnp.pad(x_nhwc, ((0, 0), (pad, pad), (pad, pad), (0, 0)))
    Hp, Wp = H + 2 * pad, W_ + 2 * pad
    OH = (Hp - kh) // stride + 1
    OW = (Wp - kw) // stride + 1
    cols = []
    for i in range(kh):
        for j in range(kw):
            cols.append(jax.lax.slice(
                xp, (0, i, j, 0),
                (N, i + stride * (OH - 1) + 1, j + stride * (OW - 1) + 1, C),
                (1, stride, stride, 1)))
    patches = jnp.stack(cols, axis=3).reshape(N * OH * OW, kh * kw * C)
    return patches, OH, OW


def conv_layer(x_nhwc, w, extra, *, stride, pad, mode, out_dtype):
    KH, KW, Cin, Cout = w.shape
    N, _, _, C = x_nhwc.shape
    assert C == Cin
    # bf16 activations before im2col: halves HBM traffic of the expanded matrix
    patches, OH, OW = _im2col(x_nhwc.astype(jnp.bfloat16), KH, KW, stride, pad)
    w2 = w.reshape(KH * KW * Cin, Cout)

    if mode == "bias_lrelu":
        y = _tiled_matmul_bias_act(patches, w2, extra, "lrelu", out_dtype)
    elif mode == "bias_sigmoid":
        y = _tiled_matmul_bias_act(patches, w2, extra, "sigmoid", out_dtype)
    else:  # "bn_lrelu" (conv has no bias when followed by BatchNorm2d)
        gamma, beta = extra
        y = _tiled_matmul_bn_lrelu(patches, w2, gamma, beta, out_dtype)

    return y.reshape(N, OH, OW, Cout)


# -----------------------------------------------------------------------------
# Parameter construction mirroring NLayerDiscriminator.__init__
# (norm_layer = BatchNorm2d  =>  use_bias = False for the middle convs)
# -----------------------------------------------------------------------------
def init_params(key, input_nc, ndf=64, n_layers=3):
    kw = 4
    specs = [(input_nc * 2, ndf, 2, 1, "bias_lrelu")]
    nf_mult = 1
    for n in range(1, n_layers):
        nf_prev, nf_mult = nf_mult, min(2 ** n, 8)
        specs.append((ndf * nf_prev, ndf * nf_mult, 2, 1, "bn_lrelu"))
    nf_prev, nf_mult = nf_mult, min(2 ** n_layers, 8)
    specs.append((ndf * nf_prev, ndf * nf_mult, 2, 1, "bn_lrelu"))
    specs.append((ndf * nf_mult, 1, 1, 0, "bias_sigmoid"))

    params = []
    for (cin, cout, stride, pad, mode) in specs:
        key, k_w, k_b = jax.random.split(key, 3)
        fan_in = cin * kw * kw
        bound = 1.0 / float(fan_in) ** 0.5  # PyTorch Conv2d default init range
        w = jax.random.uniform(k_w, (kw, kw, cin, cout), jnp.float32, -bound, bound)
        if mode in ("bias_lrelu", "bias_sigmoid"):
            extra = jax.random.uniform(k_b, (cout,), jnp.float32, -bound, bound)
        else:
            extra = (jnp.ones((cout,), jnp.float32),    # BN gamma (default 1)
                     jnp.zeros((cout,), jnp.float32))   # BN beta  (default 0)
        params.append((w, extra, stride, pad, mode))
    return params


def nlayer_discriminator(x_nchw, params):
    # bf16 before the layout transpose: halves the HBM traffic of that pass
    x = jnp.transpose(x_nchw.astype(jnp.bfloat16), (0, 2, 3, 1))  # NCHW -> NHWC
    n_layers = len(params)
    for li, (w, extra, stride, pad, mode) in enumerate(params):
        last = li == n_layers - 1
        x = conv_layer(x, w, extra, stride=stride, pad=pad, mode=mode,
                       out_dtype=jnp.float32 if last else jnp.bfloat16)
    return jnp.transpose(x, (0, 3, 1, 2))    # NHWC -> NCHW (match PyTorch)


if __name__ == "__main__":
    key = jax.random.PRNGKey(0)
    k_x, k_p = jax.random.split(key)

    # Small config: input_nc=2 => the concatenated (input, generated) pair has
    # 4 channels; ndf=8 keeps filter counts small; spatial 64 is the smallest
    # size for which the default n_layers=3 architecture is valid
    # (4 stride-2 convs then a 4x4 valid conv: 64->32->16->8->4->1).
    input_nc, ndf, n_layers = 2, 8, 3
    N, H, W = 2, 64, 64

    x = jax.random.normal(k_x, (N, input_nc * 2, H, W), dtype=jnp.float32)
    params = init_params(k_p, input_nc, ndf=ndf, n_layers=n_layers)

    fwd = jax.jit(lambda inp: nlayer_discriminator(inp, params))
    out = jax.block_until_ready(fwd(x))

    assert out.shape == (N, 1, 1, 1), out.shape
    assert out.dtype == jnp.float32
    assert bool(jnp.all((out >= 0.0) & (out <= 1.0)))  # sigmoid output range
    print("KERNEL_OK")
</pallas_src>

<mosaic_0001>
module attributes {stable_mosaic.version = 11 : i64} {
  func.func @_mm_bias_act_kernel(%arg0: i32, %arg1: i32, %arg2: memref<2048x64xbf16, #tpu.memory_space<vmem>>, %arg3: memref<64x128xbf16, #tpu.memory_space<vmem>>, %arg4: memref<1x128xf32, #tpu.memory_space<vmem>>, %arg5: memref<2048x128xbf16, #tpu.memory_space<vmem>>, %arg6: memref<2048x128xf32, #tpu.memory_space<vmem>>) attributes {dimension_semantics = [#tpu.dimension_semantics<parallel>, #tpu.dimension_semantics<arbitrary>], iteration_bounds = array<i64: 1, 1>, scalar_prefetch = 0 : i64, scratch_operands = 1 : i64, tpu.core_type = #tpu.core_type<tc>, window_params = [{transform_indices = @transform_0, window_bounds = array<i64: 2048, 64>}, {transform_indices = @transform_1, window_bounds = array<i64: 64, 128>}, {pipeline_mode = #tpu.pipeline_mode<synchronous>, transform_indices = @transform_2, window_bounds = array<i64: 1, 128>}, {transform_indices = @transform_3, window_bounds = array<i64: 2048, 128>}]} {
    %c0_i32 = arith.constant 0 : i32
    %0 = arith.cmpi eq, %arg1, %c0_i32 : i32
    %1 = arith.extui %0 : i1 to i32
    %c0_i32_0 = arith.constant 0 : i32
    %2 = arith.cmpi ne, %1, %c0_i32_0 : i32
    scf.if %2 {
      %cst_10 = arith.constant 0.000000e+00 : f32
      %12 = vector.broadcast %cst_10 : f32 to vector<2048x128xf32>
      %c0_11 = arith.constant 0 : index
      %c0_12 = arith.constant 0 : index
      %13 = vector.load %arg6[%c0_11, %c0_12] : memref<2048x128xf32, #tpu.memory_space<vmem>>, vector<2048x128xf32>
      tpu.vector_store %arg6[%c0_11, %c0_12], %12 {strides = array<i32>} : memref<2048x128xf32, #tpu.memory_space<vmem>>, vector<2048x128xf32>,
    } else {
    }
    %c0 = arith.constant 0 : index
    %c0_1 = arith.constant 0 : index
    %3 = vector.load %arg6[%c0, %c0_1] : memref<2048x128xf32, #tpu.memory_space<vmem>>, vector<2048x128xf32>
    %c0_2 = arith.constant 0 : index
    %c0_3 = arith.constant 0 : index
    %4 = vector.load %arg2[%c0_2, %c0_3] : memref<2048x64xbf16, #tpu.memory_space<vmem>>, vector<2048x64xbf16>
    %c0_4 = arith.constant 0 : index
    %c0_5 = arith.constant 0 : index
    %5 = vector.load %arg3[%c0_4, %c0_5] : memref<64x128xbf16, #tpu.memory_space<vmem>>, vector<64x128xbf16>
    %cst = arith.constant dense<0.000000e+00> : vector<2048x128xf32>
    %6 = tpu.matmul %4, %5, %cst {dimension_numbers = #tpu.dot_dimension_numbers<[1], [0], [0], [1], [0, 0, 1, 1], [], []>} : vector<2048x64xbf16>, vector<64x128xbf16>, vector<2048x128xf32> -> vector<2048x128xf32>
    %7 = arith.addf %3, %6 : vector<2048x128xf32>
    %c0_6 = arith.constant 0 : index
    %c0_7 = arith.constant 0 : index
    %8 = vector.load %arg6[%c0_6, %c0_7] : memref<2048x128xf32, #tpu.memory_space<vmem>>, vector<2048x128xf32>
    tpu.vector_store %arg6[%c0_6, %c0_7], %7 {strides = array<i32>} : memref<2048x128xf32, #tpu.memory_space<vmem>>, vector<2048x128xf32>,
    %c0_i32_8 = arith.constant 0 : i32
    %9 = arith.cmpi eq, %arg1, %c0_i32_8 : i32
    %10 = arith.extui %9 : i1 to i32
    %c0_i32_9 = arith.constant 0 : i32
    %11 = arith.cmpi ne, %10, %c0_i32_9 : i32
    scf.if %11 {
      %c0_10 = arith.constant 0 : index
      %c0_11 = arith.constant 0 : index
      %12 = vector.load %arg6[%c0_10, %c0_11] : memref<2048x128xf32, #tpu.memory_space<vmem>>, vector<2048x128xf32>
      %c0_12 = arith.constant 0 : index
      %c0_13 = arith.constant 0 : index
      %13 = vector.load %arg4[%c0_12, %c0_13] : memref<1x128xf32, #tpu.memory_space<vmem>>, vector<1x128xf32>
      %14 = vector.broadcast %13 : vector<1x128xf32> to vector<2048x128xf32>
      %15 = arith.addf %12, %14 : vector<2048x128xf32>
      %cst_14 = arith.constant 0.000000e+00 : f32
      %16 = vector.broadcast %cst_14 : f32 to vector<2048x128xf32>
      %17 = arith.cmpf oge, %15, %16 : vector<2048x128xf32>
      %cst_15 = arith.constant 2.000000e-01 : f32
      %18 = vector.broadcast %cst_15 : f32 to vector<2048x128xf32>
      %19 = arith.mulf %18, %15 : vector<2048x128xf32>
      %20 = arith.select %17, %15, %19 : vector<2048x128xi1>, vector<2048x128xf32>
      %21 = arith.truncf %20 : vector<2048x128xf32> to vector<2048x128xbf16>
      %c0_16 = arith.constant 0 : index
      %c0_17 = arith.constant 0 : index
      %22 = vector.load %arg5[%c0_16, %c0_17] : memref<2048x128xbf16, #tpu.memory_space<vmem>>, vector<2048x128xbf16>
      tpu.vector_store %arg5[%c0_16, %c0_17], %21 {strides = array<i32>} : memref<2048x128xbf16, #tpu.memory_space<vmem>>, vector<2048x128xbf16>,
    } else {
    }
    return
  }
  func.func @transform_0(%arg0: i32, %arg1: i32) -> (i32, i32) {
    %c0_i32 = arith.constant 0 : i32
    return %arg0, %arg1 : i32, i32
  }
  func.func @transform_1(%arg0: i32, %arg1: i32) -> (i32, i32) {
    %c0_i32 = arith.constant 0 : i32
    %c0_i32_0 = arith.constant 0 : i32
    return %arg1, %c0_i32 : i32, i32
  }
  func.func @transform_2(%arg0: i32, %arg1: i32) -> (i32, i32) {
    %c0_i32 = arith.constant 0 : i32
    %c0_i32_0 = arith.constant 0 : i32
    %c0_i32_1 = arith.constant 0 : i32
    return %c0_i32, %c0_i32_0 : i32, i32
  }
  func.func @transform_3(%arg0: i32, %arg1: i32) -> (i32, i32) {
    %c0_i32 = arith.constant 0 : i32
    %c0_i32_0 = arith.constant 0 : i32
    return %arg0, %c0_i32 : i32, i32
  }
}

module attributes {stable_mosaic.version = 11 : i64} {
  func.func @_mm_stats_kernel(%arg0: i32, %arg1: i32, %arg2: memref<512x128xbf16, #tpu.memory_space<vmem>>, %arg3: memref<128x128xbf16, #tpu.memory_space<vmem>>, %arg4: memref<512x128xbf16, #tpu.memory_space<vmem>>, %arg5: memref<8x128xf32, #tpu.memory_space<vmem>>, %arg6: memref<8x128xf32, #tpu.memory_space<vmem>>, %arg7: memref<512x128xf32, #tpu.memory_space<vmem>>) attributes {dimension_semantics = [#tpu.dimension_semantics<parallel>, #tpu.dimension_semantics<arbitrary>], iteration_bounds = array<i64: 1, 1>, scalar_prefetch = 0 : i64, scratch_operands = 1 : i64, tpu.core_type = #tpu.core_type<tc>, window_params = [{transform_indices = @transform_0, window_bounds = array<i64: 512, 128>}, {transform_indices = @transform_1, window_bounds = array<i64: 128, 128>}, {transform_indices = @transform_2, window_bounds = array<i64: 512, 128>}, {transform_indices = @transform_3, window_bounds = array<i64: 8, 128>}, {transform_indices = @transform_4, window_bounds = array<i64: 8, 128>}]} {
    %c0_i32 = arith.constant 0 : i32
    %0 = arith.cmpi eq, %arg1, %c0_i32 : i32
    %1 = arith.extui %0 : i1 to i32
    %c0_i32_0 = arith.constant 0 : i32
    %2 = arith.cmpi ne, %1, %c0_i32_0 : i32
    scf.if %2 {
      %cst_10 = arith.constant 0.000000e+00 : f32
      %12 = vector.broadcast %cst_10 : f32 to vector<512x128xf32>
      %c0_11 = arith.constant 0 : index
      %c0_12 = arith.constant 0 : index
      %13 = vector.load %arg7[%c0_11, %c0_12] : memref<512x128xf32, #tpu.memory_space<vmem>>, vector<512x128xf32>
      tpu.vector_store %arg7[%c0_11, %c0_12], %12 {strides = array<i32>} : memref<512x128xf32, #tpu.memory_space<vmem>>, vector<512x128xf32>,
    } else {
    }
    %c0 = arith.constant 0 : index
    %c0_1 = arith.constant 0 : index
    %3 = vector.load %arg7[%c0, %c0_1] : memref<512x128xf32, #tpu.memory_space<vmem>>, vector<512x128xf32>
    %c0_2 = arith.constant 0 : index
    %c0_3 = arith.constant 0 : index
    %4 = vector.load %arg2[%c0_2, %c0_3] : memref<512x128xbf16, #tpu.memory_space<vmem>>, vector<512x128xbf16>
    %c0_4 = arith.constant 0 : index
    %c0_5 = arith.constant 0 : index
    %5 = vector.load %arg3[%c0_4, %c0_5] : memref<128x128xbf16, #tpu.memory_space<vmem>>, vector<128x128xbf16>
    %cst = arith.constant dense<0.000000e+00> : vector<512x128xf32>
    %6 = tpu.matmul %4, %5, %cst {dimension_numbers = #tpu.dot_dimension_numbers<[1], [0], [0], [1], [0, 0, 1, 1], [], []>} : vector<512x128xbf16>, vector<128x128xbf16>, vector<512x128xf32> -> vector<512x128xf32>
    %7 = arith.addf %3, %6 : vector<512x128xf32>
    %c0_6 = arith.constant 0 : index
    %c0_7 = arith.constant 0 : index
    %8 = vector.load %arg7[%c0_6, %c0_7] : memref<512x128xf32, #tpu.memory_space<vmem>>, vector<512x128xf32>
    tpu.vector_store %arg7[%c0_6, %c0_7], %7 {strides = array<i32>} : memref<512x128xf32, #tpu.memory_space<vmem>>, vector<512x128xf32>,
    %c0_i32_8 = arith.constant 0 : i32
    %9 = arith.cmpi eq, %arg1, %c0_i32_8 : i32
    %10 = arith.extui %9 : i1 to i32
    %c0_i32_9 = arith.constant 0 : i32
    %11 = arith.cmpi ne, %10, %c0_i32_9 : i32
    scf.if %11 {
      %c0_10 = arith.constant 0 : index
      %c0_11 = arith.constant 0 : index
      %12 = vector.load %arg7[%c0_10, %c0_11] : memref<512x128xf32, #tpu.memory_space<vmem>>, vector<512x128xf32>
      %13 = arith.truncf %12 : vector<512x128xf32> to vector<512x128xbf16>
      %c0_12 = arith.constant 0 : index
      %c0_13 = arith.constant 0 : index
      %14 = vector.load %arg4[%c0_12, %c0_13] : memref<512x128xbf16, #tpu.memory_space<vmem>>, vector<512x128xbf16>
      tpu.vector_store %arg4[%c0_12, %c0_13], %13 {strides = array<i32>} : memref<512x128xbf16, #tpu.memory_space<vmem>>, vector<512x128xbf16>,
      %cst_14 = arith.constant dense<0.000000e+00> : vector<128xf32>
      %15 = vector.multi_reduction <add>, %12, %cst_14 [0] : vector<512x128xf32> to vector<128xf32>
      %16 = vector.shape_cast %15 : vector<128xf32> to vector<1x128xf32>
      %17 = arith.mulf %12, %12 : vector<512x128xf32>
      %cst_15 = arith.constant dense<0.000000e+00> : vector<128xf32>
      %18 = vector.multi_reduction <add>, %17, %cst_15 [0] : vector<512x128xf32> to vector<128xf32>
      %19 = vector.shape_cast %18 : vector<128xf32> to vector<1x128xf32>
      %20 = vector.shape_cast %16 : vector<1x128xf32> to vector<1x128xf32>
      %21 = vector.broadcast %20 : vector<1x128xf32> to vector<8x128xf32>
      %c0_16 = arith.constant 0 : index
      %c0_17 = arith.constant 0 : index
      %22 = vector.load %arg5[%c0_16, %c0_17] : memref<8x128xf32, #tpu.memory_space<vmem>>, vector<8x128xf32>
      tpu.vector_store %arg5[%c0_16, %c0_17], %21 {strides = array<i32>} : memref<8x128xf32, #tpu.memory_space<vmem>>, vector<8x128xf32>,
      %23 = vector.shape_cast %19 : vector<1x128xf32> to vector<1x128xf32>
      %24 = vector.broadcast %23 : vector<1x128xf32> to vector<8x128xf32>
      %c0_18 = arith.constant 0 : index
      %c0_19 = arith.constant 0 : index
      %25 = vector.load %arg6[%c0_18, %c0_19] : memref<8x128xf32, #tpu.memory_space<vmem>>, vector<8x128xf32>
      tpu.vector_store %arg6[%c0_18, %c0_19], %24 {strides = array<i32>} : memref<8x128xf32, #tpu.memory_space<vmem>>, vector<8x128xf32>,
    } else {
    }
    return
  }
  func.func @transform_0(%arg0: i32, %arg1: i32) -> (i32, i32) {
    %c0_i32 = arith.constant 0 : i32
    return %arg0, %arg1 : i32, i32
  }
  func.func @transform_1(%arg0: i32, %arg1: i32) -> (i32, i32) {
    %c0_i32 = arith.constant 0 : i32
    %c0_i32_0 = arith.constant 0 : i32
    return %arg1, %c0_i32 : i32, i32
  }
  func.func @transform_2(%arg0: i32, %arg1: i32) -> (i32, i32) {
    %c0_i32 = arith.constant 0 : i32
    %c0_i32_0 = arith.constant 0 : i32
    return %arg0, %c0_i32 : i32, i32
  }
  func.func @transform_3(%arg0: i32, %arg1: i32) -> (i32, i32) {
    %c0_i32 = arith.constant 0 : i32
    %c0_i32_0 = arith.constant 0 : i32
    return %arg0, %c0_i32 : i32, i32
  }
  func.func @transform_4(%arg0: i32, %arg1: i32) -> (i32, i32) {
    %c0_i32 = arith.constant 0 : i32
    %c0_i32_0 = arith.constant 0 : i32
    return %arg0, %c0_i32 : i32, i32
  }
}

module attributes {stable_mosaic.version = 11 : i64} {
  func.func @_bn_lrelu_kernel(%arg0: i32, %arg1: memref<512x128xbf16, #tpu.memory_space<vmem>>, %arg2: memref<1x128xf32, #tpu.memory_space<vmem>>, %arg3: memref<1x128xf32, #tpu.memory_space<vmem>>, %arg4: memref<512x128xbf16, #tpu.memory_space<vmem>>) attributes {dimension_semantics = [#tpu.dimension_semantics<parallel>], iteration_bounds = array<i64: 1>, scalar_prefetch = 0 : i64, scratch_operands = 0 : i64, tpu.core_type = #tpu.core_type<tc>, window_params = [{transform_indices = @transform_0, window_bounds = array<i64: 512, 128>}, {pipeline_mode = #tpu.pipeline_mode<synchronous>, transform_indices = @transform_1, window_bounds = array<i64: 1, 128>}, {pipeline_mode = #tpu.pipeline_mode<synchronous>, transform_indices = @transform_2, window_bounds = array<i64: 1, 128>}, {transform_indices = @transform_3, window_bounds = array<i64: 512, 128>}]} {
    %c0 = arith.constant 0 : index
    %c0_0 = arith.constant 0 : index
    %0 = vector.load %arg1[%c0, %c0_0] : memref<512x128xbf16, #tpu.memory_space<vmem>>, vector<512x128xbf16>
    %1 = arith.extf %0 : vector<512x128xbf16> to vector<512x128xf32>
    %c0_1 = arith.constant 0 : index
    %c0_2 = arith.constant 0 : index
    %2 = vector.load %arg2[%c0_1, %c0_2] : memref<1x128xf32, #tpu.memory_space<vmem>>, vector<1x128xf32>
    %3 = vector.broadcast %2 : vector<1x128xf32> to vector<512x128xf32>
    %4 = arith.mulf %1, %3 : vector<512x128xf32>
    %c0_3 = arith.constant 0 : index
    %c0_4 = arith.constant 0 : index
    %5 = vector.load %arg3[%c0_3, %c0_4] : memref<1x128xf32, #tpu.memory_space<vmem>>, vector<1x128xf32>
    %6 = vector.broadcast %5 : vector<1x128xf32> to vector<512x128xf32>
    %7 = arith.addf %4, %6 : vector<512x128xf32>
    %cst = arith.constant 0.000000e+00 : f32
    %8 = vector.broadcast %cst : f32 to vector<512x128xf32>
    %9 = arith.cmpf oge, %7, %8 : vector<512x128xf32>
    %cst_5 = arith.constant 2.000000e-01 : f32
    %10 = vector.broadcast %cst_5 : f32 to vector<512x128xf32>
    %11 = arith.mulf %10, %7 : vector<512x128xf32>
    %12 = arith.select %9, %7, %11 : vector<512x128xi1>, vector<512x128xf32>
    %13 = arith.truncf %12 : vector<512x128xf32> to vector<512x128xbf16>
    %c0_6 = arith.constant 0 : index
    %c0_7 = arith.constant 0 : index
    %14 = vector.load %arg4[%c0_6, %c0_7] : memref<512x128xbf16, #tpu.memory_space<vmem>>, vector<512x128xbf16>
    tpu.vector_store %arg4[%c0_6, %c0_7], %13 {strides = array<i32>} : memref<512x128xbf16, #tpu.memory_space<vmem>>, vector<512x128xbf16>,
    return
  }
  func.func @transform_0(%arg0: i32) -> (i32, i32) {
    %c0_i32 = arith.constant 0 : i32
    %c0_i32_0 = arith.constant 0 : i32
    return %arg0, %c0_i32 : i32, i32
  }
  func.func @transform_1(%arg0: i32) -> (i32, i32) {
    %c0_i32 = arith.constant 0 : i32
    %c0_i32_0 = arith.constant 0 : i32
    %c0_i32_1 = arith.constant 0 : i32
    return %c0_i32, %c0_i32_0 : i32, i32
  }
  func.func @transform_2(%arg0: i32) -> (i32, i32) {
    %c0_i32 = arith.constant 0 : i32
    %c0_i32_0 = arith.constant 0 : i32
    %c0_i32_1 = arith.constant 0 : i32
    return %c0_i32, %c0_i32_0 : i32, i32
  }
  func.func @transform_3(%arg0: i32) -> (i32, i32) {
    %c0_i32 = arith.constant 0 : i32
    %c0_i32_0 = arith.constant 0 : i32
    return %arg0, %c0_i32 : i32, i32
  }
}

module attributes {stable_mosaic.version = 11 : i64} {
  func.func @_mm_stats_kernel(%arg0: i32, %arg1: i32, %arg2: memref<128x256xbf16, #tpu.memory_space<vmem>>, %arg3: memref<256x128xbf16, #tpu.memory_space<vmem>>, %arg4: memref<128x128xbf16, #tpu.memory_space<vmem>>, %arg5: memref<8x128xf32, #tpu.memory_space<vmem>>, %arg6: memref<8x128xf32, #tpu.memory_space<vmem>>, %arg7: memref<128x128xf32, #tpu.memory_space<vmem>>) attributes {dimension_semantics = [#tpu.dimension_semantics<parallel>, #tpu.dimension_semantics<arbitrary>], iteration_bounds = array<i64: 1, 1>, scalar_prefetch = 0 : i64, scratch_operands = 1 : i64, tpu.core_type = #tpu.core_type<tc>, window_params = [{transform_indices = @transform_0, window_bounds = array<i64: 128, 256>}, {transform_indices = @transform_1, window_bounds = array<i64: 256, 128>}, {transform_indices = @transform_2, window_bounds = array<i64: 128, 128>}, {transform_indices = @transform_3, window_bounds = array<i64: 8, 128>}, {transform_indices = @transform_4, window_bounds = array<i64: 8, 128>}]} {
    %c0_i32 = arith.constant 0 : i32
    %0 = arith.cmpi eq, %arg1, %c0_i32 : i32
    %1 = arith.extui %0 : i1 to i32
    %c0_i32_0 = arith.constant 0 : i32
    %2 = arith.cmpi ne, %1, %c0_i32_0 : i32
    scf.if %2 {
      %cst_10 = arith.constant 0.000000e+00 : f32
      %12 = vector.broadcast %cst_10 : f32 to vector<128x128xf32>
      %c0_11 = arith.constant 0 : index
      %c0_12 = arith.constant 0 : index
      %13 = vector.load %arg7[%c0_11, %c0_12] : memref<128x128xf32, #tpu.memory_space<vmem>>, vector<128x128xf32>
      tpu.vector_store %arg7[%c0_11, %c0_12], %12 {strides = array<i32>} : memref<128x128xf32, #tpu.memory_space<vmem>>, vector<128x128xf32>,
    } else {
    }
    %c0 = arith.constant 0 : index
    %c0_1 = arith.constant 0 : index
    %3 = vector.load %arg7[%c0, %c0_1] : memref<128x128xf32, #tpu.memory_space<vmem>>, vector<128x128xf32>
    %c0_2 = arith.constant 0 : index
    %c0_3 = arith.constant 0 : index
    %4 = vector.load %arg2[%c0_2, %c0_3] : memref<128x256xbf16, #tpu.memory_space<vmem>>, vector<128x256xbf16>
    %c0_4 = arith.constant 0 : index
    %c0_5 = arith.constant 0 : index
    %5 = vector.load %arg3[%c0_4, %c0_5] : memref<256x128xbf16, #tpu.memory_space<vmem>>, vector<256x128xbf16>
    %cst = arith.constant dense<0.000000e+00> : vector<128x128xf32>
    %6 = tpu.matmul %4, %5, %cst {dimension_numbers = #tpu.dot_dimension_numbers<[1], [0], [0], [1], [0, 0, 1, 1], [], []>} : vector<128x256xbf16>, vector<256x128xbf16>, vector<128x128xf32> -> vector<128x128xf32>
    %7 = arith.addf %3, %6 : vector<128x128xf32>
    %c0_6 = arith.constant 0 : index
    %c0_7 = arith.constant 0 : index
    %8 = vector.load %arg7[%c0_6, %c0_7] : memref<128x128xf32, #tpu.memory_space<vmem>>, vector<128x128xf32>
    tpu.vector_store %arg7[%c0_6, %c0_7], %7 {strides = array<i32>} : memref<128x128xf32, #tpu.memory_space<vmem>>, vector<128x128xf32>,
    %c0_i32_8 = arith.constant 0 : i32
    %9 = arith.cmpi eq, %arg1, %c0_i32_8 : i32
    %10 = arith.extui %9 : i1 to i32
    %c0_i32_9 = arith.constant 0 : i32
    %11 = arith.cmpi ne, %10, %c0_i32_9 : i32
    scf.if %11 {
      %c0_10 = arith.constant 0 : index
      %c0_11 = arith.constant 0 : index
      %12 = vector.load %arg7[%c0_10, %c0_11] : memref<128x128xf32, #tpu.memory_space<vmem>>, vector<128x128xf32>
      %13 = arith.truncf %12 : vector<128x128xf32> to vector<128x128xbf16>
      %c0_12 = arith.constant 0 : index
      %c0_13 = arith.constant 0 : index
      %14 = vector.load %arg4[%c0_12, %c0_13] : memref<128x128xbf16, #tpu.memory_space<vmem>>, vector<128x128xbf16>
      tpu.vector_store %arg4[%c0_12, %c0_13], %13 {strides = array<i32>} : memref<128x128xbf16, #tpu.memory_space<vmem>>, vector<128x128xbf16>,
      %cst_14 = arith.constant dense<0.000000e+00> : vector<128xf32>
      %15 = vector.multi_reduction <add>, %12, %cst_14 [0] : vector<128x128xf32> to vector<128xf32>
      %16 = vector.shape_cast %15 : vector<128xf32> to vector<1x128xf32>
      %17 = arith.mulf %12, %12 : vector<128x128xf32>
      %cst_15 = arith.constant dense<0.000000e+00> : vector<128xf32>
      %18 = vector.multi_reduction <add>, %17, %cst_15 [0] : vector<128x128xf32> to vector<128xf32>
      %19 = vector.shape_cast %18 : vector<128xf32> to vector<1x128xf32>
      %20 = vector.shape_cast %16 : vector<1x128xf32> to vector<1x128xf32>
      %21 = vector.broadcast %20 : vector<1x128xf32> to vector<8x128xf32>
      %c0_16 = arith.constant 0 : index
      %c0_17 = arith.constant 0 : index
      %22 = vector.load %arg5[%c0_16, %c0_17] : memref<8x128xf32, #tpu.memory_space<vmem>>, vector<8x128xf32>
      tpu.vector_store %arg5[%c0_16, %c0_17], %21 {strides = array<i32>} : memref<8x128xf32, #tpu.memory_space<vmem>>, vector<8x128xf32>,
      %23 = vector.shape_cast %19 : vector<1x128xf32> to vector<1x128xf32>
      %24 = vector.broadcast %23 : vector<1x128xf32> to vector<8x128xf32>
      %c0_18 = arith.constant 0 : index
      %c0_19 = arith.constant 0 : index
      %25 = vector.load %arg6[%c0_18, %c0_19] : memref<8x128xf32, #tpu.memory_space<vmem>>, vector<8x128xf32>
      tpu.vector_store %arg6[%c0_18, %c0_19], %24 {strides = array<i32>} : memref<8x128xf32, #tpu.memory_space<vmem>>, vector<8x128xf32>,
    } else {
    }
    return
  }
  func.func @transform_0(%arg0: i32, %arg1: i32) -> (i32, i32) {
    %c0_i32 = arith.constant 0 : i32
    return %arg0, %arg1 : i32, i32
  }
  func.func @transform_1(%arg0: i32, %arg1: i32) -> (i32, i32) {
    %c0_i32 = arith.constant 0 : i32
    %c0_i32_0 = arith.constant 0 : i32
    return %arg1, %c0_i32 : i32, i32
  }
  func.func @transform_2(%arg0: i32, %arg1: i32) -> (i32, i32) {
    %c0_i32 = arith.constant 0 : i32
    %c0_i32_0 = arith.constant 0 : i32
    return %arg0, %c0_i32 : i32, i32
  }
  func.func @transform_3(%arg0: i32, %arg1: i32) -> (i32, i32) {
    %c0_i32 = arith.constant 0 : i32
    %c0_i32_0 = arith.constant 0 : i32
    return %arg0, %c0_i32 : i32, i32
  }
  func.func @transform_4(%arg0: i32, %arg1: i32) -> (i32, i32) {
    %c0_i32 = arith.constant 0 : i32
    %c0_i32_0 = arith.constant 0 : i32
    return %arg0, %c0_i32 : i32, i32
  }
}

module attributes {stable_mosaic.version = 11 : i64} {
  func.func @_bn_lrelu_kernel(%arg0: i32, %arg1: memref<128x128xbf16, #tpu.memory_space<vmem>>, %arg2: memref<1x128xf32, #tpu.memory_space<vmem>>, %arg3: memref<1x128xf32, #tpu.memory_space<vmem>>, %arg4: memref<128x128xbf16, #tpu.memory_space<vmem>>) attributes {dimension_semantics = [#tpu.dimension_semantics<parallel>], iteration_bounds = array<i64: 1>, scalar_prefetch = 0 : i64, scratch_operands = 0 : i64, tpu.core_type = #tpu.core_type<tc>, window_params = [{transform_indices = @transform_0, window_bounds = array<i64: 128, 128>}, {pipeline_mode = #tpu.pipeline_mode<synchronous>, transform_indices = @transform_1, window_bounds = array<i64: 1, 128>}, {pipeline_mode = #tpu.pipeline_mode<synchronous>, transform_indices = @transform_2, window_bounds = array<i64: 1, 128>}, {transform_indices = @transform_3, window_bounds = array<i64: 128, 128>}]} {
    %c0 = arith.constant 0 : index
    %c0_0 = arith.constant 0 : index
    %0 = vector.load %arg1[%c0, %c0_0] : memref<128x128xbf16, #tpu.memory_space<vmem>>, vector<128x128xbf16>
    %1 = arith.extf %0 : vector<128x128xbf16> to vector<128x128xf32>
    %c0_1 = arith.constant 0 : index
    %c0_2 = arith.constant 0 : index
    %2 = vector.load %arg2[%c0_1, %c0_2] : memref<1x128xf32, #tpu.memory_space<vmem>>, vector<1x128xf32>
    %3 = vector.broadcast %2 : vector<1x128xf32> to vector<128x128xf32>
    %4 = arith.mulf %1, %3 : vector<128x128xf32>
    %c0_3 = arith.constant 0 : index
    %c0_4 = arith.constant 0 : index
    %5 = vector.load %arg3[%c0_3, %c0_4] : memref<1x128xf32, #tpu.memory_space<vmem>>, vector<1x128xf32>
    %6 = vector.broadcast %5 : vector<1x128xf32> to vector<128x128xf32>
    %7 = arith.addf %4, %6 : vector<128x128xf32>
    %cst = arith.constant 0.000000e+00 : f32
    %8 = vector.broadcast %cst : f32 to vector<128x128xf32>
    %9 = arith.cmpf oge, %7, %8 : vector<128x128xf32>
    %cst_5 = arith.constant 2.000000e-01 : f32
    %10 = vector.broadcast %cst_5 : f32 to vector<128x128xf32>
    %11 = arith.mulf %10, %7 : vector<128x128xf32>
    %12 = arith.select %9, %7, %11 : vector<128x128xi1>, vector<128x128xf32>
    %13 = arith.truncf %12 : vector<128x128xf32> to vector<128x128xbf16>
    %c0_6 = arith.constant 0 : index
    %c0_7 = arith.constant 0 : index
    %14 = vector.load %arg4[%c0_6, %c0_7] : memref<128x128xbf16, #tpu.memory_space<vmem>>, vector<128x128xbf16>
    tpu.vector_store %arg4[%c0_6, %c0_7], %13 {strides = array<i32>} : memref<128x128xbf16, #tpu.memory_space<vmem>>, vector<128x128xbf16>,
    return
  }
  func.func @transform_0(%arg0: i32) -> (i32, i32) {
    %c0_i32 = arith.constant 0 : i32
    %c0_i32_0 = arith.constant 0 : i32
    return %arg0, %c0_i32 : i32, i32
  }
  func.func @transform_1(%arg0: i32) -> (i32, i32) {
    %c0_i32 = arith.constant 0 : i32
    %c0_i32_0 = arith.constant 0 : i32
    %c0_i32_1 = arith.constant 0 : i32
    return %c0_i32, %c0_i32_0 : i32, i32
  }
  func.func @transform_2(%arg0: i32) -> (i32, i32) {
    %c0_i32 = arith.constant 0 : i32
    %c0_i32_0 = arith.constant 0 : i32
    %c0_i32_1 = arith.constant 0 : i32
    return %c0_i32, %c0_i32_0 : i32, i32
  }
  func.func @transform_3(%arg0: i32) -> (i32, i32) {
    %c0_i32 = arith.constant 0 : i32
    %c0_i32_0 = arith.constant 0 : i32
    return %arg0, %c0_i32 : i32, i32
  }
}

module attributes {stable_mosaic.version = 11 : i64} {
  func.func @_bn_lrelu_kernel(%arg0: i32, %arg1: memref<32x128xbf16, #tpu.memory_space<vmem>>, %arg2: memref<1x128xf32, #tpu.memory_space<vmem>>, %arg3: memref<1x128xf32, #tpu.memory_space<vmem>>, %arg4: memref<32x128xbf16, #tpu.memory_space<vmem>>) attributes {dimension_semantics = [#tpu.dimension_semantics<parallel>], iteration_bounds = array<i64: 1>, scalar_prefetch = 0 : i64, scratch_operands = 0 : i64, tpu.core_type = #tpu.core_type<tc>, window_params = [{transform_indices = @transform_0, window_bounds = array<i64: 32, 128>}, {pipeline_mode = #tpu.pipeline_mode<synchronous>, transform_indices = @transform_1, window_bounds = array<i64: 1, 128>}, {pipeline_mode = #tpu.pipeline_mode<synchronous>, transform_indices = @transform_2, window_bounds = array<i64: 1, 128>}, {transform_indices = @transform_3, window_bounds = array<i64: 32, 128>}]} {
    %c0 = arith.constant 0 : index
    %c0_0 = arith.constant 0 : index
    %0 = vector.load %arg1[%c0, %c0_0] : memref<32x128xbf16, #tpu.memory_space<vmem>>, vector<32x128xbf16>
    %1 = arith.extf %0 : vector<32x128xbf16> to vector<32x128xf32>
    %c0_1 = arith.constant 0 : index
    %c0_2 = arith.constant 0 : index
    %2 = vector.load %arg2[%c0_1, %c0_2] : memref<1x128xf32, #tpu.memory_space<vmem>>, vector<1x128xf32>
    %3 = vector.broadcast %2 : vector<1x128xf32> to vector<32x128xf32>
    %4 = arith.mulf %1, %3 : vector<32x128xf32>
    %c0_3 = arith.constant 0 : index
    %c0_4 = arith.constant 0 : index
    %5 = vector.load %arg3[%c0_3, %c0_4] : memref<1x128xf32, #tpu.memory_space<vmem>>, vector<1x128xf32>
    %6 = vector.broadcast %5 : vector<1x128xf32> to vector<32x128xf32>
    %7 = arith.addf %4, %6 : vector<32x128xf32>
    %cst = arith.constant 0.000000e+00 : f32
    %8 = vector.broadcast %cst : f32 to vector<32x128xf32>
    %9 = arith.cmpf oge, %7, %8 : vector<32x128xf32>
    %cst_5 = arith.constant 2.000000e-01 : f32
    %10 = vector.broadcast %cst_5 : f32 to vector<32x128xf32>
    %11 = arith.mulf %10, %7 : vector<32x128xf32>
    %12 = arith.select %9, %7, %11 : vector<32x128xi1>, vector<32x128xf32>
    %13 = arith.truncf %12 : vector<32x128xf32> to vector<32x128xbf16>
    %c0_6 = arith.constant 0 : index
    %c0_7 = arith.constant 0 : index
    %14 = vector.load %arg4[%c0_6, %c0_7] : memref<32x128xbf16, #tpu.memory_space<vmem>>, vector<32x128xbf16>
    tpu.vector_store %arg4[%c0_6, %c0_7], %13 {strides = array<i32>} : memref<32x128xbf16, #tpu.memory_space<vmem>>, vector<32x128xbf16>,
    return
  }
  func.func @transform_0(%arg0: i32) -> (i32, i32) {
    %c0_i32 = arith.constant 0 : i32
    %c0_i32_0 = arith.constant 0 : i32
    return %arg0, %c0_i32 : i32, i32
  }
  func.func @transform_1(%arg0: i32) -> (i32, i32) {
    %c0_i32 = arith.constant 0 : i32
    %c0_i32_0 = arith.constant 0 : i32
    %c0_i32_1 = arith.constant 0 : i32
    return %c0_i32, %c0_i32_0 : i32, i32
  }
  func.func @transform_2(%arg0: i32) -> (i32, i32) {
    %c0_i32 = arith.constant 0 : i32
    %c0_i32_0 = arith.constant 0 : i32
    %c0_i32_1 = arith.constant 0 : i32
    return %c0_i32, %c0_i32_0 : i32, i32
  }
  func.func @transform_3(%arg0: i32) -> (i32, i32) {
    %c0_i32 = arith.constant 0 : i32
    %c0_i32_0 = arith.constant 0 : i32
    return %arg0, %c0_i32 : i32, i32
  }
}

module attributes {stable_mosaic.version = 11 : i64} {
  func.func @_mm_stats_kernel(%arg0: i32, %arg1: i32, %arg2: memref<32x512xbf16, #tpu.memory_space<vmem>>, %arg3: memref<512x128xbf16, #tpu.memory_space<vmem>>, %arg4: memref<32x128xbf16, #tpu.memory_space<vmem>>, %arg5: memref<8x128xf32, #tpu.memory_space<vmem>>, %arg6: memref<8x128xf32, #tpu.memory_space<vmem>>, %arg7: memref<32x128xf32, #tpu.memory_space<vmem>>) attributes {dimension_semantics = [#tpu.dimension_semantics<parallel>, #tpu.dimension_semantics<arbitrary>], iteration_bounds = array<i64: 1, 1>, scalar_prefetch = 0 : i64, scratch_operands = 1 : i64, tpu.core_type = #tpu.core_type<tc>, window_params = [{transform_indices = @transform_0, window_bounds = array<i64: 32, 512>}, {transform_indices = @transform_1, window_bounds = array<i64: 512, 128>}, {transform_indices = @transform_2, window_bounds = array<i64: 32, 128>}, {transform_indices = @transform_3, window_bounds = array<i64: 8, 128>}, {transform_indices = @transform_4, window_bounds = array<i64: 8, 128>}]} {
    %c0_i32 = arith.constant 0 : i32
    %0 = arith.cmpi eq, %arg1, %c0_i32 : i32
    %1 = arith.extui %0 : i1 to i32
    %c0_i32_0 = arith.constant 0 : i32
    %2 = arith.cmpi ne, %1, %c0_i32_0 : i32
    scf.if %2 {
      %cst_10 = arith.constant 0.000000e+00 : f32
      %12 = vector.broadcast %cst_10 : f32 to vector<32x128xf32>
      %c0_11 = arith.constant 0 : index
      %c0_12 = arith.constant 0 : index
      %13 = vector.load %arg7[%c0_11, %c0_12] : memref<32x128xf32, #tpu.memory_space<vmem>>, vector<32x128xf32>
      tpu.vector_store %arg7[%c0_11, %c0_12], %12 {strides = array<i32>} : memref<32x128xf32, #tpu.memory_space<vmem>>, vector<32x128xf32>,
    } else {
    }
    %c0 = arith.constant 0 : index
    %c0_1 = arith.constant 0 : index
    %3 = vector.load %arg7[%c0, %c0_1] : memref<32x128xf32, #tpu.memory_space<vmem>>, vector<32x128xf32>
    %c0_2 = arith.constant 0 : index
    %c0_3 = arith.constant 0 : index
    %4 = vector.load %arg2[%c0_2, %c0_3] : memref<32x512xbf16, #tpu.memory_space<vmem>>, vector<32x512xbf16>
    %c0_4 = arith.constant 0 : index
    %c0_5 = arith.constant 0 : index
    %5 = vector.load %arg3[%c0_4, %c0_5] : memref<512x128xbf16, #tpu.memory_space<vmem>>, vector<512x128xbf16>
    %cst = arith.constant dense<0.000000e+00> : vector<32x128xf32>
    %6 = tpu.matmul %4, %5, %cst {dimension_numbers = #tpu.dot_dimension_numbers<[1], [0], [0], [1], [0, 0, 1, 1], [], []>} : vector<32x512xbf16>, vector<512x128xbf16>, vector<32x128xf32> -> vector<32x128xf32>
    %7 = arith.addf %3, %6 : vector<32x128xf32>
    %c0_6 = arith.constant 0 : index
    %c0_7 = arith.constant 0 : index
    %8 = vector.load %arg7[%c0_6, %c0_7] : memref<32x128xf32, #tpu.memory_space<vmem>>, vector<32x128xf32>
    tpu.vector_store %arg7[%c0_6, %c0_7], %7 {strides = array<i32>} : memref<32x128xf32, #tpu.memory_space<vmem>>, vector<32x128xf32>,
    %c0_i32_8 = arith.constant 0 : i32
    %9 = arith.cmpi eq, %arg1, %c0_i32_8 : i32
    %10 = arith.extui %9 : i1 to i32
    %c0_i32_9 = arith.constant 0 : i32
    %11 = arith.cmpi ne, %10, %c0_i32_9 : i32
    scf.if %11 {
      %c0_10 = arith.constant 0 : index
      %c0_11 = arith.constant 0 : index
      %12 = vector.load %arg7[%c0_10, %c0_11] : memref<32x128xf32, #tpu.memory_space<vmem>>, vector<32x128xf32>
      %13 = arith.truncf %12 : vector<32x128xf32> to vector<32x128xbf16>
      %c0_12 = arith.constant 0 : index
      %c0_13 = arith.constant 0 : index
      %14 = vector.load %arg4[%c0_12, %c0_13] : memref<32x128xbf16, #tpu.memory_space<vmem>>, vector<32x128xbf16>
      tpu.vector_store %arg4[%c0_12, %c0_13], %13 {strides = array<i32>} : memref<32x128xbf16, #tpu.memory_space<vmem>>, vector<32x128xbf16>,
      %cst_14 = arith.constant dense<0.000000e+00> : vector<128xf32>
      %15 = vector.multi_reduction <add>, %12, %cst_14 [0] : vector<32x128xf32> to vector<128xf32>
      %16 = vector.shape_cast %15 : vector<128xf32> to vector<1x128xf32>
      %17 = arith.mulf %12, %12 : vector<32x128xf32>
      %cst_15 = arith.constant dense<0.000000e+00> : vector<128xf32>
      %18 = vector.multi_reduction <add>, %17, %cst_15 [0] : vector<32x128xf32> to vector<128xf32>
      %19 = vector.shape_cast %18 : vector<128xf32> to vector<1x128xf32>
      %20 = vector.shape_cast %16 : vector<1x128xf32> to vector<1x128xf32>
      %21 = vector.broadcast %20 : vector<1x128xf32> to vector<8x128xf32>
      %c0_16 = arith.constant 0 : index
      %c0_17 = arith.constant 0 : index
      %22 = vector.load %arg5[%c0_16, %c0_17] : memref<8x128xf32, #tpu.memory_space<vmem>>, vector<8x128xf32>
      tpu.vector_store %arg5[%c0_16, %c0_17], %21 {strides = array<i32>} : memref<8x128xf32, #tpu.memory_space<vmem>>, vector<8x128xf32>,
      %23 = vector.shape_cast %19 : vector<1x128xf32> to vector<1x128xf32>
      %24 = vector.broadcast %23 : vector<1x128xf32> to vector<8x128xf32>
      %c0_18 = arith.constant 0 : index
      %c0_19 = arith.constant 0 : index
      %25 = vector.load %arg6[%c0_18, %c0_19] : memref<8x128xf32, #tpu.memory_space<vmem>>, vector<8x128xf32>
      tpu.vector_store %arg6[%c0_18, %c0_19], %24 {strides = array<i32>} : memref<8x128xf32, #tpu.memory_space<vmem>>, vector<8x128xf32>,
    } else {
    }
    return
  }
  func.func @transform_0(%arg0: i32, %arg1: i32) -> (i32, i32) {
    %c0_i32 = arith.constant 0 : i32
    return %arg0, %arg1 : i32, i32
  }
  func.func @transform_1(%arg0: i32, %arg1: i32) -> (i32, i32) {
    %c0_i32 = arith.constant 0 : i32
    %c0_i32_0 = arith.constant 0 : i32
    return %arg1, %c0_i32 : i32, i32
  }
  func.func @transform_2(%arg0: i32, %arg1: i32) -> (i32, i32) {
    %c0_i32 = arith.constant 0 : i32
    %c0_i32_0 = arith.constant 0 : i32
    return %arg0, %c0_i32 : i32, i32
  }
  func.func @transform_3(%arg0: i32, %arg1: i32) -> (i32, i32) {
    %c0_i32 = arith.constant 0 : i32
    %c0_i32_0 = arith.constant 0 : i32
    return %arg0, %c0_i32 : i32, i32
  }
  func.func @transform_4(%arg0: i32, %arg1: i32) -> (i32, i32) {
    %c0_i32 = arith.constant 0 : i32
    %c0_i32_0 = arith.constant 0 : i32
    return %arg0, %c0_i32 : i32, i32
  }
}

module attributes {stable_mosaic.version = 11 : i64} {
  func.func @_mm_bias_act_kernel(%arg0: i32, %arg1: i32, %arg2: memref<8x1024xbf16, #tpu.memory_space<vmem>>, %arg3: memref<1024x128xbf16, #tpu.memory_space<vmem>>, %arg4: memref<1x128xf32, #tpu.memory_space<vmem>>, %arg5: memref<8x128xf32, #tpu.memory_space<vmem>>, %arg6: memref<8x128xf32, #tpu.memory_space<vmem>>) attributes {dimension_semantics = [#tpu.dimension_semantics<parallel>, #tpu.dimension_semantics<arbitrary>], iteration_bounds = array<i64: 1, 1>, scalar_prefetch = 0 : i64, scratch_operands = 1 : i64, tpu.core_type = #tpu.core_type<tc>, window_params = [{transform_indices = @transform_0, window_bounds = array<i64: 8, 1024>}, {transform_indices = @transform_1, window_bounds = array<i64: 1024, 128>}, {pipeline_mode = #tpu.pipeline_mode<synchronous>, transform_indices = @transform_2, window_bounds = array<i64: 1, 128>}, {transform_indices = @transform_3, window_bounds = array<i64: 8, 128>}]} {
    %c0_i32 = arith.constant 0 : i32
    %0 = arith.cmpi eq, %arg1, %c0_i32 : i32
    %1 = arith.extui %0 : i1 to i32
    %c0_i32_0 = arith.constant 0 : i32
    %2 = arith.cmpi ne, %1, %c0_i32_0 : i32
    scf.if %2 {
      %cst_10 = arith.constant 0.000000e+00 : f32
      %12 = vector.broadcast %cst_10 : f32 to vector<8x128xf32>
      %c0_11 = arith.constant 0 : index
      %c0_12 = arith.constant 0 : index
      %13 = vector.load %arg6[%c0_11, %c0_12] : memref<8x128xf32, #tpu.memory_space<vmem>>, vector<8x128xf32>
      tpu.vector_store %arg6[%c0_11, %c0_12], %12 {strides = array<i32>} : memref<8x128xf32, #tpu.memory_space<vmem>>, vector<8x128xf32>,
    } else {
    }
    %c0 = arith.constant 0 : index
    %c0_1 = arith.constant 0 : index
    %3 = vector.load %arg6[%c0, %c0_1] : memref<8x128xf32, #tpu.memory_space<vmem>>, vector<8x128xf32>
    %c0_2 = arith.constant 0 : index
    %c0_3 = arith.constant 0 : index
    %4 = vector.load %arg2[%c0_2, %c0_3] : memref<8x1024xbf16, #tpu.memory_space<vmem>>, vector<8x1024xbf16>
    %c0_4 = arith.constant 0 : index
    %c0_5 = arith.constant 0 : index
    %5 = vector.load %arg3[%c0_4, %c0_5] : memref<1024x128xbf16, #tpu.memory_space<vmem>>, vector<1024x128xbf16>
    %cst = arith.constant dense<0.000000e+00> : vector<8x128xf32>
    %6 = tpu.matmul %4, %5, %cst {dimension_numbers = #tpu.dot_dimension_numbers<[1], [0], [0], [1], [0, 0, 1, 1], [], []>} : vector<8x1024xbf16>, vector<1024x128xbf16>, vector<8x128xf32> -> vector<8x128xf32>
    %7 = arith.addf %3, %6 : vector<8x128xf32>
    %c0_6 = arith.constant 0 : index
    %c0_7 = arith.constant 0 : index
    %8 = vector.load %arg6[%c0_6, %c0_7] : memref<8x128xf32, #tpu.memory_space<vmem>>, vector<8x128xf32>
    tpu.vector_store %arg6[%c0_6, %c0_7], %7 {strides = array<i32>} : memref<8x128xf32, #tpu.memory_space<vmem>>, vector<8x128xf32>,
    %c0_i32_8 = arith.constant 0 : i32
    %9 = arith.cmpi eq, %arg1, %c0_i32_8 : i32
    %10 = arith.extui %9 : i1 to i32
    %c0_i32_9 = arith.constant 0 : i32
    %11 = arith.cmpi ne, %10, %c0_i32_9 : i32
    scf.if %11 {
      %c0_10 = arith.constant 0 : index
      %c0_11 = arith.constant 0 : index
      %12 = vector.load %arg6[%c0_10, %c0_11] : memref<8x128xf32, #tpu.memory_space<vmem>>, vector<8x128xf32>
      %c0_12 = arith.constant 0 : index
      %c0_13 = arith.constant 0 : index
      %13 = vector.load %arg4[%c0_12, %c0_13] : memref<1x128xf32, #tpu.memory_space<vmem>>, vector<1x128xf32>
      %14 = vector.broadcast %13 : vector<1x128xf32> to vector<8x128xf32>
      %15 = arith.addf %12, %14 : vector<8x128xf32>
      %cst_14 = arith.constant 5.000000e-01 : f32
      %16 = vector.broadcast %cst_14 : f32 to vector<8x128xf32>
      %17 = arith.mulf %16, %15 : vector<8x128xf32>
      %18 = math.tanh %17 : vector<8x128xf32>
      %cst_15 = arith.constant 1.000000e+00 : f32
      %19 = vector.broadcast %cst_15 : f32 to vector<8x128xf32>
      %20 = arith.addf %18, %19 : vector<8x128xf32>
      %cst_16 = arith.constant 5.000000e-01 : f32
      %21 = vector.broadcast %cst_16 : f32 to vector<8x128xf32>
      %22 = arith.mulf %21, %20 : vector<8x128xf32>
      %c0_17 = arith.constant 0 : index
      %c0_18 = arith.constant 0 : index
      %23 = vector.load %arg5[%c0_17, %c0_18] : memref<8x128xf32, #tpu.memory_space<vmem>>, vector<8x128xf32>
      tpu.vector_store %arg5[%c0_17, %c0_18], %22 {strides = array<i32>} : memref<8x128xf32, #tpu.memory_space<vmem>>, vector<8x128xf32>,
    } else {
    }
    return
  }
  func.func @transform_0(%arg0: i32, %arg1: i32) -> (i32, i32) {
    %c0_i32 = arith.constant 0 : i32
    return %arg0, %arg1 : i32, i32
  }
  func.func @transform_1(%arg0: i32, %arg1: i32) -> (i32, i32) {
    %c0_i32 = arith.constant 0 : i32
    %c0_i32_0 = arith.constant 0 : i32
    return %arg1, %c0_i32 : i32, i32
  }
  func.func @transform_2(%arg0: i32, %arg1: i32) -> (i32, i32) {
    %c0_i32 = arith.constant 0 : i32
    %c0_i32_0 = arith.constant 0 : i32
    %c0_i32_1 = arith.constant 0 : i32
    return %c0_i32, %c0_i32_0 : i32, i32
  }
  func.func @transform_3(%arg0: i32, %arg1: i32) -> (i32, i32) {
    %c0_i32 = arith.constant 0 : i32
    %c0_i32_0 = arith.constant 0 : i32
    return %arg0, %c0_i32 : i32, i32
  }
}

</mosaic_0001>

<llo_original>
// kernel: _lambda_.8
$region0: #{_lambda_.8}
  #allocation0 [shape = 'u32[]', space=smem, size = 0x4, offset = 0x4, fixed_abs, tag = 'smem constant byte address 0x4 - core index']
  #allocation1 [shape = 'u32[72,128]{1,0:T(1,128)}', space=vmem, size = 0x9000, scoped, tag = 'internal scratch']
  #allocation2 [shape = 'f32[2048,128]{1,0:T(8,128)}', space=vmem, size = 0x100000, scoped, tag = 'scratch operand']
  %s0 = inlined_call_operand.vmem [shape: bf16[2048,64], index: 0, kind: input, shape index: {}]
  %s1 = inlined_call_operand.vmem [shape: bf16[64,128], index: 1, kind: input, shape index: {}]
  %s2 = inlined_call_operand.vmem [shape: f32[1,128], index: 2, kind: input, shape index: {}]
  %s3 = inlined_call_operand.vmem [shape: bf16[2048,128], index: 3, kind: output, shape index: {}]
  %s4 = sld [smem:[#allocation0]]
  $region30: #{_lambda_.8} parent=0
    _
  %s6 = ssub.s32 1, %s4
  %s7 = scalar_select 0, %s6, %s4
  // Predicated region
  $region2: #{_lambda_.8} parent=0 // pred_check
    _
  $region3: #{_lambda_.8} parent=0 // pred_check_branch
    %9 = sbr.rel (0) target = $region5
  $region4: #{_lambda_.8} parent=0 // pred_region
    _
  $region5: #{_lambda_.8} parent=0 // pred_fallthru
    _
  // Predicated region
  $region6: #{_lambda_.8} parent=0 // pred_check
    _
  $region7: #{_lambda_.8} parent=0 // pred_check_branch
    %11 = sbr.rel (0) target = $region9
  $region8: #{_lambda_.8} parent=0 // pred_region
    _
  $region9: #{_lambda_.8} parent=0 // pred_fallthru
    _
  // Predicated region
  $region10: #{_lambda_.8} parent=0 // pred_check
    _
  $region11: #{_lambda_.8} parent=0 // pred_check_branch
    %13 = sbr.rel (0) target = $region13
  $region12: #{_lambda_.8} parent=0 // pred_region
    _
  $region13: #{_lambda_.8} parent=0 // pred_fallthru
    _
  %p15 = scmp.eq.s32.totalorder 0, 0
  // Predicated region
  $region14: #{_lambda_.8} parent=0 // pred_check
    %p16 = pneg %p15
  $region15: #{_lambda_.8} parent=0 // pred_check_branch
    %18 = sbr.rel (%p16) target = $region17
  $region16: #{_lambda_.8} parent=0 // pred_region
    %19 = vst [vmem:[#allocation2] sm:$0xff] 0.0
    %20 = vst [vmem:[#allocation2 + $0x8] sm:$0xff] 0.0
    %21 = vst [vmem:[#allocation2 + $0x10] sm:$0xff] 0.0
    %22 = vst [vmem:[#allocation2 + $0x18] sm:$0xff] 0.0
    %23 = vst [vmem:[#allocation2 + $0x20] sm:$0xff] 0.0
    %24 = vst [vmem:[#allocation2 + $0x28] sm:$0xff] 0.0
    %25 = vst [vmem:[#allocation2 + $0x30] sm:$0xff] 0.0
    %26 = vst [vmem:[#allocation2 + $0x38] sm:$0xff] 0.0
    %27 = vst [vmem:[#allocation2 + $0x40] sm:$0xff] 0.0
    %28 = vst [vmem:[#allocation2 + $0x48] sm:$0xff] 0.0
    %29 = vst [vmem:[#allocation2 + $0x50] sm:$0xff] 0.0
    %30 = vst [vmem:[#allocation2 + $0x58] sm:$0xff] 0.0
    %31 = vst [vmem:[#allocation2 + $0x60] sm:$0xff] 0.0
    %32 = vst [vmem:[#allocation2 + $0x68] sm:$0xff] 0.0
    %33 = vst [vmem:[#allocation2 + $0x70] sm:$0xff] 0.0
    %34 = vst [vmem:[#allocation2 + $0x78] sm:$0xff] 0.0
    %35 = vst [vmem:[#allocation2 + $0x80] sm:$0xff] 0.0
    %36 = vst [vmem:[#allocation2 + $0x88] sm:$0xff] 0.0
    %37 = vst [vmem:[#allocation2 + $0x90] sm:$0xff] 0.0
    %38 = vst [vmem:[#allocation2 + $0x98] sm:$0xff] 0.0
    %39 = vst [vmem:[#allocation2 + $0xa0] sm:$0xff] 0.0
    %40 = vst [vmem:[#allocation2 + $0xa8] sm:$0xff] 0.0
    %41 = vst [vmem:[#allocation2 + $0xb0] sm:$0xff] 0.0
    %42 = vst [vmem:[#allocation2 + $0xb8] sm:$0xff] 0.0
    %43 = vst [vmem:[#allocation2 + $0xc0] sm:$0xff] 0.0
    %44 = vst [vmem:[#allocation2 + $0xc8] sm:$0xff] 0.0
    %45 = vst [vmem:[#allocation2 + $0xd0] sm:$0xff] 0.0
    %46 = vst [vmem:[#allocation2 + $0xd8] sm:$0xff] 0.0
    %47 = vst [vmem:[#allocation2 + $0xe0] sm:$0xff] 0.0
    %48 = vst [vmem:[#allocation2 + $0xe8] sm:$0xff] 0.0
    %49 = vst [vmem:[#allocation2 + $0xf0] sm:$0xff] 0.0
    %50 = vst [vmem:[#allocation2 + $0xf8] sm:$0xff] 0.0
    %51 = vst [vmem:[#allocation2 + $0x100] sm:$0xff] 0.0
    %52 = vst [vmem:[#allocation2 + $0x108] sm:$0xff] 0.0
    %53 = vst [vmem:[#allocation2 + $0x110] sm:$0xff] 0.0
    %54 = vst [vmem:[#allocation2 + $0x118] sm:$0xff] 0.0
    %55 = vst [vmem:[#allocation2 + $0x120] sm:$0xff] 0.0
    %56 = vst [vmem:[#allocation2 + $0x128] sm:$0xff] 0.0
    %57 = vst [vmem:[#allocation2 + $0x130] sm:$0xff] 0.0
    %58 = vst [vmem:[#allocation2 + $0x138] sm:$0xff] 0.0
    %59 = vst [vmem:[#allocation2 + $0x140] sm:$0xff] 0.0
    %60 = vst [vmem:[#allocation2 + $0x148] sm:$0xff] 0.0
    %61 = vst [vmem:[#allocation2 + $0x150] sm:$0xff] 0.0
    %62 = vst [vmem:[#allocation2 + $0x158] sm:$0xff] 0.0
    %63 = vst [vmem:[#allocation2 + $0x160] sm:$0xff] 0.0
    %64 = vst [vmem:[#allocation2 + $0x168] sm:$0xff] 0.0
    %65 = vst [vmem:[#allocation2 + $0x170] sm:$0xff] 0.0
    %66 = vst [vmem:[#allocation2 + $0x178] sm:$0xff] 0.0
    %67 = vst [vmem:[#allocation2 + $0x180] sm:$0xff] 0.0
    %68 = vst [vmem:[#allocation2 + $0x188] sm:$0xff] 0.0
    %69 = vst [vmem:[#allocation2 + $0x190] sm:$0xff] 0.0
    %70 = vst [vmem:[#allocation2 + $0x198] sm:$0xff] 0.0
    %71 = vst [vmem:[#allocation2 + $0x1a0] sm:$0xff] 0.0
    %72 = vst [vmem:[#allocation2 + $0x1a8] sm:$0xff] 0.0
    %73 = vst [vmem:[#allocation2 + $0x1b0] sm:$0xff] 0.0
    %74 = vst [vmem:[#allocation2 + $0x1b8] sm:$0xff] 0.0
    %75 = vst [vmem:[#allocation2 + $0x1c0] sm:$0xff] 0.0
    %76 = vst [vmem:[#allocation2 + $0x1c8] sm:$0xff] 0.0
    %77 = vst [vmem:[#allocation2 + $0x1d0] sm:$0xff] 0.0
    %78 = vst [vmem:[#allocation2 + $0x1d8] sm:$0xff] 0.0
    %79 = vst [vmem:[#allocation2 + $0x1e0] sm:$0xff] 0.0
    %80 = vst [vmem:[#allocation2 + $0x1e8] sm:$0xff] 0.0
    %81 = vst [vmem:[#allocation2 + $0x1f0] sm:$0xff] 0.0
    %82 = vst [vmem:[#allocation2 + $0x1f8] sm:$0xff] 0.0
    %83 = vst [vmem:[#allocation2 + $0x200] sm:$0xff] 0.0
    %84 = vst [vmem:[#allocation2 + $0x208] sm:$0xff] 0.0
    %85 = vst [vmem:[#allocation2 + $0x210] sm:$0xff] 0.0
    %86 = vst [vmem:[#allocation2 + $0x218] sm:$0xff] 0.0
    %87 = vst [vmem:[#allocation2 + $0x220] sm:$0xff] 0.0
    %88 = vst [vmem:[#allocation2 + $0x228] sm:$0xff] 0.0
    %89 = vst [vmem:[#allocation2 + $0x230] sm:$0xff] 0.0
    %90 = vst [vmem:[#allocation2 + $0x238] sm:$0xff] 0.0
    %91 = vst [vmem:[#allocation2 + $0x240] sm:$0xff] 0.0
    %92 = vst [vmem:[#allocation2 + $0x248] sm:$0xff] 0.0
    %93 = vst [vmem:[#allocation2 + $0x250] sm:$0xff] 0.0
    %94 = vst [vmem:[#allocation2 + $0x258] sm:$0xff] 0.0
    %95 = vst [vmem:[#allocation2 + $0x260] sm:$0xff] 0.0
    %96 = vst [vmem:[#allocation2 + $0x268] sm:$0xff] 0.0
    %97 = vst [vmem:[#allocation2 + $0x270] sm:$0xff] 0.0
    %98 = vst [vmem:[#allocation2 + $0x278] sm:$0xff] 0.0
    %99 = vst [vmem:[#allocation2 + $0x280] sm:$0xff] 0.0
    %100 = vst [vmem:[#allocation2 + $0x288] sm:$0xff] 0.0
    %101 = vst [vmem:[#allocation2 + $0x290] sm:$0xff] 0.0
    %102 = vst [vmem:[#allocation2 + $0x298] sm:$0xff] 0.0
    %103 = vst [vmem:[#allocation2 + $0x2a0] sm:$0xff] 0.0
    %104 = vst [vmem:[#allocation2 + $0x2a8] sm:$0xff] 0.0
    %105 = vst [vmem:[#allocation2 + $0x2b0] sm:$0xff] 0.0
    %106 = vst [vmem:[#allocation2 + $0x2b8] sm:$0xff] 0.0
    %107 = vst [vmem:[#allocation2 + $0x2c0] sm:$0xff] 0.0
    %108 = vst [vmem:[#allocation2 + $0x2c8] sm:$0xff] 0.0
    %109 = vst [vmem:[#allocation2 + $0x2d0] sm:$0xff] 0.0
    %110 = vst [vmem:[#allocation2 + $0x2d8] sm:$0xff] 0.0
    %111 = vst [vmem:[#allocation2 + $0x2e0] sm:$0xff] 0.0
    %112 = vst [vmem:[#allocation2 + $0x2e8] sm:$0xff] 0.0
    %113 = vst [vmem:[#allocation2 + $0x2f0] sm:$0xff] 0.0
    %114 = vst [vmem:[#allocation2 + $0x2f8] sm:$0xff] 0.0
    %115 = vst [vmem:[#allocation2 + $0x300] sm:$0xff] 0.0
    %116 = vst [vmem:[#allocation2 + $0x308] sm:$0xff] 0.0
    %117 = vst [vmem:[#allocation2 + $0x310] sm:$0xff] 0.0
    %118 = vst [vmem:[#allocation2 + $0x318] sm:$0xff] 0.0
    %119 = vst [vmem:[#allocation2 + $0x320] sm:$0xff] 0.0
    %120 = vst [vmem:[#allocation2 + $0x328] sm:$0xff] 0.0
    %121 = vst [vmem:[#allocation2 + $0x330] sm:$0xff] 0.0
    %122 = vst [vmem:[#allocation2 + $0x338] sm:$0xff] 0.0
    %123 = vst [vmem:[#allocation2 + $0x340] sm:$0xff] 0.0
    %124 = vst [vmem:[#allocation2 + $0x348] sm:$0xff] 0.0
    %125 = vst [vmem:[#allocation2 + $0x350] sm:$0xff] 0.0
    %126 = vst [vmem:[#allocation2 + $0x358] sm:$0xff] 0.0
    %127 = vst [vmem:[#allocation2 + $0x360] sm:$0xff] 0.0
    %128 = vst [vmem:[#allocation2 + $0x368] sm:$0xff] 0.0
    %129 = vst [vmem:[#allocation2 + $0x370] sm:$0xff] 0.0
    %130 = vst [vmem:[#allocation2 + $0x378] sm:$0xff] 0.0
    %131 = vst [vmem:[#allocation2 + $0x380] sm:$0xff] 0.0
    %132 = vst [vmem:[#allocation2 + $0x388] sm:$0xff] 0.0
    %133 = vst [vmem:[#allocation2 + $0x390] sm:$0xff] 0.0
    %134 = vst [vmem:[#allocation2 + $0x398] sm:$0xff] 0.0
    %135 = vst [vmem:[#allocation2 + $0x3a0] sm:$0xff] 0.0
    %136 = vst [vmem:[#allocation2 + $0x3a8] sm:$0xff] 0.0
    %137 = vst [vmem:[#allocation2 + $0x3b0] sm:$0xff] 0.0
    %138 = vst [vmem:[#allocation2 + $0x3b8] sm:$0xff] 0.0
    %139 = vst [vmem:[#allocation2 + $0x3c0] sm:$0xff] 0.0
    %140 = vst [vmem:[#allocation2 + $0x3c8] sm:$0xff] 0.0
    %141 = vst [vmem:[#allocation2 + $0x3d0] sm:$0xff] 0.0
    %142 = vst [vmem:[#allocation2 + $0x3d8] sm:$0xff] 0.0
    %143 = vst [vmem:[#allocation2 + $0x3e0] sm:$0xff] 0.0
    %144 = vst [vmem:[#allocation2 + $0x3e8] sm:$0xff] 0.0
    %145 = vst [vmem:[#allocation2 + $0x3f0] sm:$0xff] 0.0
    %146 = vst [vmem:[#allocation2 + $0x3f8] sm:$0xff] 0.0
    %147 = vst [vmem:[#allocation2 + $0x400] sm:$0xff] 0.0
    %148 = vst [vmem:[#allocation2 + $0x408] sm:$0xff] 0.0
    %149 = vst [vmem:[#allocation2 + $0x410] sm:$0xff] 0.0
    %150 = vst [vmem:[#allocation2 + $0x418] sm:$0xff] 0.0
    %151 = vst [vmem:[#allocation2 + $0x420] sm:$0xff] 0.0
    %152 = vst [vmem:[#allocation2 + $0x428] sm:$0xff] 0.0
    %153 = vst [vmem:[#allocation2 + $0x430] sm:$0xff] 0.0
    %154 = vst [vmem:[#allocation2 + $0x438] sm:$0xff] 0.0
    %155 = vst [vmem:[#allocation2 + $0x440] sm:$0xff] 0.0
    %156 = vst [vmem:[#allocation2 + $0x448] sm:$0xff] 0.0
    %157 = vst [vmem:[#allocation2 + $0x450] sm:$0xff] 0.0
    %158 = vst [vmem:[#allocation2 + $0x458] sm:$0xff] 0.0
    %159 = vst [vmem:[#allocation2 + $0x460] sm:$0xff] 0.0
    %160 = vst [vmem:[#allocation2 + $0x468] sm:$0xff] 0.0
    %161 = vst [vmem:[#allocation2 + $0x470] sm:$0xff] 0.0
    %162 = vst [vmem:[#allocation2 + $0x478] sm:$0xff] 0.0
    %163 = vst [vmem:[#allocation2 + $0x480] sm:$0xff] 0.0
    %164 = vst [vmem:[#allocation2 + $0x488] sm:$0xff] 0.0
    %165 = vst [vmem:[#allocation2 + $0x490] sm:$0xff] 0.0
    %166 = vst [vmem:[#allocation2 + $0x498] sm:$0xff] 0.0
    %167 = vst [vmem:[#allocation2 + $0x4a0] sm:$0xff] 0.0
    %168 = vst [vmem:[#allocation2 + $0x4a8] sm:$0xff] 0.0
    %169 = vst [vmem:[#allocation2 + $0x4b0] sm:$0xff] 0.0
    %170 = vst [vmem:[#allocation2 + $0x4b8] sm:$0xff] 0.0
    %171 = vst [vmem:[#allocation2 + $0x4c0] sm:$0xff] 0.0
    %172 = vst [vmem:[#allocation2 + $0x4c8] sm:$0xff] 0.0
    %173 = vst [vmem:[#allocation2 + $0x4d0] sm:$0xff] 0.0
    %174 = vst [vmem:[#allocation2 + $0x4d8] sm:$0xff] 0.0
    %175 = vst [vmem:[#allocation2 + $0x4e0] sm:$0xff] 0.0
    %176 = vst [vmem:[#allocation2 + $0x4e8] sm:$0xff] 0.0
    %177 = vst [vmem:[#allocation2 + $0x4f0] sm:$0xff] 0.0
    %178 = vst [vmem:[#allocation2 + $0x4f8] sm:$0xff] 0.0
    %179 = vst [vmem:[#allocation2 + $0x500] sm:$0xff] 0.0
    %180 = vst [vmem:[#allocation2 + $0x508] sm:$0xff] 0.0
    %181 = vst [vmem:[#allocation2 + $0x510] sm:$0xff] 0.0
    %182 = vst [vmem:[#allocation2 + $0x518] sm:$0xff] 0.0
    %183 = vst [vmem:[#allocation2 + $0x520] sm:$0xff] 0.0
    %184 = vst [vmem:[#allocation2 + $0x528] sm:$0xff] 0.0
    %185 = vst [vmem:[#allocation2 + $0x530] sm:$0xff] 0.0
    %186 = vst [vmem:[#allocation2 + $0x538] sm:$0xff] 0.0
    %187 = vst [vmem:[#allocation2 + $0x540] sm:$0xff] 0.0
    %188 = vst [vmem:[#allocation2 + $0x548] sm:$0xff] 0.0
    %189 = vst [vmem:[#allocation2 + $0x550] sm:$0xff] 0.0
    %190 = vst [vmem:[#allocation2 + $0x558] sm:$0xff] 0.0
    %191 = vst [vmem:[#allocation2 + $0x560] sm:$0xff] 0.0
    %192 = vst [vmem:[#allocation2 + $0x568] sm:$0xff] 0.0
    %193 = vst [vmem:[#allocation2 + $0x570] sm:$0xff] 0.0
    %194 = vst [vmem:[#allocation2 + $0x578] sm:$0xff] 0.0
    %195 = vst [vmem:[#allocation2 + $0x580] sm:$0xff] 0.0
    %196 = vst [vmem:[#allocation2 + $0x588] sm:$0xff] 0.0
    %197 = vst [vmem:[#allocation2 + $0x590] sm:$0xff] 0.0
    %198 = vst [vmem:[#allocation2 + $0x598] sm:$0xff] 0.0
    %199 = vst [vmem:[#allocation2 + $0x5a0] sm:$0xff] 0.0
    %200 = vst [vmem:[#allocation2 + $0x5a8] sm:$0xff] 0.0
    %201 = vst [vmem:[#allocation2 + $0x5b0] sm:$0xff] 0.0
    %202 = vst [vmem:[#allocation2 + $0x5b8] sm:$0xff] 0.0
    %203 = vst [vmem:[#allocation2 + $0x5c0] sm:$0xff] 0.0
    %204 = vst [vmem:[#allocation2 + $0x5c8] sm:$0xff] 0.0
    %205 = vst [vmem:[#allocation2 + $0x5d0] sm:$0xff] 0.0
    %206 = vst [vmem:[#allocation2 + $0x5d8] sm:$0xff] 0.0
    %207 = vst [vmem:[#allocation2 + $0x5e0] sm:$0xff] 0.0
    %208 = vst [vmem:[#allocation2 + $0x5e8] sm:$0xff] 0.0
    %209 = vst [vmem:[#allocation2 + $0x5f0] sm:$0xff] 0.0
    %210 = vst [vmem:[#allocation2 + $0x5f8] sm:$0xff] 0.0
    %211 = vst [vmem:[#allocation2 + $0x600] sm:$0xff] 0.0
    %212 = vst [vmem:[#allocation2 + $0x608] sm:$0xff] 0.0
    %213 = vst [vmem:[#allocation2 + $0x610] sm:$0xff] 0.0
    %214 = vst [vmem:[#allocation2 + $0x618] sm:$0xff] 0.0
    %215 = vst [vmem:[#allocation2 + $0x620] sm:$0xff] 0.0
    %216 = vst [vmem:[#allocation2 + $0x628] sm:$0xff] 0.0
    %217 = vst [vmem:[#allocation2 + $0x630] sm:$0xff] 0.0
    %218 = vst [vmem:[#allocation2 + $0x638] sm:$0xff] 0.0
    %219 = vst [vmem:[#allocation2 + $0x640] sm:$0xff] 0.0
    %220 = vst [vmem:[#allocation2 + $0x648] sm:$0xff] 0.0
    %221 = vst [vmem:[#allocation2 + $0x650] sm:$0xff] 0.0
    %222 = vst [vmem:[#allocation2 + $0x658] sm:$0xff] 0.0
    %223 = vst [vmem:[#allocation2 + $0x660] sm:$0xff] 0.0
    %224 = vst [vmem:[#allocation2 + $0x668] sm:$0xff] 0.0
    %225 = vst [vmem:[#allocation2 + $0x670] sm:$0xff] 0.0
    %226 = vst [vmem:[#allocation2 + $0x678] sm:$0xff] 0.0
    %227 = vst [vmem:[#allocation2 + $0x680] sm:$0xff] 0.0
    %228 = vst [vmem:[#allocation2 + $0x688] sm:$0xff] 0.0
    %229 = vst [vmem:[#allocation2 + $0x690] sm:$0xff] 0.0
    %230 = vst [vmem:[#allocation2 + $0x698] sm:$0xff] 0.0
    %231 = vst [vmem:[#allocation2 + $0x6a0] sm:$0xff] 0.0
    %232 = vst [vmem:[#allocation2 + $0x6a8] sm:$0xff] 0.0
    %233 = vst [vmem:[#allocation2 + $0x6b0] sm:$0xff] 0.0
    %234 = vst [vmem:[#allocation2 + $0x6b8] sm:$0xff] 0.0
    %235 = vst [vmem:[#allocation2 + $0x6c0] sm:$0xff] 0.0
    %236 = vst [vmem:[#allocation2 + $0x6c8] sm:$0xff] 0.0
    %237 = vst [vmem:[#allocation2 + $0x6d0] sm:$0xff] 0.0
    %238 = vst [vmem:[#allocation2 + $0x6d8] sm:$0xff] 0.0
    %239 = vst [vmem:[#allocation2 + $0x6e0] sm:$0xff] 0.0
    %240 = vst [vmem:[#allocation2 + $0x6e8] sm:$0xff] 0.0
    %241 = vst [vmem:[#allocation2 + $0x6f0] sm:$0xff] 0.0
    %242 = vst [vmem:[#allocation2 + $0x6f8] sm:$0xff] 0.0
    %243 = vst [vmem:[#allocation2 + $0x700] sm:$0xff] 0.0
    %244 = vst [vmem:[#allocation2 + $0x708] sm:$0xff] 0.0
    %245 = vst [vmem:[#allocation2 + $0x710] sm:$0xff] 0.0
    %246 = vst [vmem:[#allocation2 + $0x718] sm:$0xff] 0.0
    %247 = vst [vmem:[#allocation2 + $0x720] sm:$0xff] 0.0
    %248 = vst [vmem:[#allocation2 + $0x728] sm:$0xff] 0.0
    %249 = vst [vmem:[#allocation2 + $0x730] sm:$0xff] 0.0
    %250 = vst [vmem:[#allocation2 + $0x738] sm:$0xff] 0.0
    %251 = vst [vmem:[#allocation2 + $0x740] sm:$0xff] 0.0
    %252 = vst [vmem:[#allocation2 + $0x748] sm:$0xff] 0.0
    %253 = vst [vmem:[#allocation2 + $0x750] sm:$0xff] 0.0
    %254 = vst [vmem:[#allocation2 + $0x758] sm:$0xff] 0.0
    %255 = vst [vmem:[#allocation2 + $0x760] sm:$0xff] 0.0
    %256 = vst [vmem:[#allocation2 + $0x768] sm:$0xff] 0.0
    %257 = vst [vmem:[#allocation2 + $0x770] sm:$0xff] 0.0
    %258 = vst [vmem:[#allocation2 + $0x778] sm:$0xff] 0.0
    %259 = vst [vmem:[#allocation2 + $0x780] sm:$0xff] 0.0
    %260 = vst [vmem:[#allocation2 + $0x788] sm:$0xff] 0.0
    %261 = vst [vmem:[#allocation2 + $0x790] sm:$0xff] 0.0
    %262 = vst [vmem:[#allocation2 + $0x798] sm:$0xff] 0.0
    %263 = vst [vmem:[#allocation2 + $0x7a0] sm:$0xff] 0.0
    %264 = vst [vmem:[#allocation2 + $0x7a8] sm:$0xff] 0.0
    %265 = vst [vmem:[#allocation2 + $0x7b0] sm:$0xff] 0.0
    %266 = vst [vmem:[#allocation2 + $0x7b8] sm:$0xff] 0.0
    %267 = vst [vmem:[#allocation2 + $0x7c0] sm:$0xff] 0.0
    %268 = vst [vmem:[#allocation2 + $0x7c8] sm:$0xff] 0.0
    %269 = vst [vmem:[#allocation2 + $0x7d0] sm:$0xff] 0.0
    %270 = vst [vmem:[#allocation2 + $0x7d8] sm:$0xff] 0.0
    %271 = vst [vmem:[#allocation2 + $0x7e0] sm:$0xff] 0.0
    %272 = vst [vmem:[#allocation2 + $0x7e8] sm:$0xff] 0.0
    %273 = vst [vmem:[#allocation2 + $0x7f0] sm:$0xff] 0.0
    %274 = vst [vmem:[#allocation2 + $0x7f8] sm:$0xff] 0.0
  $region17: #{_lambda_.8} parent=0 // pred_fallthru
    _
  %v275 = vld [vmem:[#allocation2] sm:$0xff]
  %v276 = vld [vmem:[#allocation2 + $0x8] sm:$0xff]
  %v277 = vld [vmem:[#allocation2 + $0x10] sm:$0xff]
  %v278 = vld [vmem:[#allocation2 + $0x18] sm:$0xff]
  %v279 = vld [vmem:[#allocation2 + $0x20] sm:$0xff]
  %v280 = vld [vmem:[#allocation2 + $0x28] sm:$0xff]
  %v281 = vld [vmem:[#allocation2 + $0x30] sm:$0xff]
  %v282 = vld [vmem:[#allocation2 + $0x38] sm:$0xff]
  %v283 = vld [vmem:[#allocation2 + $0x40] sm:$0xff]
  %v284 = vld [vmem:[#allocation2 + $0x48] sm:$0xff]
  %v285 = vld [vmem:[#allocation2 + $0x50] sm:$0xff]
  %v286 = vld [vmem:[#allocation2 + $0x58] sm:$0xff]
  %v287 = vld [vmem:[#allocation2 + $0x60] sm:$0xff]
  %v288 = vld [vmem:[#allocation2 + $0x68] sm:$0xff]
  %v289 = vld [vmem:[#allocation2 + $0x70] sm:$0xff]
  %v290 = vld [vmem:[#allocation2 + $0x78] sm:$0xff]
  %v291 = vld [vmem:[#allocation2 + $0x80] sm:$0xff]
  %v292 = vld [vmem:[#allocation2 + $0x88] sm:$0xff]
  %v293 = vld [vmem:[#allocation2 + $0x90] sm:$0xff]
  %v294 = vld [vmem:[#allocation2 + $0x98] sm:$0xff]
  %v295 = vld [vmem:[#allocation2 + $0xa0] sm:$0xff]
  %v296 = vld [vmem:[#allocation2 + $0xa8] sm:$0xff]
  %v297 = vld [vmem:[#allocation2 + $0xb0] sm:$0xff]
  %v298 = vld [vmem:[#allocation2 + $0xb8] sm:$0xff]
  %v299 = vld [vmem:[#allocation2 + $0xc0] sm:$0xff]
  %v300 = vld [vmem:[#allocation2 + $0xc8] sm:$0xff]
  %v301 = vld [vmem:[#allocation2 + $0xd0] sm:$0xff]
  %v302 = vld [vmem:[#allocation2 + $0xd8] sm:$0xff]
  %v303 = vld [vmem:[#allocation2 + $0xe0] sm:$0xff]
  %v304 = vld [vmem:[#allocation2 + $0xe8] sm:$0xff]
  %v305 = vld [vmem:[#allocation2 + $0xf0] sm:$0xff]
  %v306 = vld [vmem:[#allocation2 + $0xf8] sm:$0xff]
  %v307 = vld [vmem:[#allocation2 + $0x100] sm:$0xff]
  %v308 = vld [vmem:[#allocation2 + $0x108] sm:$0xff]
  %v309 = vld [vmem:[#allocation2 + $0x110] sm:$0xff]
  %v310 = vld [vmem:[#allocation2 + $0x118] sm:$0xff]
  %v311 = vld [vmem:[#allocation2 + $0x120] sm:$0xff]
  %v312 = vld [vmem:[#allocation2 + $0x128] sm:$0xff]
  %v313 = vld [vmem:[#allocation2 + $0x130] sm:$0xff]
  %v314 = vld [vmem:[#allocation2 + $0x138] sm:$0xff]
  %v315 = vld [vmem:[#allocation2 + $0x140] sm:$0xff]
  %v316 = vld [vmem:[#allocation2 + $0x148] sm:$0xff]
  %v317 = vld [vmem:[#allocation2 + $0x150] sm:$0xff]
  %v318 = vld [vmem:[#allocation2 + $0x158] sm:$0xff]
  %v319 = vld [vmem:[#allocation2 + $0x160] sm:$0xff]
  %v320 = vld [vmem:[#allocation2 + $0x168] sm:$0xff]
  %v321 = vld [vmem:[#allocation2 + $0x170] sm:$0xff]
  %v322 = vld [vmem:[#allocation2 + $0x178] sm:$0xff]
  %v323 = vld [vmem:[#allocation2 + $0x180] sm:$0xff]
  %v324 = vld [vmem:[#allocation2 + $0x188] sm:$0xff]
  %v325 = vld [vmem:[#allocation2 + $0x190] sm:$0xff]
  %v326 = vld [vmem:[#allocation2 + $0x198] sm:$0xff]
  %v327 = vld [vmem:[#allocation2 + $0x1a0] sm:$0xff]
  %v328 = vld [vmem:[#allocation2 + $0x1a8] sm:$0xff]
  %v329 = vld [vmem:[#allocation2 + $0x1b0] sm:$0xff]
  %v330 = vld [vmem:[#allocation2 + $0x1b8] sm:$0xff]
  %v331 = vld [vmem:[#allocation2 + $0x1c0] sm:$0xff]
  %v332 = vld [vmem:[#allocation2 + $0x1c8] sm:$0xff]
  %v333 = vld [vmem:[#allocation2 + $0x1d0] sm:$0xff]
  %v334 = vld [vmem:[#allocation2 + $0x1d8] sm:$0xff]
  %v335 = vld [vmem:[#allocation2 + $0x1e0] sm:$0xff]
  %v336 = vld [vmem:[#allocation2 + $0x1e8] sm:$0xff]
  %v337 = vld [vmem:[#allocation2 + $0x1f0] sm:$0xff]
  %v338 = vld [vmem:[#allocation2 + $0x1f8] sm:$0xff]
  %v339 = vld [vmem:[#allocation2 + $0x200] sm:$0xff]
  %v340 = vld [vmem:[#allocation2 + $0x208] sm:$0xff]
  %v341 = vld [vmem:[#allocation2 + $0x210] sm:$0xff]
  %v342 = vld [vmem:[#allocation2 + $0x218] sm:$0xff]
  %v343 = vld [vmem:[#allocation2 + $0x220] sm:$0xff]
  %v344 = vld [vmem:[#allocation2 + $0x228] sm:$0xff]
  %v345 = vld [vmem:[#allocation2 + $0x230] sm:$0xff]
  %v346 = vld [vmem:[#allocation2 + $0x238] sm:$0xff]
  %v347 = vld [vmem:[#allocation2 + $0x240] sm:$0xff]
  %v348 = vld [vmem:[#allocation2 + $0x248] sm:$0xff]
  %v349 = vld [vmem:[#allocation2 + $0x250] sm:$0xff]
  %v350 = vld [vmem:[#allocation2 + $0x258] sm:$0xff]
  %v351 = vld [vmem:[#allocation2 + $0x260] sm:$0xff]
  %v352 = vld [vmem:[#allocation2 + $0x268] sm:$0xff]
  %v353 = vld [vmem:[#allocation2 + $0x270] sm:$0xff]
  %v354 = vld [vmem:[#allocation2 + $0x278] sm:$0xff]
  %v355 = vld [vmem:[#allocation2 + $0x280] sm:$0xff]
  %v356 = vld [vmem:[#allocation2 + $0x288] sm:$0xff]
  %v357 = vld [vmem:[#allocation2 + $0x290] sm:$0xff]
  %v358 = vld [vmem:[#allocation2 + $0x298] sm:$0xff]
  %v359 = vld [vmem:[#allocation2 + $0x2a0] sm:$0xff]
  %v360 = vld [vmem:[#allocation2 + $0x2a8] sm:$0xff]
  %v361 = vld [vmem:[#allocation2 + $0x2b0] sm:$0xff]
  %v362 = vld [vmem:[#allocation2 + $0x2b8] sm:$0xff]
  %v363 = vld [vmem:[#allocation2 + $0x2c0] sm:$0xff]
  %v364 = vld [vmem:[#allocation2 + $0x2c8] sm:$0xff]
  %v365 = vld [vmem:[#allocation2 + $0x2d0] sm:$0xff]
  %v366 = vld [vmem:[#allocation2 + $0x2d8] sm:$0xff]
  %v367 = vld [vmem:[#allocation2 + $0x2e0] sm:$0xff]
  %v368 = vld [vmem:[#allocation2 + $0x2e8] sm:$0xff]
  %v369 = vld [vmem:[#allocation2 + $0x2f0] sm:$0xff]
  %v370 = vld [vmem:[#allocation2 + $0x2f8] sm:$0xff]
  %v371 = vld [vmem:[#allocation2 + $0x300] sm:$0xff]
  %v372 = vld [vmem:[#allocation2 + $0x308] sm:$0xff]
  %v373 = vld [vmem:[#allocation2 + $0x310] sm:$0xff]
  %v374 = vld [vmem:[#allocation2 + $0x318] sm:$0xff]
  %v375 = vld [vmem:[#allocation2 + $0x320] sm:$0xff]
  %v376 = vld [vmem:[#allocation2 + $0x328] sm:$0xff]
  %v377 = vld [vmem:[#allocation2 + $0x330] sm:$0xff]
  %v378 = vld [vmem:[#allocation2 + $0x338] sm:$0xff]
  %v379 = vld [vmem:[#allocation2 + $0x340] sm:$0xff]
  %v380 = vld [vmem:[#allocation2 + $0x348] sm:$0xff]
  %v381 = vld [vmem:[#allocation2 + $0x350] sm:$0xff]
  %v382 = vld [vmem:[#allocation2 + $0x358] sm:$0xff]
  %v383 = vld [vmem:[#allocation2 + $0x360] sm:$0xff]
  %v384 = vld [vmem:[#allocation2 + $0x368] sm:$0xff]
  %v385 = vld [vmem:[#allocation2 + $0x370] sm:$0xff]
  %v386 = vld [vmem:[#allocation2 + $0x378] sm:$0xff]
  %v387 = vld [vmem:[#allocation2 + $0x380] sm:$0xff]
  %v388 = vld [vmem:[#allocation2 + $0x388] sm:$0xff]
  %v389 = vld [vmem:[#allocation2 + $0x390] sm:$0xff]
  %v390 = vld [vmem:[#allocation2 + $0x398] sm:$0xff]
  %v391 = vld [vmem:[#allocation2 + $0x3a0] sm:$0xff]
  %v392 = vld [vmem:[#allocation2 + $0x3a8] sm:$0xff]
  %v393 = vld [vmem:[#allocation2 + $0x3b0] sm:$0xff]
  %v394 = vld [vmem:[#allocation2 + $0x3b8] sm:$0xff]
  %v395 = vld [vmem:[#allocation2 + $0x3c0] sm:$0xff]
  %v396 = vld [vmem:[#allocation2 + $0x3c8] sm:$0xff]
  %v397 = vld [vmem:[#allocation2 + $0x3d0] sm:$0xff]
  %v398 = vld [vmem:[#allocation2 + $0x3d8] sm:$0xff]
  %v399 = vld [vmem:[#allocation2 + $0x3e0] sm:$0xff]
  %v400 = vld [vmem:[#allocation2 + $0x3e8] sm:$0xff]
  %v401 = vld [vmem:[#allocation2 + $0x3f0] sm:$0xff]
  %v402 = vld [vmem:[#allocation2 + $0x3f8] sm:$0xff]
  %v403 = vld [vmem:[#allocation2 + $0x400] sm:$0xff]
  %v404 = vld [vmem:[#allocation2 + $0x408] sm:$0xff]
  %v405 = vld [vmem:[#allocation2 + $0x410] sm:$0xff]
  %v406 = vld [vmem:[#allocation2 + $0x418] sm:$0xff]
  %v407 = vld [vmem:[#allocation2 + $0x420] sm:$0xff]
  %v408 = vld [vmem:[#allocation2 + $0x428] sm:$0xff]
  %v409 = vld [vmem:[#allocation2 + $0x430] sm:$0xff]
  %v410 = vld [vmem:[#allocation2 + $0x438] sm:$0xff]
  %v411 = vld [vmem:[#allocation2 + $0x440] sm:$0xff]
  %v412 = vld [vmem:[#allocation2 + $0x448] sm:$0xff]
  %v413 = vld [vmem:[#allocation2 + $0x450] sm:$0xff]
  %v414 = vld [vmem:[#allocation2 + $0x458] sm:$0xff]
  %v415 = vld [vmem:[#allocation2 + $0x460] sm:$0xff]
  %v416 = vld [vmem:[#allocation2 + $0x468] sm:$0xff]
  %v417 = vld [vmem:[#allocation2 + $0x470] sm:$0xff]
  %v418 = vld [vmem:[#allocation2 + $0x478] sm:$0xff]
  %v419 = vld [vmem:[#allocation2 + $0x480] sm:$0xff]
  %v420 = vld [vmem:[#allocation2 + $0x488] sm:$0xff]
  %v421 = vld [vmem:[#allocation2 + $0x490] sm:$0xff]
  %v422 = vld [vmem:[#allocation2 + $0x498] sm:$0xff]
  %v423 = vld [vmem:[#allocation2 + $0x4a0] sm:$0xff]
  %v424 = vld [vmem:[#allocation2 + $0x4a8] sm:$0xff]
  %v425 = vld [vmem:[#allocation2 + $0x4b0] sm:$0xff]
  %v426 = vld [vmem:[#allocation2 + $0x4b8] sm:$0xff]
  %v427 = vld [vmem:[#allocation2 + $0x4c0] sm:$0xff]
  %v428 = vld [vmem:[#allocation2 + $0x4c8] sm:$0xff]
  %v429 = vld [vmem:[#allocation2 + $0x4d0] sm:$0xff]
  %v430 = vld [vmem:[#allocation2 + $0x4d8] sm:$0xff]
  %v431 = vld [vmem:[#allocation2 + $0x4e0] sm:$0xff]
  %v432 = vld [vmem:[#allocation2 + $0x4e8] sm:$0xff]
  %v433 = vld [vmem:[#allocation2 + $0x4f0] sm:$0xff]
  %v434 = vld [vmem:[#allocation2 + $0x4f8] sm:$0xff]
  %v435 = vld [vmem:[#allocation2 + $0x500] sm:$0xff]
  %v436 = vld [vmem:[#allocation2 + $0x508] sm:$0xff]
  %v437 = vld [vmem:[#allocation2 + $0x510] sm:$0xff]
  %v438 = vld [vmem:[#allocation2 + $0x518] sm:$0xff]
  %v439 = vld [vmem:[#allocation2 + $0x520] sm:$0xff]
  %v440 = vld [vmem:[#allocation2 + $0x528] sm:$0xff]
  %v441 = vld [vmem:[#allocation2 + $0x530] sm:$0xff]
  %v442 = vld [vmem:[#allocation2 + $0x538] sm:$0xff]
  %v443 = vld [vmem:[#allocation2 + $0x540] sm:$0xff]
  %v444 = vld [vmem:[#allocation2 + $0x548] sm:$0xff]
  %v445 = vld [vmem:[#allocation2 + $0x550] sm:$0xff]
  %v446 = vld [vmem:[#allocation2 + $0x558] sm:$0xff]
  %v447 = vld [vmem:[#allocation2 + $0x560] sm:$0xff]
  %v448 = vld [vmem:[#allocation2 + $0x568] sm:$0xff]
  %v449 = vld [vmem:[#allocation2 + $0x570] sm:$0xff]
  %v450 = vld [vmem:[#allocation2 + $0x578] sm:$0xff]
  %v451 = vld [vmem:[#allocation2 + $0x580] sm:$0xff]
  %v452 = vld [vmem:[#allocation2 + $0x588] sm:$0xff]
  %v453 = vld [vmem:[#allocation2 + $0x590] sm:$0xff]
  %v454 = vld [vmem:[#allocation2 + $0x598] sm:$0xff]
  %v455 = vld [vmem:[#allocation2 + $0x5a0] sm:$0xff]
  %v456 = vld [vmem:[#allocation2 + $0x5a8] sm:$0xff]
  %v457 = vld [vmem:[#allocation2 + $0x5b0] sm:$0xff]
  %v458 = vld [vmem:[#allocation2 + $0x5b8] sm:$0xff]
  %v459 = vld [vmem:[#allocation2 + $0x5c0] sm:$0xff]
  %v460 = vld [vmem:[#allocation2 + $0x5c8] sm:$0xff]
  %v461 = vld [vmem:[#allocation2 + $0x5d0] sm:$0xff]
  %v462 = vld [vmem:[#allocation2 + $0x5d8] sm:$0xff]
  %v463 = vld [vmem:[#allocation2 + $0x5e0] sm:$0xff]
  %v464 = vld [vmem:[#allocation2 + $0x5e8] sm:$0xff]
  %v465 = vld [vmem:[#allocation2 + $0x5f0] sm:$0xff]
  %v466 = vld [vmem:[#allocation2 + $0x5f8] sm:$0xff]
  %v467 = vld [vmem:[#allocation2 + $0x600] sm:$0xff]
  %v468 = vld [vmem:[#allocation2 + $0x608] sm:$0xff]
  %v469 = vld [vmem:[#allocation2 + $0x610] sm:$0xff]
  %v470 = vld [vmem:[#allocation2 + $0x618] sm:$0xff]
  %v471 = vld [vmem:[#allocation2 + $0x620] sm:$0xff]
  %v472 = vld [vmem:[#allocation2 + $0x628] sm:$0xff]
  %v473 = vld [vmem:[#allocation2 + $0x630] sm:$0xff]
  %v474 = vld [vmem:[#allocation2 + $0x638] sm:$0xff]
  %v475 = vld [vmem:[#allocation2 + $0x640] sm:$0xff]
  %v476 = vld [vmem:[#allocation2 + $0x648] sm:$0xff]
  %v477 = vld [vmem:[#allocation2 + $0x650] sm:$0xff]
  %v478 = vld [vmem:[#allocation2 + $0x658] sm:$0xff]
  %v479 = vld [vmem:[#allocation2 + $0x660] sm:$0xff]
  %v480 = vld [vmem:[#allocation2 + $0x668] sm:$0xff]
  %v481 = vld [vmem:[#allocation2 + $0x670] sm:$0xff]
  %v482 = vld [vmem:[#allocation2 + $0x678] sm:$0xff]
  %v483 = vld [vmem:[#allocation2 + $0x680] sm:$0xff]
  %v484 = vld [vmem:[#allocation2 + $0x688] sm:$0xff]
  %v485 = vld [vmem:[#allocation2 + $0x690] sm:$0xff]
  %v486 = vld [vmem:[#allocation2 + $0x698] sm:$0xff]
  %v487 = vld [vmem:[#allocation2 + $0x6a0] sm:$0xff]
  %v488 = vld [vmem:[#allocation2 + $0x6a8] sm:$0xff]
  %v489 = vld [vmem:[#allocation2 + $0x6b0] sm:$0xff]
  %v490 = vld [vmem:[#allocation2 + $0x6b8] sm:$0xff]
  %v491 = vld [vmem:[#allocation2 + $0x6c0] sm:$0xff]
  %v492 = vld [vmem:[#allocation2 + $0x6c8] sm:$0xff]
  %v493 = vld [vmem:[#allocation2 + $0x6d0] sm:$0xff]
  %v494 = vld [vmem:[#allocation2 + $0x6d8] sm:$0xff]
  %v495 = vld [vmem:[#allocation2 + $0x6e0] sm:$0xff]
  %v496 = vld [vmem:[#allocation2 + $0x6e8] sm:$0xff]
  %v497 = vld [vmem:[#allocation2 + $0x6f0] sm:$0xff]
  %v498 = vld [vmem:[#allocation2 + $0x6f8] sm:$0xff]
  %v499 = vld [vmem:[#allocation2 + $0x700] sm:$0xff]
  %v500 = vld [vmem:[#allocation2 + $0x708] sm:$0xff]
  %v501 = vld [vmem:[#allocation2 + $0x710] sm:$0xff]
  %v502 = vld [vmem:[#allocation2 + $0x718] sm:$0xff]
  %v503 = vld [vmem:[#allocation2 + $0x720] sm:$0xff]
  %v504 = vld [vmem:[#allocation2 + $0x728] sm:$0xff]
  %v505 = vld [vmem:[#allocation2 + $0x730] sm:$0xff]
  %v506 = vld [vmem:[#allocation2 + $0x738] sm:$0xff]
  %v507 = vld [vmem:[#allocation2 + $0x740] sm:$0xff]
  %v508 = vld [vmem:[#allocation2 + $0x748] sm:$0xff]
  %v509 = vld [vmem:[#allocation2 + $0x750] sm:$0xff]
  %v510 = vld [vmem:[#allocation2 + $0x758] sm:$0xff]
  %v511 = vld [vmem:[#allocation2 + $0x760] sm:$0xff]
  %v512 = vld [vmem:[#allocation2 + $0x768] sm:$0xff]
  %v513 = vld [vmem:[#allocation2 + $0x770] sm:$0xff]
  %v514 = vld [vmem:[#allocation2 + $0x778] sm:$0xff]
  %v515 = vld [vmem:[#allocation2 + $0x780] sm:$0xff]
  %v516 = vld [vmem:[#allocation2 + $0x788] sm:$0xff]
  %v517 = vld [vmem:[#allocation2 + $0x790] sm:$0xff]
  %v518 = vld [vmem:[#allocation2 + $0x798] sm:$0xff]
  %v519 = vld [vmem:[#allocation2 + $0x7a0] sm:$0xff]
  %v520 = vld [vmem:[#allocation2 + $0x7a8] sm:$0xff]
  %v521 = vld [vmem:[#allocation2 + $0x7b0] sm:$0xff]
  %v522 = vld [vmem:[#allocation2 + $0x7b8] sm:$0xff]
  %v523 = vld [vmem:[#allocation2 + $0x7c0] sm:$0xff]
  %v524 = vld [vmem:[#allocation2 + $0x7c8] sm:$0xff]
  %v525 = vld [vmem:[#allocation2 + $0x7d0] sm:$0xff]
  %v526 = vld [vmem:[#allocation2 + $0x7d8] sm:$0xff]
  %v527 = vld [vmem:[#allocation2 + $0x7e0] sm:$0xff]
  %v528 = vld [vmem:[#allocation2 + $0x7e8] sm:$0xff]
  %v529 = vld [vmem:[#allocation2 + $0x7f0] sm:$0xff]
  %v530 = vld [vmem:[#allocation2 + $0x7f8] sm:$0xff]
  %v531 = vld [vmem:[%s0] sm:$0xf]
  %v532 = vld [vmem:[%s0 + $0x4] sm:$0xf]
  %v533 = vld [vmem:[%s0 + $0x8] sm:$0xf]
  %v534 = vld [vmem:[%s0 + $0xc] sm:$0xf]
  %v535 = vld [vmem:[%s0 + $0x10] sm:$0xf]
  %v536 = vld [vmem:[%s0 + $0x14] sm:$0xf]
  %v537 = vld [vmem:[%s0 + $0x18] sm:$0xf]
  %v538 = vld [vmem:[%s0 + $0x1c] sm:$0xf]
  %v539 = vld [vmem:[%s0 + $0x20] sm:$0xf]
  %v540 = vld [vmem:[%s0 + $0x24] sm:$0xf]
  %v541 = vld [vmem:[%s0 + $0x28] sm:$0xf]
  %v542 = vld [vmem:[%s0 + $0x2c] sm:$0xf]
  %v543 = vld [vmem:[%s0 + $0x30] sm:$0xf]
  %v544 = vld [vmem:[%s0 + $0x34] sm:$0xf]
  %v545 = vld [vmem:[%s0 + $0x38] sm:$0xf]
  %v546 = vld [vmem:[%s0 + $0x3c] sm:$0xf]
  %v547 = vld [vmem:[%s0 + $0x40] sm:$0xf]
  %v548 = vld [vmem:[%s0 + $0x44] sm:$0xf]
  %v549 = vld [vmem:[%s0 + $0x48] sm:$0xf]
  %v550 = vld [vmem:[%s0 + $0x4c] sm:$0xf]
  %v551 = vld [vmem:[%s0 + $0x50] sm:$0xf]
  %v552 = vld [vmem:[%s0 + $0x54] sm:$0xf]
  %v553 = vld [vmem:[%s0 + $0x58] sm:$0xf]
  %v554 = vld [vmem:[%s0 + $0x5c] sm:$0xf]
  %v555 = vld [vmem:[%s0 + $0x60] sm:$0xf]
  %v556 = vld [vmem:[%s0 + $0x64] sm:$0xf]
  %v557 = vld [vmem:[%s0 + $0x68] sm:$0xf]
  %v558 = vld [vmem:[%s0 + $0x6c] sm:$0xf]
  %v559 = vld [vmem:[%s0 + $0x70] sm:$0xf]
  %v560 = vld [vmem:[%s0 + $0x74] sm:$0xf]
  %v561 = vld [vmem:[%s0 + $0x78] sm:$0xf]
  %v562 = vld [vmem:[%s0 + $0x7c] sm:$0xf]
  %v563 = vld [vmem:[%s0 + $0x80] sm:$0xf]
  %v564 = vld [vmem:[%s0 + $0x84] sm:$0xf]
  %v565 = vld [vmem:[%s0 + $0x88] sm:$0xf]
  %v566 = vld [vmem:[%s0 + $0x8c] sm:$0xf]
  %v567 = vld [vmem:[%s0 + $0x90] sm:$0xf]
  %v568 = vld [vmem:[%s0 + $0x94] sm:$0xf]
  %v569 = vld [vmem:[%s0 + $0x98] sm:$0xf]
  %v570 = vld [vmem:[%s0 + $0x9c] sm:$0xf]
  %v571 = vld [vmem:[%s0 + $0xa0] sm:$0xf]
  %v572 = vld [vmem:[%s0 + $0xa4] sm:$0xf]
  %v573 = vld [vmem:[%s0 + $0xa8] sm:$0xf]
  %v574 = vld [vmem:[%s0 + $0xac] sm:$0xf]
  %v575 = vld [vmem:[%s0 + $0xb0] sm:$0xf]
  %v576 = vld [vmem:[%s0 + $0xb4] sm:$0xf]
  %v577 = vld [vmem:[%s0 + $0xb8] sm:$0xf]
  %v578 = vld [vmem:[%s0 + $0xbc] sm:$0xf]
  %v579 = vld [vmem:[%s0 + $0xc0] sm:$0xf]
  %v580 = vld [vmem:[%s0 + $0xc4] sm:$0xf]
  %v581 = vld [vmem:[%s0 + $0xc8] sm:$0xf]
  %v582 = vld [vmem:[%s0 + $0xcc] sm:$0xf]
  %v583 = vld [vmem:[%s0 + $0xd0] sm:$0xf]
  %v584 = vld [vmem:[%s0 + $0xd4] sm:$0xf]
  %v585 = vld [vmem:[%s0 + $0xd8] sm:$0xf]
  %v586 = vld [vmem:[%s0 + $0xdc] sm:$0xf]
  %v587 = vld [vmem:[%s0 + $0xe0] sm:$0xf]
  %v588 = vld [vmem:[%s0 + $0xe4] sm:$0xf]
  %v589 = vld [vmem:[%s0 + $0xe8] sm:$0xf]
  %v590 = vld [vmem:[%s0 + $0xec] sm:$0xf]
  %v591 = vld [vmem:[%s0 + $0xf0] sm:$0xf]
  %v592 = vld [vmem:[%s0 + $0xf4] sm:$0xf]
  %v593 = vld [vmem:[%s0 + $0xf8] sm:$0xf]
  %v594 = vld [vmem:[%s0 + $0xfc] sm:$0xf]
  %v595 = vld [vmem:[%s0 + $0x100] sm:$0xf]
  %v596 = vld [vmem:[%s0 + $0x104] sm:$0xf]
  %v597 = vld [vmem:[%s0 + $0x108] sm:$0xf]
  %v598 = vld [vmem:[%s0 + $0x10c] sm:$0xf]
  %v599 = vld [vmem:[%s0 + $0x110] sm:$0xf]
  %v600 = vld [vmem:[%s0 + $0x114] sm:$0xf]
  %v601 = vld [vmem:[%s0 + $0x118] sm:$0xf]
  %v602 = vld [vmem:[%s0 + $0x11c] sm:$0xf]
  %v603 = vld [vmem:[%s0 + $0x120] sm:$0xf]
  %v604 = vld [vmem:[%s0 + $0x124] sm:$0xf]
  %v605 = vld [vmem:[%s0 + $0x128] sm:$0xf]
  %v606 = vld [vmem:[%s0 + $0x12c] sm:$0xf]
  %v607 = vld [vmem:[%s0 + $0x130] sm:$0xf]
  %v608 = vld [vmem:[%s0 + $0x134] sm:$0xf]
  %v609 = vld [vmem:[%s0 + $0x138] sm:$0xf]
  %v610 = vld [vmem:[%s0 + $0x13c] sm:$0xf]
  %v611 = vld [vmem:[%s0 + $0x140] sm:$0xf]
  %v612 = vld [vmem:[%s0 + $0x144] sm:$0xf]
  %v613 = vld [vmem:[%s0 + $0x148] sm:$0xf]
  %v614 = vld [vmem:[%s0 + $0x14c] sm:$0xf]
  %v615 = vld [vmem:[%s0 + $0x150] sm:$0xf]
  %v616 = vld [vmem:[%s0 + $0x154] sm:$0xf]
  %v617 = vld [vmem:[%s0 + $0x158] sm:$0xf]
  %v618 = vld [vmem:[%s0 + $0x15c] sm:$0xf]
  %v619 = vld [vmem:[%s0 + $0x160] sm:$0xf]
  %v620 = vld [vmem:[%s0 + $0x164] sm:$0xf]
  %v621 = vld [vmem:[%s0 + $0x168] sm:$0xf]
  %v622 = vld [vmem:[%s0 + $0x16c] sm:$0xf]
  %v623 = vld [vmem:[%s0 + $0x170] sm:$0xf]
  %v624 = vld [vmem:[%s0 + $0x174] sm:$0xf]
  %v625 = vld [vmem:[%s0 + $0x178] sm:$0xf]
  %v626 = vld [vmem:[%s0 + $0x17c] sm:$0xf]
  %v627 = vld [vmem:[%s0 + $0x180] sm:$0xf]
  %v628 = vld [vmem:[%s0 + $0x184] sm:$0xf]
  %v629 = vld [vmem:[%s0 + $0x188] sm:$0xf]
  %v630 = vld [vmem:[%s0 + $0x18c] sm:$0xf]
  %v631 = vld [vmem:[%s0 + $0x190] sm:$0xf]
  %v632 = vld [vmem:[%s0 + $0x194] sm:$0xf]
  %v633 = vld [vmem:[%s0 + $0x198] sm:$0xf]
  %v634 = vld [vmem:[%s0 + $0x19c] sm:$0xf]
  %v635 = vld [vmem:[%s0 + $0x1a0] sm:$0xf]
  %v636 = vld [vmem:[%s0 + $0x1a4] sm:$0xf]
  %v637 = vld [vmem:[%s0 + $0x1a8] sm:$0xf]
  %v638 = vld [vmem:[%s0 + $0x1ac] sm:$0xf]
  %v639 = vld [vmem:[%s0 + $0x1b0] sm:$0xf]
  %v640 = vld [vmem:[%s0 + $0x1b4] sm:$0xf]
  %v641 = vld [vmem:[%s0 + $0x1b8] sm:$0xf]
  %v642 = vld [vmem:[%s0 + $0x1bc] sm:$0xf]
  %v643 = vld [vmem:[%s0 + $0x1c0] sm:$0xf]
  %v644 = vld [vmem:[%s0 + $0x1c4] sm:$0xf]
  %v645 = vld [vmem:[%s0 + $0x1c8] sm:$0xf]
  %v646 = vld [vmem:[%s0 + $0x1cc] sm:$0xf]
  %v647 = vld [vmem:[%s0 + $0x1d0] sm:$0xf]
  %v648 = vld [vmem:[%s0 + $0x1d4] sm:$0xf]
  %v649 = vld [vmem:[%s0 + $0x1d8] sm:$0xf]
  %v650 = vld [vmem:[%s0 + $0x1dc] sm:$0xf]
  %v651 = vld [vmem:[%s0 + $0x1e0] sm:$0xf]
  %v652 = vld [vmem:[%s0 + $0x1e4] sm:$0xf]
  %v653 = vld [vmem:[%s0 + $0x1e8] sm:$0xf]
  %v654 = vld [vmem:[%s0 + $0x1ec] sm:$0xf]
  %v655 = vld [vmem:[%s0 + $0x1f0] sm:$0xf]
  %v656 = vld [vmem:[%s0 + $0x1f4] sm:$0xf]
  %v657 = vld [vmem:[%s0 + $0x1f8] sm:$0xf]
  %v658 = vld [vmem:[%s0 + $0x1fc] sm:$0xf]
  %v659 = vld [vmem:[%s0 + $0x200] sm:$0xf]
  %v660 = vld [vmem:[%s0 + $0x204] sm:$0xf]
  %v661 = vld [vmem:[%s0 + $0x208] sm:$0xf]
  %v662 = vld [vmem:[%s0 + $0x20c] sm:$0xf]
  %v663 = vld [vmem:[%s0 + $0x210] sm:$0xf]
  %v664 = vld [vmem:[%s0 + $0x214] sm:$0xf]
  %v665 = vld [vmem:[%s0 + $0x218] sm:$0xf]
  %v666 = vld [vmem:[%s0 + $0x21c] sm:$0xf]
  %v667 = vld [vmem:[%s0 + $0x220] sm:$0xf]
  %v668 = vld [vmem:[%s0 + $0x224] sm:$0xf]
  %v669 = vld [vmem:[%s0 + $0x228] sm:$0xf]
  %v670 = vld [vmem:[%s0 + $0x22c] sm:$0xf]
  %v671 = vld [vmem:[%s0 + $0x230] sm:$0xf]
  %v672 = vld [vmem:[%s0 + $0x234] sm:$0xf]
  %v673 = vld [vmem:[%s0 + $0x238] sm:$0xf]
  %v674 = vld [vmem:[%s0 + $0x23c] sm:$0xf]
  %v675 = vld [vmem:[%s0 + $0x240] sm:$0xf]
  %v676 = vld [vmem:[%s0 + $0x244] sm:$0xf]
  %v677 = vld [vmem:[%s0 + $0x248] sm:$0xf]
  %v678 = vld [vmem:[%s0 + $0x24c] sm:$0xf]
  %v679 = vld [vmem:[%s0 + $0x250] sm:$0xf]
  %v680 = vld [vmem:[%s0 + $0x254] sm:$0xf]
  %v681 = vld [vmem:[%s0 + $0x258] sm:$0xf]
  %v682 = vld [vmem:[%s0 + $0x25c] sm:$0xf]
  %v683 = vld [vmem:[%s0 + $0x260] sm:$0xf]
  %v684 = vld [vmem:[%s0 + $0x264] sm:$0xf]
  %v685 = vld [vmem:[%s0 + $0x268] sm:$0xf]
  %v686 = vld [vmem:[%s0 + $0x26c] sm:$0xf]
  %v687 = vld [vmem:[%s0 + $0x270] sm:$0xf]
  %v688 = vld [vmem:[%s0 + $0x274] sm:$0xf]
  %v689 = vld [vmem:[%s0 + $0x278] sm:$0xf]
  %v690 = vld [vmem:[%s0 + $0x27c] sm:$0xf]
  %v691 = vld [vmem:[%s0 + $0x280] sm:$0xf]
  %v692 = vld [vmem:[%s0 + $0x284] sm:$0xf]
  %v693 = vld [vmem:[%s0 + $0x288] sm:$0xf]
  %v694 = vld [vmem:[%s0 + $0x28c] sm:$0xf]
  %v695 = vld [vmem:[%s0 + $0x290] sm:$0xf]
  %v696 = vld [vmem:[%s0 + $0x294] sm:$0xf]
  %v697 = vld [vmem:[%s0 + $0x298] sm:$0xf]
  %v698 = vld [vmem:[%s0 + $0x29c] sm:$0xf]
  %v699 = vld [vmem:[%s0 + $0x2a0] sm:$0xf]
  %v700 = vld [vmem:[%s0 + $0x2a4] sm:$0xf]
  %v701 = vld [vmem:[%s0 + $0x2a8] sm:$0xf]
  %v702 = vld [vmem:[%s0 + $0x2ac] sm:$0xf]
  %v703 = vld [vmem:[%s0 + $0x2b0] sm:$0xf]
  %v704 = vld [vmem:[%s0 + $0x2b4] sm:$0xf]
  %v705 = vld [vmem:[%s0 + $0x2b8] sm:$0xf]
  %v706 = vld [vmem:[%s0 + $0x2bc] sm:$0xf]
  %v707 = vld [vmem:[%s0 + $0x2c0] sm:$0xf]
  %v708 = vld [vmem:[%s0 + $0x2c4] sm:$0xf]
  %v709 = vld [vmem:[%s0 + $0x2c8] sm:$0xf]
  %v710 = vld [vmem:[%s0 + $0x2cc] sm:$0xf]
  %v711 = vld [vmem:[%s0 + $0x2d0] sm:$0xf]
  %v712 = vld [vmem:[%s0 + $0x2d4] sm:$0xf]
  %v713 = vld [vmem:[%s0 + $0x2d8] sm:$0xf]
  %v714 = vld [vmem:[%s0 + $0x2dc] sm:$0xf]
  %v715 = vld [vmem:[%s0 + $0x2e0] sm:$0xf]
  %v716 = vld [vmem:[%s0 + $0x2e4] sm:$0xf]
  %v717 = vld [vmem:[%s0 + $0x2e8] sm:$0xf]
  %v718 = vld [vmem:[%s0 + $0x2ec] sm:$0xf]
  %v719 = vld [vmem:[%s0 + $0x2f0] sm:$0xf]
  %v720 = vld [vmem:[%s0 + $0x2f4] sm:$0xf]
  %v721 = vld [vmem:[%s0 + $0x2f8] sm:$0xf]
  %v722 = vld [vmem:[%s0 + $0x2fc] sm:$0xf]
  %v723 = vld [vmem:[%s0 + $0x300] sm:$0xf]
  %v724 = vld [vmem:[%s0 + $0x304] sm:$0xf]
  %v725 = vld [vmem:[%s0 + $0x308] sm:$0xf]
  %v726 = vld [vmem:[%s0 + $0x30c] sm:$0xf]
  %v727 = vld [vmem:[%s0 + $0x310] sm:$0xf]
  %v728 = vld [vmem:[%s0 + $0x314] sm:$0xf]
  %v729 = vld [vmem:[%s0 + $0x318] sm:$0xf]
  %v730 = vld [vmem:[%s0 + $0x31c] sm:$0xf]
  %v731 = vld [vmem:[%s0 + $0x320] sm:$0xf]
  %v732 = vld [vmem:[%s0 + $0x324] sm:$0xf]
  %v733 = vld [vmem:[%s0 + $0x328] sm:$0xf]
  %v734 = vld [vmem:[%s0 + $0x32c] sm:$0xf]
  %v735 = vld [vmem:[%s0 + $0x330] sm:$0xf]
  %v736 = vld [vmem:[%s0 + $0x334] sm:$0xf]
  %v737 = vld [vmem:[%s0 + $0x338] sm:$0xf]
  %v738 = vld [vmem:[%s0 + $0x33c] sm:$0xf]
  %v739 = vld [vmem:[%s0 + $0x340] sm:$0xf]
  %v740 = vld [vmem:[%s0 + $0x344] sm:$0xf]
  %v741 = vld [vmem:[%s0 + $0x348] sm:$0xf]
  %v742 = vld [vmem:[%s0 + $0x34c] sm:$0xf]
  %v743 = vld [vmem:[%s0 + $0x350] sm:$0xf]
  %v744 = vld [vmem:[%s0 + $0x354] sm:$0xf]
  %v745 = vld [vmem:[%s0 + $0x358] sm:$0xf]
  %v746 = vld [vmem:[%s0 + $0x35c] sm:$0xf]
  %v747 = vld [vmem:[%s0 + $0x360] sm:$0xf]
  %v748 = vld [vmem:[%s0 + $0x364] sm:$0xf]
  %v749 = vld [vmem:[%s0 + $0x368] sm:$0xf]
  %v750 = vld [vmem:[%s0 + $0x36c] sm:$0xf]
  %v751 = vld [vmem:[%s0 + $0x370] sm:$0xf]
  %v752 = vld [vmem:[%s0 + $0x374] sm:$0xf]
  %v753 = vld [vmem:[%s0 + $0x378] sm:$0xf]
  %v754 = vld [vmem:[%s0 + $0x37c] sm:$0xf]
  %v755 = vld [vmem:[%s0 + $0x380] sm:$0xf]
  %v756 = vld [vmem:[%s0 + $0x384] sm:$0xf]
  %v757 = vld [vmem:[%s0 + $0x388] sm:$0xf]
  %v758 = vld [vmem:[%s0 + $0x38c] sm:$0xf]
  %v759 = vld [vmem:[%s0 + $0x390] sm:$0xf]
  %v760 = vld [vmem:[%s0 + $0x394] sm:$0xf]
  %v761 = vld [vmem:[%s0 + $0x398] sm:$0xf]
  %v762 = vld [vmem:[%s0 + $0x39c] sm:$0xf]
  %v763 = vld [vmem:[%s0 + $0x3a0] sm:$0xf]
  %v764 = vld [vmem:[%s0 + $0x3a4] sm:$0xf]
  %v765 = vld [vmem:[%s0 + $0x3a8] sm:$0xf]
  %v766 = vld [vmem:[%s0 + $0x3ac] sm:$0xf]
  %v767 = vld [vmem:[%s0 + $0x3b0] sm:$0xf]
  %v768 = vld [vmem:[%s0 + $0x3b4] sm:$0xf]
  %v769 = vld [vmem:[%s0 + $0x3b8] sm:$0xf]
  %v770 = vld [vmem:[%s0 + $0x3bc] sm:$0xf]
  %v771 = vld [vmem:[%s0 + $0x3c0] sm:$0xf]
  %v772 = vld [vmem:[%s0 + $0x3c4] sm:$0xf]
  %v773 = vld [vmem:[%s0 + $0x3c8] sm:$0xf]
  %v774 = vld [vmem:[%s0 + $0x3cc] sm:$0xf]
  %v775 = vld [vmem:[%s0 + $0x3d0] sm:$0xf]
  %v776 = vld [vmem:[%s0 + $0x3d4] sm:$0xf]
  %v777 = vld [vmem:[%s0 + $0x3d8] sm:$0xf]
  %v778 = vld [vmem:[%s0 + $0x3dc] sm:$0xf]
  %v779 = vld [vmem:[%s0 + $0x3e0] sm:$0xf]
  %v780 = vld [vmem:[%s0 + $0x3e4] sm:$0xf]
  %v781 = vld [vmem:[%s0 + $0x3e8] sm:$0xf]
  %v782 = vld [vmem:[%s0 + $0x3ec] sm:$0xf]
  %v783 = vld [vmem:[%s0 + $0x3f0] sm:$0xf]
  %v784 = vld [vmem:[%s0 + $0x3f4] sm:$0xf]
  %v785 = vld [vmem:[%s0 + $0x3f8] sm:$0xf]
  %v786 = vld [vmem:[%s0 + $0x3fc] sm:$0xf]
  %v787 = vld [vmem:[%s1] sm:$0xf]
  %v788 = vld [vmem:[%s1 + $0x4] sm:$0xf]
  %v789 = vld [vmem:[%s1 + $0x8] sm:$0xf]
  %v790 = vld [vmem:[%s1 + $0xc] sm:$0xf]
  %v791 = vld [vmem:[%s1 + $0x10] sm:$0xf]
  %v792 = vld [vmem:[%s1 + $0x14] sm:$0xf]
  %v793 = vld [vmem:[%s1 + $0x18] sm:$0xf]
  %v794 = vld [vmem:[%s1 + $0x1c] sm:$0xf]
  %v1051 = vunpack.c.l.b16 %v531
  %v1052 = vunpack.c.l.b16 %v532
  %v1053 = vunpack.c.l.b16 %v533
  %v1054 = vunpack.c.l.b16 %v534
  %v1055 = vunpack.c.l.b16 %v535
  %v1056 = vunpack.c.l.b16 %v536
  %v1057 = vunpack.c.l.b16 %v537
  %v1058 = vunpack.c.l.b16 %v538
  %v1059 = vunpack.c.l.b16 %v539
  %v1060 = vunpack.c.l.b16 %v540
  %v1061 = vunpack.c.l.b16 %v541
  %v1062 = vunpack.c.l.b16 %v542
  %v1063 = vunpack.c.l.b16 %v543
  %v1064 = vunpack.c.l.b16 %v544
  %v1065 = vunpack.c.l.b16 %v545
  %v1066 = vunpack.c.l.b16 %v546
  %v1067 = vunpack.c.l.b16 %v547
  %v1068 = vunpack.c.l.b16 %v548
  %v1069 = vunpack.c.l.b16 %v549
  %v1070 = vunpack.c.l.b16 %v550
  %v1071 = vunpack.c.l.b16 %v551
  %v1072 = vunpack.c.l.b16 %v552
  %v1073 = vunpack.c.l.b16 %v553
  %v1074 = vunpack.c.l.b16 %v554
  %v1075 = vunpack.c.l.b16 %v555
  %v1076 = vunpack.c.l.b16 %v556
  %v1077 = vunpack.c.l.b16 %v557
  %v1078 = vunpack.c.l.b16 %v558
  %v1079 = vunpack.c.l.b16 %v559
  %v1080 = vunpack.c.l.b16 %v560
  %v1081 = vunpack.c.l.b16 %v561
  %v1082 = vunpack.c.l.b16 %v562
  %v1083 = vunpack.c.l.b16 %v563
  %v1084 = vunpack.c.l.b16 %v564
  %v1085 = vunpack.c.l.b16 %v565
  %v1086 = vunpack.c.l.b16 %v566
  %v1087 = vunpack.c.l.b16 %v567
  %v1088 = vunpack.c.l.b16 %v568
  %v1089 = vunpack.c.l.b16 %v569
  %v1090 = vunpack.c.l.b16 %v570
  %v1091 = vunpack.c.l.b16 %v571
  %v1092 = vunpack.c.l.b16 %v572
  %v1093 = vunpack.c.l.b16 %v573
  %v1094 = vunpack.c.l.b16 %v574
  %v1095 = vunpack.c.l.b16 %v575
  %v1096 = vunpack.c.l.b16 %v576
  %v1097 = vunpack.c.l.b16 %v577
  %v1098 = vunpack.c.l.b16 %v578
  %v1099 = vunpack.c.l.b16 %v579
  %v1100 = vunpack.c.l.b16 %v580
  %v1101 = vunpack.c.l.b16 %v581
  %v1102 = vunpack.c.l.b16 %v582
  %v1103 = vunpack.c.l.b16 %v583
  %v1104 = vunpack.c.l.b16 %v584
  %v1105 = vunpack.c.l.b16 %v585
  %v1106 = vunpack.c.l.b16 %v586
  %v1107 = vunpack.c.l.b16 %v587
  %v1108 = vunpack.c.l.b16 %v588
  %v1109 = vunpack.c.l.b16 %v589
  %v1110 = vunpack.c.l.b16 %v590
  %v1111 = vunpack.c.l.b16 %v591
  %v1112 = vunpack.c.l.b16 %v592
  %v1113 = vunpack.c.l.b16 %v593
  %v1114 = vunpack.c.l.b16 %v594
  %v1115 = vunpack.c.l.b16 %v595
  %v1116 = vunpack.c.l.b16 %v596
  %v1117 = vunpack.c.l.b16 %v597
  %v1118 = vunpack.c.l.b16 %v598
  %v1119 = vunpack.c.l.b16 %v599
  %v1120 = vunpack.c.l.b16 %v600
  %v1121 = vunpack.c.l.b16 %v601
  %v1122 = vunpack.c.l.b16 %v602
  %v1123 = vunpack.c.l.b16 %v603
  %v1124 = vunpack.c.l.b16 %v604
  %v1125 = vunpack.c.l.b16 %v605
  %v1126 = vunpack.c.l.b16 %v606
  %v1127 = vunpack.c.l.b16 %v607
  %v1128 = vunpack.c.l.b16 %v608
  %v1129 = vunpack.c.l.b16 %v609
  %v1130 = vunpack.c.l.b16 %v610
  %v1131 = vunpack.c.l.b16 %v611
  %v1132 = vunpack.c.l.b16 %v612
  %v1133 = vunpack.c.l.b16 %v613
  %v1134 = vunpack.c.l.b16 %v614
  %v1135 = vunpack.c.l.b16 %v615
  %v1136 = vunpack.c.l.b16 %v616
  %v1137 = vunpack.c.l.b16 %v617
  %v1138 = vunpack.c.l.b16 %v618
  %v1139 = vunpack.c.l.b16 %v619
  %v1140 = vunpack.c.l.b16 %v620
  %v1141 = vunpack.c.l.b16 %v621
  %v1142 = vunpack.c.l.b16 %v622
  %v1143 = vunpack.c.l.b16 %v623
  %v1144 = vunpack.c.l.b16 %v624
  %v1145 = vunpack.c.l.b16 %v625
  %v1146 = vunpack.c.l.b16 %v626
  %v1147 = vunpack.c.l.b16 %v627
  %v1148 = vunpack.c.l.b16 %v628
  %v1149 = vunpack.c.l.b16 %v629
  %v1150 = vunpack.c.l.b16 %v630
  %v1151 = vunpack.c.l.b16 %v631
  %v1152 = vunpack.c.l.b16 %v632
  %v1153 = vunpack.c.l.b16 %v633
  %v1154 = vunpack.c.l.b16 %v634
  %v1155 = vunpack.c.l.b16 %v635
  %v1156 = vunpack.c.l.b16 %v636
  %v1157 = vunpack.c.l.b16 %v637
  %v1158 = vunpack.c.l.b16 %v638
  %v1159 = vunpack.c.l.b16 %v639
  %v1160 = vunpack.c.l.b16 %v640
  %v1161 = vunpack.c.l.b16 %v641
  %v1162 = vunpack.c.l.b16 %v642
  %v1163 = vunpack.c.l.b16 %v643
  %v1164 = vunpack.c.l.b16 %v644
  %v1165 = vunpack.c.l.b16 %v645
  %v1166 = vunpack.c.l.b16 %v646
  %v1167 = vunpack.c.l.b16 %v647
  %v1168 = vunpack.c.l.b16 %v648
  %v1169 = vunpack.c.l.b16 %v649
  %v1170 = vunpack.c.l.b16 %v650
  %v1171 = vunpack.c.l.b16 %v651
  %v1172 = vunpack.c.l.b16 %v652
  %v1173 = vunpack.c.l.b16 %v653
  %v1174 = vunpack.c.l.b16 %v654
  %v1175 = vunpack.c.l.b16 %v655
  %v1176 = vunpack.c.l.b16 %v656
  %v1177 = vunpack.c.l.b16 %v657
  %v1178 = vunpack.c.l.b16 %v658
  %v1179 = vunpack.c.l.b16 %v659
  %v1180 = vunpack.c.l.b16 %v660
  %v1181 = vunpack.c.l.b16 %v661
  %v1182 = vunpack.c.l.b16 %v662
  %v1183 = vunpack.c.l.b16 %v663
  %v1184 = vunpack.c.l.b16 %v664
  %v1185 = vunpack.c.l.b16 %v665
  %v1186 = vunpack.c.l.b16 %v666
  %v1187 = vunpack.c.l.b16 %v667
  %v1188 = vunpack.c.l.b16 %v668
  %v1189 = vunpack.c.l.b16 %v669
  %v1190 = vunpack.c.l.b16 %v670
  %v1191 = vunpack.c.l.b16 %v671
  %v1192 = vunpack.c.l.b16 %v672
  %v1193 = vunpack.c.l.b16 %v673
  %v1194 = vunpack.c.l.b16 %v674
  %v1195 = vunpack.c.l.b16 %v675
  %v1196 = vunpack.c.l.b16 %v676
  %v1197 = vunpack.c.l.b16 %v677
  %v1198 = vunpack.c.l.b16 %v678
  %v1199 = vunpack.c.l.b16 %v679
  %v1200 = vunpack.c.l.b16 %v680
  %v1201 = vunpack.c.l.b16 %v681
  %v1202 = vunpack.c.l.b16 %v682
  %v1203 = vunpack.c.l.b16 %v683
  %v1204 = vunpack.c.l.b16 %v684
  %v1205 = vunpack.c.l.b16 %v685
  %v1206 = vunpack.c.l.b16 %v686
  %v1207 = vunpack.c.l.b16 %v687
  %v1208 = vunpack.c.l.b16 %v688
  %v1209 = vunpack.c.l.b16 %v689
  %v1210 = vunpack.c.l.b16 %v690
  %v1211 = vunpack.c.l.b16 %v691
  %v1212 = vunpack.c.l.b16 %v692
  %v1213 = vunpack.c.l.b16 %v693
  %v1214 = vunpack.c.l.b16 %v694
  %v1215 = vunpack.c.l.b16 %v695
  %v1216 = vunpack.c.l.b16 %v696
  %v1217 = vunpack.c.l.b16 %v697
  %v1218 = vunpack.c.l.b16 %v698
  %v1219 = vunpack.c.l.b16 %v699
  %v1220 = vunpack.c.l.b16 %v700
  %v1221 = vunpack.c.l.b16 %v701
  %v1222 = vunpack.c.l.b16 %v702
  %v1223 = vunpack.c.l.b16 %v703
  %v1224 = vunpack.c.l.b16 %v704
  %v1225 = vunpack.c.l.b16 %v705
  %v1226 = vunpack.c.l.b16 %v706
  %v1227 = vunpack.c.l.b16 %v707
  %v1228 = vunpack.c.l.b16 %v708
  %v1229 = vunpack.c.l.b16 %v709
  %v1230 = vunpack.c.l.b16 %v710
  %v1231 = vunpack.c.l.b16 %v711
  %v1232 = vunpack.c.l.b16 %v712
  %v1233 = vunpack.c.l.b16 %v713
  %v1234 = vunpack.c.l.b16 %v714
  %v1235 = vunpack.c.l.b16 %v715
  %v1236 = vunpack.c.l.b16 %v716
  %v1237 = vunpack.c.l.b16 %v717
  %v1238 = vunpack.c.l.b16 %v718
  %v1239 = vunpack.c.l.b16 %v719
  %v1240 = vunpack.c.l.b16 %v720
  %v1241 = vunpack.c.l.b16 %v721
  %v1242 = vunpack.c.l.b16 %v722
  %v1243 = vunpack.c.l.b16 %v723
  %v1244 = vunpack.c.l.b16 %v724
  %v1245 = vunpack.c.l.b16 %v725
  %v1246 = vunpack.c.l.b16 %v726
  %v1247 = vunpack.c.l.b16 %v727
  %v1248 = vunpack.c.l.b16 %v728
  %v1249 = vunpack.c.l.b16 %v729
  %v1250 = vunpack.c.l.b16 %v730
  %v1251 = vunpack.c.l.b16 %v731
  %v1252 = vunpack.c.l.b16 %v732
  %v1253 = vunpack.c.l.b16 %v733
  %v1254 = vunpack.c.l.b16 %v734
  %v1255 = vunpack.c.l.b16 %v735
  %v1256 = vunpack.c.l.b16 %v736
  %v1257 = vunpack.c.l.b16 %v737
  %v1258 = vunpack.c.l.b16 %v738
  %v1259 = vunpack.c.l.b16 %v739
  %v1260 = vunpack.c.l.b16 %v740
  %v1261 = vunpack.c.l.b16 %v741
  %v1262 = vunpack.c.l.b16 %v742
  %v1263 = vunpack.c.l.b16 %v743
  %v1264 = vunpack.c.l.b16 %v744
  %v1265 = vunpack.c.l.b16 %v745
  %v1266 = vunpack.c.l.b16 %v746
  %v1267 = vunpack.c.l.b16 %v747
  %v1268 = vunpack.c.l.b16 %v748
  %v1269 = vunpack.c.l.b16 %v749
  %v1270 = vunpack.c.l.b16 %v750
  %v1271 = vunpack.c.l.b16 %v751
  %v1272 = vunpack.c.l.b16 %v752
  %v1273 = vunpack.c.l.b16 %v753
  %v1274 = vunpack.c.l.b16 %v754
  %v1275 = vunpack.c.l.b16 %v755
  %v1276 = vunpack.c.l.b16 %v756
  %v1277 = vunpack.c.l.b16 %v757
  %v1278 = vunpack.c.l.b16 %v758
  %v1279 = vunpack.c.l.b16 %v759
  %v1280 = vunpack.c.l.b16 %v760
  %v1281 = vunpack.c.l.b16 %v761
  %v1282 = vunpack.c.l.b16 %v762
  %v1283 = vunpack.c.l.b16 %v763
  %v1284 = vunpack.c.l.b16 %v764
  %v1285 = vunpack.c.l.b16 %v765
  %v1286 = vunpack.c.l.b16 %v766
  %v1287 = vunpack.c.l.b16 %v767
  %v1288 = vunpack.c.l.b16 %v768
  %v1289 = vunpack.c.l.b16 %v769
  %v1290 = vunpack.c.l.b16 %v770
  %v1291 = vunpack.c.l.b16 %v771
  %v1292 = vunpack.c.l.b16 %v772
  %v1293 = vunpack.c.l.b16 %v773
  %v1294 = vunpack.c.l.b16 %v774
  %v1295 = vunpack.c.l.b16 %v775
  %v1296 = vunpack.c.l.b16 %v776
  %v1297 = vunpack.c.l.b16 %v777
  %v1298 = vunpack.c.l.b16 %v778
  %v1299 = vunpack.c.l.b16 %v779
  %v1300 = vunpack.c.l.b16 %v780
  %v1301 = vunpack.c.l.b16 %v781
  %v1302 = vunpack.c.l.b16 %v782
  %v1303 = vunpack.c.l.b16 %v783
  %v1304 = vunpack.c.l.b16 %v784
  %v1305 = vunpack.c.l.b16 %v785
  %v1306 = vunpack.c.l.b16 %v786
  %v1307 = vpack.c.b16 %v1052, %v1051
  %v1308 = vpack.c.b16 %v1054, %v1053
  %v1309 = vpack.c.b16 %v1056, %v1055
  %v1310 = vpack.c.b16 %v1058, %v1057
  %v1311 = vpack.c.b16 %v1060, %v1059
  %v1312 = vpack.c.b16 %v1062, %v1061
  %v1313 = vpack.c.b16 %v1064, %v1063
  %v1314 = vpack.c.b16 %v1066, %v1065
  %v1315 = vpack.c.b16 %v1068, %v1067
  %v1316 = vpack.c.b16 %v1070, %v1069
  %v1317 = vpack.c.b16 %v1072, %v1071
  %v1318 = vpack.c.b16 %v1074, %v1073
  %v1319 = vpack.c.b16 %v1076, %v1075
  %v1320 = vpack.c.b16 %v1078, %v1077
  %v1321 = vpack.c.b16 %v1080, %v1079
  %v1322 = vpack.c.b16 %v1082, %v1081
  %v1323 = vpack.c.b16 %v1084, %v1083
  %v1324 = vpack.c.b16 %v1086, %v1085
  %v1325 = vpack.c.b16 %v1088, %v1087
  %v1326 = vpack.c.b16 %v1090, %v1089
  %v1327 = vpack.c.b16 %v1092, %v1091
  %v1328 = vpack.c.b16 %v1094, %v1093
  %v1329 = vpack.c.b16 %v1096, %v1095
  %v1330 = vpack.c.b16 %v1098, %v1097
  %v1331 = vpack.c.b16 %v1100, %v1099
  %v1332 = vpack.c.b16 %v1102, %v1101
  %v1333 = vpack.c.b16 %v1104, %v1103
  %v1334 = vpack.c.b16 %v1106, %v1105
  %v1335 = vpack.c.b16 %v1108, %v1107
  %v1336 = vpack.c.b16 %v1110, %v1109
  %v1337 = vpack.c.b16 %v1112, %v1111
  %v1338 = vpack.c.b16 %v1114, %v1113
  %v1339 = vpack.c.b16 %v1116, %v1115
  %v1340 = vpack.c.b16 %v1118, %v1117
  %v1341 = vpack.c.b16 %v1120, %v1119
  %v1342 = vpack.c.b16 %v1122, %v1121
  %v1343 = vpack.c.b16 %v1124, %v1123
  %v1344 = vpack.c.b16 %v1126, %v1125
  %v1345 = vpack.c.b16 %v1128, %v1127
  %v1346 = vpack.c.b16 %v1130, %v1129
  %v1347 = vpack.c.b16 %v1132, %v1131
  %v1348 = vpack.c.b16 %v1134, %v1133
  %v1349 = vpack.c.b16 %v1136, %v1135
  %v1350 = vpack.c.b16 %v1138, %v1137
  %v1351 = vpack.c.b16 %v1140, %v1139
  %v1352 = vpack.c.b16 %v1142, %v1141
  %v1353 = vpack.c.b16 %v1144, %v1143
  %v1354 = vpack.c.b16 %v1146, %v1145
  %v1355 = vpack.c.b16 %v1148, %v1147
  %v1356 = vpack.c.b16 %v1150, %v1149
  %v1357 = vpack.c.b16 %v1152, %v1151
  %v1358 = vpack.c.b16 %v1154, %v1153
  %v1359 = vpack.c.b16 %v1156, %v1155
  %v1360 = vpack.c.b16 %v1158, %v1157
  %v1361 = vpack.c.b16 %v1160, %v1159
  %v1362 = vpack.c.b16 %v1162, %v1161
  %v1363 = vpack.c.b16 %v1164, %v1163
  %v1364 = vpack.c.b16 %v1166, %v1165
  %v1365 = vpack.c.b16 %v1168, %v1167
  %v1366 = vpack.c.b16 %v1170, %v1169
  %v1367 = vpack.c.b16 %v1172, %v1171
  %v1368 = vpack.c.b16 %v1174, %v1173
  %v1369 = vpack.c.b16 %v1176, %v1175
  %v1370 = vpack.c.b16 %v1178, %v1177
  %v1371 = vpack.c.b16 %v1180, %v1179
  %v1372 = vpack.c.b16 %v1182, %v1181
  %v1373 = vpack.c.b16 %v1184, %v1183
  %v1374 = vpack.c.b16 %v1186, %v1185
  %v1375 = vpack.c.b16 %v1188, %v1187
  %v1376 = vpack.c.b16 %v1190, %v1189
  %v1377 = vpack.c.b16 %v1192, %v1191
  %v1378 = vpack.c.b16 %v1194, %v1193
  %v1379 = vpack.c.b16 %v1196, %v1195
  %v1380 = vpack.c.b16 %v1198, %v1197
  %v1381 = vpack.c.b16 %v1200, %v1199
  %v1382 = vpack.c.b16 %v1202, %v1201
  %v1383 = vpack.c.b16 %v1204, %v1203
  %v1384 = vpack.c.b16 %v1206, %v1205
  %v1385 = vpack.c.b16 %v1208, %v1207
  %v1386 = vpack.c.b16 %v1210, %v1209
  %v1387 = vpack.c.b16 %v1212, %v1211
  %v1388 = vpack.c.b16 %v1214, %v1213
  %v1389 = vpack.c.b16 %v1216, %v1215
  %v1390 = vpack.c.b16 %v1218, %v1217
  %v1391 = vpack.c.b16 %v1220, %v1219
  %v1392 = vpack.c.b16 %v1222, %v1221
  %v1393 = vpack.c.b16 %v1224, %v1223
  %v1394 = vpack.c.b16 %v1226, %v1225
  %v1395 = vpack.c.b16 %v1228, %v1227
  %v1396 = vpack.c.b16 %v1230, %v1229
  %v1397 = vpack.c.b16 %v1232, %v1231
  %v1398 = vpack.c.b16 %v1234, %v1233
  %v1399 = vpack.c.b16 %v1236, %v1235
  %v1400 = vpack.c.b16 %v1238, %v1237
  %v1401 = vpack.c.b16 %v1240, %v1239
  %v1402 = vpack.c.b16 %v1242, %v1241
  %v1403 = vpack.c.b16 %v1244, %v1243
  %v1404 = vpack.c.b16 %v1246, %v1245
  %v1405 = vpack.c.b16 %v1248, %v1247
  %v1406 = vpack.c.b16 %v1250, %v1249
  %v1407 = vpack.c.b16 %v1252, %v1251
  %v1408 = vpack.c.b16 %v1254, %v1253
  %v1409 = vpack.c.b16 %v1256, %v1255
  %v1410 = vpack.c.b16 %v1258, %v1257
  %v1411 = vpack.c.b16 %v1260, %v1259
  %v1412 = vpack.c.b16 %v1262, %v1261
  %v1413 = vpack.c.b16 %v1264, %v1263
  %v1414 = vpack.c.b16 %v1266, %v1265
  %v1415 = vpack.c.b16 %v1268, %v1267
  %v1416 = vpack.c.b16 %v1270, %v1269
  %v1417 = vpack.c.b16 %v1272, %v1271
  %v1418 = vpack.c.b16 %v1274, %v1273
  %v1419 = vpack.c.b16 %v1276, %v1275
  %v1420 = vpack.c.b16 %v1278, %v1277
  %v1421 = vpack.c.b16 %v1280, %v1279
  %v1422 = vpack.c.b16 %v1282, %v1281
  %v1423 = vpack.c.b16 %v1284, %v1283
  %v1424 = vpack.c.b16 %v1286, %v1285
  %v1425 = vpack.c.b16 %v1288, %v1287
  %v1426 = vpack.c.b16 %v1290, %v1289
  %v1427 = vpack.c.b16 %v1292, %v1291
  %v1428 = vpack.c.b16 %v1294, %v1293
  %v1429 = vpack.c.b16 %v1296, %v1295
  %v1430 = vpack.c.b16 %v1298, %v1297
  %v1431 = vpack.c.b16 %v1300, %v1299
  %v1432 = vpack.c.b16 %v1302, %v1301
  %v1433 = vpack.c.b16 %v1304, %v1303
  %v1434 = vpack.c.b16 %v1306, %v1305
  %v1443 = vunpack.c.l.b16 %v787
  %v1444 = vunpack.c.l.b16 %v788
  %v1445 = vunpack.c.l.b16 %v789
  %v1446 = vunpack.c.l.b16 %v790
  %v1447 = vunpack.c.l.b16 %v791
  %v1448 = vunpack.c.l.b16 %v792
  %v1449 = vunpack.c.l.b16 %v793
  %v1450 = vunpack.c.l.b16 %v794
  %v1451 = vpack.c.b16 %v1444, %v1443
  %v1452 = vpack.c.b16 %v1446, %v1445
  %v1453 = vpack.c.b16 %v1448, %v1447
  %v1454 = vpack.c.b16 %v1450, %v1449
  %vm1459 = vcmask 523264
  %v1461 = vsel %vm1459, %v1307, 0
  %v1464 = vsel %vm1459, %v1308, 0
  %v1467 = vsel %vm1459, %v1309, 0
  %v1470 = vsel %vm1459, %v1310, 0
  %v1473 = vsel %vm1459, %v1311, 0
  %v1476 = vsel %vm1459, %v1312, 0
  %v1479 = vsel %vm1459, %v1313, 0
  %v1482 = vsel %vm1459, %v1314, 0
  %v1485 = vsel %vm1459, %v1315, 0
  %v1488 = vsel %vm1459, %v1316, 0
  %v1491 = vsel %vm1459, %v1317, 0
  %v1494 = vsel %vm1459, %v1318, 0
  %v1497 = vsel %vm1459, %v1319, 0
  %v1500 = vsel %vm1459, %v1320, 0
  %v1503 = vsel %vm1459, %v1321, 0
  %v1506 = vsel %vm1459, %v1322, 0
  %v1509 = vsel %vm1459, %v1323, 0
  %v1512 = vsel %vm1459, %v1324, 0
  %v1515 = vsel %vm1459, %v1325, 0
  %v1518 = vsel %vm1459, %v1326, 0
  %v1521 = vsel %vm1459, %v1327, 0
  %v1524 = vsel %vm1459, %v1328, 0
  %v1527 = vsel %vm1459, %v1329, 0
  %v1530 = vsel %vm1459, %v1330, 0
  %v1533 = vsel %vm1459, %v1331, 0
  %v1536 = vsel %vm1459, %v1332, 0
  %v1539 = vsel %vm1459, %v1333, 0
  %v1542 = vsel %vm1459, %v1334, 0
  %v1545 = vsel %vm1459, %v1335, 0
  %v1548 = vsel %vm1459, %v1336, 0
  %v1551 = vsel %vm1459, %v1337, 0
  %v1554 = vsel %vm1459, %v1338, 0
  %v1557 = vsel %vm1459, %v1339, 0
  %v1560 = vsel %vm1459, %v1340, 0
  %v1563 = vsel %vm1459, %v1341, 0
  %v1566 = vsel %vm1459, %v1342, 0
  %v1569 = vsel %vm1459, %v1343, 0
  %v1572 = vsel %vm1459, %v1344, 0
  %v1575 = vsel %vm1459, %v1345, 0
  %v1578 = vsel %vm1459, %v1346, 0
  %v1581 = vsel %vm1459, %v1347, 0
  %v1584 = vsel %vm1459, %v1348, 0
  %v1587 = vsel %vm1459, %v1349, 0
  %v1590 = vsel %vm1459, %v1350, 0
  %v1593 = vsel %vm1459, %v1351, 0
  %v1596 = vsel %vm1459, %v1352, 0
  %v1599 = vsel %vm1459, %v1353, 0
  %v1602 = vsel %vm1459, %v1354, 0
  %v1605 = vsel %vm1459, %v1355, 0
  %v1608 = vsel %vm1459, %v1356, 0
  %v1611 = vsel %vm1459, %v1357, 0
  %v1614 = vsel %vm1459, %v1358, 0
  %v1617 = vsel %vm1459, %v1359, 0
  %v1620 = vsel %vm1459, %v1360, 0
  %v1623 = vsel %vm1459, %v1361, 0
  %v1626 = vsel %vm1459, %v1362, 0
  %v1629 = vsel %vm1459, %v1363, 0
  %v1632 = vsel %vm1459, %v1364, 0
  %v1635 = vsel %vm1459, %v1365, 0
  %v1638 = vsel %vm1459, %v1366, 0
  %v1641 = vsel %vm1459, %v1367, 0
  %v1644 = vsel %vm1459, %v1368, 0
  %v1647 = vsel %vm1459, %v1369, 0
  %v1650 = vsel %vm1459, %v1370, 0
  %v1653 = vsel %vm1459, %v1371, 0
  %v1656 = vsel %vm1459, %v1372, 0
  %v1659 = vsel %vm1459, %v1373, 0
  %v1662 = vsel %vm1459, %v1374, 0
  %v1665 = vsel %vm1459, %v1375, 0
  %v1668 = vsel %vm1459, %v1376, 0
  %v1671 = vsel %vm1459, %v1377, 0
  %v1674 = vsel %vm1459, %v1378, 0
  %v1677 = vsel %vm1459, %v1379, 0
  %v1680 = vsel %vm1459, %v1380, 0
  %v1683 = vsel %vm1459, %v1381, 0
  %v1686 = vsel %vm1459, %v1382, 0
  %v1689 = vsel %vm1459, %v1383, 0
  %v1692 = vsel %vm1459, %v1384, 0
  %v1695 = vsel %vm1459, %v1385, 0
  %v1698 = vsel %vm1459, %v1386, 0
  %v1701 = vsel %vm1459, %v1387, 0
  %v1704 = vsel %vm1459, %v1388, 0
  %v1707 = vsel %vm1459, %v1389, 0
  %v1710 = vsel %vm1459, %v1390, 0
  %v1713 = vsel %vm1459, %v1391, 0
  %v1716 = vsel %vm1459, %v1392, 0
  %v1719 = vsel %vm1459, %v1393, 0
  %v1722 = vsel %vm1459, %v1394, 0
  %v1725 = vsel %vm1459, %v1395, 0
  %v1728 = vsel %vm1459, %v1396, 0
  %v1731 = vsel %vm1459, %v1397, 0
  %v1734 = vsel %vm1459, %v1398, 0
  %v1737 = vsel %vm1459, %v1399, 0
  %v1740 = vsel %vm1459, %v1400, 0
  %v1743 = vsel %vm1459, %v1401, 0
  %v1746 = vsel %vm1459, %v1402, 0
  %v1749 = vsel %vm1459, %v1403, 0
  %v1752 = vsel %vm1459, %v1404, 0
  %v1755 = vsel %vm1459, %v1405, 0
  %v1758 = vsel %vm1459, %v1406, 0
  %v1761 = vsel %vm1459, %v1407, 0
  %v1764 = vsel %vm1459, %v1408, 0
  %v1767 = vsel %vm1459, %v1409, 0
  %v1770 = vsel %vm1459, %v1410, 0
  %v1773 = vsel %vm1459, %v1411, 0
  %v1776 = vsel %vm1459, %v1412, 0
  %v1779 = vsel %vm1459, %v1413, 0
  %v1782 = vsel %vm1459, %v1414, 0
  %v1785 = vsel %vm1459, %v1415, 0
  %v1788 = vsel %vm1459, %v1416, 0
  %v1791 = vsel %vm1459, %v1417, 0
  %v1794 = vsel %vm1459, %v1418, 0
  %v1797 = vsel %vm1459, %v1419, 0
  %v1800 = vsel %vm1459, %v1420, 0
  %v1803 = vsel %vm1459, %v1421, 0
  %v1806 = vsel %vm1459, %v1422, 0
  %v1809 = vsel %vm1459, %v1423, 0
  %v1812 = vsel %vm1459, %v1424, 0
  %v1815 = vsel %vm1459, %v1425, 0
  %v1818 = vsel %vm1459, %v1426, 0
  %v1821 = vsel %vm1459, %v1427, 0
  %v1824 = vsel %vm1459, %v1428, 0
  %v1827 = vsel %vm1459, %v1429, 0
  %v1830 = vsel %vm1459, %v1430, 0
  %v1833 = vsel %vm1459, %v1431, 0
  %v1836 = vsel %vm1459, %v1432, 0
  %v1839 = vsel %vm1459, %v1433, 0
  %v1842 = vsel %vm1459, %v1434, 0
  %1844 = vmatpush.bf16.msra.mxu0 0
  %1845 = vmatpush.bf16.msra.mxu0 0
  %1846 = vmatpush.bf16.msra.mxu0 0
  %1847 = vmatpush.bf16.msra.mxu0 0
  %1848 = vmatpush.bf16.msra.mxu0 %v1454
  %1849 = vmatpush.bf16.msra.mxu0 %v1453
  %1850 = vmatpush.bf16.msra.mxu0 %v1452
  %1851 = vmatpush.bf16.msra.mxu0 %v1451
  %1852 = vmatmul.bf16.gmra.mxu0 %v1461
  %v1853 = vpop.f32.mrf.mxu0
  %v1854 = vadd.f32 0.0, %v1853
  %v1855 = vpop.f32.mrf.mxu0
  %v1856 = vadd.f32 0.0, %v1855
  %1857 = vmatmul.bf16.gmra.mxu0 %v1464
  %v1858 = vpop.f32.mrf.mxu0
  %v1859 = vadd.f32 0.0, %v1858
  %v1860 = vpop.f32.mrf.mxu0
  %v1861 = vadd.f32 0.0, %v1860
  %1862 = vmatmul.bf16.gmra.mxu0 %v1467
  %v1863 = vpop.f32.mrf.mxu0
  %v1864 = vadd.f32 0.0, %v1863
  %v1865 = vpop.f32.mrf.mxu0
  %v1866 = vadd.f32 0.0, %v1865
  %1867 = vmatmul.bf16.gmra.mxu0 %v1470
  %v1868 = vpop.f32.mrf.mxu0
  %v1869 = vadd.f32 0.0, %v1868
  %v1870 = vpop.f32.mrf.mxu0
  %v1871 = vadd.f32 0.0, %v1870
  %1872 = vmatmul.bf16.gmra.mxu0 %v1473
  %v1873 = vpop.f32.mrf.mxu0
  %v1874 = vadd.f32 0.0, %v1873
  %v1875 = vpop.f32.mrf.mxu0
  %v1876 = vadd.f32 0.0, %v1875
  %1877 = vmatmul.bf16.gmra.mxu0 %v1476
  %v1878 = vpop.f32.mrf.mxu0
  %v1879 = vadd.f32 0.0, %v1878
  %v1880 = vpop.f32.mrf.mxu0
  %v1881 = vadd.f32 0.0, %v1880
  %1882 = vmatmul.bf16.gmra.mxu0 %v1479
  %v1883 = vpop.f32.mrf.mxu0
  %v1884 = vadd.f32 0.0, %v1883
  %v1885 = vpop.f32.mrf.mxu0
  %v1886 = vadd.f32 0.0, %v1885
  %1887 = vmatmul.bf16.gmra.mxu0 %v1482
  %v1888 = vpop.f32.mrf.mxu0
  %v1889 = vadd.f32 0.0, %v1888
  %v1890 = vpop.f32.mrf.mxu0
  %v1891 = vadd.f32 0.0, %v1890
  %1892 = vmatmul.bf16.gmra.mxu0 %v1485
  %v1893 = vpop.f32.mrf.mxu0
  %v1894 = vadd.f32 0.0, %v1893
  %v1895 = vpop.f32.mrf.mxu0
  %v1896 = vadd.f32 0.0, %v1895
  %1897 = vmatmul.bf16.gmra.mxu0 %v1488
  %v1898 = vpop.f32.mrf.mxu0
  %v1899 = vadd.f32 0.0, %v1898
  %v1900 = vpop.f32.mrf.mxu0
  %v1901 = vadd.f32 0.0, %v1900
  %1902 = vmatmul.bf16.gmra.mxu0 %v1491
  %v1903 = vpop.f32.mrf.mxu0
  %v1904 = vadd.f32 0.0, %v1903
  %v1905 = vpop.f32.mrf.mxu0
  %v1906 = vadd.f32 0.0, %v1905
  %1907 = vmatmul.bf16.gmra.mxu0 %v1494
  %v1908 = vpop.f32.mrf.mxu0
  %v1909 = vadd.f32 0.0, %v1908
  %v1910 = vpop.f32.mrf.mxu0
  %v1911 = vadd.f32 0.0, %v1910
  %1912 = vmatmul.bf16.gmra.mxu0 %v1497
  %v1913 = vpop.f32.mrf.mxu0
  %v1914 = vadd.f32 0.0, %v1913
  %v1915 = vpop.f32.mrf.mxu0
  %v1916 = vadd.f32 0.0, %v1915
  %1917 = vmatmul.bf16.gmra.mxu0 %v1500
  %v1918 = vpop.f32.mrf.mxu0
  %v1919 = vadd.f32 0.0, %v1918
  %v1920 = vpop.f32.mrf.mxu0
  %v1921 = vadd.f32 0.0, %v1920
  %1922 = vmatmul.bf16.gmra.mxu0 %v1503
  %v1923 = vpop.f32.mrf.mxu0
  %v1924 = vadd.f32 0.0, %v1923
  %v1925 = vpop.f32.mrf.mxu0
  %v1926 = vadd.f32 0.0, %v1925
  %1927 = vmatmul.bf16.gmra.mxu0 %v1506
  %v1928 = vpop.f32.mrf.mxu0
  %v1929 = vadd.f32 0.0, %v1928
  %v1930 = vpop.f32.mrf.mxu0
  %v1931 = vadd.f32 0.0, %v1930
  %1932 = vmatmul.bf16.gmra.mxu0 %v1509
  %v1933 = vpop.f32.mrf.mxu0
  %v1934 = vadd.f32 0.0, %v1933
  %v1935 = vpop.f32.mrf.mxu0
  %v1936 = vadd.f32 0.0, %v1935
  %1937 = vmatmul.bf16.gmra.mxu0 %v1512
  %v1938 = vpop.f32.mrf.mxu0
  %v1939 = vadd.f32 0.0, %v1938
  %v1940 = vpop.f32.mrf.mxu0
  %v1941 = vadd.f32 0.0, %v1940
  %1942 = vmatmul.bf16.gmra.mxu0 %v1515
  %v1943 = vpop.f32.mrf.mxu0
  %v1944 = vadd.f32 0.0, %v1943
  %v1945 = vpop.f32.mrf.mxu0
  %v1946 = vadd.f32 0.0, %v1945
  %1947 = vmatmul.bf16.gmra.mxu0 %v1518
  %v1948 = vpop.f32.mrf.mxu0
  %v1949 = vadd.f32 0.0, %v1948
  %v1950 = vpop.f32.mrf.mxu0
  %v1951 = vadd.f32 0.0, %v1950
  %1952 = vmatmul.bf16.gmra.mxu0 %v1521
  %v1953 = vpop.f32.mrf.mxu0
  %v1954 = vadd.f32 0.0, %v1953
  %v1955 = vpop.f32.mrf.mxu0
  %v1956 = vadd.f32 0.0, %v1955
  %1957 = vmatmul.bf16.gmra.mxu0 %v1524
  %v1958 = vpop.f32.mrf.mxu0
  %v1959 = vadd.f32 0.0, %v1958
  %v1960 = vpop.f32.mrf.mxu0
  %v1961 = vadd.f32 0.0, %v1960
  %1962 = vmatmul.bf16.gmra.mxu0 %v1527
  %v1963 = vpop.f32.mrf.mxu0
  %v1964 = vadd.f32 0.0, %v1963
  %v1965 = vpop.f32.mrf.mxu0
  %v1966 = vadd.f32 0.0, %v1965
  %1967 = vmatmul.bf16.gmra.mxu0 %v1530
  %v1968 = vpop.f32.mrf.mxu0
  %v1969 = vadd.f32 0.0, %v1968
  %v1970 = vpop.f32.mrf.mxu0
  %v1971 = vadd.f32 0.0, %v1970
  %1972 = vmatmul.bf16.gmra.mxu0 %v1533
  %v1973 = vpop.f32.mrf.mxu0
  %v1974 = vadd.f32 0.0, %v1973
  %v1975 = vpop.f32.mrf.mxu0
  %v1976 = vadd.f32 0.0, %v1975
  %1977 = vmatmul.bf16.gmra.mxu0 %v1536
  %v1978 = vpop.f32.mrf.mxu0
  %v1979 = vadd.f32 0.0, %v1978
  %v1980 = vpop.f32.mrf.mxu0
  %v1981 = vadd.f32 0.0, %v1980
  %1982 = vmatmul.bf16.gmra.mxu0 %v1539
  %v1983 = vpop.f32.mrf.mxu0
  %v1984 = vadd.f32 0.0, %v1983
  %v1985 = vpop.f32.mrf.mxu0
  %v1986 = vadd.f32 0.0, %v1985
  %1987 = vmatmul.bf16.gmra.mxu0 %v1542
  %v1988 = vpop.f32.mrf.mxu0
  %v1989 = vadd.f32 0.0, %v1988
  %v1990 = vpop.f32.mrf.mxu0
  %v1991 = vadd.f32 0.0, %v1990
  %1992 = vmatmul.bf16.gmra.mxu0 %v1545
  %v1993 = vpop.f32.mrf.mxu0
  %v1994 = vadd.f32 0.0, %v1993
  %v1995 = vpop.f32.mrf.mxu0
  %v1996 = vadd.f32 0.0, %v1995
  %1997 = vmatmul.bf16.gmra.mxu0 %v1548
  %v1998 = vpop.f32.mrf.mxu0
  %v1999 = vadd.f32 0.0, %v1998
  %v2000 = vpop.f32.mrf.mxu0
  %v2001 = vadd.f32 0.0, %v2000
  %2002 = vmatmul.bf16.gmra.mxu0 %v1551
  %v2003 = vpop.f32.mrf.mxu0
  %v2004 = vadd.f32 0.0, %v2003
  %v2005 = vpop.f32.mrf.mxu0
  %v2006 = vadd.f32 0.0, %v2005
  %2007 = vmatmul.bf16.gmra.mxu0 %v1554
  %v2008 = vpop.f32.mrf.mxu0
  %v2009 = vadd.f32 0.0, %v2008
  %v2010 = vpop.f32.mrf.mxu0
  %v2011 = vadd.f32 0.0, %v2010
  %2012 = vmatmul.bf16.gmra.mxu0 %v1557
  %v2013 = vpop.f32.mrf.mxu0
  %v2014 = vadd.f32 0.0, %v2013
  %v2015 = vpop.f32.mrf.mxu0
  %v2016 = vadd.f32 0.0, %v2015
  %2017 = vmatmul.bf16.gmra.mxu0 %v1560
  %v2018 = vpop.f32.mrf.mxu0
  %v2019 = vadd.f32 0.0, %v2018
  %v2020 = vpop.f32.mrf.mxu0
  %v2021 = vadd.f32 0.0, %v2020
  %2022 = vmatmul.bf16.gmra.mxu0 %v1563
  %v2023 = vpop.f32.mrf.mxu0
  %v2024 = vadd.f32 0.0, %v2023
  %v2025 = vpop.f32.mrf.mxu0
  %v2026 = vadd.f32 0.0, %v2025
  %2027 = vmatmul.bf16.gmra.mxu0 %v1566
  %v2028 = vpop.f32.mrf.mxu0
  %v2029 = vadd.f32 0.0, %v2028
  %v2030 = vpop.f32.mrf.mxu0
  %v2031 = vadd.f32 0.0, %v2030
  %2032 = vmatmul.bf16.gmra.mxu0 %v1569
  %v2033 = vpop.f32.mrf.mxu0
  %v2034 = vadd.f32 0.0, %v2033
  %v2035 = vpop.f32.mrf.mxu0
  %v2036 = vadd.f32 0.0, %v2035
  %2037 = vmatmul.bf16.gmra.mxu0 %v1572
  %v2038 = vpop.f32.mrf.mxu0
  %v2039 = vadd.f32 0.0, %v2038
  %v2040 = vpop.f32.mrf.mxu0
  %v2041 = vadd.f32 0.0, %v2040
  %2042 = vmatmul.bf16.gmra.mxu0 %v1575
  %v2043 = vpop.f32.mrf.mxu0
  %v2044 = vadd.f32 0.0, %v2043
  %v2045 = vpop.f32.mrf.mxu0
  %v2046 = vadd.f32 0.0, %v2045
  %2047 = vmatmul.bf16.gmra.mxu0 %v1578
  %v2048 = vpop.f32.mrf.mxu0
  %v2049 = vadd.f32 0.0, %v2048
  %v2050 = vpop.f32.mrf.mxu0
  %v2051 = vadd.f32 0.0, %v2050
  %2052 = vmatmul.bf16.gmra.mxu0 %v1581
  %v2053 = vpop.f32.mrf.mxu0
  %v2054 = vadd.f32 0.0, %v2053
  %v2055 = vpop.f32.mrf.mxu0
  %v2056 = vadd.f32 0.0, %v2055
  %2057 = vmatmul.bf16.gmra.mxu0 %v1584
  %v2058 = vpop.f32.mrf.mxu0
  %v2059 = vadd.f32 0.0, %v2058
  %v2060 = vpop.f32.mrf.mxu0
  %v2061 = vadd.f32 0.0, %v2060
  %2062 = vmatmul.bf16.gmra.mxu0 %v1587
  %v2063 = vpop.f32.mrf.mxu0
  %v2064 = vadd.f32 0.0, %v2063
  %v2065 = vpop.f32.mrf.mxu0
  %v2066 = vadd.f32 0.0, %v2065
  %2067 = vmatmul.bf16.gmra.mxu0 %v1590
  %v2068 = vpop.f32.mrf.mxu0
  %v2069 = vadd.f32 0.0, %v2068
  %v2070 = vpop.f32.mrf.mxu0
  %v2071 = vadd.f32 0.0, %v2070
  %2072 = vmatmul.bf16.gmra.mxu0 %v1593
  %v2073 = vpop.f32.mrf.mxu0
  %v2074 = vadd.f32 0.0, %v2073
  %v2075 = vpop.f32.mrf.mxu0
  %v2076 = vadd.f32 0.0, %v2075
  %2077 = vmatmul.bf16.gmra.mxu0 %v1596
  %v2078 = vpop.f32.mrf.mxu0
  %v2079 = vadd.f32 0.0, %v2078
  %v2080 = vpop.f32.mrf.mxu0
  %v2081 = vadd.f32 0.0, %v2080
  %2082 = vmatmul.bf16.gmra.mxu0 %v1599
  %v2083 = vpop.f32.mrf.mxu0
  %v2084 = vadd.f32 0.0, %v2083
  %v2085 = vpop.f32.mrf.mxu0
  %v2086 = vadd.f32 0.0, %v2085
  %2087 = vmatmul.bf16.gmra.mxu0 %v1602
  %v2088 = vpop.f32.mrf.mxu0
  %v2089 = vadd.f32 0.0, %v2088
  %v2090 = vpop.f32.mrf.mxu0
  %v2091 = vadd.f32 0.0, %v2090
  %2092 = vmatmul.bf16.gmra.mxu0 %v1605
  %v2093 = vpop.f32.mrf.mxu0
  %v2094 = vadd.f32 0.0, %v2093
  %v2095 = vpop.f32.mrf.mxu0
  %v2096 = vadd.f32 0.0, %v2095
  %2097 = vmatmul.bf16.gmra.mxu0 %v1608
  %v2098 = vpop.f32.mrf.mxu0
  %v2099 = vadd.f32 0.0, %v2098
  %v2100 = vpop.f32.mrf.mxu0
  %v2101 = vadd.f32 0.0, %v2100
  %2102 = vmatmul.bf16.gmra.mxu0 %v1611
  %v2103 = vpop.f32.mrf.mxu0
  %v2104 = vadd.f32 0.0, %v2103
  %v2105 = vpop.f32.mrf.mxu0
  %v2106 = vadd.f32 0.0, %v2105
  %2107 = vmatmul.bf16.gmra.mxu0 %v1614
  %v2108 = vpop.f32.mrf.mxu0
  %v2109 = vadd.f32 0.0, %v2108
  %v2110 = vpop.f32.mrf.mxu0
  %v2111 = vadd.f32 0.0, %v2110
  %2112 = vmatmul.bf16.gmra.mxu0 %v1617
  %v2113 = vpop.f32.mrf.mxu0
  %v2114 = vadd.f32 0.0, %v2113
  %v2115 = vpop.f32.mrf.mxu0
  %v2116 = vadd.f32 0.0, %v2115
  %2117 = vmatmul.bf16.gmra.mxu0 %v1620
  %v2118 = vpop.f32.mrf.mxu0
  %v2119 = vadd.f32 0.0, %v2118
  %v2120 = vpop.f32.mrf.mxu0
  %v2121 = vadd.f32 0.0, %v2120
  %2122 = vmatmul.bf16.gmra.mxu0 %v1623
  %v2123 = vpop.f32.mrf.mxu0
  %v2124 = vadd.f32 0.0, %v2123
  %v2125 = vpop.f32.mrf.mxu0
  %v2126 = vadd.f32 0.0, %v2125
  %2127 = vmatmul.bf16.gmra.mxu0 %v1626
  %v2128 = vpop.f32.mrf.mxu0
  %v2129 = vadd.f32 0.0, %v2128
  %v2130 = vpop.f32.mrf.mxu0
  %v2131 = vadd.f32 0.0, %v2130
  %2132 = vmatmul.bf16.gmra.mxu0 %v1629
  %v2133 = vpop.f32.mrf.mxu0
  %v2134 = vadd.f32 0.0, %v2133
  %v2135 = vpop.f32.mrf.mxu0
  %v2136 = vadd.f32 0.0, %v2135
  %2137 = vmatmul.bf16.gmra.mxu0 %v1632
  %v2138 = vpop.f32.mrf.mxu0
  %v2139 = vadd.f32 0.0, %v2138
  %v2140 = vpop.f32.mrf.mxu0
  %v2141 = vadd.f32 0.0, %v2140
  %2142 = vmatmul.bf16.gmra.mxu0 %v1635
  %v2143 = vpop.f32.mrf.mxu0
  %v2144 = vadd.f32 0.0, %v2143
  %v2145 = vpop.f32.mrf.mxu0
  %v2146 = vadd.f32 0.0, %v2145
  %2147 = vmatmul.bf16.gmra.mxu0 %v1638
  %v2148 = vpop.f32.mrf.mxu0
  %v2149 = vadd.f32 0.0, %v2148
  %v2150 = vpop.f32.mrf.mxu0
  %v2151 = vadd.f32 0.0, %v2150
  %2152 = vmatmul.bf16.gmra.mxu0 %v1641
  %v2153 = vpop.f32.mrf.mxu0
  %v2154 = vadd.f32 0.0, %v2153
  %v2155 = vpop.f32.mrf.mxu0
  %v2156 = vadd.f32 0.0, %v2155
  %2157 = vmatmul.bf16.gmra.mxu0 %v1644
  %v2158 = vpop.f32.mrf.mxu0
  %v2159 = vadd.f32 0.0, %v2158
  %v2160 = vpop.f32.mrf.mxu0
  %v2161 = vadd.f32 0.0, %v2160
  %2162 = vmatmul.bf16.gmra.mxu0 %v1647
  %v2163 = vpop.f32.mrf.mxu0
  %v2164 = vadd.f32 0.0, %v2163
  %v2165 = vpop.f32.mrf.mxu0
  %v2166 = vadd.f32 0.0, %v2165
  %2167 = vmatmul.bf16.gmra.mxu0 %v1650
  %v2168 = vpop.f32.mrf.mxu0
  %v2169 = vadd.f32 0.0, %v2168
  %v2170 = vpop.f32.mrf.mxu0
  %v2171 = vadd.f32 0.0, %v2170
  %2172 = vmatmul.bf16.gmra.mxu0 %v1653
  %v2173 = vpop.f32.mrf.mxu0
  %v2174 = vadd.f32 0.0, %v2173
  %v2175 = vpop.f32.mrf.mxu0
  %v2176 = vadd.f32 0.0, %v2175
  %2177 = vmatmul.bf16.gmra.mxu0 %v1656
  %v2178 = vpop.f32.mrf.mxu0
  %v2179 = vadd.f32 0.0, %v2178
  %v2180 = vpop.f32.mrf.mxu0
  %v2181 = vadd.f32 0.0, %v2180
  %2182 = vmatmul.bf16.gmra.mxu0 %v1659
  %v2183 = vpop.f32.mrf.mxu0
  %v2184 = vadd.f32 0.0, %v2183
  %v2185 = vpop.f32.mrf.mxu0
  %v2186 = vadd.f32 0.0, %v2185
  %2187 = vmatmul.bf16.gmra.mxu0 %v1662
  %v2188 = vpop.f32.mrf.mxu0
  %v2189 = vadd.f32 0.0, %v2188
  %v2190 = vpop.f32.mrf.mxu0
  %v2191 = vadd.f32 0.0, %v2190
  %2192 = vmatmul.bf16.gmra.mxu0 %v1665
  %v2193 = vpop.f32.mrf.mxu0
  %v2194 = vadd.f32 0.0, %v2193
  %v2195 = vpop.f32.mrf.mxu0
  %v2196 = vadd.f32 0.0, %v2195
  %2197 = vmatmul.bf16.gmra.mxu0 %v1668
  %v2198 = vpop.f32.mrf.mxu0
  %v2199 = vadd.f32 0.0, %v2198
  %v2200 = vpop.f32.mrf.mxu0
  %v2201 = vadd.f32 0.0, %v2200
  %2202 = vmatmul.bf16.gmra.mxu0 %v1671
  %v2203 = vpop.f32.mrf.mxu0
  %v2204 = vadd.f32 0.0, %v2203
  %v2205 = vpop.f32.mrf.mxu0
  %v2206 = vadd.f32 0.0, %v2205
  %2207 = vmatmul.bf16.gmra.mxu0 %v1674
  %v2208 = vpop.f32.mrf.mxu0
  %v2209 = vadd.f32 0.0, %v2208
  %v2210 = vpop.f32.mrf.mxu0
  %v2211 = vadd.f32 0.0, %v2210
  %2212 = vmatmul.bf16.gmra.mxu0 %v1677
  %v2213 = vpop.f32.mrf.mxu0
  %v2214 = vadd.f32 0.0, %v2213
  %v2215 = vpop.f32.mrf.mxu0
  %v2216 = vadd.f32 0.0, %v2215
  %2217 = vmatmul.bf16.gmra.mxu0 %v1680
  %v2218 = vpop.f32.mrf.mxu0
  %v2219 = vadd.f32 0.0, %v2218
  %v2220 = vpop.f32.mrf.mxu0
  %v2221 = vadd.f32 0.0, %v2220
  %2222 = vmatmul.bf16.gmra.mxu0 %v1683
  %v2223 = vpop.f32.mrf.mxu0
  %v2224 = vadd.f32 0.0, %v2223
  %v2225 = vpop.f32.mrf.mxu0
  %v2226 = vadd.f32 0.0, %v2225
  %2227 = vmatmul.bf16.gmra.mxu0 %v1686
  %v2228 = vpop.f32.mrf.mxu0
  %v2229 = vadd.f32 0.0, %v2228
  %v2230 = vpop.f32.mrf.mxu0
  %v2231 = vadd.f32 0.0, %v2230
  %2232 = vmatmul.bf16.gmra.mxu0 %v1689
  %v2233 = vpop.f32.mrf.mxu0
  %v2234 = vadd.f32 0.0, %v2233
  %v2235 = vpop.f32.mrf.mxu0
  %v2236 = vadd.f32 0.0, %v2235
  %2237 = vmatmul.bf16.gmra.mxu0 %v1692
  %v2238 = vpop.f32.mrf.mxu0
  %v2239 = vadd.f32 0.0, %v2238
  %v2240 = vpop.f32.mrf.mxu0
  %v2241 = vadd.f32 0.0, %v2240
  %2242 = vmatmul.bf16.gmra.mxu0 %v1695
  %v2243 = vpop.f32.mrf.mxu0
  %v2244 = vadd.f32 0.0, %v2243
  %v2245 = vpop.f32.mrf.mxu0
  %v2246 = vadd.f32 0.0, %v2245
  %2247 = vmatmul.bf16.gmra.mxu0 %v1698
  %v2248 = vpop.f32.mrf.mxu0
  %v2249 = vadd.f32 0.0, %v2248
  %v2250 = vpop.f32.mrf.mxu0
  %v2251 = vadd.f32 0.0, %v2250
  %2252 = vmatmul.bf16.gmra.mxu0 %v1701
  %v2253 = vpop.f32.mrf.mxu0
  %v2254 = vadd.f32 0.0, %v2253
  %v2255 = vpop.f32.mrf.mxu0
  %v2256 = vadd.f32 0.0, %v2255
  %2257 = vmatmul.bf16.gmra.mxu0 %v1704
  %v2258 = vpop.f32.mrf.mxu0
  %v2259 = vadd.f32 0.0, %v2258
  %v2260 = vpop.f32.mrf.mxu0
  %v2261 = vadd.f32 0.0, %v2260
  %2262 = vmatmul.bf16.gmra.mxu0 %v1707
  %v2263 = vpop.f32.mrf.mxu0
  %v2264 = vadd.f32 0.0, %v2263
  %v2265 = vpop.f32.mrf.mxu0
  %v2266 = vadd.f32 0.0, %v2265
  %2267 = vmatmul.bf16.gmra.mxu0 %v1710
  %v2268 = vpop.f32.mrf.mxu0
  %v2269 = vadd.f32 0.0, %v2268
  %v2270 = vpop.f32.mrf.mxu0
  %v2271 = vadd.f32 0.0, %v2270
  %2272 = vmatmul.bf16.gmra.mxu0 %v1713
  %v2273 = vpop.f32.mrf.mxu0
  %v2274 = vadd.f32 0.0, %v2273
  %v2275 = vpop.f32.mrf.mxu0
  %v2276 = vadd.f32 0.0, %v2275
  %2277 = vmatmul.bf16.gmra.mxu0 %v1716
  %v2278 = vpop.f32.mrf.mxu0
  %v2279 = vadd.f32 0.0, %v2278
  %v2280 = vpop.f32.mrf.mxu0
  %v2281 = vadd.f32 0.0, %v2280
  %2282 = vmatmul.bf16.gmra.mxu0 %v1719
  %v2283 = vpop.f32.mrf.mxu0
  %v2284 = vadd.f32 0.0, %v2283
  %v2285 = vpop.f32.mrf.mxu0
  %v2286 = vadd.f32 0.0, %v2285
  %2287 = vmatmul.bf16.gmra.mxu0 %v1722
  %v2288 = vpop.f32.mrf.mxu0
  %v2289 = vadd.f32 0.0, %v2288
  %v2290 = vpop.f32.mrf.mxu0
  %v2291 = vadd.f32 0.0, %v2290
  %2292 = vmatmul.bf16.gmra.mxu0 %v1725
  %v2293 = vpop.f32.mrf.mxu0
  %v2294 = vadd.f32 0.0, %v2293
  %v2295 = vpop.f32.mrf.mxu0
  %v2296 = vadd.f32 0.0, %v2295
  %2297 = vmatmul.bf16.gmra.mxu0 %v1728
  %v2298 = vpop.f32.mrf.mxu0
  %v2299 = vadd.f32 0.0, %v2298
  %v2300 = vpop.f32.mrf.mxu0
  %v2301 = vadd.f32 0.0, %v2300
  %2302 = vmatmul.bf16.gmra.mxu0 %v1731
  %v2303 = vpop.f32.mrf.mxu0
  %v2304 = vadd.f32 0.0, %v2303
  %v2305 = vpop.f32.mrf.mxu0
  %v2306 = vadd.f32 0.0, %v2305
  %2307 = vmatmul.bf16.gmra.mxu0 %v1734
  %v2308 = vpop.f32.mrf.mxu0
  %v2309 = vadd.f32 0.0, %v2308
  %v2310 = vpop.f32.mrf.mxu0
  %v2311 = vadd.f32 0.0, %v2310
  %2312 = vmatmul.bf16.gmra.mxu0 %v1737
  %v2313 = vpop.f32.mrf.mxu0
  %v2314 = vadd.f32 0.0, %v2313
  %v2315 = vpop.f32.mrf.mxu0
  %v2316 = vadd.f32 0.0, %v2315
  %2317 = vmatmul.bf16.gmra.mxu0 %v1740
  %v2318 = vpop.f32.mrf.mxu0
  %v2319 = vadd.f32 0.0, %v2318
  %v2320 = vpop.f32.mrf.mxu0
  %v2321 = vadd.f32 0.0, %v2320
  %2322 = vmatmul.bf16.gmra.mxu0 %v1743
  %v2323 = vpop.f32.mrf.mxu0
  %v2324 = vadd.f32 0.0, %v2323
  %v2325 = vpop.f32.mrf.mxu0
  %v2326 = vadd.f32 0.0, %v2325
  %2327 = vmatmul.bf16.gmra.mxu0 %v1746
  %v2328 = vpop.f32.mrf.mxu0
  %v2329 = vadd.f32 0.0, %v2328
  %v2330 = vpop.f32.mrf.mxu0
  %v2331 = vadd.f32 0.0, %v2330
  %2332 = vmatmul.bf16.gmra.mxu0 %v1749
  %v2333 = vpop.f32.mrf.mxu0
  %v2334 = vadd.f32 0.0, %v2333
  %v2335 = vpop.f32.mrf.mxu0
  %v2336 = vadd.f32 0.0, %v2335
  %2337 = vmatmul.bf16.gmra.mxu0 %v1752
  %v2338 = vpop.f32.mrf.mxu0
  %v2339 = vadd.f32 0.0, %v2338
  %v2340 = vpop.f32.mrf.mxu0
  %v2341 = vadd.f32 0.0, %v2340
  %2342 = vmatmul.bf16.gmra.mxu0 %v1755
  %v2343 = vpop.f32.mrf.mxu0
  %v2344 = vadd.f32 0.0, %v2343
  %v2345 = vpop.f32.mrf.mxu0
  %v2346 = vadd.f32 0.0, %v2345
  %2347 = vmatmul.bf16.gmra.mxu0 %v1758
  %v2348 = vpop.f32.mrf.mxu0
  %v2349 = vadd.f32 0.0, %v2348
  %v2350 = vpop.f32.mrf.mxu0
  %v2351 = vadd.f32 0.0, %v2350
  %2352 = vmatmul.bf16.gmra.mxu0 %v1761
  %v2353 = vpop.f32.mrf.mxu0
  %v2354 = vadd.f32 0.0, %v2353
  %v2355 = vpop.f32.mrf.mxu0
  %v2356 = vadd.f32 0.0, %v2355
  %2357 = vmatmul.bf16.gmra.mxu0 %v1764
  %v2358 = vpop.f32.mrf.mxu0
  %v2359 = vadd.f32 0.0, %v2358
  %v2360 = vpop.f32.mrf.mxu0
  %v2361 = vadd.f32 0.0, %v2360
  %2362 = vmatmul.bf16.gmra.mxu0 %v1767
  %v2363 = vpop.f32.mrf.mxu0
  %v2364 = vadd.f32 0.0, %v2363
  %v2365 = vpop.f32.mrf.mxu0
  %v2366 = vadd.f32 0.0, %v2365
  %2367 = vmatmul.bf16.gmra.mxu0 %v1770
  %v2368 = vpop.f32.mrf.mxu0
  %v2369 = vadd.f32 0.0, %v2368
  %v2370 = vpop.f32.mrf.mxu0
  %v2371 = vadd.f32 0.0, %v2370
  %2372 = vmatmul.bf16.gmra.mxu0 %v1773
  %v2373 = vpop.f32.mrf.mxu0
  %v2374 = vadd.f32 0.0, %v2373
  %v2375 = vpop.f32.mrf.mxu0
  %v2376 = vadd.f32 0.0, %v2375
  %2377 = vmatmul.bf16.gmra.mxu0 %v1776
  %v2378 = vpop.f32.mrf.mxu0
  %v2379 = vadd.f32 0.0, %v2378
  %v2380 = vpop.f32.mrf.mxu0
  %v2381 = vadd.f32 0.0, %v2380
  %2382 = vmatmul.bf16.gmra.mxu0 %v1779
  %v2383 = vpop.f32.mrf.mxu0
  %v2384 = vadd.f32 0.0, %v2383
  %v2385 = vpop.f32.mrf.mxu0
  %v2386 = vadd.f32 0.0, %v2385
  %2387 = vmatmul.bf16.gmra.mxu0 %v1782
  %v2388 = vpop.f32.mrf.mxu0
  %v2389 = vadd.f32 0.0, %v2388
  %v2390 = vpop.f32.mrf.mxu0
  %v2391 = vadd.f32 0.0, %v2390
  %2392 = vmatmul.bf16.gmra.mxu0 %v1785
  %v2393 = vpop.f32.mrf.mxu0
  %v2394 = vadd.f32 0.0, %v2393
  %v2395 = vpop.f32.mrf.mxu0
  %v2396 = vadd.f32 0.0, %v2395
  %2397 = vmatmul.bf16.gmra.mxu0 %v1788
  %v2398 = vpop.f32.mrf.mxu0
  %v2399 = vadd.f32 0.0, %v2398
  %v2400 = vpop.f32.mrf.mxu0
  %v2401 = vadd.f32 0.0, %v2400
  %2402 = vmatmul.bf16.gmra.mxu0 %v1791
  %v2403 = vpop.f32.mrf.mxu0
  %v2404 = vadd.f32 0.0, %v2403
  %v2405 = vpop.f32.mrf.mxu0
  %v2406 = vadd.f32 0.0, %v2405
  %2407 = vmatmul.bf16.gmra.mxu0 %v1794
  %v2408 = vpop.f32.mrf.mxu0
  %v2409 = vadd.f32 0.0, %v2408
  %v2410 = vpop.f32.mrf.mxu0
  %v2411 = vadd.f32 0.0, %v2410
  %2412 = vmatmul.bf16.gmra.mxu0 %v1797
  %v2413 = vpop.f32.mrf.mxu0
  %v2414 = vadd.f32 0.0, %v2413
  %v2415 = vpop.f32.mrf.mxu0
  %v2416 = vadd.f32 0.0, %v2415
  %2417 = vmatmul.bf16.gmra.mxu0 %v1800
  %v2418 = vpop.f32.mrf.mxu0
  %v2419 = vadd.f32 0.0, %v2418
  %v2420 = vpop.f32.mrf.mxu0
  %v2421 = vadd.f32 0.0, %v2420
  %2422 = vmatmul.bf16.gmra.mxu0 %v1803
  %v2423 = vpop.f32.mrf.mxu0
  %v2424 = vadd.f32 0.0, %v2423
  %v2425 = vpop.f32.mrf.mxu0
  %v2426 = vadd.f32 0.0, %v2425
  %2427 = vmatmul.bf16.gmra.mxu0 %v1806
  %v2428 = vpop.f32.mrf.mxu0
  %v2429 = vadd.f32 0.0, %v2428
  %v2430 = vpop.f32.mrf.mxu0
  %v2431 = vadd.f32 0.0, %v2430
  %2432 = vmatmul.bf16.gmra.mxu0 %v1809
  %v2433 = vpop.f32.mrf.mxu0
  %v2434 = vadd.f32 0.0, %v2433
  %v2435 = vpop.f32.mrf.mxu0
  %v2436 = vadd.f32 0.0, %v2435
  %2437 = vmatmul.bf16.gmra.mxu0 %v1812
  %v2438 = vpop.f32.mrf.mxu0
  %v2439 = vadd.f32 0.0, %v2438
  %v2440 = vpop.f32.mrf.mxu0
  %v2441 = vadd.f32 0.0, %v2440
  %2442 = vmatmul.bf16.gmra.mxu0 %v1815
  %v2443 = vpop.f32.mrf.mxu0
  %v2444 = vadd.f32 0.0, %v2443
  %v2445 = vpop.f32.mrf.mxu0
  %v2446 = vadd.f32 0.0, %v2445
  %2447 = vmatmul.bf16.gmra.mxu0 %v1818
  %v2448 = vpop.f32.mrf.mxu0
  %v2449 = vadd.f32 0.0, %v2448
  %v2450 = vpop.f32.mrf.mxu0
  %v2451 = vadd.f32 0.0, %v2450
  %2452 = vmatmul.bf16.gmra.mxu0 %v1821
  %v2453 = vpop.f32.mrf.mxu0
  %v2454 = vadd.f32 0.0, %v2453
  %v2455 = vpop.f32.mrf.mxu0
  %v2456 = vadd.f32 0.0, %v2455
  %2457 = vmatmul.bf16.gmra.mxu0 %v1824
  %v2458 = vpop.f32.mrf.mxu0
  %v2459 = vadd.f32 0.0, %v2458
  %v2460 = vpop.f32.mrf.mxu0
  %v2461 = vadd.f32 0.0, %v2460
  %2462 = vmatmul.bf16.gmra.mxu0 %v1827
  %v2463 = vpop.f32.mrf.mxu0
  %v2464 = vadd.f32 0.0, %v2463
  %v2465 = vpop.f32.mrf.mxu0
  %v2466 = vadd.f32 0.0, %v2465
  %2467 = vmatmul.bf16.gmra.mxu0 %v1830
  %v2468 = vpop.f32.mrf.mxu0
  %v2469 = vadd.f32 0.0, %v2468
  %v2470 = vpop.f32.mrf.mxu0
  %v2471 = vadd.f32 0.0, %v2470
  %2472 = vmatmul.bf16.gmra.mxu0 %v1833
  %v2473 = vpop.f32.mrf.mxu0
  %v2474 = vadd.f32 0.0, %v2473
  %v2475 = vpop.f32.mrf.mxu0
  %v2476 = vadd.f32 0.0, %v2475
  %2477 = vmatmul.bf16.gmra.mxu0 %v1836
  %v2478 = vpop.f32.mrf.mxu0
  %v2479 = vadd.f32 0.0, %v2478
  %v2480 = vpop.f32.mrf.mxu0
  %v2481 = vadd.f32 0.0, %v2480
  %2482 = vmatmul.bf16.gmra.mxu0 %v1839
  %v2483 = vpop.f32.mrf.mxu0
  %v2484 = vadd.f32 0.0, %v2483
  %v2485 = vpop.f32.mrf.mxu0
  %v2486 = vadd.f32 0.0, %v2485
  %2487 = vmatmul.bf16.gmra.mxu0 %v1842
  %v2488 = vpop.f32.mrf.mxu0
  %v2489 = vadd.f32 0.0, %v2488
  %v2490 = vpop.f32.mrf.mxu0
  %v2491 = vadd.f32 0.0, %v2490
  %2492 = vdwg.mxu0
  %v2493 = vadd.f32 %v275, %v1854
  %v2494 = vadd.f32 %v276, %v1856
  %v2495 = vadd.f32 %v277, %v1859
  %v2496 = vadd.f32 %v278, %v1861
  %v2497 = vadd.f32 %v279, %v1864
  %v2498 = vadd.f32 %v280, %v1866
  %v2499 = vadd.f32 %v281, %v1869
  %v2500 = vadd.f32 %v282, %v1871
  %v2501 = vadd.f32 %v283, %v1874
  %v2502 = vadd.f32 %v284, %v1876
  %v2503 = vadd.f32 %v285, %v1879
  %v2504 = vadd.f32 %v286, %v1881
  %v2505 = vadd.f32 %v287, %v1884
  %v2506 = vadd.f32 %v288, %v1886
  %v2507 = vadd.f32 %v289, %v1889
  %v2508 = vadd.f32 %v290, %v1891
  %v2509 = vadd.f32 %v291, %v1894
  %v2510 = vadd.f32 %v292, %v1896
  %v2511 = vadd.f32 %v293, %v1899
  %v2512 = vadd.f32 %v294, %v1901
  %v2513 = vadd.f32 %v295, %v1904
  %v2514 = vadd.f32 %v296, %v1906
  %v2515 = vadd.f32 %v297, %v1909
  %v2516 = vadd.f32 %v298, %v1911
  %v2517 = vadd.f32 %v299, %v1914
  %v2518 = vadd.f32 %v300, %v1916
  %v2519 = vadd.f32 %v301, %v1919
  %v2520 = vadd.f32 %v302, %v1921
  %v2521 = vadd.f32 %v303, %v1924
  %v2522 = vadd.f32 %v304, %v1926
  %v2523 = vadd.f32 %v305, %v1929
  %v2524 = vadd.f32 %v306, %v1931
  %v2525 = vadd.f32 %v307, %v1934
  %v2526 = vadd.f32 %v308, %v1936
  %v2527 = vadd.f32 %v309, %v1939
  %v2528 = vadd.f32 %v310, %v1941
  %v2529 = vadd.f32 %v311, %v1944
  %v2530 = vadd.f32 %v312, %v1946
  %v2531 = vadd.f32 %v313, %v1949
  %v2532 = vadd.f32 %v314, %v1951
  %v2533 = vadd.f32 %v315, %v1954
  %v2534 = vadd.f32 %v316, %v1956
  %v2535 = vadd.f32 %v317, %v1959
  %v2536 = vadd.f32 %v318, %v1961
  %v2537 = vadd.f32 %v319, %v1964
  %v2538 = vadd.f32 %v320, %v1966
  %v2539 = vadd.f32 %v321, %v1969
  %v2540 = vadd.f32 %v322, %v1971
  %v2541 = vadd.f32 %v323, %v1974
  %v2542 = vadd.f32 %v324, %v1976
  %v2543 = vadd.f32 %v325, %v1979
  %v2544 = vadd.f32 %v326, %v1981
  %v2545 = vadd.f32 %v327, %v1984
  %v2546 = vadd.f32 %v328, %v1986
  %v2547 = vadd.f32 %v329, %v1989
  %v2548 = vadd.f32 %v330, %v1991
  %v2549 = vadd.f32 %v331, %v1994
  %v2550 = vadd.f32 %v332, %v1996
  %v2551 = vadd.f32 %v333, %v1999
  %v2552 = vadd.f32 %v334, %v2001
  %v2553 = vadd.f32 %v335, %v2004
  %v2554 = vadd.f32 %v336, %v2006
  %v2555 = vadd.f32 %v337, %v2009
  %v2556 = vadd.f32 %v338, %v2011
  %v2557 = vadd.f32 %v339, %v2014
  %v2558 = vadd.f32 %v340, %v2016
  %v2559 = vadd.f32 %v341, %v2019
  %v2560 = vadd.f32 %v342, %v2021
  %v2561 = vadd.f32 %v343, %v2024
  %v2562 = vadd.f32 %v344, %v2026
  %v2563 = vadd.f32 %v345, %v2029
  %v2564 = vadd.f32 %v346, %v2031
  %v2565 = vadd.f32 %v347, %v2034
  %v2566 = vadd.f32 %v348, %v2036
  %v2567 = vadd.f32 %v349, %v2039
  %v2568 = vadd.f32 %v350, %v2041
  %v2569 = vadd.f32 %v351, %v2044
  %v2570 = vadd.f32 %v352, %v2046
  %v2571 = vadd.f32 %v353, %v2049
  %v2572 = vadd.f32 %v354, %v2051
  %v2573 = vadd.f32 %v355, %v2054
  %v2574 = vadd.f32 %v356, %v2056
  %v2575 = vadd.f32 %v357, %v2059
  %v2576 = vadd.f32 %v358, %v2061
  %v2577 = vadd.f32 %v359, %v2064
  %v2578 = vadd.f32 %v360, %v2066
  %v2579 = vadd.f32 %v361, %v2069
  %v2580 = vadd.f32 %v362, %v2071
  %v2581 = vadd.f32 %v363, %v2074
  %v2582 = vadd.f32 %v364, %v2076
  %v2583 = vadd.f32 %v365, %v2079
  %v2584 = vadd.f32 %v366, %v2081
  %v2585 = vadd.f32 %v367, %v2084
  %v2586 = vadd.f32 %v368, %v2086
  %v2587 = vadd.f32 %v369, %v2089
  %v2588 = vadd.f32 %v370, %v2091
  %v2589 = vadd.f32 %v371, %v2094
  %v2590 = vadd.f32 %v372, %v2096
  %v2591 = vadd.f32 %v373, %v2099
  %v2592 = vadd.f32 %v374, %v2101
  %v2593 = vadd.f32 %v375, %v2104
  %v2594 = vadd.f32 %v376, %v2106
  %v2595 = vadd.f32 %v377, %v2109
  %v2596 = vadd.f32 %v378, %v2111
  %v2597 = vadd.f32 %v379, %v2114
  %v2598 = vadd.f32 %v380, %v2116
  %v2599 = vadd.f32 %v381, %v2119
  %v2600 = vadd.f32 %v382, %v2121
  %v2601 = vadd.f32 %v383, %v2124
  %v2602 = vadd.f32 %v384, %v2126
  %v2603 = vadd.f32 %v385, %v2129
  %v2604 = vadd.f32 %v386, %v2131
  %v2605 = vadd.f32 %v387, %v2134
  %v2606 = vadd.f32 %v388, %v2136
  %v2607 = vadd.f32 %v389, %v2139
  %v2608 = vadd.f32 %v390, %v2141
  %v2609 = vadd.f32 %v391, %v2144
  %v2610 = vadd.f32 %v392, %v2146
  %v2611 = vadd.f32 %v393, %v2149
  %v2612 = vadd.f32 %v394, %v2151
  %v2613 = vadd.f32 %v395, %v2154
  %v2614 = vadd.f32 %v396, %v2156
  %v2615 = vadd.f32 %v397, %v2159
  %v2616 = vadd.f32 %v398, %v2161
  %v2617 = vadd.f32 %v399, %v2164
  %v2618 = vadd.f32 %v400, %v2166
  %v2619 = vadd.f32 %v401, %v2169
  %v2620 = vadd.f32 %v402, %v2171
  %v2621 = vadd.f32 %v403, %v2174
  %v2622 = vadd.f32 %v404, %v2176
  %v2623 = vadd.f32 %v405, %v2179
  %v2624 = vadd.f32 %v406, %v2181
  %v2625 = vadd.f32 %v407, %v2184
  %v2626 = vadd.f32 %v408, %v2186
  %v2627 = vadd.f32 %v409, %v2189
  %v2628 = vadd.f32 %v410, %v2191
  %v2629 = vadd.f32 %v411, %v2194
  %v2630 = vadd.f32 %v412, %v2196
  %v2631 = vadd.f32 %v413, %v2199
  %v2632 = vadd.f32 %v414, %v2201
  %v2633 = vadd.f32 %v415, %v2204
  %v2634 = vadd.f32 %v416, %v2206
  %v2635 = vadd.f32 %v417, %v2209
  %v2636 = vadd.f32 %v418, %v2211
  %v2637 = vadd.f32 %v419, %v2214
  %v2638 = vadd.f32 %v420, %v2216
  %v2639 = vadd.f32 %v421, %v2219
  %v2640 = vadd.f32 %v422, %v2221
  %v2641 = vadd.f32 %v423, %v2224
  %v2642 = vadd.f32 %v424, %v2226
  %v2643 = vadd.f32 %v425, %v2229
  %v2644 = vadd.f32 %v426, %v2231
  %v2645 = vadd.f32 %v427, %v2234
  %v2646 = vadd.f32 %v428, %v2236
  %v2647 = vadd.f32 %v429, %v2239
  %v2648 = vadd.f32 %v430, %v2241
  %v2649 = vadd.f32 %v431, %v2244
  %v2650 = vadd.f32 %v432, %v2246
  %v2651 = vadd.f32 %v433, %v2249
  %v2652 = vadd.f32 %v434, %v2251
  %v2653 = vadd.f32 %v435, %v2254
  %v2654 = vadd.f32 %v436, %v2256
  %v2655 = vadd.f32 %v437, %v2259
  %v2656 = vadd.f32 %v438, %v2261
  %v2657 = vadd.f32 %v439, %v2264
  %v2658 = vadd.f32 %v440, %v2266
  %v2659 = vadd.f32 %v441, %v2269
  %v2660 = vadd.f32 %v442, %v2271
  %v2661 = vadd.f32 %v443, %v2274
  %v2662 = vadd.f32 %v444, %v2276
  %v2663 = vadd.f32 %v445, %v2279
  %v2664 = vadd.f32 %v446, %v2281
  %v2665 = vadd.f32 %v447, %v2284
  %v2666 = vadd.f32 %v448, %v2286
  %v2667 = vadd.f32 %v449, %v2289
  %v2668 = vadd.f32 %v450, %v2291
  %v2669 = vadd.f32 %v451, %v2294
  %v2670 = vadd.f32 %v452, %v2296
  %v2671 = vadd.f32 %v453, %v2299
  %v2672 = vadd.f32 %v454, %v2301
  %v2673 = vadd.f32 %v455, %v2304
  %v2674 = vadd.f32 %v456, %v2306
  %v2675 = vadd.f32 %v457, %v2309
  %v2676 = vadd.f32 %v458, %v2311
  %v2677 = vadd.f32 %v459, %v2314
  %v2678 = vadd.f32 %v460, %v2316
  %v2679 = vadd.f32 %v461, %v2319
  %v2680 = vadd.f32 %v462, %v2321
  %v2681 = vadd.f32 %v463, %v2324
  %v2682 = vadd.f32 %v464, %v2326
  %v2683 = vadd.f32 %v465, %v2329
  %v2684 = vadd.f32 %v466, %v2331
  %v2685 = vadd.f32 %v467, %v2334
  %v2686 = vadd.f32 %v468, %v2336
  %v2687 = vadd.f32 %v469, %v2339
  %v2688 = vadd.f32 %v470, %v2341
  %v2689 = vadd.f32 %v471, %v2344
  %v2690 = vadd.f32 %v472, %v2346
  %v2691 = vadd.f32 %v473, %v2349
  %v2692 = vadd.f32 %v474, %v2351
  %v2693 = vadd.f32 %v475, %v2354
  %v2694 = vadd.f32 %v476, %v2356
  %v2695 = vadd.f32 %v477, %v2359
  %v2696 = vadd.f32 %v478, %v2361
  %v2697 = vadd.f32 %v479, %v2364
  %v2698 = vadd.f32 %v480, %v2366
  %v2699 = vadd.f32 %v481, %v2369
  %v2700 = vadd.f32 %v482, %v2371
  %v2701 = vadd.f32 %v483, %v2374
  %v2702 = vadd.f32 %v484, %v2376
  %v2703 = vadd.f32 %v485, %v2379
  %v2704 = vadd.f32 %v486, %v2381
  %v2705 = vadd.f32 %v487, %v2384
  %v2706 = vadd.f32 %v488, %v2386
  %v2707 = vadd.f32 %v489, %v2389
  %v2708 = vadd.f32 %v490, %v2391
  %v2709 = vadd.f32 %v491, %v2394
  %v2710 = vadd.f32 %v492, %v2396
  %v2711 = vadd.f32 %v493, %v2399
  %v2712 = vadd.f32 %v494, %v2401
  %v2713 = vadd.f32 %v495, %v2404
  %v2714 = vadd.f32 %v496, %v2406
  %v2715 = vadd.f32 %v497, %v2409
  %v2716 = vadd.f32 %v498, %v2411
  %v2717 = vadd.f32 %v499, %v2414
  %v2718 = vadd.f32 %v500, %v2416
  %v2719 = vadd.f32 %v501, %v2419
  %v2720 = vadd.f32 %v502, %v2421
  %v2721 = vadd.f32 %v503, %v2424
  %v2722 = vadd.f32 %v504, %v2426
  %v2723 = vadd.f32 %v505, %v2429
  %v2724 = vadd.f32 %v506, %v2431
  %v2725 = vadd.f32 %v507, %v2434
  %v2726 = vadd.f32 %v508, %v2436
  %v2727 = vadd.f32 %v509, %v2439
  %v2728 = vadd.f32 %v510, %v2441
  %v2729 = vadd.f32 %v511, %v2444
  %v2730 = vadd.f32 %v512, %v2446
  %v2731 = vadd.f32 %v513, %v2449
  %v2732 = vadd.f32 %v514, %v2451
  %v2733 = vadd.f32 %v515, %v2454
  %v2734 = vadd.f32 %v516, %v2456
  %v2735 = vadd.f32 %v517, %v2459
  %v2736 = vadd.f32 %v518, %v2461
  %v2737 = vadd.f32 %v519, %v2464
  %v2738 = vadd.f32 %v520, %v2466
  %v2739 = vadd.f32 %v521, %v2469
  %v2740 = vadd.f32 %v522, %v2471
  %v2741 = vadd.f32 %v523, %v2474
  %v2742 = vadd.f32 %v524, %v2476
  %v2743 = vadd.f32 %v525, %v2479
  %v2744 = vadd.f32 %v526, %v2481
  %v2745 = vadd.f32 %v527, %v2484
  %v2746 = vadd.f32 %v528, %v2486
  %v2747 = vadd.f32 %v529, %v2489
  %v2748 = vadd.f32 %v530, %v2491
  %2749 = vst [vmem:[#allocation2] sm:$0xff] %v2493
  %2750 = vst [vmem:[#allocation2 + $0x8] sm:$0xff] %v2494
  %2751 = vst [vmem:[#allocation2 + $0x10] sm:$0xff] %v2495
  %2752 = vst [vmem:[#allocation2 + $0x18] sm:$0xff] %v2496
  %2753 = vst [vmem:[#allocation2 + $0x20] sm:$0xff] %v2497
  %2754 = vst [vmem:[#allocation2 + $0x28] sm:$0xff] %v2498
  %2755 = vst [vmem:[#allocation2 + $0x30] sm:$0xff] %v2499
  %2756 = vst [vmem:[#allocation2 + $0x38] sm:$0xff] %v2500
  %2757 = vst [vmem:[#allocation2 + $0x40] sm:$0xff] %v2501
  %2758 = vst [vmem:[#allocation2 + $0x48] sm:$0xff] %v2502
  %2759 = vst [vmem:[#allocation2 + $0x50] sm:$0xff] %v2503
  %2760 = vst [vmem:[#allocation2 + $0x58] sm:$0xff] %v2504
  %2761 = vst [vmem:[#allocation2 + $0x60] sm:$0xff] %v2505
  %2762 = vst [vmem:[#allocation2 + $0x68] sm:$0xff] %v2506
  %2763 = vst [vmem:[#allocation2 + $0x70] sm:$0xff] %v2507
  %2764 = vst [vmem:[#allocation2 + $0x78] sm:$0xff] %v2508
  %2765 = vst [vmem:[#allocation2 + $0x80] sm:$0xff] %v2509
  %2766 = vst [vmem:[#allocation2 + $0x88] sm:$0xff] %v2510
  %2767 = vst [vmem:[#allocation2 + $0x90] sm:$0xff] %v2511
  %2768 = vst [vmem:[#allocation2 + $0x98] sm:$0xff] %v2512
  %2769 = vst [vmem:[#allocation2 + $0xa0] sm:$0xff] %v2513
  %2770 = vst [vmem:[#allocation2 + $0xa8] sm:$0xff] %v2514
  %2771 = vst [vmem:[#allocation2 + $0xb0] sm:$0xff] %v2515
  %2772 = vst [vmem:[#allocation2 + $0xb8] sm:$0xff] %v2516
  %2773 = vst [vmem:[#allocation2 + $0xc0] sm:$0xff] %v2517
  %2774 = vst [vmem:[#allocation2 + $0xc8] sm:$0xff] %v2518
  %2775 = vst [vmem:[#allocation2 + $0xd0] sm:$0xff] %v2519
  %2776 = vst [vmem:[#allocation2 + $0xd8] sm:$0xff] %v2520
  %2777 = vst [vmem:[#allocation2 + $0xe0] sm:$0xff] %v2521
  %2778 = vst [vmem:[#allocation2 + $0xe8] sm:$0xff] %v2522
  %2779 = vst [vmem:[#allocation2 + $0xf0] sm:$0xff] %v2523
  %2780 = vst [vmem:[#allocation2 + $0xf8] sm:$0xff] %v2524
  %2781 = vst [vmem:[#allocation2 + $0x100] sm:$0xff] %v2525
  %2782 = vst [vmem:[#allocation2 + $0x108] sm:$0xff] %v2526
  %2783 = vst [vmem:[#allocation2 + $0x110] sm:$0xff] %v2527
  %2784 = vst [vmem:[#allocation2 + $0x118] sm:$0xff] %v2528
  %2785 = vst [vmem:[#allocation2 + $0x120] sm:$0xff] %v2529
  %2786 = vst [vmem:[#allocation2 + $0x128] sm:$0xff] %v2530
  %2787 = vst [vmem:[#allocation2 + $0x130] sm:$0xff] %v2531
  %2788 = vst [vmem:[#allocation2 + $0x138] sm:$0xff] %v2532
  %2789 = vst [vmem:[#allocation2 + $0x140] sm:$0xff] %v2533
  %2790 = vst [vmem:[#allocation2 + $0x148] sm:$0xff] %v2534
  %2791 = vst [vmem:[#allocation2 + $0x150] sm:$0xff] %v2535
  %2792 = vst [vmem:[#allocation2 + $0x158] sm:$0xff] %v2536
  %2793 = vst [vmem:[#allocation2 + $0x160] sm:$0xff] %v2537
  %2794 = vst [vmem:[#allocation2 + $0x168] sm:$0xff] %v2538
  %2795 = vst [vmem:[#allocation2 + $0x170] sm:$0xff] %v2539
  %2796 = vst [vmem:[#allocation2 + $0x178] sm:$0xff] %v2540
  %2797 = vst [vmem:[#allocation2 + $0x180] sm:$0xff] %v2541
  %2798 = vst [vmem:[#allocation2 + $0x188] sm:$0xff] %v2542
  %2799 = vst [vmem:[#allocation2 + $0x190] sm:$0xff] %v2543
  %2800 = vst [vmem:[#allocation2 + $0x198] sm:$0xff] %v2544
  %2801 = vst [vmem:[#allocation2 + $0x1a0] sm:$0xff] %v2545
  %2802 = vst [vmem:[#allocation2 + $0x1a8] sm:$0xff] %v2546
  %2803 = vst [vmem:[#allocation2 + $0x1b0] sm:$0xff] %v2547
  %2804 = vst [vmem:[#allocation2 + $0x1b8] sm:$0xff] %v2548
  %2805 = vst [vmem:[#allocation2 + $0x1c0] sm:$0xff] %v2549
  %2806 = vst [vmem:[#allocation2 + $0x1c8] sm:$0xff] %v2550
  %2807 = vst [vmem:[#allocation2 + $0x1d0] sm:$0xff] %v2551
  %2808 = vst [vmem:[#allocation2 + $0x1d8] sm:$0xff] %v2552
  %2809 = vst [vmem:[#allocation2 + $0x1e0] sm:$0xff] %v2553
  %2810 = vst [vmem:[#allocation2 + $0x1e8] sm:$0xff] %v2554
  %2811 = vst [vmem:[#allocation2 + $0x1f0] sm:$0xff] %v2555
  %2812 = vst [vmem:[#allocation2 + $0x1f8] sm:$0xff] %v2556
  %2813 = vst [vmem:[#allocation2 + $0x200] sm:$0xff] %v2557
  %2814 = vst [vmem:[#allocation2 + $0x208] sm:$0xff] %v2558
  %2815 = vst [vmem:[#allocation2 + $0x210] sm:$0xff] %v2559
  %2816 = vst [vmem:[#allocation2 + $0x218] sm:$0xff] %v2560
  %2817 = vst [vmem:[#allocation2 + $0x220] sm:$0xff] %v2561
  %2818 = vst [vmem:[#allocation2 + $0x228] sm:$0xff] %v2562
  %2819 = vst [vmem:[#allocation2 + $0x230] sm:$0xff] %v2563
  %2820 = vst [vmem:[#allocation2 + $0x238] sm:$0xff] %v2564
  %2821 = vst [vmem:[#allocation2 + $0x240] sm:$0xff] %v2565
  %2822 = vst [vmem:[#allocation2 + $0x248] sm:$0xff] %v2566
  %2823 = vst [vmem:[#allocation2 + $0x250] sm:$0xff] %v2567
  %2824 = vst [vmem:[#allocation2 + $0x258] sm:$0xff] %v2568
  %2825 = vst [vmem:[#allocation2 + $0x260] sm:$0xff] %v2569
  %2826 = vst [vmem:[#allocation2 + $0x268] sm:$0xff] %v2570
  %2827 = vst [vmem:[#allocation2 + $0x270] sm:$0xff] %v2571
  %2828 = vst [vmem:[#allocation2 + $0x278] sm:$0xff] %v2572
  %2829 = vst [vmem:[#allocation2 + $0x280] sm:$0xff] %v2573
  %2830 = vst [vmem:[#allocation2 + $0x288] sm:$0xff] %v2574
  %2831 = vst [vmem:[#allocation2 + $0x290] sm:$0xff] %v2575
  %2832 = vst [vmem:[#allocation2 + $0x298] sm:$0xff] %v2576
  %2833 = vst [vmem:[#allocation2 + $0x2a0] sm:$0xff] %v2577
  %2834 = vst [vmem:[#allocation2 + $0x2a8] sm:$0xff] %v2578
  %2835 = vst [vmem:[#allocation2 + $0x2b0] sm:$0xff] %v2579
  %2836 = vst [vmem:[#allocation2 + $0x2b8] sm:$0xff] %v2580
  %2837 = vst [vmem:[#allocation2 + $0x2c0] sm:$0xff] %v2581
  %2838 = vst [vmem:[#allocation2 + $0x2c8] sm:$0xff] %v2582
  %2839 = vst [vmem:[#allocation2 + $0x2d0] sm:$0xff] %v2583
  %2840 = vst [vmem:[#allocation2 + $0x2d8] sm:$0xff] %v2584
  %2841 = vst [vmem:[#allocation2 + $0x2e0] sm:$0xff] %v2585
  %2842 = vst [vmem:[#allocation2 + $0x2e8] sm:$0xff] %v2586
  %2843 = vst [vmem:[#allocation2 + $0x2f0] sm:$0xff] %v2587
  %2844 = vst [vmem:[#allocation2 + $0x2f8] sm:$0xff] %v2588
  %2845 = vst [vmem:[#allocation2 + $0x300] sm:$0xff] %v2589
  %2846 = vst [vmem:[#allocation2 + $0x308] sm:$0xff] %v2590
  %2847 = vst [vmem:[#allocation2 + $0x310] sm:$0xff] %v2591
  %2848 = vst [vmem:[#allocation2 + $0x318] sm:$0xff] %v2592
  %2849 = vst [vmem:[#allocation2 + $0x320] sm:$0xff] %v2593
  %2850 = vst [vmem:[#allocation2 + $0x328] sm:$0xff] %v2594
  %2851 = vst [vmem:[#allocation2 + $0x330] sm:$0xff] %v2595
  %2852 = vst [vmem:[#allocation2 + $0x338] sm:$0xff] %v2596
  %2853 = vst [vmem:[#allocation2 + $0x340] sm:$0xff] %v2597
  %2854 = vst [vmem:[#allocation2 + $0x348] sm:$0xff] %v2598
  %2855 = vst [vmem:[#allocation2 + $0x350] sm:$0xff] %v2599
  %2856 = vst [vmem:[#allocation2 + $0x358] sm:$0xff] %v2600
  %2857 = vst [vmem:[#allocation2 + $0x360] sm:$0xff] %v2601
  %2858 = vst [vmem:[#allocation2 + $0x368] sm:$0xff] %v2602
  %2859 = vst [vmem:[#allocation2 + $0x370] sm:$0xff] %v2603
  %2860 = vst [vmem:[#allocation2 + $0x378] sm:$0xff] %v2604
  %2861 = vst [vmem:[#allocation2 + $0x380] sm:$0xff] %v2605
  %2862 = vst [vmem:[#allocation2 + $0x388] sm:$0xff] %v2606
  %2863 = vst [vmem:[#allocation2 + $0x390] sm:$0xff] %v2607
  %2864 = vst [vmem:[#allocation2 + $0x398] sm:$0xff] %v2608
  %2865 = vst [vmem:[#allocation2 + $0x3a0] sm:$0xff] %v2609
  %2866 = vst [vmem:[#allocation2 + $0x3a8] sm:$0xff] %v2610
  %2867 = vst [vmem:[#allocation2 + $0x3b0] sm:$0xff] %v2611
  %2868 = vst [vmem:[#allocation2 + $0x3b8] sm:$0xff] %v2612
  %2869 = vst [vmem:[#allocation2 + $0x3c0] sm:$0xff] %v2613
  %2870 = vst [vmem:[#allocation2 + $0x3c8] sm:$0xff] %v2614
  %2871 = vst [vmem:[#allocation2 + $0x3d0] sm:$0xff] %v2615
  %2872 = vst [vmem:[#allocation2 + $0x3d8] sm:$0xff] %v2616
  %2873 = vst [vmem:[#allocation2 + $0x3e0] sm:$0xff] %v2617
  %2874 = vst [vmem:[#allocation2 + $0x3e8] sm:$0xff] %v2618
  %2875 = vst [vmem:[#allocation2 + $0x3f0] sm:$0xff] %v2619
  %2876 = vst [vmem:[#allocation2 + $0x3f8] sm:$0xff] %v2620
  %2877 = vst [vmem:[#allocation2 + $0x400] sm:$0xff] %v2621
  %2878 = vst [vmem:[#allocation2 + $0x408] sm:$0xff] %v2622
  %2879 = vst [vmem:[#allocation2 + $0x410] sm:$0xff] %v2623
  %2880 = vst [vmem:[#allocation2 + $0x418] sm:$0xff] %v2624
  %2881 = vst [vmem:[#allocation2 + $0x420] sm:$0xff] %v2625
  %2882 = vst [vmem:[#allocation2 + $0x428] sm:$0xff] %v2626
  %2883 = vst [vmem:[#allocation2 + $0x430] sm:$0xff] %v2627
  %2884 = vst [vmem:[#allocation2 + $0x438] sm:$0xff] %v2628
  %2885 = vst [vmem:[#allocation2 + $0x440] sm:$0xff] %v2629
  %2886 = vst [vmem:[#allocation2 + $0x448] sm:$0xff] %v2630
  %2887 = vst [vmem:[#allocation2 + $0x450] sm:$0xff] %v2631
  %2888 = vst [vmem:[#allocation2 + $0x458] sm:$0xff] %v2632
  %2889 = vst [vmem:[#allocation2 + $0x460] sm:$0xff] %v2633
  %2890 = vst [vmem:[#allocation2 + $0x468] sm:$0xff] %v2634
  %2891 = vst [vmem:[#allocation2 + $0x470] sm:$0xff] %v2635
  %2892 = vst [vmem:[#allocation2 + $0x478] sm:$0xff] %v2636
  %2893 = vst [vmem:[#allocation2 + $0x480] sm:$0xff] %v2637
  %2894 = vst [vmem:[#allocation2 + $0x488] sm:$0xff] %v2638
  %2895 = vst [vmem:[#allocation2 + $0x490] sm:$0xff] %v2639
  %2896 = vst [vmem:[#allocation2 + $0x498] sm:$0xff] %v2640
  %2897 = vst [vmem:[#allocation2 + $0x4a0] sm:$0xff] %v2641
  %2898 = vst [vmem:[#allocation2 + $0x4a8] sm:$0xff] %v2642
  %2899 = vst [vmem:[#allocation2 + $0x4b0] sm:$0xff] %v2643
  %2900 = vst [vmem:[#allocation2 + $0x4b8] sm:$0xff] %v2644
  %2901 = vst [vmem:[#allocation2 + $0x4c0] sm:$0xff] %v2645
  %2902 = vst [vmem:[#allocation2 + $0x4c8] sm:$0xff] %v2646
  %2903 = vst [vmem:[#allocation2 + $0x4d0] sm:$0xff] %v2647
  %2904 = vst [vmem:[#allocation2 + $0x4d8] sm:$0xff] %v2648
  %2905 = vst [vmem:[#allocation2 + $0x4e0] sm:$0xff] %v2649
  %2906 = vst [vmem:[#allocation2 + $0x4e8] sm:$0xff] %v2650
  %2907 = vst [vmem:[#allocation2 + $0x4f0] sm:$0xff] %v2651
  %2908 = vst [vmem:[#allocation2 + $0x4f8] sm:$0xff] %v2652
  %2909 = vst [vmem:[#allocation2 + $0x500] sm:$0xff] %v2653
  %2910 = vst [vmem:[#allocation2 + $0x508] sm:$0xff] %v2654
  %2911 = vst [vmem:[#allocation2 + $0x510] sm:$0xff] %v2655
  %2912 = vst [vmem:[#allocation2 + $0x518] sm:$0xff] %v2656
  %2913 = vst [vmem:[#allocation2 + $0x520] sm:$0xff] %v2657
  %2914 = vst [vmem:[#allocation2 + $0x528] sm:$0xff] %v2658
  %2915 = vst [vmem:[#allocation2 + $0x530] sm:$0xff] %v2659
  %2916 = vst [vmem:[#allocation2 + $0x538] sm:$0xff] %v2660
  %2917 = vst [vmem:[#allocation2 + $0x540] sm:$0xff] %v2661
  %2918 = vst [vmem:[#allocation2 + $0x548] sm:$0xff] %v2662
  %2919 = vst [vmem:[#allocation2 + $0x550] sm:$0xff] %v2663
  %2920 = vst [vmem:[#allocation2 + $0x558] sm:$0xff] %v2664
  %2921 = vst [vmem:[#allocation2 + $0x560] sm:$0xff] %v2665
  %2922 = vst [vmem:[#allocation2 + $0x568] sm:$0xff] %v2666
  %2923 = vst [vmem:[#allocation2 + $0x570] sm:$0xff] %v2667
  %2924 = vst [vmem:[#allocation2 + $0x578] sm:$0xff] %v2668
  %2925 = vst [vmem:[#allocation2 + $0x580] sm:$0xff] %v2669
  %2926 = vst [vmem:[#allocation2 + $0x588] sm:$0xff] %v2670
  %2927 = vst [vmem:[#allocation2 + $0x590] sm:$0xff] %v2671
  %2928 = vst [vmem:[#allocation2 + $0x598] sm:$0xff] %v2672
  %2929 = vst [vmem:[#allocation2 + $0x5a0] sm:$0xff] %v2673
  %2930 = vst [vmem:[#allocation2 + $0x5a8] sm:$0xff] %v2674
  %2931 = vst [vmem:[#allocation2 + $0x5b0] sm:$0xff] %v2675
  %2932 = vst [vmem:[#allocation2 + $0x5b8] sm:$0xff] %v2676
  %2933 = vst [vmem:[#allocation2 + $0x5c0] sm:$0xff] %v2677
  %2934 = vst [vmem:[#allocation2 + $0x5c8] sm:$0xff] %v2678
  %2935 = vst [vmem:[#allocation2 + $0x5d0] sm:$0xff] %v2679
  %2936 = vst [vmem:[#allocation2 + $0x5d8] sm:$0xff] %v2680
  %2937 = vst [vmem:[#allocation2 + $0x5e0] sm:$0xff] %v2681
  %2938 = vst [vmem:[#allocation2 + $0x5e8] sm:$0xff] %v2682
  %2939 = vst [vmem:[#allocation2 + $0x5f0] sm:$0xff] %v2683
  %2940 = vst [vmem:[#allocation2 + $0x5f8] sm:$0xff] %v2684
  %2941 = vst [vmem:[#allocation2 + $0x600] sm:$0xff] %v2685
  %2942 = vst [vmem:[#allocation2 + $0x608] sm:$0xff] %v2686
  %2943 = vst [vmem:[#allocation2 + $0x610] sm:$0xff] %v2687
  %2944 = vst [vmem:[#allocation2 + $0x618] sm:$0xff] %v2688
  %2945 = vst [vmem:[#allocation2 + $0x620] sm:$0xff] %v2689
  %2946 = vst [vmem:[#allocation2 + $0x628] sm:$0xff] %v2690
  %2947 = vst [vmem:[#allocation2 + $0x630] sm:$0xff] %v2691
  %2948 = vst [vmem:[#allocation2 + $0x638] sm:$0xff] %v2692
  %2949 = vst [vmem:[#allocation2 + $0x640] sm:$0xff] %v2693
  %2950 = vst [vmem:[#allocation2 + $0x648] sm:$0xff] %v2694
  %2951 = vst [vmem:[#allocation2 + $0x650] sm:$0xff] %v2695
  %2952 = vst [vmem:[#allocation2 + $0x658] sm:$0xff] %v2696
  %2953 = vst [vmem:[#allocation2 + $0x660] sm:$0xff] %v2697
  %2954 = vst [vmem:[#allocation2 + $0x668] sm:$0xff] %v2698
  %2955 = vst [vmem:[#allocation2 + $0x670] sm:$0xff] %v2699
  %2956 = vst [vmem:[#allocation2 + $0x678] sm:$0xff] %v2700
  %2957 = vst [vmem:[#allocation2 + $0x680] sm:$0xff] %v2701
  %2958 = vst [vmem:[#allocation2 + $0x688] sm:$0xff] %v2702
  %2959 = vst [vmem:[#allocation2 + $0x690] sm:$0xff] %v2703
  %2960 = vst [vmem:[#allocation2 + $0x698] sm:$0xff] %v2704
  %2961 = vst [vmem:[#allocation2 + $0x6a0] sm:$0xff] %v2705
  %2962 = vst [vmem:[#allocation2 + $0x6a8] sm:$0xff] %v2706
  %2963 = vst [vmem:[#allocation2 + $0x6b0] sm:$0xff] %v2707
  %2964 = vst [vmem:[#allocation2 + $0x6b8] sm:$0xff] %v2708
  %2965 = vst [vmem:[#allocation2 + $0x6c0] sm:$0xff] %v2709
  %2966 = vst [vmem:[#allocation2 + $0x6c8] sm:$0xff] %v2710
  %2967 = vst [vmem:[#allocation2 + $0x6d0] sm:$0xff] %v2711
  %2968 = vst [vmem:[#allocation2 + $0x6d8] sm:$0xff] %v2712
  %2969 = vst [vmem:[#allocation2 + $0x6e0] sm:$0xff] %v2713
  %2970 = vst [vmem:[#allocation2 + $0x6e8] sm:$0xff] %v2714
  %2971 = vst [vmem:[#allocation2 + $0x6f0] sm:$0xff] %v2715
  %2972 = vst [vmem:[#allocation2 + $0x6f8] sm:$0xff] %v2716
  %2973 = vst [vmem:[#allocation2 + $0x700] sm:$0xff] %v2717
  %2974 = vst [vmem:[#allocation2 + $0x708] sm:$0xff] %v2718
  %2975 = vst [vmem:[#allocation2 + $0x710] sm:$0xff] %v2719
  %2976 = vst [vmem:[#allocation2 + $0x718] sm:$0xff] %v2720
  %2977 = vst [vmem:[#allocation2 + $0x720] sm:$0xff] %v2721
  %2978 = vst [vmem:[#allocation2 + $0x728] sm:$0xff] %v2722
  %2979 = vst [vmem:[#allocation2 + $0x730] sm:$0xff] %v2723
  %2980 = vst [vmem:[#allocation2 + $0x738] sm:$0xff] %v2724
  %2981 = vst [vmem:[#allocation2 + $0x740] sm:$0xff] %v2725
  %2982 = vst [vmem:[#allocation2 + $0x748] sm:$0xff] %v2726
  %2983 = vst [vmem:[#allocation2 + $0x750] sm:$0xff] %v2727
  %2984 = vst [vmem:[#allocation2 + $0x758] sm:$0xff] %v2728
  %2985 = vst [vmem:[#allocation2 + $0x760] sm:$0xff] %v2729
  %2986 = vst [vmem:[#allocation2 + $0x768] sm:$0xff] %v2730
  %2987 = vst [vmem:[#allocation2 + $0x770] sm:$0xff] %v2731
  %2988 = vst [vmem:[#allocation2 + $0x778] sm:$0xff] %v2732
  %2989 = vst [vmem:[#allocation2 + $0x780] sm:$0xff] %v2733
  %2990 = vst [vmem:[#allocation2 + $0x788] sm:$0xff] %v2734
  %2991 = vst [vmem:[#allocation2 + $0x790] sm:$0xff] %v2735
  %2992 = vst [vmem:[#allocation2 + $0x798] sm:$0xff] %v2736
  %2993 = vst [vmem:[#allocation2 + $0x7a0] sm:$0xff] %v2737
  %2994 = vst [vmem:[#allocation2 + $0x7a8] sm:$0xff] %v2738
  %2995 = vst [vmem:[#allocation2 + $0x7b0] sm:$0xff] %v2739
  %2996 = vst [vmem:[#allocation2 + $0x7b8] sm:$0xff] %v2740
  %2997 = vst [vmem:[#allocation2 + $0x7c0] sm:$0xff] %v2741
  %2998 = vst [vmem:[#allocation2 + $0x7c8] sm:$0xff] %v2742
  %2999 = vst [vmem:[#allocation2 + $0x7d0] sm:$0xff] %v2743
  %3000 = vst [vmem:[#allocation2 + $0x7d8] sm:$0xff] %v2744
  %3001 = vst [vmem:[#allocation2 + $0x7e0] sm:$0xff] %v2745
  %3002 = vst [vmem:[#allocation2 + $0x7e8] sm:$0xff] %v2746
  %3003 = vst [vmem:[#allocation2 + $0x7f0] sm:$0xff] %v2747
  %3004 = vst [vmem:[#allocation2 + $0x7f8] sm:$0xff] %v2748
  // Predicated region
  $region18: #{_lambda_.8} parent=0 // pred_check
    %p3005 = pneg %p15
  $region19: #{_lambda_.8} parent=0 // pred_check_branch
    %3007 = sbr.rel (%p3005) target = $region21
  $region20: #{_lambda_.8} parent=0 // pred_region
    %v3008 = vld [vmem:[#allocation2] sm:$0xff]
    %v3009 = vld [vmem:[#allocation2 + $0x8] sm:$0xff]
    %v3010 = vld [vmem:[#allocation2 + $0x10] sm:$0xff]
    %v3011 = vld [vmem:[#allocation2 + $0x18] sm:$0xff]
    %v3012 = vld [vmem:[#allocation2 + $0x20] sm:$0xff]
    %v3013 = vld [vmem:[#allocation2 + $0x28] sm:$0xff]
    %v3014 = vld [vmem:[#allocation2 + $0x30] sm:$0xff]
    %v3015 = vld [vmem:[#allocation2 + $0x38] sm:$0xff]
    %v3016 = vld [vmem:[#allocation2 + $0x40] sm:$0xff]
    %v3017 = vld [vmem:[#allocation2 + $0x48] sm:$0xff]
    %v3018 = vld [vmem:[#allocation2 + $0x50] sm:$0xff]
    %v3019 = vld [vmem:[#allocation2 + $0x58] sm:$0xff]
    %v3020 = vld [vmem:[#allocation2 + $0x60] sm:$0xff]
    %v3021 = vld [vmem:[#allocation2 + $0x68] sm:$0xff]
    %v3022 = vld [vmem:[#allocation2 + $0x70] sm:$0xff]
    %v3023 = vld [vmem:[#allocation2 + $0x78] sm:$0xff]
    %v3024 = vld [vmem:[#allocation2 + $0x80] sm:$0xff]
    %v3025 = vld [vmem:[#allocation2 + $0x88] sm:$0xff]
    %v3026 = vld [vmem:[#allocation2 + $0x90] sm:$0xff]
    %v3027 = vld [vmem:[#allocation2 + $0x98] sm:$0xff]
    %v3028 = vld [vmem:[#allocation2 + $0xa0] sm:$0xff]
    %v3029 = vld [vmem:[#allocation2 + $0xa8] sm:$0xff]
    %v3030 = vld [vmem:[#allocation2 + $0xb0] sm:$0xff]
    %v3031 = vld [vmem:[#allocation2 + $0xb8] sm:$0xff]
    %v3032 = vld [vmem:[#allocation2 + $0xc0] sm:$0xff]
    %v3033 = vld [vmem:[#allocation2 + $0xc8] sm:$0xff]
    %v3034 = vld [vmem:[#allocation2 + $0xd0] sm:$0xff]
    %v3035 = vld [vmem:[#allocation2 + $0xd8] sm:$0xff]
    %v3036 = vld [vmem:[#allocation2 + $0xe0] sm:$0xff]
    %v3037 = vld [vmem:[#allocation2 + $0xe8] sm:$0xff]
    %v3038 = vld [vmem:[#allocation2 + $0xf0] sm:$0xff]
    %v3039 = vld [vmem:[#allocation2 + $0xf8] sm:$0xff]
    %v3040 = vld [vmem:[#allocation2 + $0x100] sm:$0xff]
    %v3041 = vld [vmem:[#allocation2 + $0x108] sm:$0xff]
    %v3042 = vld [vmem:[#allocation2 + $0x110] sm:$0xff]
    %v3043 = vld [vmem:[#allocation2 + $0x118] sm:$0xff]
    %v3044 = vld [vmem:[#allocation2 + $0x120] sm:$0xff]
    %v3045 = vld [vmem:[#allocation2 + $0x128] sm:$0xff]
    %v3046 = vld [vmem:[#allocation2 + $0x130] sm:$0xff]
    %v3047 = vld [vmem:[#allocation2 + $0x138] sm:$0xff]
    %v3048 = vld [vmem:[#allocation2 + $0x140] sm:$0xff]
    %v3049 = vld [vmem:[#allocation2 + $0x148] sm:$0xff]
    %v3050 = vld [vmem:[#allocation2 + $0x150] sm:$0xff]
    %v3051 = vld [vmem:[#allocation2 + $0x158] sm:$0xff]
    %v3052 = vld [vmem:[#allocation2 + $0x160] sm:$0xff]
    %v3053 = vld [vmem:[#allocation2 + $0x168] sm:$0xff]
    %v3054 = vld [vmem:[#allocation2 + $0x170] sm:$0xff]
    %v3055 = vld [vmem:[#allocation2 + $0x178] sm:$0xff]
    %v3056 = vld [vmem:[#allocation2 + $0x180] sm:$0xff]
    %v3057 = vld [vmem:[#allocation2 + $0x188] sm:$0xff]
    %v3058 = vld [vmem:[#allocation2 + $0x190] sm:$0xff]
    %v3059 = vld [vmem:[#allocation2 + $0x198] sm:$0xff]
    %v3060 = vld [vmem:[#allocation2 + $0x1a0] sm:$0xff]
    %v3061 = vld [vmem:[#allocation2 + $0x1a8] sm:$0xff]
    %v3062 = vld [vmem:[#allocation2 + $0x1b0] sm:$0xff]
    %v3063 = vld [vmem:[#allocation2 + $0x1b8] sm:$0xff]
    %v3064 = vld [vmem:[#allocation2 + $0x1c0] sm:$0xff]
    %v3065 = vld [vmem:[#allocation2 + $0x1c8] sm:$0xff]
    %v3066 = vld [vmem:[#allocation2 + $0x1d0] sm:$0xff]
    %v3067 = vld [vmem:[#allocation2 + $0x1d8] sm:$0xff]
    %v3068 = vld [vmem:[#allocation2 + $0x1e0] sm:$0xff]
    %v3069 = vld [vmem:[#allocation2 + $0x1e8] sm:$0xff]
    %v3070 = vld [vmem:[#allocation2 + $0x1f0] sm:$0xff]
    %v3071 = vld [vmem:[#allocation2 + $0x1f8] sm:$0xff]
    %v3072 = vld [vmem:[#allocation2 + $0x200] sm:$0xff]
    %v3073 = vld [vmem:[#allocation2 + $0x208] sm:$0xff]
    %v3074 = vld [vmem:[#allocation2 + $0x210] sm:$0xff]
    %v3075 = vld [vmem:[#allocation2 + $0x218] sm:$0xff]
    %v3076 = vld [vmem:[#allocation2 + $0x220] sm:$0xff]
    %v3077 = vld [vmem:[#allocation2 + $0x228] sm:$0xff]
    %v3078 = vld [vmem:[#allocation2 + $0x230] sm:$0xff]
    %v3079 = vld [vmem:[#allocation2 + $0x238] sm:$0xff]
    %v3080 = vld [vmem:[#allocation2 + $0x240] sm:$0xff]
    %v3081 = vld [vmem:[#allocation2 + $0x248] sm:$0xff]
    %v3082 = vld [vmem:[#allocation2 + $0x250] sm:$0xff]
    %v3083 = vld [vmem:[#allocation2 + $0x258] sm:$0xff]
    %v3084 = vld [vmem:[#allocation2 + $0x260] sm:$0xff]
    %v3085 = vld [vmem:[#allocation2 + $0x268] sm:$0xff]
    %v3086 = vld [vmem:[#allocation2 + $0x270] sm:$0xff]
    %v3087 = vld [vmem:[#allocation2 + $0x278] sm:$0xff]
    %v3088 = vld [vmem:[#allocation2 + $0x280] sm:$0xff]
    %v3089 = vld [vmem:[#allocation2 + $0x288] sm:$0xff]
    %v3090 = vld [vmem:[#allocation2 + $0x290] sm:$0xff]
    %v3091 = vld [vmem:[#allocation2 + $0x298] sm:$0xff]
    %v3092 = vld [vmem:[#allocation2 + $0x2a0] sm:$0xff]
    %v3093 = vld [vmem:[#allocation2 + $0x2a8] sm:$0xff]
    %v3094 = vld [vmem:[#allocation2 + $0x2b0] sm:$0xff]
    %v3095 = vld [vmem:[#allocation2 + $0x2b8] sm:$0xff]
    %v3096 = vld [vmem:[#allocation2 + $0x2c0] sm:$0xff]
    %v3097 = vld [vmem:[#allocation2 + $0x2c8] sm:$0xff]
    %v3098 = vld [vmem:[#allocation2 + $0x2d0] sm:$0xff]
    %v3099 = vld [vmem:[#allocation2 + $0x2d8] sm:$0xff]
    %v3100 = vld [vmem:[#allocation2 + $0x2e0] sm:$0xff]
    %v3101 = vld [vmem:[#allocation2 + $0x2e8] sm:$0xff]
    %v3102 = vld [vmem:[#allocation2 + $0x2f0] sm:$0xff]
    %v3103 = vld [vmem:[#allocation2 + $0x2f8] sm:$0xff]
    %v3104 = vld [vmem:[#allocation2 + $0x300] sm:$0xff]
    %v3105 = vld [vmem:[#allocation2 + $0x308] sm:$0xff]
    %v3106 = vld [vmem:[#allocation2 + $0x310] sm:$0xff]
    %v3107 = vld [vmem:[#allocation2 + $0x318] sm:$0xff]
    %v3108 = vld [vmem:[#allocation2 + $0x320] sm:$0xff]
    %v3109 = vld [vmem:[#allocation2 + $0x328] sm:$0xff]
    %v3110 = vld [vmem:[#allocation2 + $0x330] sm:$0xff]
    %v3111 = vld [vmem:[#allocation2 + $0x338] sm:$0xff]
    %v3112 = vld [vmem:[#allocation2 + $0x340] sm:$0xff]
    %v3113 = vld [vmem:[#allocation2 + $0x348] sm:$0xff]
    %v3114 = vld [vmem:[#allocation2 + $0x350] sm:$0xff]
    %v3115 = vld [vmem:[#allocation2 + $0x358] sm:$0xff]
    %v3116 = vld [vmem:[#allocation2 + $0x360] sm:$0xff]
    %v3117 = vld [vmem:[#allocation2 + $0x368] sm:$0xff]
    %v3118 = vld [vmem:[#allocation2 + $0x370] sm:$0xff]
    %v3119 = vld [vmem:[#allocation2 + $0x378] sm:$0xff]
    %v3120 = vld [vmem:[#allocation2 + $0x380] sm:$0xff]
    %v3121 = vld [vmem:[#allocation2 + $0x388] sm:$0xff]
    %v3122 = vld [vmem:[#allocation2 + $0x390] sm:$0xff]
    %v3123 = vld [vmem:[#allocation2 + $0x398] sm:$0xff]
    %v3124 = vld [vmem:[#allocation2 + $0x3a0] sm:$0xff]
    %v3125 = vld [vmem:[#allocation2 + $0x3a8] sm:$0xff]
    %v3126 = vld [vmem:[#allocation2 + $0x3b0] sm:$0xff]
    %v3127 = vld [vmem:[#allocation2 + $0x3b8] sm:$0xff]
    %v3128 = vld [vmem:[#allocation2 + $0x3c0] sm:$0xff]
    %v3129 = vld [vmem:[#allocation2 + $0x3c8] sm:$0xff]
    %v3130 = vld [vmem:[#allocation2 + $0x3d0] sm:$0xff]
    %v3131 = vld [vmem:[#allocation2 + $0x3d8] sm:$0xff]
    %v3132 = vld [vmem:[#allocation2 + $0x3e0] sm:$0xff]
    %v3133 = vld [vmem:[#allocation2 + $0x3e8] sm:$0xff]
    %v3134 = vld [vmem:[#allocation2 + $0x3f0] sm:$0xff]
    %v3135 = vld [vmem:[#allocation2 + $0x3f8] sm:$0xff]
    %v3136 = vld [vmem:[#allocation2 + $0x400] sm:$0xff]
    %v3137 = vld [vmem:[#allocation2 + $0x408] sm:$0xff]
    %v3138 = vld [vmem:[#allocation2 + $0x410] sm:$0xff]
    %v3139 = vld [vmem:[#allocation2 + $0x418] sm:$0xff]
    %v3140 = vld [vmem:[#allocation2 + $0x420] sm:$0xff]
    %v3141 = vld [vmem:[#allocation2 + $0x428] sm:$0xff]
    %v3142 = vld [vmem:[#allocation2 + $0x430] sm:$0xff]
    %v3143 = vld [vmem:[#allocation2 + $0x438] sm:$0xff]
    %v3144 = vld [vmem:[#allocation2 + $0x440] sm:$0xff]
    %v3145 = vld [vmem:[#allocation2 + $0x448] sm:$0xff]
    %v3146 = vld [vmem:[#allocation2 + $0x450] sm:$0xff]
    %v3147 = vld [vmem:[#allocation2 + $0x458] sm:$0xff]
    %v3148 = vld [vmem:[#allocation2 + $0x460] sm:$0xff]
    %v3149 = vld [vmem:[#allocation2 + $0x468] sm:$0xff]
    %v3150 = vld [vmem:[#allocation2 + $0x470] sm:$0xff]
    %v3151 = vld [vmem:[#allocation2 + $0x478] sm:$0xff]
    %v3152 = vld [vmem:[#allocation2 + $0x480] sm:$0xff]
    %v3153 = vld [vmem:[#allocation2 + $0x488] sm:$0xff]
    %v3154 = vld [vmem:[#allocation2 + $0x490] sm:$0xff]
    %v3155 = vld [vmem:[#allocation2 + $0x498] sm:$0xff]
    %v3156 = vld [vmem:[#allocation2 + $0x4a0] sm:$0xff]
    %v3157 = vld [vmem:[#allocation2 + $0x4a8] sm:$0xff]
    %v3158 = vld [vmem:[#allocation2 + $0x4b0] sm:$0xff]
    %v3159 = vld [vmem:[#allocation2 + $0x4b8] sm:$0xff]
    %v3160 = vld [vmem:[#allocation2 + $0x4c0] sm:$0xff]
    %v3161 = vld [vmem:[#allocation2 + $0x4c8] sm:$0xff]
    %v3162 = vld [vmem:[#allocation2 + $0x4d0] sm:$0xff]
    %v3163 = vld [vmem:[#allocation2 + $0x4d8] sm:$0xff]
    %v3164 = vld [vmem:[#allocation2 + $0x4e0] sm:$0xff]
    %v3165 = vld [vmem:[#allocation2 + $0x4e8] sm:$0xff]
    %v3166 = vld [vmem:[#allocation2 + $0x4f0] sm:$0xff]
    %v3167 = vld [vmem:[#allocation2 + $0x4f8] sm:$0xff]
    %v3168 = vld [vmem:[#allocation2 + $0x500] sm:$0xff]
    %v3169 = vld [vmem:[#allocation2 + $0x508] sm:$0xff]
    %v3170 = vld [vmem:[#allocation2 + $0x510] sm:$0xff]
    %v3171 = vld [vmem:[#allocation2 + $0x518] sm:$0xff]
    %v3172 = vld [vmem:[#allocation2 + $0x520] sm:$0xff]
    %v3173 = vld [vmem:[#allocation2 + $0x528] sm:$0xff]
    %v3174 = vld [vmem:[#allocation2 + $0x530] sm:$0xff]
    %v3175 = vld [vmem:[#allocation2 + $0x538] sm:$0xff]
    %v3176 = vld [vmem:[#allocation2 + $0x540] sm:$0xff]
    %v3177 = vld [vmem:[#allocation2 + $0x548] sm:$0xff]
    %v3178 = vld [vmem:[#allocation2 + $0x550] sm:$0xff]
    %v3179 = vld [vmem:[#allocation2 + $0x558] sm:$0xff]
    %v3180 = vld [vmem:[#allocation2 + $0x560] sm:$0xff]
    %v3181 = vld [vmem:[#allocation2 + $0x568] sm:$0xff]
    %v3182 = vld [vmem:[#allocation2 + $0x570] sm:$0xff]
    %v3183 = vld [vmem:[#allocation2 + $0x578] sm:$0xff]
    %v3184 = vld [vmem:[#allocation2 + $0x580] sm:$0xff]
    %v3185 = vld [vmem:[#allocation2 + $0x588] sm:$0xff]
    %v3186 = vld [vmem:[#allocation2 + $0x590] sm:$0xff]
    %v3187 = vld [vmem:[#allocation2 + $0x598] sm:$0xff]
    %v3188 = vld [vmem:[#allocation2 + $0x5a0] sm:$0xff]
    %v3189 = vld [vmem:[#allocation2 + $0x5a8] sm:$0xff]
    %v3190 = vld [vmem:[#allocation2 + $0x5b0] sm:$0xff]
    %v3191 = vld [vmem:[#allocation2 + $0x5b8] sm:$0xff]
    %v3192 = vld [vmem:[#allocation2 + $0x5c0] sm:$0xff]
    %v3193 = vld [vmem:[#allocation2 + $0x5c8] sm:$0xff]
    %v3194 = vld [vmem:[#allocation2 + $0x5d0] sm:$0xff]
    %v3195 = vld [vmem:[#allocation2 + $0x5d8] sm:$0xff]
    %v3196 = vld [vmem:[#allocation2 + $0x5e0] sm:$0xff]
    %v3197 = vld [vmem:[#allocation2 + $0x5e8] sm:$0xff]
    %v3198 = vld [vmem:[#allocation2 + $0x5f0] sm:$0xff]
    %v3199 = vld [vmem:[#allocation2 + $0x5f8] sm:$0xff]
    %v3200 = vld [vmem:[#allocation2 + $0x600] sm:$0xff]
    %v3201 = vld [vmem:[#allocation2 + $0x608] sm:$0xff]
    %v3202 = vld [vmem:[#allocation2 + $0x610] sm:$0xff]
    %v3203 = vld [vmem:[#allocation2 + $0x618] sm:$0xff]
    %v3204 = vld [vmem:[#allocation2 + $0x620] sm:$0xff]
    %v3205 = vld [vmem:[#allocation2 + $0x628] sm:$0xff]
    %v3206 = vld [vmem:[#allocation2 + $0x630] sm:$0xff]
    %v3207 = vld [vmem:[#allocation2 + $0x638] sm:$0xff]
    %v3208 = vld [vmem:[#allocation2 + $0x640] sm:$0xff]
    %v3209 = vld [vmem:[#allocation2 + $0x648] sm:$0xff]
    %v3210 = vld [vmem:[#allocation2 + $0x650] sm:$0xff]
    %v3211 = vld [vmem:[#allocation2 + $0x658] sm:$0xff]
    %v3212 = vld [vmem:[#allocation2 + $0x660] sm:$0xff]
    %v3213 = vld [vmem:[#allocation2 + $0x668] sm:$0xff]
    %v3214 = vld [vmem:[#allocation2 + $0x670] sm:$0xff]
    %v3215 = vld [vmem:[#allocation2 + $0x678] sm:$0xff]
    %v3216 = vld [vmem:[#allocation2 + $0x680] sm:$0xff]
    %v3217 = vld [vmem:[#allocation2 + $0x688] sm:$0xff]
    %v3218 = vld [vmem:[#allocation2 + $0x690] sm:$0xff]
    %v3219 = vld [vmem:[#allocation2 + $0x698] sm:$0xff]
    %v3220 = vld [vmem:[#allocation2 + $0x6a0] sm:$0xff]
    %v3221 = vld [vmem:[#allocation2 + $0x6a8] sm:$0xff]
    %v3222 = vld [vmem:[#allocation2 + $0x6b0] sm:$0xff]
    %v3223 = vld [vmem:[#allocation2 + $0x6b8] sm:$0xff]
    %v3224 = vld [vmem:[#allocation2 + $0x6c0] sm:$0xff]
    %v3225 = vld [vmem:[#allocation2 + $0x6c8] sm:$0xff]
    %v3226 = vld [vmem:[#allocation2 + $0x6d0] sm:$0xff]
    %v3227 = vld [vmem:[#allocation2 + $0x6d8] sm:$0xff]
    %v3228 = vld [vmem:[#allocation2 + $0x6e0] sm:$0xff]
    %v3229 = vld [vmem:[#allocation2 + $0x6e8] sm:$0xff]
    %v3230 = vld [vmem:[#allocation2 + $0x6f0] sm:$0xff]
    %v3231 = vld [vmem:[#allocation2 + $0x6f8] sm:$0xff]
    %v3232 = vld [vmem:[#allocation2 + $0x700] sm:$0xff]
    %v3233 = vld [vmem:[#allocation2 + $0x708] sm:$0xff]
    %v3234 = vld [vmem:[#allocation2 + $0x710] sm:$0xff]
    %v3235 = vld [vmem:[#allocation2 + $0x718] sm:$0xff]
    %v3236 = vld [vmem:[#allocation2 + $0x720] sm:$0xff]
    %v3237 = vld [vmem:[#allocation2 + $0x728] sm:$0xff]
    %v3238 = vld [vmem:[#allocation2 + $0x730] sm:$0xff]
    %v3239 = vld [vmem:[#allocation2 + $0x738] sm:$0xff]
    %v3240 = vld [vmem:[#allocation2 + $0x740] sm:$0xff]
    %v3241 = vld [vmem:[#allocation2 + $0x748] sm:$0xff]
    %v3242 = vld [vmem:[#allocation2 + $0x750] sm:$0xff]
    %v3243 = vld [vmem:[#allocation2 + $0x758] sm:$0xff]
    %v3244 = vld [vmem:[#allocation2 + $0x760] sm:$0xff]
    %v3245 = vld [vmem:[#allocation2 + $0x768] sm:$0xff]
    %v3246 = vld [vmem:[#allocation2 + $0x770] sm:$0xff]
    %v3247 = vld [vmem:[#allocation2 + $0x778] sm:$0xff]
    %v3248 = vld [vmem:[#allocation2 + $0x780] sm:$0xff]
    %v3249 = vld [vmem:[#allocation2 + $0x788] sm:$0xff]
    %v3250 = vld [vmem:[#allocation2 + $0x790] sm:$0xff]
    %v3251 = vld [vmem:[#allocation2 + $0x798] sm:$0xff]
    %v3252 = vld [vmem:[#allocation2 + $0x7a0] sm:$0xff]
    %v3253 = vld [vmem:[#allocation2 + $0x7a8] sm:$0xff]
    %v3254 = vld [vmem:[#allocation2 + $0x7b0] sm:$0xff]
    %v3255 = vld [vmem:[#allocation2 + $0x7b8] sm:$0xff]
    %v3256 = vld [vmem:[#allocation2 + $0x7c0] sm:$0xff]
    %v3257 = vld [vmem:[#allocation2 + $0x7c8] sm:$0xff]
    %v3258 = vld [vmem:[#allocation2 + $0x7d0] sm:$0xff]
    %v3259 = vld [vmem:[#allocation2 + $0x7d8] sm:$0xff]
    %v3260 = vld [vmem:[#allocation2 + $0x7e0] sm:$0xff]
    %v3261 = vld [vmem:[#allocation2 + $0x7e8] sm:$0xff]
    %v3262 = vld [vmem:[#allocation2 + $0x7f0] sm:$0xff]
    %v3263 = vld [vmem:[#allocation2 + $0x7f8] sm:$0xff]
    %v3264 = vld [vmem:[%s2] sm:$0x1]
    %v3266 = vperm.slane %v3264, 0
    %v3268 = vadd.f32 %v3008, %v3266
    %v3269 = vadd.f32 %v3009, %v3266
    %v3270 = vadd.f32 %v3010, %v3266
    %v3271 = vadd.f32 %v3011, %v3266
    %v3272 = vadd.f32 %v3012, %v3266
    %v3273 = vadd.f32 %v3013, %v3266
    %v3274 = vadd.f32 %v3014, %v3266
    %v3275 = vadd.f32 %v3015, %v3266
    %v3276 = vadd.f32 %v3016, %v3266
    %v3277 = vadd.f32 %v3017, %v3266
    %v3278 = vadd.f32 %v3018, %v3266
    %v3279 = vadd.f32 %v3019, %v3266
    %v3280 = vadd.f32 %v3020, %v3266
    %v3281 = vadd.f32 %v3021, %v3266
    %v3282 = vadd.f32 %v3022, %v3266
    %v3283 = vadd.f32 %v3023, %v3266
    %v3284 = vadd.f32 %v3024, %v3266
    %v3285 = vadd.f32 %v3025, %v3266
    %v3286 = vadd.f32 %v3026, %v3266
    %v3287 = vadd.f32 %v3027, %v3266
    %v3288 = vadd.f32 %v3028, %v3266
    %v3289 = vadd.f32 %v3029, %v3266
    %v3290 = vadd.f32 %v3030, %v3266
    %v3291 = vadd.f32 %v3031, %v3266
    %v3292 = vadd.f32 %v3032, %v3266
    %v3293 = vadd.f32 %v3033, %v3266
    %v3294 = vadd.f32 %v3034, %v3266
    %v3295 = vadd.f32 %v3035, %v3266
    %v3296 = vadd.f32 %v3036, %v3266
    %v3297 = vadd.f32 %v3037, %v3266
    %v3298 = vadd.f32 %v3038, %v3266
    %v3299 = vadd.f32 %v3039, %v3266
    %v3300 = vadd.f32 %v3040, %v3266
    %v3301 = vadd.f32 %v3041, %v3266
    %v3302 = vadd.f32 %v3042, %v3266
    %v3303 = vadd.f32 %v3043, %v3266
    %v3304 = vadd.f32 %v3044, %v3266
    %v3305 = vadd.f32 %v3045, %v3266
    %v3306 = vadd.f32 %v3046, %v3266
    %v3307 = vadd.f32 %v3047, %v3266
    %v3308 = vadd.f32 %v3048, %v3266
    %v3309 = vadd.f32 %v3049, %v3266
    %v3310 = vadd.f32 %v3050, %v3266
    %v3311 = vadd.f32 %v3051, %v3266
    %v3312 = vadd.f32 %v3052, %v3266
    %v3313 = vadd.f32 %v3053, %v3266
    %v3314 = vadd.f32 %v3054, %v3266
    %v3315 = vadd.f32 %v3055, %v3266
    %v3316 = vadd.f32 %v3056, %v3266
    %v3317 = vadd.f32 %v3057, %v3266
    %v3318 = vadd.f32 %v3058, %v3266
    %v3319 = vadd.f32 %v3059, %v3266
    %v3320 = vadd.f32 %v3060, %v3266
    %v3321 = vadd.f32 %v3061, %v3266
    %v3322 = vadd.f32 %v3062, %v3266
    %v3323 = vadd.f32 %v3063, %v3266
    %v3324 = vadd.f32 %v3064, %v3266
    %v3325 = vadd.f32 %v3065, %v3266
    %v3326 = vadd.f32 %v3066, %v3266
    %v3327 = vadd.f32 %v3067, %v3266
    %v3328 = vadd.f32 %v3068, %v3266
    %v3329 = vadd.f32 %v3069, %v3266
    %v3330 = vadd.f32 %v3070, %v3266
    %v3331 = vadd.f32 %v3071, %v3266
    %v3332 = vadd.f32 %v3072, %v3266
    %v3333 = vadd.f32 %v3073, %v3266
    %v3334 = vadd.f32 %v3074, %v3266
    %v3335 = vadd.f32 %v3075, %v3266
    %v3336 = vadd.f32 %v3076, %v3266
    %v3337 = vadd.f32 %v3077, %v3266
    %v3338 = vadd.f32 %v3078, %v3266
    %v3339 = vadd.f32 %v3079, %v3266
    %v3340 = vadd.f32 %v3080, %v3266
    %v3341 = vadd.f32 %v3081, %v3266
    %v3342 = vadd.f32 %v3082, %v3266
    %v3343 = vadd.f32 %v3083, %v3266
    %v3344 = vadd.f32 %v3084, %v3266
    %v3345 = vadd.f32 %v3085, %v3266
    %v3346 = vadd.f32 %v3086, %v3266
    %v3347 = vadd.f32 %v3087, %v3266
    %v3348 = vadd.f32 %v3088, %v3266
    %v3349 = vadd.f32 %v3089, %v3266
    %v3350 = vadd.f32 %v3090, %v3266
    %v3351 = vadd.f32 %v3091, %v3266
    %v3352 = vadd.f32 %v3092, %v3266
    %v3353 = vadd.f32 %v3093, %v3266
    %v3354 = vadd.f32 %v3094, %v3266
    %v3355 = vadd.f32 %v3095, %v3266
    %v3356 = vadd.f32 %v3096, %v3266
    %v3357 = vadd.f32 %v3097, %v3266
    %v3358 = vadd.f32 %v3098, %v3266
    %v3359 = vadd.f32 %v3099, %v3266
    %v3360 = vadd.f32 %v3100, %v3266
    %v3361 = vadd.f32 %v3101, %v3266
    %v3362 = vadd.f32 %v3102, %v3266
    %v3363 = vadd.f32 %v3103, %v3266
    %v3364 = vadd.f32 %v3104, %v3266
    %v3365 = vadd.f32 %v3105, %v3266
    %v3366 = vadd.f32 %v3106, %v3266
    %v3367 = vadd.f32 %v3107, %v3266
    %v3368 = vadd.f32 %v3108, %v3266
    %v3369 = vadd.f32 %v3109, %v3266
    %v3370 = vadd.f32 %v3110, %v3266
    %v3371 = vadd.f32 %v3111, %v3266
    %v3372 = vadd.f32 %v3112, %v3266
    %v3373 = vadd.f32 %v3113, %v3266
    %v3374 = vadd.f32 %v3114, %v3266
    %v3375 = vadd.f32 %v3115, %v3266
    %v3376 = vadd.f32 %v3116, %v3266
    %v3377 = vadd.f32 %v3117, %v3266
    %v3378 = vadd.f32 %v3118, %v3266
    %v3379 = vadd.f32 %v3119, %v3266
    %v3380 = vadd.f32 %v3120, %v3266
    %v3381 = vadd.f32 %v3121, %v3266
    %v3382 = vadd.f32 %v3122, %v3266
    %v3383 = vadd.f32 %v3123, %v3266
    %v3384 = vadd.f32 %v3124, %v3266
    %v3385 = vadd.f32 %v3125, %v3266
    %v3386 = vadd.f32 %v3126, %v3266
    %v3387 = vadd.f32 %v3127, %v3266
    %v3388 = vadd.f32 %v3128, %v3266
    %v3389 = vadd.f32 %v3129, %v3266
    %v3390 = vadd.f32 %v3130, %v3266
    %v3391 = vadd.f32 %v3131, %v3266
    %v3392 = vadd.f32 %v3132, %v3266
    %v3393 = vadd.f32 %v3133, %v3266
    %v3394 = vadd.f32 %v3134, %v3266
    %v3395 = vadd.f32 %v3135, %v3266
    %v3396 = vadd.f32 %v3136, %v3266
    %v3397 = vadd.f32 %v3137, %v3266
    %v3398 = vadd.f32 %v3138, %v3266
    %v3399 = vadd.f32 %v3139, %v3266
    %v3400 = vadd.f32 %v3140, %v3266
    %v3401 = vadd.f32 %v3141, %v3266
    %v3402 = vadd.f32 %v3142, %v3266
    %v3403 = vadd.f32 %v3143, %v3266
    %v3404 = vadd.f32 %v3144, %v3266
    %v3405 = vadd.f32 %v3145, %v3266
    %v3406 = vadd.f32 %v3146, %v3266
    %v3407 = vadd.f32 %v3147, %v3266
    %v3408 = vadd.f32 %v3148, %v3266
    %v3409 = vadd.f32 %v3149, %v3266
    %v3410 = vadd.f32 %v3150, %v3266
    %v3411 = vadd.f32 %v3151, %v3266
    %v3412 = vadd.f32 %v3152, %v3266
    %v3413 = vadd.f32 %v3153, %v3266
    %v3414 = vadd.f32 %v3154, %v3266
    %v3415 = vadd.f32 %v3155, %v3266
    %v3416 = vadd.f32 %v3156, %v3266
    %v3417 = vadd.f32 %v3157, %v3266
    %v3418 = vadd.f32 %v3158, %v3266
    %v3419 = vadd.f32 %v3159, %v3266
    %v3420 = vadd.f32 %v3160, %v3266
    %v3421 = vadd.f32 %v3161, %v3266
    %v3422 = vadd.f32 %v3162, %v3266
    %v3423 = vadd.f32 %v3163, %v3266
    %v3424 = vadd.f32 %v3164, %v3266
    %v3425 = vadd.f32 %v3165, %v3266
    %v3426 = vadd.f32 %v3166, %v3266
    %v3427 = vadd.f32 %v3167, %v3266
    %v3428 = vadd.f32 %v3168, %v3266
    %v3429 = vadd.f32 %v3169, %v3266
    %v3430 = vadd.f32 %v3170, %v3266
    %v3431 = vadd.f32 %v3171, %v3266
    %v3432 = vadd.f32 %v3172, %v3266
    %v3433 = vadd.f32 %v3173, %v3266
    %v3434 = vadd.f32 %v3174, %v3266
    %v3435 = vadd.f32 %v3175, %v3266
    %v3436 = vadd.f32 %v3176, %v3266
    %v3437 = vadd.f32 %v3177, %v3266
    %v3438 = vadd.f32 %v3178, %v3266
    %v3439 = vadd.f32 %v3179, %v3266
    %v3440 = vadd.f32 %v3180, %v3266
    %v3441 = vadd.f32 %v3181, %v3266
    %v3442 = vadd.f32 %v3182, %v3266
    %v3443 = vadd.f32 %v3183, %v3266
    %v3444 = vadd.f32 %v3184, %v3266
    %v3445 = vadd.f32 %v3185, %v3266
    %v3446 = vadd.f32 %v3186, %v3266
    %v3447 = vadd.f32 %v3187, %v3266
    %v3448 = vadd.f32 %v3188, %v3266
    %v3449 = vadd.f32 %v3189, %v3266
    %v3450 = vadd.f32 %v3190, %v3266
    %v3451 = vadd.f32 %v3191, %v3266
    %v3452 = vadd.f32 %v3192, %v3266
    %v3453 = vadd.f32 %v3193, %v3266
    %v3454 = vadd.f32 %v3194, %v3266
    %v3455 = vadd.f32 %v3195, %v3266
    %v3456 = vadd.f32 %v3196, %v3266
    %v3457 = vadd.f32 %v3197, %v3266
    %v3458 = vadd.f32 %v3198, %v3266
    %v3459 = vadd.f32 %v3199, %v3266
    %v3460 = vadd.f32 %v3200, %v3266
    %v3461 = vadd.f32 %v3201, %v3266
    %v3462 = vadd.f32 %v3202, %v3266
    %v3463 = vadd.f32 %v3203, %v3266
    %v3464 = vadd.f32 %v3204, %v3266
    %v3465 = vadd.f32 %v3205, %v3266
    %v3466 = vadd.f32 %v3206, %v3266
    %v3467 = vadd.f32 %v3207, %v3266
    %v3468 = vadd.f32 %v3208, %v3266
    %v3469 = vadd.f32 %v3209, %v3266
    %v3470 = vadd.f32 %v3210, %v3266
    %v3471 = vadd.f32 %v3211, %v3266
    %v3472 = vadd.f32 %v3212, %v3266
    %v3473 = vadd.f32 %v3213, %v3266
    %v3474 = vadd.f32 %v3214, %v3266
    %v3475 = vadd.f32 %v3215, %v3266
    %v3476 = vadd.f32 %v3216, %v3266
    %v3477 = vadd.f32 %v3217, %v3266
    %v3478 = vadd.f32 %v3218, %v3266
    %v3479 = vadd.f32 %v3219, %v3266
    %v3480 = vadd.f32 %v3220, %v3266
    %v3481 = vadd.f32 %v3221, %v3266
    %v3482 = vadd.f32 %v3222, %v3266
    %v3483 = vadd.f32 %v3223, %v3266
    %v3484 = vadd.f32 %v3224, %v3266
    %v3485 = vadd.f32 %v3225, %v3266
    %v3486 = vadd.f32 %v3226, %v3266
    %v3487 = vadd.f32 %v3227, %v3266
    %v3488 = vadd.f32 %v3228, %v3266
    %v3489 = vadd.f32 %v3229, %v3266
    %v3490 = vadd.f32 %v3230, %v3266
    %v3491 = vadd.f32 %v3231, %v3266
    %v3492 = vadd.f32 %v3232, %v3266
    %v3493 = vadd.f32 %v3233, %v3266
    %v3494 = vadd.f32 %v3234, %v3266
    %v3495 = vadd.f32 %v3235, %v3266
    %v3496 = vadd.f32 %v3236, %v3266
    %v3497 = vadd.f32 %v3237, %v3266
    %v3498 = vadd.f32 %v3238, %v3266
    %v3499 = vadd.f32 %v3239, %v3266
    %v3500 = vadd.f32 %v3240, %v3266
    %v3501 = vadd.f32 %v3241, %v3266
    %v3502 = vadd.f32 %v3242, %v3266
    %v3503 = vadd.f32 %v3243, %v3266
    %v3504 = vadd.f32 %v3244, %v3266
    %v3505 = vadd.f32 %v3245, %v3266
    %v3506 = vadd.f32 %v3246, %v3266
    %v3507 = vadd.f32 %v3247, %v3266
    %v3508 = vadd.f32 %v3248, %v3266
    %v3509 = vadd.f32 %v3249, %v3266
    %v3510 = vadd.f32 %v3250, %v3266
    %v3511 = vadd.f32 %v3251, %v3266
    %v3512 = vadd.f32 %v3252, %v3266
    %v3513 = vadd.f32 %v3253, %v3266
    %v3514 = vadd.f32 %v3254, %v3266
    %v3515 = vadd.f32 %v3255, %v3266
    %v3516 = vadd.f32 %v3256, %v3266
    %v3517 = vadd.f32 %v3257, %v3266
    %v3518 = vadd.f32 %v3258, %v3266
    %v3519 = vadd.f32 %v3259, %v3266
    %v3520 = vadd.f32 %v3260, %v3266
    %v3521 = vadd.f32 %v3261, %v3266
    %v3522 = vadd.f32 %v3262, %v3266
    %v3523 = vadd.f32 %v3263, %v3266
    %vm3524 = vcmp.ge.f32.partialorder %v3268, 0.0
    %vm3525 = vcmp.ge.f32.partialorder %v3269, 0.0
    %vm3526 = vcmp.ge.f32.partialorder %v3270, 0.0
    %vm3527 = vcmp.ge.f32.partialorder %v3271, 0.0
    %vm3528 = vcmp.ge.f32.partialorder %v3272, 0.0
    %vm3529 = vcmp.ge.f32.partialorder %v3273, 0.0
    %vm3530 = vcmp.ge.f32.partialorder %v3274, 0.0
    %vm3531 = vcmp.ge.f32.partialorder %v3275, 0.0
    %vm3532 = vcmp.ge.f32.partialorder %v3276, 0.0
    %vm3533 = vcmp.ge.f32.partialorder %v3277, 0.0
    %vm3534 = vcmp.ge.f32.partialorder %v3278, 0.0
    %vm3535 = vcmp.ge.f32.partialorder %v3279, 0.0
    %vm3536 = vcmp.ge.f32.partialorder %v3280, 0.0
    %vm3537 = vcmp.ge.f32.partialorder %v3281, 0.0
    %vm3538 = vcmp.ge.f32.partialorder %v3282, 0.0
    %vm3539 = vcmp.ge.f32.partialorder %v3283, 0.0
    %vm3540 = vcmp.ge.f32.partialorder %v3284, 0.0
    %vm3541 = vcmp.ge.f32.partialorder %v3285, 0.0
    %vm3542 = vcmp.ge.f32.partialorder %v3286, 0.0
    %vm3543 = vcmp.ge.f32.partialorder %v3287, 0.0
    %vm3544 = vcmp.ge.f32.partialorder %v3288, 0.0
    %vm3545 = vcmp.ge.f32.partialorder %v3289, 0.0
    %vm3546 = vcmp.ge.f32.partialorder %v3290, 0.0
    %vm3547 = vcmp.ge.f32.partialorder %v3291, 0.0
    %vm3548 = vcmp.ge.f32.partialorder %v3292, 0.0
    %vm3549 = vcmp.ge.f32.partialorder %v3293, 0.0
    %vm3550 = vcmp.ge.f32.partialorder %v3294, 0.0
    %vm3551 = vcmp.ge.f32.partialorder %v3295, 0.0
    %vm3552 = vcmp.ge.f32.partialorder %v3296, 0.0
    %vm3553 = vcmp.ge.f32.partialorder %v3297, 0.0
    %vm3554 = vcmp.ge.f32.partialorder %v3298, 0.0
    %vm3555 = vcmp.ge.f32.partialorder %v3299, 0.0
    %vm3556 = vcmp.ge.f32.partialorder %v3300, 0.0
    %vm3557 = vcmp.ge.f32.partialorder %v3301, 0.0
    %vm3558 = vcmp.ge.f32.partialorder %v3302, 0.0
    %vm3559 = vcmp.ge.f32.partialorder %v3303, 0.0
    %vm3560 = vcmp.ge.f32.partialorder %v3304, 0.0
    %vm3561 = vcmp.ge.f32.partialorder %v3305, 0.0
    %vm3562 = vcmp.ge.f32.partialorder %v3306, 0.0
    %vm3563 = vcmp.ge.f32.partialorder %v3307, 0.0
    %vm3564 = vcmp.ge.f32.partialorder %v3308, 0.0
    %vm3565 = vcmp.ge.f32.partialorder %v3309, 0.0
    %vm3566 = vcmp.ge.f32.partialorder %v3310, 0.0
    %vm3567 = vcmp.ge.f32.partialorder %v3311, 0.0
    %vm3568 = vcmp.ge.f32.partialorder %v3312, 0.0
    %vm3569 = vcmp.ge.f32.partialorder %v3313, 0.0
    %vm3570 = vcmp.ge.f32.partialorder %v3314, 0.0
    %vm3571 = vcmp.ge.f32.partialorder %v3315, 0.0
    %vm3572 = vcmp.ge.f32.partialorder %v3316, 0.0
    %vm3573 = vcmp.ge.f32.partialorder %v3317, 0.0
    %vm3574 = vcmp.ge.f32.partialorder %v3318, 0.0
    %vm3575 = vcmp.ge.f32.partialorder %v3319, 0.0
    %vm3576 = vcmp.ge.f32.partialorder %v3320, 0.0
    %vm3577 = vcmp.ge.f32.partialorder %v3321, 0.0
    %vm3578 = vcmp.ge.f32.partialorder %v3322, 0.0
    %vm3579 = vcmp.ge.f32.partialorder %v3323, 0.0
    %vm3580 = vcmp.ge.f32.partialorder %v3324, 0.0
    %vm3581 = vcmp.ge.f32.partialorder %v3325, 0.0
    %vm3582 = vcmp.ge.f32.partialorder %v3326, 0.0
    %vm3583 = vcmp.ge.f32.partialorder %v3327, 0.0
    %vm3584 = vcmp.ge.f32.partialorder %v3328, 0.0
    %vm3585 = vcmp.ge.f32.partialorder %v3329, 0.0
    %vm3586 = vcmp.ge.f32.partialorder %v3330, 0.0
    %vm3587 = vcmp.ge.f32.partialorder %v3331, 0.0
    %vm3588 = vcmp.ge.f32.partialorder %v3332, 0.0
    %vm3589 = vcmp.ge.f32.partialorder %v3333, 0.0
    %vm3590 = vcmp.ge.f32.partialorder %v3334, 0.0
    %vm3591 = vcmp.ge.f32.partialorder %v3335, 0.0
    %vm3592 = vcmp.ge.f32.partialorder %v3336, 0.0
    %vm3593 = vcmp.ge.f32.partialorder %v3337, 0.0
    %vm3594 = vcmp.ge.f32.partialorder %v3338, 0.0
    %vm3595 = vcmp.ge.f32.partialorder %v3339, 0.0
    %vm3596 = vcmp.ge.f32.partialorder %v3340, 0.0
    %vm3597 = vcmp.ge.f32.partialorder %v3341, 0.0
    %vm3598 = vcmp.ge.f32.partialorder %v3342, 0.0
    %vm3599 = vcmp.ge.f32.partialorder %v3343, 0.0
    %vm3600 = vcmp.ge.f32.partialorder %v3344, 0.0
    %vm3601 = vcmp.ge.f32.partialorder %v3345, 0.0
    %vm3602 = vcmp.ge.f32.partialorder %v3346, 0.0
    %vm3603 = vcmp.ge.f32.partialorder %v3347, 0.0
    %vm3604 = vcmp.ge.f32.partialorder %v3348, 0.0
    %vm3605 = vcmp.ge.f32.partialorder %v3349, 0.0
    %vm3606 = vcmp.ge.f32.partialorder %v3350, 0.0
    %vm3607 = vcmp.ge.f32.partialorder %v3351, 0.0
    %vm3608 = vcmp.ge.f32.partialorder %v3352, 0.0
    %vm3609 = vcmp.ge.f32.partialorder %v3353, 0.0
    %vm3610 = vcmp.ge.f32.partialorder %v3354, 0.0
    %vm3611 = vcmp.ge.f32.partialorder %v3355, 0.0
    %vm3612 = vcmp.ge.f32.partialorder %v3356, 0.0
    %vm3613 = vcmp.ge.f32.partialorder %v3357, 0.0
    %vm3614 = vcmp.ge.f32.partialorder %v3358, 0.0
    %vm3615 = vcmp.ge.f32.partialorder %v3359, 0.0
    %vm3616 = vcmp.ge.f32.partialorder %v3360, 0.0
    %vm3617 = vcmp.ge.f32.partialorder %v3361, 0.0
    %vm3618 = vcmp.ge.f32.partialorder %v3362, 0.0
    %vm3619 = vcmp.ge.f32.partialorder %v3363, 0.0
    %vm3620 = vcmp.ge.f32.partialorder %v3364, 0.0
    %vm3621 = vcmp.ge.f32.partialorder %v3365, 0.0
    %vm3622 = vcmp.ge.f32.partialorder %v3366, 0.0
    %vm3623 = vcmp.ge.f32.partialorder %v3367, 0.0
    %vm3624 = vcmp.ge.f32.partialorder %v3368, 0.0
    %vm3625 = vcmp.ge.f32.partialorder %v3369, 0.0
    %vm3626 = vcmp.ge.f32.partialorder %v3370, 0.0
    %vm3627 = vcmp.ge.f32.partialorder %v3371, 0.0
    %vm3628 = vcmp.ge.f32.partialorder %v3372, 0.0
    %vm3629 = vcmp.ge.f32.partialorder %v3373, 0.0
    %vm3630 = vcmp.ge.f32.partialorder %v3374, 0.0
    %vm3631 = vcmp.ge.f32.partialorder %v3375, 0.0
    %vm3632 = vcmp.ge.f32.partialorder %v3376, 0.0
    %vm3633 = vcmp.ge.f32.partialorder %v3377, 0.0
    %vm3634 = vcmp.ge.f32.partialorder %v3378, 0.0
    %vm3635 = vcmp.ge.f32.partialorder %v3379, 0.0
    %vm3636 = vcmp.ge.f32.partialorder %v3380, 0.0
    %vm3637 = vcmp.ge.f32.partialorder %v3381, 0.0
    %vm3638 = vcmp.ge.f32.partialorder %v3382, 0.0
    %vm3639 = vcmp.ge.f32.partialorder %v3383, 0.0
    %vm3640 = vcmp.ge.f32.partialorder %v3384, 0.0
    %vm3641 = vcmp.ge.f32.partialorder %v3385, 0.0
    %vm3642 = vcmp.ge.f32.partialorder %v3386, 0.0
    %vm3643 = vcmp.ge.f32.partialorder %v3387, 0.0
    %vm3644 = vcmp.ge.f32.partialorder %v3388, 0.0
    %vm3645 = vcmp.ge.f32.partialorder %v3389, 0.0
    %vm3646 = vcmp.ge.f32.partialorder %v3390, 0.0
    %vm3647 = vcmp.ge.f32.partialorder %v3391, 0.0
    %vm3648 = vcmp.ge.f32.partialorder %v3392, 0.0
    %vm3649 = vcmp.ge.f32.partialorder %v3393, 0.0
    %vm3650 = vcmp.ge.f32.partialorder %v3394, 0.0
    %vm3651 = vcmp.ge.f32.partialorder %v3395, 0.0
    %vm3652 = vcmp.ge.f32.partialorder %v3396, 0.0
    %vm3653 = vcmp.ge.f32.partialorder %v3397, 0.0
    %vm3654 = vcmp.ge.f32.partialorder %v3398, 0.0
    %vm3655 = vcmp.ge.f32.partialorder %v3399, 0.0
    %vm3656 = vcmp.ge.f32.partialorder %v3400, 0.0
    %vm3657 = vcmp.ge.f32.partialorder %v3401, 0.0
    %vm3658 = vcmp.ge.f32.partialorder %v3402, 0.0
    %vm3659 = vcmp.ge.f32.partialorder %v3403, 0.0
    %vm3660 = vcmp.ge.f32.partialorder %v3404, 0.0
    %vm3661 = vcmp.ge.f32.partialorder %v3405, 0.0
    %vm3662 = vcmp.ge.f32.partialorder %v3406, 0.0
    %vm3663 = vcmp.ge.f32.partialorder %v3407, 0.0
    %vm3664 = vcmp.ge.f32.partialorder %v3408, 0.0
    %vm3665 = vcmp.ge.f32.partialorder %v3409, 0.0
    %vm3666 = vcmp.ge.f32.partialorder %v3410, 0.0
    %vm3667 = vcmp.ge.f32.partialorder %v3411, 0.0
    %vm3668 = vcmp.ge.f32.partialorder %v3412, 0.0
    %vm3669 = vcmp.ge.f32.partialorder %v3413, 0.0
    %vm3670 = vcmp.ge.f32.partialorder %v3414, 0.0
    %vm3671 = vcmp.ge.f32.partialorder %v3415, 0.0
    %vm3672 = vcmp.ge.f32.partialorder %v3416, 0.0
    %vm3673 = vcmp.ge.f32.partialorder %v3417, 0.0
    %vm3674 = vcmp.ge.f32.partialorder %v3418, 0.0
    %vm3675 = vcmp.ge.f32.partialorder %v3419, 0.0
    %vm3676 = vcmp.ge.f32.partialorder %v3420, 0.0
    %vm3677 = vcmp.ge.f32.partialorder %v3421, 0.0
    %vm3678 = vcmp.ge.f32.partialorder %v3422, 0.0
    %vm3679 = vcmp.ge.f32.partialorder %v3423, 0.0
    %vm3680 = vcmp.ge.f32.partialorder %v3424, 0.0
    %vm3681 = vcmp.ge.f32.partialorder %v3425, 0.0
    %vm3682 = vcmp.ge.f32.partialorder %v3426, 0.0
    %vm3683 = vcmp.ge.f32.partialorder %v3427, 0.0
    %vm3684 = vcmp.ge.f32.partialorder %v3428, 0.0
    %vm3685 = vcmp.ge.f32.partialorder %v3429, 0.0
    %vm3686 = vcmp.ge.f32.partialorder %v3430, 0.0
    %vm3687 = vcmp.ge.f32.partialorder %v3431, 0.0
    %vm3688 = vcmp.ge.f32.partialorder %v3432, 0.0
    %vm3689 = vcmp.ge.f32.partialorder %v3433, 0.0
    %vm3690 = vcmp.ge.f32.partialorder %v3434, 0.0
    %vm3691 = vcmp.ge.f32.partialorder %v3435, 0.0
    %vm3692 = vcmp.ge.f32.partialorder %v3436, 0.0
    %vm3693 = vcmp.ge.f32.partialorder %v3437, 0.0
    %vm3694 = vcmp.ge.f32.partialorder %v3438, 0.0
    %vm3695 = vcmp.ge.f32.partialorder %v3439, 0.0
    %vm3696 = vcmp.ge.f32.partialorder %v3440, 0.0
    %vm3697 = vcmp.ge.f32.partialorder %v3441, 0.0
    %vm3698 = vcmp.ge.f32.partialorder %v3442, 0.0
    %vm3699 = vcmp.ge.f32.partialorder %v3443, 0.0
    %vm3700 = vcmp.ge.f32.partialorder %v3444, 0.0
    %vm3701 = vcmp.ge.f32.partialorder %v3445, 0.0
    %vm3702 = vcmp.ge.f32.partialorder %v3446, 0.0
    %vm3703 = vcmp.ge.f32.partialorder %v3447, 0.0
    %vm3704 = vcmp.ge.f32.partialorder %v3448, 0.0
    %vm3705 = vcmp.ge.f32.partialorder %v3449, 0.0
    %vm3706 = vcmp.ge.f32.partialorder %v3450, 0.0
    %vm3707 = vcmp.ge.f32.partialorder %v3451, 0.0
    %vm3708 = vcmp.ge.f32.partialorder %v3452, 0.0
    %vm3709 = vcmp.ge.f32.partialorder %v3453, 0.0
    %vm3710 = vcmp.ge.f32.partialorder %v3454, 0.0
    %vm3711 = vcmp.ge.f32.partialorder %v3455, 0.0
    %vm3712 = vcmp.ge.f32.partialorder %v3456, 0.0
    %vm3713 = vcmp.ge.f32.partialorder %v3457, 0.0
    %vm3714 = vcmp.ge.f32.partialorder %v3458, 0.0
    %vm3715 = vcmp.ge.f32.partialorder %v3459, 0.0
    %vm3716 = vcmp.ge.f32.partialorder %v3460, 0.0
    %vm3717 = vcmp.ge.f32.partialorder %v3461, 0.0
    %vm3718 = vcmp.ge.f32.partialorder %v3462, 0.0
    %vm3719 = vcmp.ge.f32.partialorder %v3463, 0.0
    %vm3720 = vcmp.ge.f32.partialorder %v3464, 0.0
    %vm3721 = vcmp.ge.f32.partialorder %v3465, 0.0
    %vm3722 = vcmp.ge.f32.partialorder %v3466, 0.0
    %vm3723 = vcmp.ge.f32.partialorder %v3467, 0.0
    %vm3724 = vcmp.ge.f32.partialorder %v3468, 0.0
    %vm3725 = vcmp.ge.f32.partialorder %v3469, 0.0
    %vm3726 = vcmp.ge.f32.partialorder %v3470, 0.0
    %vm3727 = vcmp.ge.f32.partialorder %v3471, 0.0
    %vm3728 = vcmp.ge.f32.partialorder %v3472, 0.0
    %vm3729 = vcmp.ge.f32.partialorder %v3473, 0.0
    %vm3730 = vcmp.ge.f32.partialorder %v3474, 0.0
    %vm3731 = vcmp.ge.f32.partialorder %v3475, 0.0
    %vm3732 = vcmp.ge.f32.partialorder %v3476, 0.0
    %vm3733 = vcmp.ge.f32.partialorder %v3477, 0.0
    %vm3734 = vcmp.ge.f32.partialorder %v3478, 0.0
    %vm3735 = vcmp.ge.f32.partialorder %v3479, 0.0
    %vm3736 = vcmp.ge.f32.partialorder %v3480, 0.0
    %vm3737 = vcmp.ge.f32.partialorder %v3481, 0.0
    %vm3738 = vcmp.ge.f32.partialorder %v3482, 0.0
    %vm3739 = vcmp.ge.f32.partialorder %v3483, 0.0
    %vm3740 = vcmp.ge.f32.partialorder %v3484, 0.0
    %vm3741 = vcmp.ge.f32.partialorder %v3485, 0.0
    %vm3742 = vcmp.ge.f32.partialorder %v3486, 0.0
    %vm3743 = vcmp.ge.f32.partialorder %v3487, 0.0
    %vm3744 = vcmp.ge.f32.partialorder %v3488, 0.0
    %vm3745 = vcmp.ge.f32.partialorder %v3489, 0.0
    %vm3746 = vcmp.ge.f32.partialorder %v3490, 0.0
    %vm3747 = vcmp.ge.f32.partialorder %v3491, 0.0
    %vm3748 = vcmp.ge.f32.partialorder %v3492, 0.0
    %vm3749 = vcmp.ge.f32.partialorder %v3493, 0.0
    %vm3750 = vcmp.ge.f32.partialorder %v3494, 0.0
    %vm3751 = vcmp.ge.f32.partialorder %v3495, 0.0
    %vm3752 = vcmp.ge.f32.partialorder %v3496, 0.0
    %vm3753 = vcmp.ge.f32.partialorder %v3497, 0.0
    %vm3754 = vcmp.ge.f32.partialorder %v3498, 0.0
    %vm3755 = vcmp.ge.f32.partialorder %v3499, 0.0
    %vm3756 = vcmp.ge.f32.partialorder %v3500, 0.0
    %vm3757 = vcmp.ge.f32.partialorder %v3501, 0.0
    %vm3758 = vcmp.ge.f32.partialorder %v3502, 0.0
    %vm3759 = vcmp.ge.f32.partialorder %v3503, 0.0
    %vm3760 = vcmp.ge.f32.partialorder %v3504, 0.0
    %vm3761 = vcmp.ge.f32.partialorder %v3505, 0.0
    %vm3762 = vcmp.ge.f32.partialorder %v3506, 0.0
    %vm3763 = vcmp.ge.f32.partialorder %v3507, 0.0
    %vm3764 = vcmp.ge.f32.partialorder %v3508, 0.0
    %vm3765 = vcmp.ge.f32.partialorder %v3509, 0.0
    %vm3766 = vcmp.ge.f32.partialorder %v3510, 0.0
    %vm3767 = vcmp.ge.f32.partialorder %v3511, 0.0
    %vm3768 = vcmp.ge.f32.partialorder %v3512, 0.0
    %vm3769 = vcmp.ge.f32.partialorder %v3513, 0.0
    %vm3770 = vcmp.ge.f32.partialorder %v3514, 0.0
    %vm3771 = vcmp.ge.f32.partialorder %v3515, 0.0
    %vm3772 = vcmp.ge.f32.partialorder %v3516, 0.0
    %vm3773 = vcmp.ge.f32.partialorder %v3517, 0.0
    %vm3774 = vcmp.ge.f32.partialorder %v3518, 0.0
    %vm3775 = vcmp.ge.f32.partialorder %v3519, 0.0
    %vm3776 = vcmp.ge.f32.partialorder %v3520, 0.0
    %vm3777 = vcmp.ge.f32.partialorder %v3521, 0.0
    %vm3778 = vcmp.ge.f32.partialorder %v3522, 0.0
    %vm3779 = vcmp.ge.f32.partialorder %v3523, 0.0
    %v3780 = vmul.f32 %v3268, 0.2
    %v3781 = vmul.f32 %v3269, 0.2
    %v3782 = vmul.f32 %v3270, 0.2
    %v3783 = vmul.f32 %v3271, 0.2
    %v3784 = vmul.f32 %v3272, 0.2
    %v3785 = vmul.f32 %v3273, 0.2
    %v3786 = vmul.f32 %v3274, 0.2
    %v3787 = vmul.f32 %v3275, 0.2
    %v3788 = vmul.f32 %v3276, 0.2
    %v3789 = vmul.f32 %v3277, 0.2
    %v3790 = vmul.f32 %v3278, 0.2
    %v3791 = vmul.f32 %v3279, 0.2
    %v3792 = vmul.f32 %v3280, 0.2
    %v3793 = vmul.f32 %v3281, 0.2
    %v3794 = vmul.f32 %v3282, 0.2
    %v3795 = vmul.f32 %v3283, 0.2
    %v3796 = vmul.f32 %v3284, 0.2
    %v3797 = vmul.f32 %v3285, 0.2
    %v3798 = vmul.f32 %v3286, 0.2
    %v3799 = vmul.f32 %v3287, 0.2
    %v3800 = vmul.f32 %v3288, 0.2
    %v3801 = vmul.f32 %v3289, 0.2
    %v3802 = vmul.f32 %v3290, 0.2
    %v3803 = vmul.f32 %v3291, 0.2
    %v3804 = vmul.f32 %v3292, 0.2
    %v3805 = vmul.f32 %v3293, 0.2
    %v3806 = vmul.f32 %v3294, 0.2
    %v3807 = vmul.f32 %v3295, 0.2
    %v3808 = vmul.f32 %v3296, 0.2
    %v3809 = vmul.f32 %v3297, 0.2
    %v3810 = vmul.f32 %v3298, 0.2
    %v3811 = vmul.f32 %v3299, 0.2
    %v3812 = vmul.f32 %v3300, 0.2
    %v3813 = vmul.f32 %v3301, 0.2
    %v3814 = vmul.f32 %v3302, 0.2
    %v3815 = vmul.f32 %v3303, 0.2
    %v3816 = vmul.f32 %v3304, 0.2
    %v3817 = vmul.f32 %v3305, 0.2
    %v3818 = vmul.f32 %v3306, 0.2
    %v3819 = vmul.f32 %v3307, 0.2
    %v3820 = vmul.f32 %v3308, 0.2
    %v3821 = vmul.f32 %v3309, 0.2
    %v3822 = vmul.f32 %v3310, 0.2
    %v3823 = vmul.f32 %v3311, 0.2
    %v3824 = vmul.f32 %v3312, 0.2
    %v3825 = vmul.f32 %v3313, 0.2
    %v3826 = vmul.f32 %v3314, 0.2
    %v3827 = vmul.f32 %v3315, 0.2
    %v3828 = vmul.f32 %v3316, 0.2
    %v3829 = vmul.f32 %v3317, 0.2
    %v3830 = vmul.f32 %v3318, 0.2
    %v3831 = vmul.f32 %v3319, 0.2
    %v3832 = vmul.f32 %v3320, 0.2
    %v3833 = vmul.f32 %v3321, 0.2
    %v3834 = vmul.f32 %v3322, 0.2
    %v3835 = vmul.f32 %v3323, 0.2
    %v3836 = vmul.f32 %v3324, 0.2
    %v3837 = vmul.f32 %v3325, 0.2
    %v3838 = vmul.f32 %v3326, 0.2
    %v3839 = vmul.f32 %v3327, 0.2
    %v3840 = vmul.f32 %v3328, 0.2
    %v3841 = vmul.f32 %v3329, 0.2
    %v3842 = vmul.f32 %v3330, 0.2
    %v3843 = vmul.f32 %v3331, 0.2
    %v3844 = vmul.f32 %v3332, 0.2
    %v3845 = vmul.f32 %v3333, 0.2
    %v3846 = vmul.f32 %v3334, 0.2
    %v3847 = vmul.f32 %v3335, 0.2
    %v3848 = vmul.f32 %v3336, 0.2
    %v3849 = vmul.f32 %v3337, 0.2
    %v3850 = vmul.f32 %v3338, 0.2
    %v3851 = vmul.f32 %v3339, 0.2
    %v3852 = vmul.f32 %v3340, 0.2
    %v3853 = vmul.f32 %v3341, 0.2
    %v3854 = vmul.f32 %v3342, 0.2
    %v3855 = vmul.f32 %v3343, 0.2
    %v3856 = vmul.f32 %v3344, 0.2
    %v3857 = vmul.f32 %v3345, 0.2
    %v3858 = vmul.f32 %v3346, 0.2
    %v3859 = vmul.f32 %v3347, 0.2
    %v3860 = vmul.f32 %v3348, 0.2
    %v3861 = vmul.f32 %v3349, 0.2
    %v3862 = vmul.f32 %v3350, 0.2
    %v3863 = vmul.f32 %v3351, 0.2
    %v3864 = vmul.f32 %v3352, 0.2
    %v3865 = vmul.f32 %v3353, 0.2
    %v3866 = vmul.f32 %v3354, 0.2
    %v3867 = vmul.f32 %v3355, 0.2
    %v3868 = vmul.f32 %v3356, 0.2
    %v3869 = vmul.f32 %v3357, 0.2
    %v3870 = vmul.f32 %v3358, 0.2
    %v3871 = vmul.f32 %v3359, 0.2
    %v3872 = vmul.f32 %v3360, 0.2
    %v3873 = vmul.f32 %v3361, 0.2
    %v3874 = vmul.f32 %v3362, 0.2
    %v3875 = vmul.f32 %v3363, 0.2
    %v3876 = vmul.f32 %v3364, 0.2
    %v3877 = vmul.f32 %v3365, 0.2
    %v3878 = vmul.f32 %v3366, 0.2
    %v3879 = vmul.f32 %v3367, 0.2
    %v3880 = vmul.f32 %v3368, 0.2
    %v3881 = vmul.f32 %v3369, 0.2
    %v3882 = vmul.f32 %v3370, 0.2
    %v3883 = vmul.f32 %v3371, 0.2
    %v3884 = vmul.f32 %v3372, 0.2
    %v3885 = vmul.f32 %v3373, 0.2
    %v3886 = vmul.f32 %v3374, 0.2
    %v3887 = vmul.f32 %v3375, 0.2
    %v3888 = vmul.f32 %v3376, 0.2
    %v3889 = vmul.f32 %v3377, 0.2
    %v3890 = vmul.f32 %v3378, 0.2
    %v3891 = vmul.f32 %v3379, 0.2
    %v3892 = vmul.f32 %v3380, 0.2
    %v3893 = vmul.f32 %v3381, 0.2
    %v3894 = vmul.f32 %v3382, 0.2
    %v3895 = vmul.f32 %v3383, 0.2
    %v3896 = vmul.f32 %v3384, 0.2
    %v3897 = vmul.f32 %v3385, 0.2
    %v3898 = vmul.f32 %v3386, 0.2
    %v3899 = vmul.f32 %v3387, 0.2
    %v3900 = vmul.f32 %v3388, 0.2
    %v3901 = vmul.f32 %v3389, 0.2
    %v3902 = vmul.f32 %v3390, 0.2
    %v3903 = vmul.f32 %v3391, 0.2
    %v3904 = vmul.f32 %v3392, 0.2
    %v3905 = vmul.f32 %v3393, 0.2
    %v3906 = vmul.f32 %v3394, 0.2
    %v3907 = vmul.f32 %v3395, 0.2
    %v3908 = vmul.f32 %v3396, 0.2
    %v3909 = vmul.f32 %v3397, 0.2
    %v3910 = vmul.f32 %v3398, 0.2
    %v3911 = vmul.f32 %v3399, 0.2
    %v3912 = vmul.f32 %v3400, 0.2
    %v3913 = vmul.f32 %v3401, 0.2
    %v3914 = vmul.f32 %v3402, 0.2
    %v3915 = vmul.f32 %v3403, 0.2
    %v3916 = vmul.f32 %v3404, 0.2
    %v3917 = vmul.f32 %v3405, 0.2
    %v3918 = vmul.f32 %v3406, 0.2
    %v3919 = vmul.f32 %v3407, 0.2
    %v3920 = vmul.f32 %v3408, 0.2
    %v3921 = vmul.f32 %v3409, 0.2
    %v3922 = vmul.f32 %v3410, 0.2
    %v3923 = vmul.f32 %v3411, 0.2
    %v3924 = vmul.f32 %v3412, 0.2
    %v3925 = vmul.f32 %v3413, 0.2
    %v3926 = vmul.f32 %v3414, 0.2
    %v3927 = vmul.f32 %v3415, 0.2
    %v3928 = vmul.f32 %v3416, 0.2
    %v3929 = vmul.f32 %v3417, 0.2
    %v3930 = vmul.f32 %v3418, 0.2
    %v3931 = vmul.f32 %v3419, 0.2
    %v3932 = vmul.f32 %v3420, 0.2
    %v3933 = vmul.f32 %v3421, 0.2
    %v3934 = vmul.f32 %v3422, 0.2
    %v3935 = vmul.f32 %v3423, 0.2
    %v3936 = vmul.f32 %v3424, 0.2
    %v3937 = vmul.f32 %v3425, 0.2
    %v3938 = vmul.f32 %v3426, 0.2
    %v3939 = vmul.f32 %v3427, 0.2
    %v3940 = vmul.f32 %v3428, 0.2
    %v3941 = vmul.f32 %v3429, 0.2
    %v3942 = vmul.f32 %v3430, 0.2
    %v3943 = vmul.f32 %v3431, 0.2
    %v3944 = vmul.f32 %v3432, 0.2
    %v3945 = vmul.f32 %v3433, 0.2
    %v3946 = vmul.f32 %v3434, 0.2
    %v3947 = vmul.f32 %v3435, 0.2
    %v3948 = vmul.f32 %v3436, 0.2
    %v3949 = vmul.f32 %v3437, 0.2
    %v3950 = vmul.f32 %v3438, 0.2
    %v3951 = vmul.f32 %v3439, 0.2
    %v3952 = vmul.f32 %v3440, 0.2
    %v3953 = vmul.f32 %v3441, 0.2
    %v3954 = vmul.f32 %v3442, 0.2
    %v3955 = vmul.f32 %v3443, 0.2
    %v3956 = vmul.f32 %v3444, 0.2
    %v3957 = vmul.f32 %v3445, 0.2
    %v3958 = vmul.f32 %v3446, 0.2
    %v3959 = vmul.f32 %v3447, 0.2
    %v3960 = vmul.f32 %v3448, 0.2
    %v3961 = vmul.f32 %v3449, 0.2
    %v3962 = vmul.f32 %v3450, 0.2
    %v3963 = vmul.f32 %v3451, 0.2
    %v3964 = vmul.f32 %v3452, 0.2
    %v3965 = vmul.f32 %v3453, 0.2
    %v3966 = vmul.f32 %v3454, 0.2
    %v3967 = vmul.f32 %v3455, 0.2
    %v3968 = vmul.f32 %v3456, 0.2
    %v3969 = vmul.f32 %v3457, 0.2
    %v3970 = vmul.f32 %v3458, 0.2
    %v3971 = vmul.f32 %v3459, 0.2
    %v3972 = vmul.f32 %v3460, 0.2
    %v3973 = vmul.f32 %v3461, 0.2
    %v3974 = vmul.f32 %v3462, 0.2
    %v3975 = vmul.f32 %v3463, 0.2
    %v3976 = vmul.f32 %v3464, 0.2
    %v3977 = vmul.f32 %v3465, 0.2
    %v3978 = vmul.f32 %v3466, 0.2
    %v3979 = vmul.f32 %v3467, 0.2
    %v3980 = vmul.f32 %v3468, 0.2
    %v3981 = vmul.f32 %v3469, 0.2
    %v3982 = vmul.f32 %v3470, 0.2
    %v3983 = vmul.f32 %v3471, 0.2
    %v3984 = vmul.f32 %v3472, 0.2
    %v3985 = vmul.f32 %v3473, 0.2
    %v3986 = vmul.f32 %v3474, 0.2
    %v3987 = vmul.f32 %v3475, 0.2
    %v3988 = vmul.f32 %v3476, 0.2
    %v3989 = vmul.f32 %v3477, 0.2
    %v3990 = vmul.f32 %v3478, 0.2
    %v3991 = vmul.f32 %v3479, 0.2
    %v3992 = vmul.f32 %v3480, 0.2
    %v3993 = vmul.f32 %v3481, 0.2
    %v3994 = vmul.f32 %v3482, 0.2
    %v3995 = vmul.f32 %v3483, 0.2
    %v3996 = vmul.f32 %v3484, 0.2
    %v3997 = vmul.f32 %v3485, 0.2
    %v3998 = vmul.f32 %v3486, 0.2
    %v3999 = vmul.f32 %v3487, 0.2
    %v4000 = vmul.f32 %v3488, 0.2
    %v4001 = vmul.f32 %v3489, 0.2
    %v4002 = vmul.f32 %v3490, 0.2
    %v4003 = vmul.f32 %v3491, 0.2
    %v4004 = vmul.f32 %v3492, 0.2
    %v4005 = vmul.f32 %v3493, 0.2
    %v4006 = vmul.f32 %v3494, 0.2
    %v4007 = vmul.f32 %v3495, 0.2
    %v4008 = vmul.f32 %v3496, 0.2
    %v4009 = vmul.f32 %v3497, 0.2
    %v4010 = vmul.f32 %v3498, 0.2
    %v4011 = vmul.f32 %v3499, 0.2
    %v4012 = vmul.f32 %v3500, 0.2
    %v4013 = vmul.f32 %v3501, 0.2
    %v4014 = vmul.f32 %v3502, 0.2
    %v4015 = vmul.f32 %v3503, 0.2
    %v4016 = vmul.f32 %v3504, 0.2
    %v4017 = vmul.f32 %v3505, 0.2
    %v4018 = vmul.f32 %v3506, 0.2
    %v4019 = vmul.f32 %v3507, 0.2
    %v4020 = vmul.f32 %v3508, 0.2
    %v4021 = vmul.f32 %v3509, 0.2
    %v4022 = vmul.f32 %v3510, 0.2
    %v4023 = vmul.f32 %v3511, 0.2
    %v4024 = vmul.f32 %v3512, 0.2
    %v4025 = vmul.f32 %v3513, 0.2
    %v4026 = vmul.f32 %v3514, 0.2
    %v4027 = vmul.f32 %v3515, 0.2
    %v4028 = vmul.f32 %v3516, 0.2
    %v4029 = vmul.f32 %v3517, 0.2
    %v4030 = vmul.f32 %v3518, 0.2
    %v4031 = vmul.f32 %v3519, 0.2
    %v4032 = vmul.f32 %v3520, 0.2
    %v4033 = vmul.f32 %v3521, 0.2
    %v4034 = vmul.f32 %v3522, 0.2
    %v4035 = vmul.f32 %v3523, 0.2
    %v4036 = vsel %vm3524, %v3268, %v3780
    %v4037 = vsel %vm3525, %v3269, %v3781
    %v4038 = vsel %vm3526, %v3270, %v3782
    %v4039 = vsel %vm3527, %v3271, %v3783
    %v4040 = vsel %vm3528, %v3272, %v3784
    %v4041 = vsel %vm3529, %v3273, %v3785
    %v4042 = vsel %vm3530, %v3274, %v3786
    %v4043 = vsel %vm3531, %v3275, %v3787
    %v4044 = vsel %vm3532, %v3276, %v3788
    %v4045 = vsel %vm3533, %v3277, %v3789
    %v4046 = vsel %vm3534, %v3278, %v3790
    %v4047 = vsel %vm3535, %v3279, %v3791
    %v4048 = vsel %vm3536, %v3280, %v3792
    %v4049 = vsel %vm3537, %v3281, %v3793
    %v4050 = vsel %vm3538, %v3282, %v3794
    %v4051 = vsel %vm3539, %v3283, %v3795
    %v4052 = vsel %vm3540, %v3284, %v3796
    %v4053 = vsel %vm3541, %v3285, %v3797
    %v4054 = vsel %vm3542, %v3286, %v3798
    %v4055 = vsel %vm3543, %v3287, %v3799
    %v4056 = vsel %vm3544, %v3288, %v3800
    %v4057 = vsel %vm3545, %v3289, %v3801
    %v4058 = vsel %vm3546, %v3290, %v3802
    %v4059 = vsel %vm3547, %v3291, %v3803
    %v4060 = vsel %vm3548, %v3292, %v3804
    %v4061 = vsel %vm3549, %v3293, %v3805
    %v4062 = vsel %vm3550, %v3294, %v3806
    %v4063 = vsel %vm3551, %v3295, %v3807
    %v4064 = vsel %vm3552, %v3296, %v3808
    %v4065 = vsel %vm3553, %v3297, %v3809
    %v4066 = vsel %vm3554, %v3298, %v3810
    %v4067 = vsel %vm3555, %v3299, %v3811
    %v4068 = vsel %vm3556, %v3300, %v3812
    %v4069 = vsel %vm3557, %v3301, %v3813
    %v4070 = vsel %vm3558, %v3302, %v3814
    %v4071 = vsel %vm3559, %v3303, %v3815
    %v4072 = vsel %vm3560, %v3304, %v3816
    %v4073 = vsel %vm3561, %v3305, %v3817
    %v4074 = vsel %vm3562, %v3306, %v3818
    %v4075 = vsel %vm3563, %v3307, %v3819
    %v4076 = vsel %vm3564, %v3308, %v3820
    %v4077 = vsel %vm3565, %v3309, %v3821
    %v4078 = vsel %vm3566, %v3310, %v3822
    %v4079 = vsel %vm3567, %v3311, %v3823
    %v4080 = vsel %vm3568, %v3312, %v3824
    %v4081 = vsel %vm3569, %v3313, %v3825
    %v4082 = vsel %vm3570, %v3314, %v3826
    %v4083 = vsel %vm3571, %v3315, %v3827
    %v4084 = vsel %vm3572, %v3316, %v3828
    %v4085 = vsel %vm3573, %v3317, %v3829
    %v4086 = vsel %vm3574, %v3318, %v3830
    %v4087 = vsel %vm3575, %v3319, %v3831
    %v4088 = vsel %vm3576, %v3320, %v3832
    %v4089 = vsel %vm3577, %v3321, %v3833
    %v4090 = vsel %vm3578, %v3322, %v3834
    %v4091 = vsel %vm3579, %v3323, %v3835
    %v4092 = vsel %vm3580, %v3324, %v3836
    %v4093 = vsel %vm3581, %v3325, %v3837
    %v4094 = vsel %vm3582, %v3326, %v3838
    %v4095 = vsel %vm3583, %v3327, %v3839
    %v4096 = vsel %vm3584, %v3328, %v3840
    %v4097 = vsel %vm3585, %v3329, %v3841
    %v4098 = vsel %vm3586, %v3330, %v3842
    %v4099 = vsel %vm3587, %v3331, %v3843
    %v4100 = vsel %vm3588, %v3332, %v3844
    %v4101 = vsel %vm3589, %v3333, %v3845
    %v4102 = vsel %vm3590, %v3334, %v3846
    %v4103 = vsel %vm3591, %v3335, %v3847
    %v4104 = vsel %vm3592, %v3336, %v3848
    %v4105 = vsel %vm3593, %v3337, %v3849
    %v4106 = vsel %vm3594, %v3338, %v3850
    %v4107 = vsel %vm3595, %v3339, %v3851
    %v4108 = vsel %vm3596, %v3340, %v3852
    %v4109 = vsel %vm3597, %v3341, %v3853
    %v4110 = vsel %vm3598, %v3342, %v3854
    %v4111 = vsel %vm3599, %v3343, %v3855
    %v4112 = vsel %vm3600, %v3344, %v3856
    %v4113 = vsel %vm3601, %v3345, %v3857
    %v4114 = vsel %vm3602, %v3346, %v3858
    %v4115 = vsel %vm3603, %v3347, %v3859
    %v4116 = vsel %vm3604, %v3348, %v3860
    %v4117 = vsel %vm3605, %v3349, %v3861
    %v4118 = vsel %vm3606, %v3350, %v3862
    %v4119 = vsel %vm3607, %v3351, %v3863
    %v4120 = vsel %vm3608, %v3352, %v3864
    %v4121 = vsel %vm3609, %v3353, %v3865
    %v4122 = vsel %vm3610, %v3354, %v3866
    %v4123 = vsel %vm3611, %v3355, %v3867
    %v4124 = vsel %vm3612, %v3356, %v3868
    %v4125 = vsel %vm3613, %v3357, %v3869
    %v4126 = vsel %vm3614, %v3358, %v3870
    %v4127 = vsel %vm3615, %v3359, %v3871
    %v4128 = vsel %vm3616, %v3360, %v3872
    %v4129 = vsel %vm3617, %v3361, %v3873
    %v4130 = vsel %vm3618, %v3362, %v3874
    %v4131 = vsel %vm3619, %v3363, %v3875
    %v4132 = vsel %vm3620, %v3364, %v3876
    %v4133 = vsel %vm3621, %v3365, %v3877
    %v4134 = vsel %vm3622, %v3366, %v3878
    %v4135 = vsel %vm3623, %v3367, %v3879
    %v4136 = vsel %vm3624, %v3368, %v3880
    %v4137 = vsel %vm3625, %v3369, %v3881
    %v4138 = vsel %vm3626, %v3370, %v3882
    %v4139 = vsel %vm3627, %v3371, %v3883
    %v4140 = vsel %vm3628, %v3372, %v3884
    %v4141 = vsel %vm3629, %v3373, %v3885
    %v4142 = vsel %vm3630, %v3374, %v3886
    %v4143 = vsel %vm3631, %v3375, %v3887
    %v4144 = vsel %vm3632, %v3376, %v3888
    %v4145 = vsel %vm3633, %v3377, %v3889
    %v4146 = vsel %vm3634, %v3378, %v3890
    %v4147 = vsel %vm3635, %v3379, %v3891
    %v4148 = vsel %vm3636, %v3380, %v3892
    %v4149 = vsel %vm3637, %v3381, %v3893
    %v4150 = vsel %vm3638, %v3382, %v3894
    %v4151 = vsel %vm3639, %v3383, %v3895
    %v4152 = vsel %vm3640, %v3384, %v3896
    %v4153 = vsel %vm3641, %v3385, %v3897
    %v4154 = vsel %vm3642, %v3386, %v3898
    %v4155 = vsel %vm3643, %v3387, %v3899
    %v4156 = vsel %vm3644, %v3388, %v3900
    %v4157 = vsel %vm3645, %v3389, %v3901
    %v4158 = vsel %vm3646, %v3390, %v3902
    %v4159 = vsel %vm3647, %v3391, %v3903
    %v4160 = vsel %vm3648, %v3392, %v3904
    %v4161 = vsel %vm3649, %v3393, %v3905
    %v4162 = vsel %vm3650, %v3394, %v3906
    %v4163 = vsel %vm3651, %v3395, %v3907
    %v4164 = vsel %vm3652, %v3396, %v3908
    %v4165 = vsel %vm3653, %v3397, %v3909
    %v4166 = vsel %vm3654, %v3398, %v3910
    %v4167 = vsel %vm3655, %v3399, %v3911
    %v4168 = vsel %vm3656, %v3400, %v3912
    %v4169 = vsel %vm3657, %v3401, %v3913
    %v4170 = vsel %vm3658, %v3402, %v3914
    %v4171 = vsel %vm3659, %v3403, %v3915
    %v4172 = vsel %vm3660, %v3404, %v3916
    %v4173 = vsel %vm3661, %v3405, %v3917
    %v4174 = vsel %vm3662, %v3406, %v3918
    %v4175 = vsel %vm3663, %v3407, %v3919
    %v4176 = vsel %vm3664, %v3408, %v3920
    %v4177 = vsel %vm3665, %v3409, %v3921
    %v4178 = vsel %vm3666, %v3410, %v3922
    %v4179 = vsel %vm3667, %v3411, %v3923
    %v4180 = vsel %vm3668, %v3412, %v3924
    %v4181 = vsel %vm3669, %v3413, %v3925
    %v4182 = vsel %vm3670, %v3414, %v3926
    %v4183 = vsel %vm3671, %v3415, %v3927
    %v4184 = vsel %vm3672, %v3416, %v3928
    %v4185 = vsel %vm3673, %v3417, %v3929
    %v4186 = vsel %vm3674, %v3418, %v3930
    %v4187 = vsel %vm3675, %v3419, %v3931
    %v4188 = vsel %vm3676, %v3420, %v3932
    %v4189 = vsel %vm3677, %v3421, %v3933
    %v4190 = vsel %vm3678, %v3422, %v3934
    %v4191 = vsel %vm3679, %v3423, %v3935
    %v4192 = vsel %vm3680, %v3424, %v3936
    %v4193 = vsel %vm3681, %v3425, %v3937
    %v4194 = vsel %vm3682, %v3426, %v3938
    %v4195 = vsel %vm3683, %v3427, %v3939
    %v4196 = vsel %vm3684, %v3428, %v3940
    %v4197 = vsel %vm3685, %v3429, %v3941
    %v4198 = vsel %vm3686, %v3430, %v3942
    %v4199 = vsel %vm3687, %v3431, %v3943
    %v4200 = vsel %vm3688, %v3432, %v3944
    %v4201 = vsel %vm3689, %v3433, %v3945
    %v4202 = vsel %vm3690, %v3434, %v3946
    %v4203 = vsel %vm3691, %v3435, %v3947
    %v4204 = vsel %vm3692, %v3436, %v3948
    %v4205 = vsel %vm3693, %v3437, %v3949
    %v4206 = vsel %vm3694, %v3438, %v3950
    %v4207 = vsel %vm3695, %v3439, %v3951
    %v4208 = vsel %vm3696, %v3440, %v3952
    %v4209 = vsel %vm3697, %v3441, %v3953
    %v4210 = vsel %vm3698, %v3442, %v3954
    %v4211 = vsel %vm3699, %v3443, %v3955
    %v4212 = vsel %vm3700, %v3444, %v3956
    %v4213 = vsel %vm3701, %v3445, %v3957
    %v4214 = vsel %vm3702, %v3446, %v3958
    %v4215 = vsel %vm3703, %v3447, %v3959
    %v4216 = vsel %vm3704, %v3448, %v3960
    %v4217 = vsel %vm3705, %v3449, %v3961
    %v4218 = vsel %vm3706, %v3450, %v3962
    %v4219 = vsel %vm3707, %v3451, %v3963
    %v4220 = vsel %vm3708, %v3452, %v3964
    %v4221 = vsel %vm3709, %v3453, %v3965
    %v4222 = vsel %vm3710, %v3454, %v3966
    %v4223 = vsel %vm3711, %v3455, %v3967
    %v4224 = vsel %vm3712, %v3456, %v3968
    %v4225 = vsel %vm3713, %v3457, %v3969
    %v4226 = vsel %vm3714, %v3458, %v3970
    %v4227 = vsel %vm3715, %v3459, %v3971
    %v4228 = vsel %vm3716, %v3460, %v3972
    %v4229 = vsel %vm3717, %v3461, %v3973
    %v4230 = vsel %vm3718, %v3462, %v3974
    %v4231 = vsel %vm3719, %v3463, %v3975
    %v4232 = vsel %vm3720, %v3464, %v3976
    %v4233 = vsel %vm3721, %v3465, %v3977
    %v4234 = vsel %vm3722, %v3466, %v3978
    %v4235 = vsel %vm3723, %v3467, %v3979
    %v4236 = vsel %vm3724, %v3468, %v3980
    %v4237 = vsel %vm3725, %v3469, %v3981
    %v4238 = vsel %vm3726, %v3470, %v3982
    %v4239 = vsel %vm3727, %v3471, %v3983
    %v4240 = vsel %vm3728, %v3472, %v3984
    %v4241 = vsel %vm3729, %v3473, %v3985
    %v4242 = vsel %vm3730, %v3474, %v3986
    %v4243 = vsel %vm3731, %v3475, %v3987
    %v4244 = vsel %vm3732, %v3476, %v3988
    %v4245 = vsel %vm3733, %v3477, %v3989
    %v4246 = vsel %vm3734, %v3478, %v3990
    %v4247 = vsel %vm3735, %v3479, %v3991
    %v4248 = vsel %vm3736, %v3480, %v3992
    %v4249 = vsel %vm3737, %v3481, %v3993
    %v4250 = vsel %vm3738, %v3482, %v3994
    %v4251 = vsel %vm3739, %v3483, %v3995
    %v4252 = vsel %vm3740, %v3484, %v3996
    %v4253 = vsel %vm3741, %v3485, %v3997
    %v4254 = vsel %vm3742, %v3486, %v3998
    %v4255 = vsel %vm3743, %v3487, %v3999
    %v4256 = vsel %vm3744, %v3488, %v4000
    %v4257 = vsel %vm3745, %v3489, %v4001
    %v4258 = vsel %vm3746, %v3490, %v4002
    %v4259 = vsel %vm3747, %v3491, %v4003
    %v4260 = vsel %vm3748, %v3492, %v4004
    %v4261 = vsel %vm3749, %v3493, %v4005
    %v4262 = vsel %vm3750, %v3494, %v4006
    %v4263 = vsel %vm3751, %v3495, %v4007
    %v4264 = vsel %vm3752, %v3496, %v4008
    %v4265 = vsel %vm3753, %v3497, %v4009
    %v4266 = vsel %vm3754, %v3498, %v4010
    %v4267 = vsel %vm3755, %v3499, %v4011
    %v4268 = vsel %vm3756, %v3500, %v4012
    %v4269 = vsel %vm3757, %v3501, %v4013
    %v4270 = vsel %vm3758, %v3502, %v4014
    %v4271 = vsel %vm3759, %v3503, %v4015
    %v4272 = vsel %vm3760, %v3504, %v4016
    %v4273 = vsel %vm3761, %v3505, %v4017
    %v4274 = vsel %vm3762, %v3506, %v4018
    %v4275 = vsel %vm3763, %v3507, %v4019
    %v4276 = vsel %vm3764, %v3508, %v4020
    %v4277 = vsel %vm3765, %v3509, %v4021
    %v4278 = vsel %vm3766, %v3510, %v4022
    %v4279 = vsel %vm3767, %v3511, %v4023
    %v4280 = vsel %vm3768, %v3512, %v4024
    %v4281 = vsel %vm3769, %v3513, %v4025
    %v4282 = vsel %vm3770, %v3514, %v4026
    %v4283 = vsel %vm3771, %v3515, %v4027
    %v4284 = vsel %vm3772, %v3516, %v4028
    %v4285 = vsel %vm3773, %v3517, %v4029
    %v4286 = vsel %vm3774, %v3518, %v4030
    %v4287 = vsel %vm3775, %v3519, %v4031
    %v4288 = vsel %vm3776, %v3520, %v4032
    %v4289 = vsel %vm3777, %v3521, %v4033
    %v4290 = vsel %vm3778, %v3522, %v4034
    %v4291 = vsel %vm3779, %v3523, %v4035
    %v4292 = vpack.c.bf16 %v4036, %v4036
    %v4293 = vpack.c.bf16 %v4037, %v4037
    %v4294 = vpack.c.bf16 %v4038, %v4038
    %v4295 = vpack.c.bf16 %v4039, %v4039
    %v4296 = vpack.c.bf16 %v4040, %v4040
    %v4297 = vpack.c.bf16 %v4041, %v4041
    %v4298 = vpack.c.bf16 %v4042, %v4042
    %v4299 = vpack.c.bf16 %v4043, %v4043
    %v4300 = vpack.c.bf16 %v4044, %v4044
    %v4301 = vpack.c.bf16 %v4045, %v4045
    %v4302 = vpack.c.bf16 %v4046, %v4046
    %v4303 = vpack.c.bf16 %v4047, %v4047
    %v4304 = vpack.c.bf16 %v4048, %v4048
    %v4305 = vpack.c.bf16 %v4049, %v4049
    %v4306 = vpack.c.bf16 %v4050, %v4050
    %v4307 = vpack.c.bf16 %v4051, %v4051
    %v4308 = vpack.c.bf16 %v4052, %v4052
    %v4309 = vpack.c.bf16 %v4053, %v4053
    %v4310 = vpack.c.bf16 %v4054, %v4054
    %v4311 = vpack.c.bf16 %v4055, %v4055
    %v4312 = vpack.c.bf16 %v4056, %v4056
    %v4313 = vpack.c.bf16 %v4057, %v4057
    %v4314 = vpack.c.bf16 %v4058, %v4058
    %v4315 = vpack.c.bf16 %v4059, %v4059
    %v4316 = vpack.c.bf16 %v4060, %v4060
    %v4317 = vpack.c.bf16 %v4061, %v4061
    %v4318 = vpack.c.bf16 %v4062, %v4062
    %v4319 = vpack.c.bf16 %v4063, %v4063
    %v4320 = vpack.c.bf16 %v4064, %v4064
    %v4321 = vpack.c.bf16 %v4065, %v4065
    %v4322 = vpack.c.bf16 %v4066, %v4066
    %v4323 = vpack.c.bf16 %v4067, %v4067
    %v4324 = vpack.c.bf16 %v4068, %v4068
    %v4325 = vpack.c.bf16 %v4069, %v4069
    %v4326 = vpack.c.bf16 %v4070, %v4070
    %v4327 = vpack.c.bf16 %v4071, %v4071
    %v4328 = vpack.c.bf16 %v4072, %v4072
    %v4329 = vpack.c.bf16 %v4073, %v4073
    %v4330 = vpack.c.bf16 %v4074, %v4074
    %v4331 = vpack.c.bf16 %v4075, %v4075
    %v4332 = vpack.c.bf16 %v4076, %v4076
    %v4333 = vpack.c.bf16 %v4077, %v4077
    %v4334 = vpack.c.bf16 %v4078, %v4078
    %v4335 = vpack.c.bf16 %v4079, %v4079
    %v4336 = vpack.c.bf16 %v4080, %v4080
    %v4337 = vpack.c.bf16 %v4081, %v4081
    %v4338 = vpack.c.bf16 %v4082, %v4082
    %v4339 = vpack.c.bf16 %v4083, %v4083
    %v4340 = vpack.c.bf16 %v4084, %v4084
    %v4341 = vpack.c.bf16 %v4085, %v4085
    %v4342 = vpack.c.bf16 %v4086, %v4086
    %v4343 = vpack.c.bf16 %v4087, %v4087
    %v4344 = vpack.c.bf16 %v4088, %v4088
    %v4345 = vpack.c.bf16 %v4089, %v4089
    %v4346 = vpack.c.bf16 %v4090, %v4090
    %v4347 = vpack.c.bf16 %v4091, %v4091
    %v4348 = vpack.c.bf16 %v4092, %v4092
    %v4349 = vpack.c.bf16 %v4093, %v4093
    %v4350 = vpack.c.bf16 %v4094, %v4094
    %v4351 = vpack.c.bf16 %v4095, %v4095
    %v4352 = vpack.c.bf16 %v4096, %v4096
    %v4353 = vpack.c.bf16 %v4097, %v4097
    %v4354 = vpack.c.bf16 %v4098, %v4098
    %v4355 = vpack.c.bf16 %v4099, %v4099
    %v4356 = vpack.c.bf16 %v4100, %v4100
    %v4357 = vpack.c.bf16 %v4101, %v4101
    %v4358 = vpack.c.bf16 %v4102, %v4102
    %v4359 = vpack.c.bf16 %v4103, %v4103
    %v4360 = vpack.c.bf16 %v4104, %v4104
    %v4361 = vpack.c.bf16 %v4105, %v4105
    %v4362 = vpack.c.bf16 %v4106, %v4106
    %v4363 = vpack.c.bf16 %v4107, %v4107
    %v4364 = vpack.c.bf16 %v4108, %v4108
    %v4365 = vpack.c.bf16 %v4109, %v4109
    %v4366 = vpack.c.bf16 %v4110, %v4110
    %v4367 = vpack.c.bf16 %v4111, %v4111
    %v4368 = vpack.c.bf16 %v4112, %v4112
    %v4369 = vpack.c.bf16 %v4113, %v4113
    %v4370 = vpack.c.bf16 %v4114, %v4114
    %v4371 = vpack.c.bf16 %v4115, %v4115
    %v4372 = vpack.c.bf16 %v4116, %v4116
    %v4373 = vpack.c.bf16 %v4117, %v4117
    %v4374 = vpack.c.bf16 %v4118, %v4118
    %v4375 = vpack.c.bf16 %v4119, %v4119
    %v4376 = vpack.c.bf16 %v4120, %v4120
    %v4377 = vpack.c.bf16 %v4121, %v4121
    %v4378 = vpack.c.bf16 %v4122, %v4122
    %v4379 = vpack.c.bf16 %v4123, %v4123
    %v4380 = vpack.c.bf16 %v4124, %v4124
    %v4381 = vpack.c.bf16 %v4125, %v4125
    %v4382 = vpack.c.bf16 %v4126, %v4126
    %v4383 = vpack.c.bf16 %v4127, %v4127
    %v4384 = vpack.c.bf16 %v4128, %v4128
    %v4385 = vpack.c.bf16 %v4129, %v4129
    %v4386 = vpack.c.bf16 %v4130, %v4130
    %v4387 = vpack.c.bf16 %v4131, %v4131
    %v4388 = vpack.c.bf16 %v4132, %v4132
    %v4389 = vpack.c.bf16 %v4133, %v4133
    %v4390 = vpack.c.bf16 %v4134, %v4134
    %v4391 = vpack.c.bf16 %v4135, %v4135
    %v4392 = vpack.c.bf16 %v4136, %v4136
    %v4393 = vpack.c.bf16 %v4137, %v4137
    %v4394 = vpack.c.bf16 %v4138, %v4138
    %v4395 = vpack.c.bf16 %v4139, %v4139
    %v4396 = vpack.c.bf16 %v4140, %v4140
    %v4397 = vpack.c.bf16 %v4141, %v4141
    %v4398 = vpack.c.bf16 %v4142, %v4142
    %v4399 = vpack.c.bf16 %v4143, %v4143
    %v4400 = vpack.c.bf16 %v4144, %v4144
    %v4401 = vpack.c.bf16 %v4145, %v4145
    %v4402 = vpack.c.bf16 %v4146, %v4146
    %v4403 = vpack.c.bf16 %v4147, %v4147
    %v4404 = vpack.c.bf16 %v4148, %v4148
    %v4405 = vpack.c.bf16 %v4149, %v4149
    %v4406 = vpack.c.bf16 %v4150, %v4150
    %v4407 = vpack.c.bf16 %v4151, %v4151
    %v4408 = vpack.c.bf16 %v4152, %v4152
    %v4409 = vpack.c.bf16 %v4153, %v4153
    %v4410 = vpack.c.bf16 %v4154, %v4154
    %v4411 = vpack.c.bf16 %v4155, %v4155
    %v4412 = vpack.c.bf16 %v4156, %v4156
    %v4413 = vpack.c.bf16 %v4157, %v4157
    %v4414 = vpack.c.bf16 %v4158, %v4158
    %v4415 = vpack.c.bf16 %v4159, %v4159
    %v4416 = vpack.c.bf16 %v4160, %v4160
    %v4417 = vpack.c.bf16 %v4161, %v4161
    %v4418 = vpack.c.bf16 %v4162, %v4162
    %v4419 = vpack.c.bf16 %v4163, %v4163
    %v4420 = vpack.c.bf16 %v4164, %v4164
    %v4421 = vpack.c.bf16 %v4165, %v4165
    %v4422 = vpack.c.bf16 %v4166, %v4166
    %v4423 = vpack.c.bf16 %v4167, %v4167
    %v4424 = vpack.c.bf16 %v4168, %v4168
    %v4425 = vpack.c.bf16 %v4169, %v4169
    %v4426 = vpack.c.bf16 %v4170, %v4170
    %v4427 = vpack.c.bf16 %v4171, %v4171
    %v4428 = vpack.c.bf16 %v4172, %v4172
    %v4429 = vpack.c.bf16 %v4173, %v4173
    %v4430 = vpack.c.bf16 %v4174, %v4174
    %v4431 = vpack.c.bf16 %v4175, %v4175
    %v4432 = vpack.c.bf16 %v4176, %v4176
    %v4433 = vpack.c.bf16 %v4177, %v4177
    %v4434 = vpack.c.bf16 %v4178, %v4178
    %v4435 = vpack.c.bf16 %v4179, %v4179
    %v4436 = vpack.c.bf16 %v4180, %v4180
    %v4437 = vpack.c.bf16 %v4181, %v4181
    %v4438 = vpack.c.bf16 %v4182, %v4182
    %v4439 = vpack.c.bf16 %v4183, %v4183
    %v4440 = vpack.c.bf16 %v4184, %v4184
    %v4441 = vpack.c.bf16 %v4185, %v4185
    %v4442 = vpack.c.bf16 %v4186, %v4186
    %v4443 = vpack.c.bf16 %v4187, %v4187
    %v4444 = vpack.c.bf16 %v4188, %v4188
    %v4445 = vpack.c.bf16 %v4189, %v4189
    %v4446 = vpack.c.bf16 %v4190, %v4190
    %v4447 = vpack.c.bf16 %v4191, %v4191
    %v4448 = vpack.c.bf16 %v4192, %v4192
    %v4449 = vpack.c.bf16 %v4193, %v4193
    %v4450 = vpack.c.bf16 %v4194, %v4194
    %v4451 = vpack.c.bf16 %v4195, %v4195
    %v4452 = vpack.c.bf16 %v4196, %v4196
    %v4453 = vpack.c.bf16 %v4197, %v4197
    %v4454 = vpack.c.bf16 %v4198, %v4198
    %v4455 = vpack.c.bf16 %v4199, %v4199
    %v4456 = vpack.c.bf16 %v4200, %v4200
    %v4457 = vpack.c.bf16 %v4201, %v4201
    %v4458 = vpack.c.bf16 %v4202, %v4202
    %v4459 = vpack.c.bf16 %v4203, %v4203
    %v4460 = vpack.c.bf16 %v4204, %v4204
    %v4461 = vpack.c.bf16 %v4205, %v4205
    %v4462 = vpack.c.bf16 %v4206, %v4206
    %v4463 = vpack.c.bf16 %v4207, %v4207
    %v4464 = vpack.c.bf16 %v4208, %v4208
    %v4465 = vpack.c.bf16 %v4209, %v4209
    %v4466 = vpack.c.bf16 %v4210, %v4210
    %v4467 = vpack.c.bf16 %v4211, %v4211
    %v4468 = vpack.c.bf16 %v4212, %v4212
    %v4469 = vpack.c.bf16 %v4213, %v4213
    %v4470 = vpack.c.bf16 %v4214, %v4214
    %v4471 = vpack.c.bf16 %v4215, %v4215
    %v4472 = vpack.c.bf16 %v4216, %v4216
    %v4473 = vpack.c.bf16 %v4217, %v4217
    %v4474 = vpack.c.bf16 %v4218, %v4218
    %v4475 = vpack.c.bf16 %v4219, %v4219
    %v4476 = vpack.c.bf16 %v4220, %v4220
    %v4477 = vpack.c.bf16 %v4221, %v4221
    %v4478 = vpack.c.bf16 %v4222, %v4222
    %v4479 = vpack.c.bf16 %v4223, %v4223
    %v4480 = vpack.c.bf16 %v4224, %v4224
    %v4481 = vpack.c.bf16 %v4225, %v4225
    %v4482 = vpack.c.bf16 %v4226, %v4226
    %v4483 = vpack.c.bf16 %v4227, %v4227
    %v4484 = vpack.c.bf16 %v4228, %v4228
    %v4485 = vpack.c.bf16 %v4229, %v4229
    %v4486 = vpack.c.bf16 %v4230, %v4230
    %v4487 = vpack.c.bf16 %v4231, %v4231
    %v4488 = vpack.c.bf16 %v4232, %v4232
    %v4489 = vpack.c.bf16 %v4233, %v4233
    %v4490 = vpack.c.bf16 %v4234, %v4234
    %v4491 = vpack.c.bf16 %v4235, %v4235
    %v4492 = vpack.c.bf16 %v4236, %v4236
    %v4493 = vpack.c.bf16 %v4237, %v4237
    %v4494 = vpack.c.bf16 %v4238, %v4238
    %v4495 = vpack.c.bf16 %v4239, %v4239
    %v4496 = vpack.c.bf16 %v4240, %v4240
    %v4497 = vpack.c.bf16 %v4241, %v4241
    %v4498 = vpack.c.bf16 %v4242, %v4242
    %v4499 = vpack.c.bf16 %v4243, %v4243
    %v4500 = vpack.c.bf16 %v4244, %v4244
    %v4501 = vpack.c.bf16 %v4245, %v4245
    %v4502 = vpack.c.bf16 %v4246, %v4246
    %v4503 = vpack.c.bf16 %v4247, %v4247
    %v4504 = vpack.c.bf16 %v4248, %v4248
    %v4505 = vpack.c.bf16 %v4249, %v4249
    %v4506 = vpack.c.bf16 %v4250, %v4250
    %v4507 = vpack.c.bf16 %v4251, %v4251
    %v4508 = vpack.c.bf16 %v4252, %v4252
    %v4509 = vpack.c.bf16 %v4253, %v4253
    %v4510 = vpack.c.bf16 %v4254, %v4254
    %v4511 = vpack.c.bf16 %v4255, %v4255
    %v4512 = vpack.c.bf16 %v4256, %v4256
    %v4513 = vpack.c.bf16 %v4257, %v4257
    %v4514 = vpack.c.bf16 %v4258, %v4258
    %v4515 = vpack.c.bf16 %v4259, %v4259
    %v4516 = vpack.c.bf16 %v4260, %v4260
    %v4517 = vpack.c.bf16 %v4261, %v4261
    %v4518 = vpack.c.bf16 %v4262, %v4262
    %v4519 = vpack.c.bf16 %v4263, %v4263
    %v4520 = vpack.c.bf16 %v4264, %v4264
    %v4521 = vpack.c.bf16 %v4265, %v4265
    %v4522 = vpack.c.bf16 %v4266, %v4266
    %v4523 = vpack.c.bf16 %v4267, %v4267
    %v4524 = vpack.c.bf16 %v4268, %v4268
    %v4525 = vpack.c.bf16 %v4269, %v4269
    %v4526 = vpack.c.bf16 %v4270, %v4270
    %v4527 = vpack.c.bf16 %v4271, %v4271
    %v4528 = vpack.c.bf16 %v4272, %v4272
    %v4529 = vpack.c.bf16 %v4273, %v4273
    %v4530 = vpack.c.bf16 %v4274, %v4274
    %v4531 = vpack.c.bf16 %v4275, %v4275
    %v4532 = vpack.c.bf16 %v4276, %v4276
    %v4533 = vpack.c.bf16 %v4277, %v4277
    %v4534 = vpack.c.bf16 %v4278, %v4278
    %v4535 = vpack.c.bf16 %v4279, %v4279
    %v4536 = vpack.c.bf16 %v4280, %v4280
    %v4537 = vpack.c.bf16 %v4281, %v4281
    %v4538 = vpack.c.bf16 %v4282, %v4282
    %v4539 = vpack.c.bf16 %v4283, %v4283
    %v4540 = vpack.c.bf16 %v4284, %v4284
    %v4541 = vpack.c.bf16 %v4285, %v4285
    %v4542 = vpack.c.bf16 %v4286, %v4286
    %v4543 = vpack.c.bf16 %v4287, %v4287
    %v4544 = vpack.c.bf16 %v4288, %v4288
    %v4545 = vpack.c.bf16 %v4289, %v4289
    %v4546 = vpack.c.bf16 %v4290, %v4290
    %v4547 = vpack.c.bf16 %v4291, %v4291
    %4548 = vst [vmem:[%s3] sm:$0xf] %v4292
    %4549 = vst [vmem:[%s3 + $0x4] sm:$0xf] %v4293
    %4550 = vst [vmem:[%s3 + $0x8] sm:$0xf] %v4294
    %4551 = vst [vmem:[%s3 + $0xc] sm:$0xf] %v4295
    %4552 = vst [vmem:[%s3 + $0x10] sm:$0xf] %v4296
    %4553 = vst [vmem:[%s3 + $0x14] sm:$0xf] %v4297
    %4554 = vst [vmem:[%s3 + $0x18] sm:$0xf] %v4298
    %4555 = vst [vmem:[%s3 + $0x1c] sm:$0xf] %v4299
    %4556 = vst [vmem:[%s3 + $0x20] sm:$0xf] %v4300
    %4557 = vst [vmem:[%s3 + $0x24] sm:$0xf] %v4301
    %4558 = vst [vmem:[%s3 + $0x28] sm:$0xf] %v4302
    %4559 = vst [vmem:[%s3 + $0x2c] sm:$0xf] %v4303
    %4560 = vst [vmem:[%s3 + $0x30] sm:$0xf] %v4304
    %4561 = vst [vmem:[%s3 + $0x34] sm:$0xf] %v4305
    %4562 = vst [vmem:[%s3 + $0x38] sm:$0xf] %v4306
    %4563 = vst [vmem:[%s3 + $0x3c] sm:$0xf] %v4307
    %4564 = vst [vmem:[%s3 + $0x40] sm:$0xf] %v4308
    %4565 = vst [vmem:[%s3 + $0x44] sm:$0xf] %v4309
    %4566 = vst [vmem:[%s3 + $0x48] sm:$0xf] %v4310
    %4567 = vst [vmem:[%s3 + $0x4c] sm:$0xf] %v4311
    %4568 = vst [vmem:[%s3 + $0x50] sm:$0xf] %v4312
    %4569 = vst [vmem:[%s3 + $0x54] sm:$0xf] %v4313
    %4570 = vst [vmem:[%s3 + $0x58] sm:$0xf] %v4314
    %4571 = vst [vmem:[%s3 + $0x5c] sm:$0xf] %v4315
    %4572 = vst [vmem:[%s3 + $0x60] sm:$0xf] %v4316
    %4573 = vst [vmem:[%s3 + $0x64] sm:$0xf] %v4317
    %4574 = vst [vmem:[%s3 + $0x68] sm:$0xf] %v4318
    %4575 = vst [vmem:[%s3 + $0x6c] sm:$0xf] %v4319
    %4576 = vst [vmem:[%s3 + $0x70] sm:$0xf] %v4320
    %4577 = vst [vmem:[%s3 + $0x74] sm:$0xf] %v4321
    %4578 = vst [vmem:[%s3 + $0x78] sm:$0xf] %v4322
    %4579 = vst [vmem:[%s3 + $0x7c] sm:$0xf] %v4323
    %4580 = vst [vmem:[%s3 + $0x80] sm:$0xf] %v4324
    %4581 = vst [vmem:[%s3 + $0x84] sm:$0xf] %v4325
    %4582 = vst [vmem:[%s3 + $0x88] sm:$0xf] %v4326
    %4583 = vst [vmem:[%s3 + $0x8c] sm:$0xf] %v4327
    %4584 = vst [vmem:[%s3 + $0x90] sm:$0xf] %v4328
    %4585 = vst [vmem:[%s3 + $0x94] sm:$0xf] %v4329
    %4586 = vst [vmem:[%s3 + $0x98] sm:$0xf] %v4330
    %4587 = vst [vmem:[%s3 + $0x9c] sm:$0xf] %v4331
    %4588 = vst [vmem:[%s3 + $0xa0] sm:$0xf] %v4332
    %4589 = vst [vmem:[%s3 + $0xa4] sm:$0xf] %v4333
    %4590 = vst [vmem:[%s3 + $0xa8] sm:$0xf] %v4334
    %4591 = vst [vmem:[%s3 + $0xac] sm:$0xf] %v4335
    %4592 = vst [vmem:[%s3 + $0xb0] sm:$0xf] %v4336
    %4593 = vst [vmem:[%s3 + $0xb4] sm:$0xf] %v4337
    %4594 = vst [vmem:[%s3 + $0xb8] sm:$0xf] %v4338
    %4595 = vst [vmem:[%s3 + $0xbc] sm:$0xf] %v4339
    %4596 = vst [vmem:[%s3 + $0xc0] sm:$0xf] %v4340
    %4597 = vst [vmem:[%s3 + $0xc4] sm:$0xf] %v4341
    %4598 = vst [vmem:[%s3 + $0xc8] sm:$0xf] %v4342
    %4599 = vst [vmem:[%s3 + $0xcc] sm:$0xf] %v4343
    %4600 = vst [vmem:[%s3 + $0xd0] sm:$0xf] %v4344
    %4601 = vst [vmem:[%s3 + $0xd4] sm:$0xf] %v4345
    %4602 = vst [vmem:[%s3 + $0xd8] sm:$0xf] %v4346
    %4603 = vst [vmem:[%s3 + $0xdc] sm:$0xf] %v4347
    %4604 = vst [vmem:[%s3 + $0xe0] sm:$0xf] %v4348
    %4605 = vst [vmem:[%s3 + $0xe4] sm:$0xf] %v4349
    %4606 = vst [vmem:[%s3 + $0xe8] sm:$0xf] %v4350
    %4607 = vst [vmem:[%s3 + $0xec] sm:$0xf] %v4351
    %4608 = vst [vmem:[%s3 + $0xf0] sm:$0xf] %v4352
    %4609 = vst [vmem:[%s3 + $0xf4] sm:$0xf] %v4353
    %4610 = vst [vmem:[%s3 + $0xf8] sm:$0xf] %v4354
    %4611 = vst [vmem:[%s3 + $0xfc] sm:$0xf] %v4355
    %4612 = vst [vmem:[%s3 + $0x100] sm:$0xf] %v4356
    %4613 = vst [vmem:[%s3 + $0x104] sm:$0xf] %v4357
    %4614 = vst [vmem:[%s3 + $0x108] sm:$0xf] %v4358
    %4615 = vst [vmem:[%s3 + $0x10c] sm:$0xf] %v4359
    %4616 = vst [vmem:[%s3 + $0x110] sm:$0xf] %v4360
    %4617 = vst [vmem:[%s3 + $0x114] sm:$0xf] %v4361
    %4618 = vst [vmem:[%s3 + $0x118] sm:$0xf] %v4362
    %4619 = vst [vmem:[%s3 + $0x11c] sm:$0xf] %v4363
    %4620 = vst [vmem:[%s3 + $0x120] sm:$0xf] %v4364
    %4621 = vst [vmem:[%s3 + $0x124] sm:$0xf] %v4365
    %4622 = vst [vmem:[%s3 + $0x128] sm:$0xf] %v4366
    %4623 = vst [vmem:[%s3 + $0x12c] sm:$0xf] %v4367
    %4624 = vst [vmem:[%s3 + $0x130] sm:$0xf] %v4368
    %4625 = vst [vmem:[%s3 + $0x134] sm:$0xf] %v4369
    %4626 = vst [vmem:[%s3 + $0x138] sm:$0xf] %v4370
    %4627 = vst [vmem:[%s3 + $0x13c] sm:$0xf] %v4371
    %4628 = vst [vmem:[%s3 + $0x140] sm:$0xf] %v4372
    %4629 = vst [vmem:[%s3 + $0x144] sm:$0xf] %v4373
    %4630 = vst [vmem:[%s3 + $0x148] sm:$0xf] %v4374
    %4631 = vst [vmem:[%s3 + $0x14c] sm:$0xf] %v4375
    %4632 = vst [vmem:[%s3 + $0x150] sm:$0xf] %v4376
    %4633 = vst [vmem:[%s3 + $0x154] sm:$0xf] %v4377
    %4634 = vst [vmem:[%s3 + $0x158] sm:$0xf] %v4378
    %4635 = vst [vmem:[%s3 + $0x15c] sm:$0xf] %v4379
    %4636 = vst [vmem:[%s3 + $0x160] sm:$0xf] %v4380
    %4637 = vst [vmem:[%s3 + $0x164] sm:$0xf] %v4381
    %4638 = vst [vmem:[%s3 + $0x168] sm:$0xf] %v4382
    %4639 = vst [vmem:[%s3 + $0x16c] sm:$0xf] %v4383
    %4640 = vst [vmem:[%s3 + $0x170] sm:$0xf] %v4384
    %4641 = vst [vmem:[%s3 + $0x174] sm:$0xf] %v4385
    %4642 = vst [vmem:[%s3 + $0x178] sm:$0xf] %v4386
    %4643 = vst [vmem:[%s3 + $0x17c] sm:$0xf] %v4387
    %4644 = vst [vmem:[%s3 + $0x180] sm:$0xf] %v4388
    %4645 = vst [vmem:[%s3 + $0x184] sm:$0xf] %v4389
    %4646 = vst [vmem:[%s3 + $0x188] sm:$0xf] %v4390
    %4647 = vst [vmem:[%s3 + $0x18c] sm:$0xf] %v4391
    %4648 = vst [vmem:[%s3 + $0x190] sm:$0xf] %v4392
    %4649 = vst [vmem:[%s3 + $0x194] sm:$0xf] %v4393
    %4650 = vst [vmem:[%s3 + $0x198] sm:$0xf] %v4394
    %4651 = vst [vmem:[%s3 + $0x19c] sm:$0xf] %v4395
    %4652 = vst [vmem:[%s3 + $0x1a0] sm:$0xf] %v4396
    %4653 = vst [vmem:[%s3 + $0x1a4] sm:$0xf] %v4397
    %4654 = vst [vmem:[%s3 + $0x1a8] sm:$0xf] %v4398
    %4655 = vst [vmem:[%s3 + $0x1ac] sm:$0xf] %v4399
    %4656 = vst [vmem:[%s3 + $0x1b0] sm:$0xf] %v4400
    %4657 = vst [vmem:[%s3 + $0x1b4] sm:$0xf] %v4401
    %4658 = vst [vmem:[%s3 + $0x1b8] sm:$0xf] %v4402
    %4659 = vst [vmem:[%s3 + $0x1bc] sm:$0xf] %v4403
    %4660 = vst [vmem:[%s3 + $0x1c0] sm:$0xf] %v4404
    %4661 = vst [vmem:[%s3 + $0x1c4] sm:$0xf] %v4405
    %4662 = vst [vmem:[%s3 + $0x1c8] sm:$0xf] %v4406
    %4663 = vst [vmem:[%s3 + $0x1cc] sm:$0xf] %v4407
    %4664 = vst [vmem:[%s3 + $0x1d0] sm:$0xf] %v4408
    %4665 = vst [vmem:[%s3 + $0x1d4] sm:$0xf] %v4409
    %4666 = vst [vmem:[%s3 + $0x1d8] sm:$0xf] %v4410
    %4667 = vst [vmem:[%s3 + $0x1dc] sm:$0xf] %v4411
    %4668 = vst [vmem:[%s3 + $0x1e0] sm:$0xf] %v4412
    %4669 = vst [vmem:[%s3 + $0x1e4] sm:$0xf] %v4413
    %4670 = vst [vmem:[%s3 + $0x1e8] sm:$0xf] %v4414
    %4671 = vst [vmem:[%s3 + $0x1ec] sm:$0xf] %v4415
    %4672 = vst [vmem:[%s3 + $0x1f0] sm:$0xf] %v4416
    %4673 = vst [vmem:[%s3 + $0x1f4] sm:$0xf] %v4417
    %4674 = vst [vmem:[%s3 + $0x1f8] sm:$0xf] %v4418
    %4675 = vst [vmem:[%s3 + $0x1fc] sm:$0xf] %v4419
    %4676 = vst [vmem:[%s3 + $0x200] sm:$0xf] %v4420
    %4677 = vst [vmem:[%s3 + $0x204] sm:$0xf] %v4421
    %4678 = vst [vmem:[%s3 + $0x208] sm:$0xf] %v4422
    %4679 = vst [vmem:[%s3 + $0x20c] sm:$0xf] %v4423
    %4680 = vst [vmem:[%s3 + $0x210] sm:$0xf] %v4424
    %4681 = vst [vmem:[%s3 + $0x214] sm:$0xf] %v4425
    %4682 = vst [vmem:[%s3 + $0x218] sm:$0xf] %v4426
    %4683 = vst [vmem:[%s3 + $0x21c] sm:$0xf] %v4427
    %4684 = vst [vmem:[%s3 + $0x220] sm:$0xf] %v4428
    %4685 = vst [vmem:[%s3 + $0x224] sm:$0xf] %v4429
    %4686 = vst [vmem:[%s3 + $0x228] sm:$0xf] %v4430
    %4687 = vst [vmem:[%s3 + $0x22c] sm:$0xf] %v4431
    %4688 = vst [vmem:[%s3 + $0x230] sm:$0xf] %v4432
    %4689 = vst [vmem:[%s3 + $0x234] sm:$0xf] %v4433
    %4690 = vst [vmem:[%s3 + $0x238] sm:$0xf] %v4434
    %4691 = vst [vmem:[%s3 + $0x23c] sm:$0xf] %v4435
    %4692 = vst [vmem:[%s3 + $0x240] sm:$0xf] %v4436
    %4693 = vst [vmem:[%s3 + $0x244] sm:$0xf] %v4437
    %4694 = vst [vmem:[%s3 + $0x248] sm:$0xf] %v4438
    %4695 = vst [vmem:[%s3 + $0x24c] sm:$0xf] %v4439
    %4696 = vst [vmem:[%s3 + $0x250] sm:$0xf] %v4440
    %4697 = vst [vmem:[%s3 + $0x254] sm:$0xf] %v4441
    %4698 = vst [vmem:[%s3 + $0x258] sm:$0xf] %v4442
    %4699 = vst [vmem:[%s3 + $0x25c] sm:$0xf] %v4443
    %4700 = vst [vmem:[%s3 + $0x260] sm:$0xf] %v4444
    %4701 = vst [vmem:[%s3 + $0x264] sm:$0xf] %v4445
    %4702 = vst [vmem:[%s3 + $0x268] sm:$0xf] %v4446
    %4703 = vst [vmem:[%s3 + $0x26c] sm:$0xf] %v4447
    %4704 = vst [vmem:[%s3 + $0x270] sm:$0xf] %v4448
    %4705 = vst [vmem:[%s3 + $0x274] sm:$0xf] %v4449
    %4706 = vst [vmem:[%s3 + $0x278] sm:$0xf] %v4450
    %4707 = vst [vmem:[%s3 + $0x27c] sm:$0xf] %v4451
    %4708 = vst [vmem:[%s3 + $0x280] sm:$0xf] %v4452
    %4709 = vst [vmem:[%s3 + $0x284] sm:$0xf] %v4453
    %4710 = vst [vmem:[%s3 + $0x288] sm:$0xf] %v4454
    %4711 = vst [vmem:[%s3 + $0x28c] sm:$0xf] %v4455
    %4712 = vst [vmem:[%s3 + $0x290] sm:$0xf] %v4456
    %4713 = vst [vmem:[%s3 + $0x294] sm:$0xf] %v4457
    %4714 = vst [vmem:[%s3 + $0x298] sm:$0xf] %v4458
    %4715 = vst [vmem:[%s3 + $0x29c] sm:$0xf] %v4459
    %4716 = vst [vmem:[%s3 + $0x2a0] sm:$0xf] %v4460
    %4717 = vst [vmem:[%s3 + $0x2a4] sm:$0xf] %v4461
    %4718 = vst [vmem:[%s3 + $0x2a8] sm:$0xf] %v4462
    %4719 = vst [vmem:[%s3 + $0x2ac] sm:$0xf] %v4463
    %4720 = vst [vmem:[%s3 + $0x2b0] sm:$0xf] %v4464
    %4721 = vst [vmem:[%s3 + $0x2b4] sm:$0xf] %v4465
    %4722 = vst [vmem:[%s3 + $0x2b8] sm:$0xf] %v4466
    %4723 = vst [vmem:[%s3 + $0x2bc] sm:$0xf] %v4467
    %4724 = vst [vmem:[%s3 + $0x2c0] sm:$0xf] %v4468
    %4725 = vst [vmem:[%s3 + $0x2c4] sm:$0xf] %v4469
    %4726 = vst [vmem:[%s3 + $0x2c8] sm:$0xf] %v4470
    %4727 = vst [vmem:[%s3 + $0x2cc] sm:$0xf] %v4471
    %4728 = vst [vmem:[%s3 + $0x2d0] sm:$0xf] %v4472
    %4729 = vst [vmem:[%s3 + $0x2d4] sm:$0xf] %v4473
    %4730 = vst [vmem:[%s3 + $0x2d8] sm:$0xf] %v4474
    %4731 = vst [vmem:[%s3 + $0x2dc] sm:$0xf] %v4475
    %4732 = vst [vmem:[%s3 + $0x2e0] sm:$0xf] %v4476
    %4733 = vst [vmem:[%s3 + $0x2e4] sm:$0xf] %v4477
    %4734 = vst [vmem:[%s3 + $0x2e8] sm:$0xf] %v4478
    %4735 = vst [vmem:[%s3 + $0x2ec] sm:$0xf] %v4479
    %4736 = vst [vmem:[%s3 + $0x2f0] sm:$0xf] %v4480
    %4737 = vst [vmem:[%s3 + $0x2f4] sm:$0xf] %v4481
    %4738 = vst [vmem:[%s3 + $0x2f8] sm:$0xf] %v4482
    %4739 = vst [vmem:[%s3 + $0x2fc] sm:$0xf] %v4483
    %4740 = vst [vmem:[%s3 + $0x300] sm:$0xf] %v4484
    %4741 = vst [vmem:[%s3 + $0x304] sm:$0xf] %v4485
    %4742 = vst [vmem:[%s3 + $0x308] sm:$0xf] %v4486
    %4743 = vst [vmem:[%s3 + $0x30c] sm:$0xf] %v4487
    %4744 = vst [vmem:[%s3 + $0x310] sm:$0xf] %v4488
    %4745 = vst [vmem:[%s3 + $0x314] sm:$0xf] %v4489
    %4746 = vst [vmem:[%s3 + $0x318] sm:$0xf] %v4490
    %4747 = vst [vmem:[%s3 + $0x31c] sm:$0xf] %v4491
    %4748 = vst [vmem:[%s3 + $0x320] sm:$0xf] %v4492
    %4749 = vst [vmem:[%s3 + $0x324] sm:$0xf] %v4493
    %4750 = vst [vmem:[%s3 + $0x328] sm:$0xf] %v4494
    %4751 = vst [vmem:[%s3 + $0x32c] sm:$0xf] %v4495
    %4752 = vst [vmem:[%s3 + $0x330] sm:$0xf] %v4496
    %4753 = vst [vmem:[%s3 + $0x334] sm:$0xf] %v4497
    %4754 = vst [vmem:[%s3 + $0x338] sm:$0xf] %v4498
    %4755 = vst [vmem:[%s3 + $0x33c] sm:$0xf] %v4499
    %4756 = vst [vmem:[%s3 + $0x340] sm:$0xf] %v4500
    %4757 = vst [vmem:[%s3 + $0x344] sm:$0xf] %v4501
    %4758 = vst [vmem:[%s3 + $0x348] sm:$0xf] %v4502
    %4759 = vst [vmem:[%s3 + $0x34c] sm:$0xf] %v4503
    %4760 = vst [vmem:[%s3 + $0x350] sm:$0xf] %v4504
    %4761 = vst [vmem:[%s3 + $0x354] sm:$0xf] %v4505
    %4762 = vst [vmem:[%s3 + $0x358] sm:$0xf] %v4506
    %4763 = vst [vmem:[%s3 + $0x35c] sm:$0xf] %v4507
    %4764 = vst [vmem:[%s3 + $0x360] sm:$0xf] %v4508
    %4765 = vst [vmem:[%s3 + $0x364] sm:$0xf] %v4509
    %4766 = vst [vmem:[%s3 + $0x368] sm:$0xf] %v4510
    %4767 = vst [vmem:[%s3 + $0x36c] sm:$0xf] %v4511
    %4768 = vst [vmem:[%s3 + $0x370] sm:$0xf] %v4512
    %4769 = vst [vmem:[%s3 + $0x374] sm:$0xf] %v4513
    %4770 = vst [vmem:[%s3 + $0x378] sm:$0xf] %v4514
    %4771 = vst [vmem:[%s3 + $0x37c] sm:$0xf] %v4515
    %4772 = vst [vmem:[%s3 + $0x380] sm:$0xf] %v4516
    %4773 = vst [vmem:[%s3 + $0x384] sm:$0xf] %v4517
    %4774 = vst [vmem:[%s3 + $0x388] sm:$0xf] %v4518
    %4775 = vst [vmem:[%s3 + $0x38c] sm:$0xf] %v4519
    %4776 = vst [vmem:[%s3 + $0x390] sm:$0xf] %v4520
    %4777 = vst [vmem:[%s3 + $0x394] sm:$0xf] %v4521
    %4778 = vst [vmem:[%s3 + $0x398] sm:$0xf] %v4522
    %4779 = vst [vmem:[%s3 + $0x39c] sm:$0xf] %v4523
    %4780 = vst [vmem:[%s3 + $0x3a0] sm:$0xf] %v4524
    %4781 = vst [vmem:[%s3 + $0x3a4] sm:$0xf] %v4525
    %4782 = vst [vmem:[%s3 + $0x3a8] sm:$0xf] %v4526
    %4783 = vst [vmem:[%s3 + $0x3ac] sm:$0xf] %v4527
    %4784 = vst [vmem:[%s3 + $0x3b0] sm:$0xf] %v4528
    %4785 = vst [vmem:[%s3 + $0x3b4] sm:$0xf] %v4529
    %4786 = vst [vmem:[%s3 + $0x3b8] sm:$0xf] %v4530
    %4787 = vst [vmem:[%s3 + $0x3bc] sm:$0xf] %v4531
    %4788 = vst [vmem:[%s3 + $0x3c0] sm:$0xf] %v4532
    %4789 = vst [vmem:[%s3 + $0x3c4] sm:$0xf] %v4533
    %4790 = vst [vmem:[%s3 + $0x3c8] sm:$0xf] %v4534
    %4791 = vst [vmem:[%s3 + $0x3cc] sm:$0xf] %v4535
    %4792 = vst [vmem:[%s3 + $0x3d0] sm:$0xf] %v4536
    %4793 = vst [vmem:[%s3 + $0x3d4] sm:$0xf] %v4537
    %4794 = vst [vmem:[%s3 + $0x3d8] sm:$0xf] %v4538
    %4795 = vst [vmem:[%s3 + $0x3dc] sm:$0xf] %v4539
    %4796 = vst [vmem:[%s3 + $0x3e0] sm:$0xf] %v4540
    %4797 = vst [vmem:[%s3 + $0x3e4] sm:$0xf] %v4541
    %4798 = vst [vmem:[%s3 + $0x3e8] sm:$0xf] %v4542
    %4799 = vst [vmem:[%s3 + $0x3ec] sm:$0xf] %v4543
    %4800 = vst [vmem:[%s3 + $0x3f0] sm:$0xf] %v4544
    %4801 = vst [vmem:[%s3 + $0x3f4] sm:$0xf] %v4545
    %4802 = vst [vmem:[%s3 + $0x3f8] sm:$0xf] %v4546
    %4803 = vst [vmem:[%s3 + $0x3fc] sm:$0xf] %v4547
  $region21: #{_lambda_.8} parent=0 // pred_fallthru
    _
  // Predicated region
  $region22: #{_lambda_.8} parent=0 // pred_check
    _
  $region23: #{_lambda_.8} parent=0 // pred_check_branch
    %4805 = sbr.rel (0) target = $region25
  $region24: #{_lambda_.8} parent=0 // pred_region
    _
  $region25: #{_lambda_.8} parent=0 // pred_fallthru
    _
  // Predicated region
  $region26: #{_lambda_.8} parent=0 // pred_check
    _
  $region27: #{_lambda_.8} parent=0 // pred_check_branch
    %4807 = sbr.rel (0) target = $region29
  $region28: #{_lambda_.8} parent=0 // pred_region
    _
  $region29: #{_lambda_.8} parent=0 // pred_fallthru
    _

// kernel: _lambda_.9
$region0: #{_lambda_.9}
  #allocation0 [shape = 'u32[]', space=smem, size = 0x4, offset = 0x4, fixed_abs, tag = 'smem constant byte address 0x4 - core index']
  #allocation1 [shape = 'u32[72,128]{1,0:T(1,128)}', space=vmem, size = 0x9000, scoped, tag = 'internal scratch']
  #allocation2 [shape = 'f32[512,128]{1,0:T(8,128)}', space=vmem, size = 0x40000, scoped, tag = 'scratch operand']
  %s0 = inlined_call_operand.vmem [shape: bf16[512,128], index: 0, kind: input, shape index: {}]
  %s1 = inlined_call_operand.vmem [shape: bf16[128,128], index: 1, kind: input, shape index: {}]
  %s2 = inlined_call_operand.vmem [shape: bf16[512,128], index: 2, kind: output, shape index: {0}]
  %s3 = inlined_call_operand.vmem [shape: f32[8,128], index: 3, kind: output, shape index: {1}]
  %s4 = inlined_call_operand.vmem [shape: f32[8,128], index: 4, kind: output, shape index: {2}]
  %5 = xla_tuple %s2, %s3, %s4
  %s6 = sld [smem:[#allocation0]]
  $region42: #{_lambda_.9} parent=0
    _
  %s8 = ssub.s32 1, %s6
  %s9 = scalar_select 0, %s8, %s6
  // Predicated region
  $region2: #{_lambda_.9} parent=0 // pred_check
    _
  $region3: #{_lambda_.9} parent=0 // pred_check_branch
    %11 = sbr.rel (0) target = $region5
  $region4: #{_lambda_.9} parent=0 // pred_region
    _
  $region5: #{_lambda_.9} parent=0 // pred_fallthru
    _
  // Predicated region
  $region6: #{_lambda_.9} parent=0 // pred_check
    _
  $region7: #{_lambda_.9} parent=0 // pred_check_branch
    %13 = sbr.rel (0) target = $region9
  $region8: #{_lambda_.9} parent=0 // pred_region
    _
  $region9: #{_lambda_.9} parent=0 // pred_fallthru
    _
  %p14 = scmp.eq.s32.totalorder 0, 0
  // Predicated region
  $region10: #{_lambda_.9} parent=0 // pred_check
    %p15 = pneg %p14
  $region11: #{_lambda_.9} parent=0 // pred_check_branch
    %17 = sbr.rel (%p15) target = $region13
  $region12: #{_lambda_.9} parent=0 // pred_region
    %18 = vst [vmem:[#allocation2] sm:$0xff] 0.0
    %19 = vst [vmem:[#allocation2 + $0x8] sm:$0xff] 0.0
    %20 = vst [vmem:[#allocation2 + $0x10] sm:$0xff] 0.0
    %21 = vst [vmem:[#allocation2 + $0x18] sm:$0xff] 0.0
    %22 = vst [vmem:[#allocation2 + $0x20] sm:$0xff] 0.0
    %23 = vst [vmem:[#allocation2 + $0x28] sm:$0xff] 0.0
    %24 = vst [vmem:[#allocation2 + $0x30] sm:$0xff] 0.0
    %25 = vst [vmem:[#allocation2 + $0x38] sm:$0xff] 0.0
    %26 = vst [vmem:[#allocation2 + $0x40] sm:$0xff] 0.0
    %27 = vst [vmem:[#allocation2 + $0x48] sm:$0xff] 0.0
    %28 = vst [vmem:[#allocation2 + $0x50] sm:$0xff] 0.0
    %29 = vst [vmem:[#allocation2 + $0x58] sm:$0xff] 0.0
    %30 = vst [vmem:[#allocation2 + $0x60] sm:$0xff] 0.0
    %31 = vst [vmem:[#allocation2 + $0x68] sm:$0xff] 0.0
    %32 = vst [vmem:[#allocation2 + $0x70] sm:$0xff] 0.0
    %33 = vst [vmem:[#allocation2 + $0x78] sm:$0xff] 0.0
    %34 = vst [vmem:[#allocation2 + $0x80] sm:$0xff] 0.0
    %35 = vst [vmem:[#allocation2 + $0x88] sm:$0xff] 0.0
    %36 = vst [vmem:[#allocation2 + $0x90] sm:$0xff] 0.0
    %37 = vst [vmem:[#allocation2 + $0x98] sm:$0xff] 0.0
    %38 = vst [vmem:[#allocation2 + $0xa0] sm:$0xff] 0.0
    %39 = vst [vmem:[#allocation2 + $0xa8] sm:$0xff] 0.0
    %40 = vst [vmem:[#allocation2 + $0xb0] sm:$0xff] 0.0
    %41 = vst [vmem:[#allocation2 + $0xb8] sm:$0xff] 0.0
    %42 = vst [vmem:[#allocation2 + $0xc0] sm:$0xff] 0.0
    %43 = vst [vmem:[#allocation2 + $0xc8] sm:$0xff] 0.0
    %44 = vst [vmem:[#allocation2 + $0xd0] sm:$0xff] 0.0
    %45 = vst [vmem:[#allocation2 + $0xd8] sm:$0xff] 0.0
    %46 = vst [vmem:[#allocation2 + $0xe0] sm:$0xff] 0.0
    %47 = vst [vmem:[#allocation2 + $0xe8] sm:$0xff] 0.0
    %48 = vst [vmem:[#allocation2 + $0xf0] sm:$0xff] 0.0
    %49 = vst [vmem:[#allocation2 + $0xf8] sm:$0xff] 0.0
    %50 = vst [vmem:[#allocation2 + $0x100] sm:$0xff] 0.0
    %51 = vst [vmem:[#allocation2 + $0x108] sm:$0xff] 0.0
    %52 = vst [vmem:[#allocation2 + $0x110] sm:$0xff] 0.0
    %53 = vst [vmem:[#allocation2 + $0x118] sm:$0xff] 0.0
    %54 = vst [vmem:[#allocation2 + $0x120] sm:$0xff] 0.0
    %55 = vst [vmem:[#allocation2 + $0x128] sm:$0xff] 0.0
    %56 = vst [vmem:[#allocation2 + $0x130] sm:$0xff] 0.0
    %57 = vst [vmem:[#allocation2 + $0x138] sm:$0xff] 0.0
    %58 = vst [vmem:[#allocation2 + $0x140] sm:$0xff] 0.0
    %59 = vst [vmem:[#allocation2 + $0x148] sm:$0xff] 0.0
    %60 = vst [vmem:[#allocation2 + $0x150] sm:$0xff] 0.0
    %61 = vst [vmem:[#allocation2 + $0x158] sm:$0xff] 0.0
    %62 = vst [vmem:[#allocation2 + $0x160] sm:$0xff] 0.0
    %63 = vst [vmem:[#allocation2 + $0x168] sm:$0xff] 0.0
    %64 = vst [vmem:[#allocation2 + $0x170] sm:$0xff] 0.0
    %65 = vst [vmem:[#allocation2 + $0x178] sm:$0xff] 0.0
    %66 = vst [vmem:[#allocation2 + $0x180] sm:$0xff] 0.0
    %67 = vst [vmem:[#allocation2 + $0x188] sm:$0xff] 0.0
    %68 = vst [vmem:[#allocation2 + $0x190] sm:$0xff] 0.0
    %69 = vst [vmem:[#allocation2 + $0x198] sm:$0xff] 0.0
    %70 = vst [vmem:[#allocation2 + $0x1a0] sm:$0xff] 0.0
    %71 = vst [vmem:[#allocation2 + $0x1a8] sm:$0xff] 0.0
    %72 = vst [vmem:[#allocation2 + $0x1b0] sm:$0xff] 0.0
    %73 = vst [vmem:[#allocation2 + $0x1b8] sm:$0xff] 0.0
    %74 = vst [vmem:[#allocation2 + $0x1c0] sm:$0xff] 0.0
    %75 = vst [vmem:[#allocation2 + $0x1c8] sm:$0xff] 0.0
    %76 = vst [vmem:[#allocation2 + $0x1d0] sm:$0xff] 0.0
    %77 = vst [vmem:[#allocation2 + $0x1d8] sm:$0xff] 0.0
    %78 = vst [vmem:[#allocation2 + $0x1e0] sm:$0xff] 0.0
    %79 = vst [vmem:[#allocation2 + $0x1e8] sm:$0xff] 0.0
    %80 = vst [vmem:[#allocation2 + $0x1f0] sm:$0xff] 0.0
    %81 = vst [vmem:[#allocation2 + $0x1f8] sm:$0xff] 0.0
  $region13: #{_lambda_.9} parent=0 // pred_fallthru
    _
  %v82 = vld [vmem:[#allocation2] sm:$0xff]
  %v83 = vld [vmem:[#allocation2 + $0x8] sm:$0xff]
  %v84 = vld [vmem:[#allocation2 + $0x10] sm:$0xff]
  %v85 = vld [vmem:[#allocation2 + $0x18] sm:$0xff]
  %v86 = vld [vmem:[#allocation2 + $0x20] sm:$0xff]
  %v87 = vld [vmem:[#allocation2 + $0x28] sm:$0xff]
  %v88 = vld [vmem:[#allocation2 + $0x30] sm:$0xff]
  %v89 = vld [vmem:[#allocation2 + $0x38] sm:$0xff]
  %v90 = vld [vmem:[#allocation2 + $0x40] sm:$0xff]
  %v91 = vld [vmem:[#allocation2 + $0x48] sm:$0xff]
  %v92 = vld [vmem:[#allocation2 + $0x50] sm:$0xff]
  %v93 = vld [vmem:[#allocation2 + $0x58] sm:$0xff]
  %v94 = vld [vmem:[#allocation2 + $0x60] sm:$0xff]
  %v95 = vld [vmem:[#allocation2 + $0x68] sm:$0xff]
  %v96 = vld [vmem:[#allocation2 + $0x70] sm:$0xff]
  %v97 = vld [vmem:[#allocation2 + $0x78] sm:$0xff]
  %v98 = vld [vmem:[#allocation2 + $0x80] sm:$0xff]
  %v99 = vld [vmem:[#allocation2 + $0x88] sm:$0xff]
  %v100 = vld [vmem:[#allocation2 + $0x90] sm:$0xff]
  %v101 = vld [vmem:[#allocation2 + $0x98] sm:$0xff]
  %v102 = vld [vmem:[#allocation2 + $0xa0] sm:$0xff]
  %v103 = vld [vmem:[#allocation2 + $0xa8] sm:$0xff]
  %v104 = vld [vmem:[#allocation2 + $0xb0] sm:$0xff]
  %v105 = vld [vmem:[#allocation2 + $0xb8] sm:$0xff]
  %v106 = vld [vmem:[#allocation2 + $0xc0] sm:$0xff]
  %v107 = vld [vmem:[#allocation2 + $0xc8] sm:$0xff]
  %v108 = vld [vmem:[#allocation2 + $0xd0] sm:$0xff]
  %v109 = vld [vmem:[#allocation2 + $0xd8] sm:$0xff]
  %v110 = vld [vmem:[#allocation2 + $0xe0] sm:$0xff]
  %v111 = vld [vmem:[#allocation2 + $0xe8] sm:$0xff]
  %v112 = vld [vmem:[#allocation2 + $0xf0] sm:$0xff]
  %v113 = vld [vmem:[#allocation2 + $0xf8] sm:$0xff]
  %v114 = vld [vmem:[#allocation2 + $0x100] sm:$0xff]
  %v115 = vld [vmem:[#allocation2 + $0x108] sm:$0xff]
  %v116 = vld [vmem:[#allocation2 + $0x110] sm:$0xff]
  %v117 = vld [vmem:[#allocation2 + $0x118] sm:$0xff]
  %v118 = vld [vmem:[#allocation2 + $0x120] sm:$0xff]
  %v119 = vld [vmem:[#allocation2 + $0x128] sm:$0xff]
  %v120 = vld [vmem:[#allocation2 + $0x130] sm:$0xff]
  %v121 = vld [vmem:[#allocation2 + $0x138] sm:$0xff]
  %v122 = vld [vmem:[#allocation2 + $0x140] sm:$0xff]
  %v123 = vld [vmem:[#allocation2 + $0x148] sm:$0xff]
  %v124 = vld [vmem:[#allocation2 + $0x150] sm:$0xff]
  %v125 = vld [vmem:[#allocation2 + $0x158] sm:$0xff]
  %v126 = vld [vmem:[#allocation2 + $0x160] sm:$0xff]
  %v127 = vld [vmem:[#allocation2 + $0x168] sm:$0xff]
  %v128 = vld [vmem:[#allocation2 + $0x170] sm:$0xff]
  %v129 = vld [vmem:[#allocation2 + $0x178] sm:$0xff]
  %v130 = vld [vmem:[#allocation2 + $0x180] sm:$0xff]
  %v131 = vld [vmem:[#allocation2 + $0x188] sm:$0xff]
  %v132 = vld [vmem:[#allocation2 + $0x190] sm:$0xff]
  %v133 = vld [vmem:[#allocation2 + $0x198] sm:$0xff]
  %v134 = vld [vmem:[#allocation2 + $0x1a0] sm:$0xff]
  %v135 = vld [vmem:[#allocation2 + $0x1a8] sm:$0xff]
  %v136 = vld [vmem:[#allocation2 + $0x1b0] sm:$0xff]
  %v137 = vld [vmem:[#allocation2 + $0x1b8] sm:$0xff]
  %v138 = vld [vmem:[#allocation2 + $0x1c0] sm:$0xff]
  %v139 = vld [vmem:[#allocation2 + $0x1c8] sm:$0xff]
  %v140 = vld [vmem:[#allocation2 + $0x1d0] sm:$0xff]
  %v141 = vld [vmem:[#allocation2 + $0x1d8] sm:$0xff]
  %v142 = vld [vmem:[#allocation2 + $0x1e0] sm:$0xff]
  %v143 = vld [vmem:[#allocation2 + $0x1e8] sm:$0xff]
  %v144 = vld [vmem:[#allocation2 + $0x1f0] sm:$0xff]
  %v145 = vld [vmem:[#allocation2 + $0x1f8] sm:$0xff]
  %v146 = vld [vmem:[%s0] sm:$0xf]
  %v147 = vld [vmem:[%s0 + $0x4] sm:$0xf]
  %v148 = vld [vmem:[%s0 + $0x8] sm:$0xf]
  %v149 = vld [vmem:[%s0 + $0xc] sm:$0xf]
  %v150 = vld [vmem:[%s0 + $0x10] sm:$0xf]
  %v151 = vld [vmem:[%s0 + $0x14] sm:$0xf]
  %v152 = vld [vmem:[%s0 + $0x18] sm:$0xf]
  %v153 = vld [vmem:[%s0 + $0x1c] sm:$0xf]
  %v154 = vld [vmem:[%s0 + $0x20] sm:$0xf]
  %v155 = vld [vmem:[%s0 + $0x24] sm:$0xf]
  %v156 = vld [vmem:[%s0 + $0x28] sm:$0xf]
  %v157 = vld [vmem:[%s0 + $0x2c] sm:$0xf]
  %v158 = vld [vmem:[%s0 + $0x30] sm:$0xf]
  %v159 = vld [vmem:[%s0 + $0x34] sm:$0xf]
  %v160 = vld [vmem:[%s0 + $0x38] sm:$0xf]
  %v161 = vld [vmem:[%s0 + $0x3c] sm:$0xf]
  %v162 = vld [vmem:[%s0 + $0x40] sm:$0xf]
  %v163 = vld [vmem:[%s0 + $0x44] sm:$0xf]
  %v164 = vld [vmem:[%s0 + $0x48] sm:$0xf]
  %v165 = vld [vmem:[%s0 + $0x4c] sm:$0xf]
  %v166 = vld [vmem:[%s0 + $0x50] sm:$0xf]
  %v167 = vld [vmem:[%s0 + $0x54] sm:$0xf]
  %v168 = vld [vmem:[%s0 + $0x58] sm:$0xf]
  %v169 = vld [vmem:[%s0 + $0x5c] sm:$0xf]
  %v170 = vld [vmem:[%s0 + $0x60] sm:$0xf]
  %v171 = vld [vmem:[%s0 + $0x64] sm:$0xf]
  %v172 = vld [vmem:[%s0 + $0x68] sm:$0xf]
  %v173 = vld [vmem:[%s0 + $0x6c] sm:$0xf]
  %v174 = vld [vmem:[%s0 + $0x70] sm:$0xf]
  %v175 = vld [vmem:[%s0 + $0x74] sm:$0xf]
  %v176 = vld [vmem:[%s0 + $0x78] sm:$0xf]
  %v177 = vld [vmem:[%s0 + $0x7c] sm:$0xf]
  %v178 = vld [vmem:[%s0 + $0x80] sm:$0xf]
  %v179 = vld [vmem:[%s0 + $0x84] sm:$0xf]
  %v180 = vld [vmem:[%s0 + $0x88] sm:$0xf]
  %v181 = vld [vmem:[%s0 + $0x8c] sm:$0xf]
  %v182 = vld [vmem:[%s0 + $0x90] sm:$0xf]
  %v183 = vld [vmem:[%s0 + $0x94] sm:$0xf]
  %v184 = vld [vmem:[%s0 + $0x98] sm:$0xf]
  %v185 = vld [vmem:[%s0 + $0x9c] sm:$0xf]
  %v186 = vld [vmem:[%s0 + $0xa0] sm:$0xf]
  %v187 = vld [vmem:[%s0 + $0xa4] sm:$0xf]
  %v188 = vld [vmem:[%s0 + $0xa8] sm:$0xf]
  %v189 = vld [vmem:[%s0 + $0xac] sm:$0xf]
  %v190 = vld [vmem:[%s0 + $0xb0] sm:$0xf]
  %v191 = vld [vmem:[%s0 + $0xb4] sm:$0xf]
  %v192 = vld [vmem:[%s0 + $0xb8] sm:$0xf]
  %v193 = vld [vmem:[%s0 + $0xbc] sm:$0xf]
  %v194 = vld [vmem:[%s0 + $0xc0] sm:$0xf]
  %v195 = vld [vmem:[%s0 + $0xc4] sm:$0xf]
  %v196 = vld [vmem:[%s0 + $0xc8] sm:$0xf]
  %v197 = vld [vmem:[%s0 + $0xcc] sm:$0xf]
  %v198 = vld [vmem:[%s0 + $0xd0] sm:$0xf]
  %v199 = vld [vmem:[%s0 + $0xd4] sm:$0xf]
  %v200 = vld [vmem:[%s0 + $0xd8] sm:$0xf]
  %v201 = vld [vmem:[%s0 + $0xdc] sm:$0xf]
  %v202 = vld [vmem:[%s0 + $0xe0] sm:$0xf]
  %v203 = vld [vmem:[%s0 + $0xe4] sm:$0xf]
  %v204 = vld [vmem:[%s0 + $0xe8] sm:$0xf]
  %v205 = vld [vmem:[%s0 + $0xec] sm:$0xf]
  %v206 = vld [vmem:[%s0 + $0xf0] sm:$0xf]
  %v207 = vld [vmem:[%s0 + $0xf4] sm:$0xf]
  %v208 = vld [vmem:[%s0 + $0xf8] sm:$0xf]
  %v209 = vld [vmem:[%s0 + $0xfc] sm:$0xf]
  %v210 = vld [vmem:[%s1] sm:$0xf]
  %v211 = vld [vmem:[%s1 + $0x4] sm:$0xf]
  %v212 = vld [vmem:[%s1 + $0x8] sm:$0xf]
  %v213 = vld [vmem:[%s1 + $0xc] sm:$0xf]
  %v214 = vld [vmem:[%s1 + $0x10] sm:$0xf]
  %v215 = vld [vmem:[%s1 + $0x14] sm:$0xf]
  %v216 = vld [vmem:[%s1 + $0x18] sm:$0xf]
  %v217 = vld [vmem:[%s1 + $0x1c] sm:$0xf]
  %v218 = vld [vmem:[%s1 + $0x20] sm:$0xf]
  %v219 = vld [vmem:[%s1 + $0x24] sm:$0xf]
  %v220 = vld [vmem:[%s1 + $0x28] sm:$0xf]
  %v221 = vld [vmem:[%s1 + $0x2c] sm:$0xf]
  %v222 = vld [vmem:[%s1 + $0x30] sm:$0xf]
  %v223 = vld [vmem:[%s1 + $0x34] sm:$0xf]
  %v224 = vld [vmem:[%s1 + $0x38] sm:$0xf]
  %v225 = vld [vmem:[%s1 + $0x3c] sm:$0xf]
  %v290 = vunpack.c.l.b16 %v146
  %v291 = vunpack.c.l.b16 %v147
  %v292 = vunpack.c.l.b16 %v148
  %v293 = vunpack.c.l.b16 %v149
  %v294 = vunpack.c.l.b16 %v150
  %v295 = vunpack.c.l.b16 %v151
  %v296 = vunpack.c.l.b16 %v152
  %v297 = vunpack.c.l.b16 %v153
  %v298 = vunpack.c.l.b16 %v154
  %v299 = vunpack.c.l.b16 %v155
  %v300 = vunpack.c.l.b16 %v156
  %v301 = vunpack.c.l.b16 %v157
  %v302 = vunpack.c.l.b16 %v158
  %v303 = vunpack.c.l.b16 %v159
  %v304 = vunpack.c.l.b16 %v160
  %v305 = vunpack.c.l.b16 %v161
  %v306 = vunpack.c.l.b16 %v162
  %v307 = vunpack.c.l.b16 %v163
  %v308 = vunpack.c.l.b16 %v164
  %v309 = vunpack.c.l.b16 %v165
  %v310 = vunpack.c.l.b16 %v166
  %v311 = vunpack.c.l.b16 %v167
  %v312 = vunpack.c.l.b16 %v168
  %v313 = vunpack.c.l.b16 %v169
  %v314 = vunpack.c.l.b16 %v170
  %v315 = vunpack.c.l.b16 %v171
  %v316 = vunpack.c.l.b16 %v172
  %v317 = vunpack.c.l.b16 %v173
  %v318 = vunpack.c.l.b16 %v174
  %v319 = vunpack.c.l.b16 %v175
  %v320 = vunpack.c.l.b16 %v176
  %v321 = vunpack.c.l.b16 %v177
  %v322 = vunpack.c.l.b16 %v178
  %v323 = vunpack.c.l.b16 %v179
  %v324 = vunpack.c.l.b16 %v180
  %v325 = vunpack.c.l.b16 %v181
  %v326 = vunpack.c.l.b16 %v182
  %v327 = vunpack.c.l.b16 %v183
  %v328 = vunpack.c.l.b16 %v184
  %v329 = vunpack.c.l.b16 %v185
  %v330 = vunpack.c.l.b16 %v186
  %v331 = vunpack.c.l.b16 %v187
  %v332 = vunpack.c.l.b16 %v188
  %v333 = vunpack.c.l.b16 %v189
  %v334 = vunpack.c.l.b16 %v190
  %v335 = vunpack.c.l.b16 %v191
  %v336 = vunpack.c.l.b16 %v192
  %v337 = vunpack.c.l.b16 %v193
  %v338 = vunpack.c.l.b16 %v194
  %v339 = vunpack.c.l.b16 %v195
  %v340 = vunpack.c.l.b16 %v196
  %v341 = vunpack.c.l.b16 %v197
  %v342 = vunpack.c.l.b16 %v198
  %v343 = vunpack.c.l.b16 %v199
  %v344 = vunpack.c.l.b16 %v200
  %v345 = vunpack.c.l.b16 %v201
  %v346 = vunpack.c.l.b16 %v202
  %v347 = vunpack.c.l.b16 %v203
  %v348 = vunpack.c.l.b16 %v204
  %v349 = vunpack.c.l.b16 %v205
  %v350 = vunpack.c.l.b16 %v206
  %v351 = vunpack.c.l.b16 %v207
  %v352 = vunpack.c.l.b16 %v208
  %v353 = vunpack.c.l.b16 %v209
  %v354 = vpack.c.b16 %v291, %v290
  %v355 = vpack.c.b16 %v293, %v292
  %v356 = vpack.c.b16 %v295, %v294
  %v357 = vpack.c.b16 %v297, %v296
  %v358 = vpack.c.b16 %v299, %v298
  %v359 = vpack.c.b16 %v301, %v300
  %v360 = vpack.c.b16 %v303, %v302
  %v361 = vpack.c.b16 %v305, %v304
  %v362 = vpack.c.b16 %v307, %v306
  %v363 = vpack.c.b16 %v309, %v308
  %v364 = vpack.c.b16 %v311, %v310
  %v365 = vpack.c.b16 %v313, %v312
  %v366 = vpack.c.b16 %v315, %v314
  %v367 = vpack.c.b16 %v317, %v316
  %v368 = vpack.c.b16 %v319, %v318
  %v369 = vpack.c.b16 %v321, %v320
  %v370 = vpack.c.b16 %v323, %v322
  %v371 = vpack.c.b16 %v325, %v324
  %v372 = vpack.c.b16 %v327, %v326
  %v373 = vpack.c.b16 %v329, %v328
  %v374 = vpack.c.b16 %v331, %v330
  %v375 = vpack.c.b16 %v333, %v332
  %v376 = vpack.c.b16 %v335, %v334
  %v377 = vpack.c.b16 %v337, %v336
  %v378 = vpack.c.b16 %v339, %v338
  %v379 = vpack.c.b16 %v341, %v340
  %v380 = vpack.c.b16 %v343, %v342
  %v381 = vpack.c.b16 %v345, %v344
  %v382 = vpack.c.b16 %v347, %v346
  %v383 = vpack.c.b16 %v349, %v348
  %v384 = vpack.c.b16 %v351, %v350
  %v385 = vpack.c.b16 %v353, %v352
  %v434 = vunpack.c.l.b16 %v210
  %v435 = vunpack.c.l.b16 %v211
  %v436 = vunpack.c.l.b16 %v212
  %v437 = vunpack.c.l.b16 %v213
  %v438 = vunpack.c.l.b16 %v214
  %v439 = vunpack.c.l.b16 %v215
  %v440 = vunpack.c.l.b16 %v216
  %v441 = vunpack.c.l.b16 %v217
  %v442 = vunpack.c.l.b16 %v218
  %v443 = vunpack.c.l.b16 %v219
  %v444 = vunpack.c.l.b16 %v220
  %v445 = vunpack.c.l.b16 %v221
  %v446 = vunpack.c.l.b16 %v222
  %v447 = vunpack.c.l.b16 %v223
  %v448 = vunpack.c.l.b16 %v224
  %v449 = vunpack.c.l.b16 %v225
  %v450 = vpack.c.b16 %v435, %v434
  %v451 = vpack.c.b16 %v437, %v436
  %v452 = vpack.c.b16 %v439, %v438
  %v453 = vpack.c.b16 %v441, %v440
  %v454 = vpack.c.b16 %v443, %v442
  %v455 = vpack.c.b16 %v445, %v444
  %v456 = vpack.c.b16 %v447, %v446
  %v457 = vpack.c.b16 %v449, %v448
  %466 = vmatpush.bf16.msra.mxu0 %v457
  %467 = vmatpush.bf16.msra.mxu0 %v456
  %468 = vmatpush.bf16.msra.mxu0 %v455
  %469 = vmatpush.bf16.msra.mxu0 %v454
  %470 = vmatpush.bf16.msra.mxu0 %v453
  %471 = vmatpush.bf16.msra.mxu0 %v452
  %472 = vmatpush.bf16.msra.mxu0 %v451
  %473 = vmatpush.bf16.msra.mxu0 %v450
  %474 = vmatmul.bf16.gmra.mxu0 %v354
  %v475 = vpop.f32.mrf.mxu0
  %v476 = vadd.f32 0.0, %v475
  %v477 = vpop.f32.mrf.mxu0
  %v478 = vadd.f32 0.0, %v477
  %479 = vmatmul.bf16.gmra.mxu0 %v355
  %v480 = vpop.f32.mrf.mxu0
  %v481 = vadd.f32 0.0, %v480
  %v482 = vpop.f32.mrf.mxu0
  %v483 = vadd.f32 0.0, %v482
  %484 = vmatmul.bf16.gmra.mxu0 %v356
  %v485 = vpop.f32.mrf.mxu0
  %v486 = vadd.f32 0.0, %v485
  %v487 = vpop.f32.mrf.mxu0
  %v488 = vadd.f32 0.0, %v487
  %489 = vmatmul.bf16.gmra.mxu0 %v357
  %v490 = vpop.f32.mrf.mxu0
  %v491 = vadd.f32 0.0, %v490
  %v492 = vpop.f32.mrf.mxu0
  %v493 = vadd.f32 0.0, %v492
  %494 = vmatmul.bf16.gmra.mxu0 %v358
  %v495 = vpop.f32.mrf.mxu0
  %v496 = vadd.f32 0.0, %v495
  %v497 = vpop.f32.mrf.mxu0
  %v498 = vadd.f32 0.0, %v497
  %499 = vmatmul.bf16.gmra.mxu0 %v359
  %v500 = vpop.f32.mrf.mxu0
  %v501 = vadd.f32 0.0, %v500
  %v502 = vpop.f32.mrf.mxu0
  %v503 = vadd.f32 0.0, %v502
  %504 = vmatmul.bf16.gmra.mxu0 %v360
  %v505 = vpop.f32.mrf.mxu0
  %v506 = vadd.f32 0.0, %v505
  %v507 = vpop.f32.mrf.mxu0
  %v508 = vadd.f32 0.0, %v507
  %509 = vmatmul.bf16.gmra.mxu0 %v361
  %v510 = vpop.f32.mrf.mxu0
  %v511 = vadd.f32 0.0, %v510
  %v512 = vpop.f32.mrf.mxu0
  %v513 = vadd.f32 0.0, %v512
  %514 = vmatmul.bf16.gmra.mxu0 %v362
  %v515 = vpop.f32.mrf.mxu0
  %v516 = vadd.f32 0.0, %v515
  %v517 = vpop.f32.mrf.mxu0
  %v518 = vadd.f32 0.0, %v517
  %519 = vmatmul.bf16.gmra.mxu0 %v363
  %v520 = vpop.f32.mrf.mxu0
  %v521 = vadd.f32 0.0, %v520
  %v522 = vpop.f32.mrf.mxu0
  %v523 = vadd.f32 0.0, %v522
  %524 = vmatmul.bf16.gmra.mxu0 %v364
  %v525 = vpop.f32.mrf.mxu0
  %v526 = vadd.f32 0.0, %v525
  %v527 = vpop.f32.mrf.mxu0
  %v528 = vadd.f32 0.0, %v527
  %529 = vmatmul.bf16.gmra.mxu0 %v365
  %v530 = vpop.f32.mrf.mxu0
  %v531 = vadd.f32 0.0, %v530
  %v532 = vpop.f32.mrf.mxu0
  %v533 = vadd.f32 0.0, %v532
  %534 = vmatmul.bf16.gmra.mxu0 %v366
  %v535 = vpop.f32.mrf.mxu0
  %v536 = vadd.f32 0.0, %v535
  %v537 = vpop.f32.mrf.mxu0
  %v538 = vadd.f32 0.0, %v537
  %539 = vmatmul.bf16.gmra.mxu0 %v367
  %v540 = vpop.f32.mrf.mxu0
  %v541 = vadd.f32 0.0, %v540
  %v542 = vpop.f32.mrf.mxu0
  %v543 = vadd.f32 0.0, %v542
  %544 = vmatmul.bf16.gmra.mxu0 %v368
  %v545 = vpop.f32.mrf.mxu0
  %v546 = vadd.f32 0.0, %v545
  %v547 = vpop.f32.mrf.mxu0
  %v548 = vadd.f32 0.0, %v547
  %549 = vmatmul.bf16.gmra.mxu0 %v369
  %v550 = vpop.f32.mrf.mxu0
  %v551 = vadd.f32 0.0, %v550
  %v552 = vpop.f32.mrf.mxu0
  %v553 = vadd.f32 0.0, %v552
  %554 = vmatmul.bf16.gmra.mxu0 %v370
  %v555 = vpop.f32.mrf.mxu0
  %v556 = vadd.f32 0.0, %v555
  %v557 = vpop.f32.mrf.mxu0
  %v558 = vadd.f32 0.0, %v557
  %559 = vmatmul.bf16.gmra.mxu0 %v371
  %v560 = vpop.f32.mrf.mxu0
  %v561 = vadd.f32 0.0, %v560
  %v562 = vpop.f32.mrf.mxu0
  %v563 = vadd.f32 0.0, %v562
  %564 = vmatmul.bf16.gmra.mxu0 %v372
  %v565 = vpop.f32.mrf.mxu0
  %v566 = vadd.f32 0.0, %v565
  %v567 = vpop.f32.mrf.mxu0
  %v568 = vadd.f32 0.0, %v567
  %569 = vmatmul.bf16.gmra.mxu0 %v373
  %v570 = vpop.f32.mrf.mxu0
  %v571 = vadd.f32 0.0, %v570
  %v572 = vpop.f32.mrf.mxu0
  %v573 = vadd.f32 0.0, %v572
  %574 = vmatmul.bf16.gmra.mxu0 %v374
  %v575 = vpop.f32.mrf.mxu0
  %v576 = vadd.f32 0.0, %v575
  %v577 = vpop.f32.mrf.mxu0
  %v578 = vadd.f32 0.0, %v577
  %579 = vmatmul.bf16.gmra.mxu0 %v375
  %v580 = vpop.f32.mrf.mxu0
  %v581 = vadd.f32 0.0, %v580
  %v582 = vpop.f32.mrf.mxu0
  %v583 = vadd.f32 0.0, %v582
  %584 = vmatmul.bf16.gmra.mxu0 %v376
  %v585 = vpop.f32.mrf.mxu0
  %v586 = vadd.f32 0.0, %v585
  %v587 = vpop.f32.mrf.mxu0
  %v588 = vadd.f32 0.0, %v587
  %589 = vmatmul.bf16.gmra.mxu0 %v377
  %v590 = vpop.f32.mrf.mxu0
  %v591 = vadd.f32 0.0, %v590
  %v592 = vpop.f32.mrf.mxu0
  %v593 = vadd.f32 0.0, %v592
  %594 = vmatmul.bf16.gmra.mxu0 %v378
  %v595 = vpop.f32.mrf.mxu0
  %v596 = vadd.f32 0.0, %v595
  %v597 = vpop.f32.mrf.mxu0
  %v598 = vadd.f32 0.0, %v597
  %599 = vmatmul.bf16.gmra.mxu0 %v379
  %v600 = vpop.f32.mrf.mxu0
  %v601 = vadd.f32 0.0, %v600
  %v602 = vpop.f32.mrf.mxu0
  %v603 = vadd.f32 0.0, %v602
  %604 = vmatmul.bf16.gmra.mxu0 %v380
  %v605 = vpop.f32.mrf.mxu0
  %v606 = vadd.f32 0.0, %v605
  %v607 = vpop.f32.mrf.mxu0
  %v608 = vadd.f32 0.0, %v607
  %609 = vmatmul.bf16.gmra.mxu0 %v381
  %v610 = vpop.f32.mrf.mxu0
  %v611 = vadd.f32 0.0, %v610
  %v612 = vpop.f32.mrf.mxu0
  %v613 = vadd.f32 0.0, %v612
  %614 = vmatmul.bf16.gmra.mxu0 %v382
  %v615 = vpop.f32.mrf.mxu0
  %v616 = vadd.f32 0.0, %v615
  %v617 = vpop.f32.mrf.mxu0
  %v618 = vadd.f32 0.0, %v617
  %619 = vmatmul.bf16.gmra.mxu0 %v383
  %v620 = vpop.f32.mrf.mxu0
  %v621 = vadd.f32 0.0, %v620
  %v622 = vpop.f32.mrf.mxu0
  %v623 = vadd.f32 0.0, %v622
  %624 = vmatmul.bf16.gmra.mxu0 %v384
  %v625 = vpop.f32.mrf.mxu0
  %v626 = vadd.f32 0.0, %v625
  %v627 = vpop.f32.mrf.mxu0
  %v628 = vadd.f32 0.0, %v627
  %629 = vmatmul.bf16.gmra.mxu0 %v385
  %v630 = vpop.f32.mrf.mxu0
  %v631 = vadd.f32 0.0, %v630
  %v632 = vpop.f32.mrf.mxu0
  %v633 = vadd.f32 0.0, %v632
  %634 = vdwg.mxu0
  %v635 = vadd.f32 %v82, %v476
  %v636 = vadd.f32 %v83, %v478
  %v637 = vadd.f32 %v84, %v481
  %v638 = vadd.f32 %v85, %v483
  %v639 = vadd.f32 %v86, %v486
  %v640 = vadd.f32 %v87, %v488
  %v641 = vadd.f32 %v88, %v491
  %v642 = vadd.f32 %v89, %v493
  %v643 = vadd.f32 %v90, %v496
  %v644 = vadd.f32 %v91, %v498
  %v645 = vadd.f32 %v92, %v501
  %v646 = vadd.f32 %v93, %v503
  %v647 = vadd.f32 %v94, %v506
  %v648 = vadd.f32 %v95, %v508
  %v649 = vadd.f32 %v96, %v511
  %v650 = vadd.f32 %v97, %v513
  %v651 = vadd.f32 %v98, %v516
  %v652 = vadd.f32 %v99, %v518
  %v653 = vadd.f32 %v100, %v521
  %v654 = vadd.f32 %v101, %v523
  %v655 = vadd.f32 %v102, %v526
  %v656 = vadd.f32 %v103, %v528
  %v657 = vadd.f32 %v104, %v531
  %v658 = vadd.f32 %v105, %v533
  %v659 = vadd.f32 %v106, %v536
  %v660 = vadd.f32 %v107, %v538
  %v661 = vadd.f32 %v108, %v541
  %v662 = vadd.f32 %v109, %v543
  %v663 = vadd.f32 %v110, %v546
  %v664 = vadd.f32 %v111, %v548
  %v665 = vadd.f32 %v112, %v551
  %v666 = vadd.f32 %v113, %v553
  %v667 = vadd.f32 %v114, %v556
  %v668 = vadd.f32 %v115, %v558
  %v669 = vadd.f32 %v116, %v561
  %v670 = vadd.f32 %v117, %v563
  %v671 = vadd.f32 %v118, %v566
  %v672 = vadd.f32 %v119, %v568
  %v673 = vadd.f32 %v120, %v571
  %v674 = vadd.f32 %v121, %v573
  %v675 = vadd.f32 %v122, %v576
  %v676 = vadd.f32 %v123, %v578
  %v677 = vadd.f32 %v124, %v581
  %v678 = vadd.f32 %v125, %v583
  %v679 = vadd.f32 %v126, %v586
  %v680 = vadd.f32 %v127, %v588
  %v681 = vadd.f32 %v128, %v591
  %v682 = vadd.f32 %v129, %v593
  %v683 = vadd.f32 %v130, %v596
  %v684 = vadd.f32 %v131, %v598
  %v685 = vadd.f32 %v132, %v601
  %v686 = vadd.f32 %v133, %v603
  %v687 = vadd.f32 %v134, %v606
  %v688 = vadd.f32 %v135, %v608
  %v689 = vadd.f32 %v136, %v611
  %v690 = vadd.f32 %v137, %v613
  %v691 = vadd.f32 %v138, %v616
  %v692 = vadd.f32 %v139, %v618
  %v693 = vadd.f32 %v140, %v621
  %v694 = vadd.f32 %v141, %v623
  %v695 = vadd.f32 %v142, %v626
  %v696 = vadd.f32 %v143, %v628
  %v697 = vadd.f32 %v144, %v631
  %v698 = vadd.f32 %v145, %v633
  %699 = vst [vmem:[#allocation2] sm:$0xff] %v635
  %700 = vst [vmem:[#allocation2 + $0x8] sm:$0xff] %v636
  %701 = vst [vmem:[#allocation2 + $0x10] sm:$0xff] %v637
  %702 = vst [vmem:[#allocation2 + $0x18] sm:$0xff] %v638
  %703 = vst [vmem:[#allocation2 + $0x20] sm:$0xff] %v639
  %704 = vst [vmem:[#allocation2 + $0x28] sm:$0xff] %v640
  %705 = vst [vmem:[#allocation2 + $0x30] sm:$0xff] %v641
  %706 = vst [vmem:[#allocation2 + $0x38] sm:$0xff] %v642
  %707 = vst [vmem:[#allocation2 + $0x40] sm:$0xff] %v643
  %708 = vst [vmem:[#allocation2 + $0x48] sm:$0xff] %v644
  %709 = vst [vmem:[#allocation2 + $0x50] sm:$0xff] %v645
  %710 = vst [vmem:[#allocation2 + $0x58] sm:$0xff] %v646
  %711 = vst [vmem:[#allocation2 + $0x60] sm:$0xff] %v647
  %712 = vst [vmem:[#allocation2 + $0x68] sm:$0xff] %v648
  %713 = vst [vmem:[#allocation2 + $0x70] sm:$0xff] %v649
  %714 = vst [vmem:[#allocation2 + $0x78] sm:$0xff] %v650
  %715 = vst [vmem:[#allocation2 + $0x80] sm:$0xff] %v651
  %716 = vst [vmem:[#allocation2 + $0x88] sm:$0xff] %v652
  %717 = vst [vmem:[#allocation2 + $0x90] sm:$0xff] %v653
  %718 = vst [vmem:[#allocation2 + $0x98] sm:$0xff] %v654
  %719 = vst [vmem:[#allocation2 + $0xa0] sm:$0xff] %v655
  %720 = vst [vmem:[#allocation2 + $0xa8] sm:$0xff] %v656
  %721 = vst [vmem:[#allocation2 + $0xb0] sm:$0xff] %v657
  %722 = vst [vmem:[#allocation2 + $0xb8] sm:$0xff] %v658
  %723 = vst [vmem:[#allocation2 + $0xc0] sm:$0xff] %v659
  %724 = vst [vmem:[#allocation2 + $0xc8] sm:$0xff] %v660
  %725 = vst [vmem:[#allocation2 + $0xd0] sm:$0xff] %v661
  %726 = vst [vmem:[#allocation2 + $0xd8] sm:$0xff] %v662
  %727 = vst [vmem:[#allocation2 + $0xe0] sm:$0xff] %v663
  %728 = vst [vmem:[#allocation2 + $0xe8] sm:$0xff] %v664
  %729 = vst [vmem:[#allocation2 + $0xf0] sm:$0xff] %v665
  %730 = vst [vmem:[#allocation2 + $0xf8] sm:$0xff] %v666
  %731 = vst [vmem:[#allocation2 + $0x100] sm:$0xff] %v667
  %732 = vst [vmem:[#allocation2 + $0x108] sm:$0xff] %v668
  %733 = vst [vmem:[#allocation2 + $0x110] sm:$0xff] %v669
  %734 = vst [vmem:[#allocation2 + $0x118] sm:$0xff] %v670
  %735 = vst [vmem:[#allocation2 + $0x120] sm:$0xff] %v671
  %736 = vst [vmem:[#allocation2 + $0x128] sm:$0xff] %v672
  %737 = vst [vmem:[#allocation2 + $0x130] sm:$0xff] %v673
  %738 = vst [vmem:[#allocation2 + $0x138] sm:$0xff] %v674
  %739 = vst [vmem:[#allocation2 + $0x140] sm:$0xff] %v675
  %740 = vst [vmem:[#allocation2 + $0x148] sm:$0xff] %v676
  %741 = vst [vmem:[#allocation2 + $0x150] sm:$0xff] %v677
  %742 = vst [vmem:[#allocation2 + $0x158] sm:$0xff] %v678
  %743 = vst [vmem:[#allocation2 + $0x160] sm:$0xff] %v679
  %744 = vst [vmem:[#allocation2 + $0x168] sm:$0xff] %v680
  %745 = vst [vmem:[#allocation2 + $0x170] sm:$0xff] %v681
  %746 = vst [vmem:[#allocation2 + $0x178] sm:$0xff] %v682
  %747 = vst [vmem:[#allocation2 + $0x180] sm:$0xff] %v683
  %748 = vst [vmem:[#allocation2 + $0x188] sm:$0xff] %v684
  %749 = vst [vmem:[#allocation2 + $0x190] sm:$0xff] %v685
  %750 = vst [vmem:[#allocation2 + $0x198] sm:$0xff] %v686
  %751 = vst [vmem:[#allocation2 + $0x1a0] sm:$0xff] %v687
  %752 = vst [vmem:[#allocation2 + $0x1a8] sm:$0xff] %v688
  %753 = vst [vmem:[#allocation2 + $0x1b0] sm:$0xff] %v689
  %754 = vst [vmem:[#allocation2 + $0x1b8] sm:$0xff] %v690
  %755 = vst [vmem:[#allocation2 + $0x1c0] sm:$0xff] %v691
  %756 = vst [vmem:[#allocation2 + $0x1c8] sm:$0xff] %v692
  %757 = vst [vmem:[#allocation2 + $0x1d0] sm:$0xff] %v693
  %758 = vst [vmem:[#allocation2 + $0x1d8] sm:$0xff] %v694
  %759 = vst [vmem:[#allocation2 + $0x1e0] sm:$0xff] %v695
  %760 = vst [vmem:[#allocation2 + $0x1e8] sm:$0xff] %v696
  %761 = vst [vmem:[#allocation2 + $0x1f0] sm:$0xff] %v697
  %762 = vst [vmem:[#allocation2 + $0x1f8] sm:$0xff] %v698
  // Predicated region
  $region14: #{_lambda_.9} parent=0 // pred_check
    %p763 = pneg %p14
  $region15: #{_lambda_.9} parent=0 // pred_check_branch
    %765 = sbr.rel (%p763) target = $region17
  $region16: #{_lambda_.9} parent=0 // pred_region
    %v766 = vld [vmem:[#allocation2] sm:$0xff]
    %v767 = vld [vmem:[#allocation2 + $0x8] sm:$0xff]
    %v768 = vld [vmem:[#allocation2 + $0x10] sm:$0xff]
    %v769 = vld [vmem:[#allocation2 + $0x18] sm:$0xff]
    %v770 = vld [vmem:[#allocation2 + $0x20] sm:$0xff]
    %v771 = vld [vmem:[#allocation2 + $0x28] sm:$0xff]
    %v772 = vld [vmem:[#allocation2 + $0x30] sm:$0xff]
    %v773 = vld [vmem:[#allocation2 + $0x38] sm:$0xff]
    %v774 = vld [vmem:[#allocation2 + $0x40] sm:$0xff]
    %v775 = vld [vmem:[#allocation2 + $0x48] sm:$0xff]
    %v776 = vld [vmem:[#allocation2 + $0x50] sm:$0xff]
    %v777 = vld [vmem:[#allocation2 + $0x58] sm:$0xff]
    %v778 = vld [vmem:[#allocation2 + $0x60] sm:$0xff]
    %v779 = vld [vmem:[#allocation2 + $0x68] sm:$0xff]
    %v780 = vld [vmem:[#allocation2 + $0x70] sm:$0xff]
    %v781 = vld [vmem:[#allocation2 + $0x78] sm:$0xff]
    %v782 = vld [vmem:[#allocation2 + $0x80] sm:$0xff]
    %v783 = vld [vmem:[#allocation2 + $0x88] sm:$0xff]
    %v784 = vld [vmem:[#allocation2 + $0x90] sm:$0xff]
    %v785 = vld [vmem:[#allocation2 + $0x98] sm:$0xff]
    %v786 = vld [vmem:[#allocation2 + $0xa0] sm:$0xff]
    %v787 = vld [vmem:[#allocation2 + $0xa8] sm:$0xff]
    %v788 = vld [vmem:[#allocation2 + $0xb0] sm:$0xff]
    %v789 = vld [vmem:[#allocation2 + $0xb8] sm:$0xff]
    %v790 = vld [vmem:[#allocation2 + $0xc0] sm:$0xff]
    %v791 = vld [vmem:[#allocation2 + $0xc8] sm:$0xff]
    %v792 = vld [vmem:[#allocation2 + $0xd0] sm:$0xff]
    %v793 = vld [vmem:[#allocation2 + $0xd8] sm:$0xff]
    %v794 = vld [vmem:[#allocation2 + $0xe0] sm:$0xff]
    %v795 = vld [vmem:[#allocation2 + $0xe8] sm:$0xff]
    %v796 = vld [vmem:[#allocation2 + $0xf0] sm:$0xff]
    %v797 = vld [vmem:[#allocation2 + $0xf8] sm:$0xff]
    %v798 = vld [vmem:[#allocation2 + $0x100] sm:$0xff]
    %v799 = vld [vmem:[#allocation2 + $0x108] sm:$0xff]
    %v800 = vld [vmem:[#allocation2 + $0x110] sm:$0xff]
    %v801 = vld [vmem:[#allocation2 + $0x118] sm:$0xff]
    %v802 = vld [vmem:[#allocation2 + $0x120] sm:$0xff]
    %v803 = vld [vmem:[#allocation2 + $0x128] sm:$0xff]
    %v804 = vld [vmem:[#allocation2 + $0x130] sm:$0xff]
    %v805 = vld [vmem:[#allocation2 + $0x138] sm:$0xff]
    %v806 = vld [vmem:[#allocation2 + $0x140] sm:$0xff]
    %v807 = vld [vmem:[#allocation2 + $0x148] sm:$0xff]
    %v808 = vld [vmem:[#allocation2 + $0x150] sm:$0xff]
    %v809 = vld [vmem:[#allocation2 + $0x158] sm:$0xff]
    %v810 = vld [vmem:[#allocation2 + $0x160] sm:$0xff]
    %v811 = vld [vmem:[#allocation2 + $0x168] sm:$0xff]
    %v812 = vld [vmem:[#allocation2 + $0x170] sm:$0xff]
    %v813 = vld [vmem:[#allocation2 + $0x178] sm:$0xff]
    %v814 = vld [vmem:[#allocation2 + $0x180] sm:$0xff]
    %v815 = vld [vmem:[#allocation2 + $0x188] sm:$0xff]
    %v816 = vld [vmem:[#allocation2 + $0x190] sm:$0xff]
    %v817 = vld [vmem:[#allocation2 + $0x198] sm:$0xff]
    %v818 = vld [vmem:[#allocation2 + $0x1a0] sm:$0xff]
    %v819 = vld [vmem:[#allocation2 + $0x1a8] sm:$0xff]
    %v820 = vld [vmem:[#allocation2 + $0x1b0] sm:$0xff]
    %v821 = vld [vmem:[#allocation2 + $0x1b8] sm:$0xff]
    %v822 = vld [vmem:[#allocation2 + $0x1c0] sm:$0xff]
    %v823 = vld [vmem:[#allocation2 + $0x1c8] sm:$0xff]
    %v824 = vld [vmem:[#allocation2 + $0x1d0] sm:$0xff]
    %v825 = vld [vmem:[#allocation2 + $0x1d8] sm:$0xff]
    %v826 = vld [vmem:[#allocation2 + $0x1e0] sm:$0xff]
    %v827 = vld [vmem:[#allocation2 + $0x1e8] sm:$0xff]
    %v828 = vld [vmem:[#allocation2 + $0x1f0] sm:$0xff]
    %v829 = vld [vmem:[#allocation2 + $0x1f8] sm:$0xff]
    %v830 = vpack.c.bf16 %v766, %v766
    %v831 = vpack.c.bf16 %v767, %v767
    %v832 = vpack.c.bf16 %v768, %v768
    %v833 = vpack.c.bf16 %v769, %v769
    %v834 = vpack.c.bf16 %v770, %v770
    %v835 = vpack.c.bf16 %v771, %v771
    %v836 = vpack.c.bf16 %v772, %v772
    %v837 = vpack.c.bf16 %v773, %v773
    %v838 = vpack.c.bf16 %v774, %v774
    %v839 = vpack.c.bf16 %v775, %v775
    %v840 = vpack.c.bf16 %v776, %v776
    %v841 = vpack.c.bf16 %v777, %v777
    %v842 = vpack.c.bf16 %v778, %v778
    %v843 = vpack.c.bf16 %v779, %v779
    %v844 = vpack.c.bf16 %v780, %v780
    %v845 = vpack.c.bf16 %v781, %v781
    %v846 = vpack.c.bf16 %v782, %v782
    %v847 = vpack.c.bf16 %v783, %v783
    %v848 = vpack.c.bf16 %v784, %v784
    %v849 = vpack.c.bf16 %v785, %v785
    %v850 = vpack.c.bf16 %v786, %v786
    %v851 = vpack.c.bf16 %v787, %v787
    %v852 = vpack.c.bf16 %v788, %v788
    %v853 = vpack.c.bf16 %v789, %v789
    %v854 = vpack.c.bf16 %v790, %v790
    %v855 = vpack.c.bf16 %v791, %v791
    %v856 = vpack.c.bf16 %v792, %v792
    %v857 = vpack.c.bf16 %v793, %v793
    %v858 = vpack.c.bf16 %v794, %v794
    %v859 = vpack.c.bf16 %v795, %v795
    %v860 = vpack.c.bf16 %v796, %v796
    %v861 = vpack.c.bf16 %v797, %v797
    %v862 = vpack.c.bf16 %v798, %v798
    %v863 = vpack.c.bf16 %v799, %v799
    %v864 = vpack.c.bf16 %v800, %v800
    %v865 = vpack.c.bf16 %v801, %v801
    %v866 = vpack.c.bf16 %v802, %v802
    %v867 = vpack.c.bf16 %v803, %v803
    %v868 = vpack.c.bf16 %v804, %v804
    %v869 = vpack.c.bf16 %v805, %v805
    %v870 = vpack.c.bf16 %v806, %v806
    %v871 = vpack.c.bf16 %v807, %v807
    %v872 = vpack.c.bf16 %v808, %v808
    %v873 = vpack.c.bf16 %v809, %v809
    %v874 = vpack.c.bf16 %v810, %v810
    %v875 = vpack.c.bf16 %v811, %v811
    %v876 = vpack.c.bf16 %v812, %v812
    %v877 = vpack.c.bf16 %v813, %v813
    %v878 = vpack.c.bf16 %v814, %v814
    %v879 = vpack.c.bf16 %v815, %v815
    %v880 = vpack.c.bf16 %v816, %v816
    %v881 = vpack.c.bf16 %v817, %v817
    %v882 = vpack.c.bf16 %v818, %v818
    %v883 = vpack.c.bf16 %v819, %v819
    %v884 = vpack.c.bf16 %v820, %v820
    %v885 = vpack.c.bf16 %v821, %v821
    %v886 = vpack.c.bf16 %v822, %v822
    %v887 = vpack.c.bf16 %v823, %v823
    %v888 = vpack.c.bf16 %v824, %v824
    %v889 = vpack.c.bf16 %v825, %v825
    %v890 = vpack.c.bf16 %v826, %v826
    %v891 = vpack.c.bf16 %v827, %v827
    %v892 = vpack.c.bf16 %v828, %v828
    %v893 = vpack.c.bf16 %v829, %v829
    %894 = vst [vmem:[%s2] sm:$0xf] %v830
    %895 = vst [vmem:[%s2 + $0x4] sm:$0xf] %v831
    %896 = vst [vmem:[%s2 + $0x8] sm:$0xf] %v832
    %897 = vst [vmem:[%s2 + $0xc] sm:$0xf] %v833
    %898 = vst [vmem:[%s2 + $0x10] sm:$0xf] %v834
    %899 = vst [vmem:[%s2 + $0x14] sm:$0xf] %v835
    %900 = vst [vmem:[%s2 + $0x18] sm:$0xf] %v836
    %901 = vst [vmem:[%s2 + $0x1c] sm:$0xf] %v837
    %902 = vst [vmem:[%s2 + $0x20] sm:$0xf] %v838
    %903 = vst [vmem:[%s2 + $0x24] sm:$0xf] %v839
    %904 = vst [vmem:[%s2 + $0x28] sm:$0xf] %v840
    %905 = vst [vmem:[%s2 + $0x2c] sm:$0xf] %v841
    %906 = vst [vmem:[%s2 + $0x30] sm:$0xf] %v842
    %907 = vst [vmem:[%s2 + $0x34] sm:$0xf] %v843
    %908 = vst [vmem:[%s2 + $0x38] sm:$0xf] %v844
    %909 = vst [vmem:[%s2 + $0x3c] sm:$0xf] %v845
    %910 = vst [vmem:[%s2 + $0x40] sm:$0xf] %v846
    %911 = vst [vmem:[%s2 + $0x44] sm:$0xf] %v847
    %912 = vst [vmem:[%s2 + $0x48] sm:$0xf] %v848
    %913 = vst [vmem:[%s2 + $0x4c] sm:$0xf] %v849
    %914 = vst [vmem:[%s2 + $0x50] sm:$0xf] %v850
    %915 = vst [vmem:[%s2 + $0x54] sm:$0xf] %v851
    %916 = vst [vmem:[%s2 + $0x58] sm:$0xf] %v852
    %917 = vst [vmem:[%s2 + $0x5c] sm:$0xf] %v853
    %918 = vst [vmem:[%s2 + $0x60] sm:$0xf] %v854
    %919 = vst [vmem:[%s2 + $0x64] sm:$0xf] %v855
    %920 = vst [vmem:[%s2 + $0x68] sm:$0xf] %v856
    %921 = vst [vmem:[%s2 + $0x6c] sm:$0xf] %v857
    %922 = vst [vmem:[%s2 + $0x70] sm:$0xf] %v858
    %923 = vst [vmem:[%s2 + $0x74] sm:$0xf] %v859
    %924 = vst [vmem:[%s2 + $0x78] sm:$0xf] %v860
    %925 = vst [vmem:[%s2 + $0x7c] sm:$0xf] %v861
    %926 = vst [vmem:[%s2 + $0x80] sm:$0xf] %v862
    %927 = vst [vmem:[%s2 + $0x84] sm:$0xf] %v863
    %928 = vst [vmem:[%s2 + $0x88] sm:$0xf] %v864
    %929 = vst [vmem:[%s2 + $0x8c] sm:$0xf] %v865
    %930 = vst [vmem:[%s2 + $0x90] sm:$0xf] %v866
    %931 = vst [vmem:[%s2 + $0x94] sm:$0xf] %v867
    %932 = vst [vmem:[%s2 + $0x98] sm:$0xf] %v868
    %933 = vst [vmem:[%s2 + $0x9c] sm:$0xf] %v869
    %934 = vst [vmem:[%s2 + $0xa0] sm:$0xf] %v870
    %935 = vst [vmem:[%s2 + $0xa4] sm:$0xf] %v871
    %936 = vst [vmem:[%s2 + $0xa8] sm:$0xf] %v872
    %937 = vst [vmem:[%s2 + $0xac] sm:$0xf] %v873
    %938 = vst [vmem:[%s2 + $0xb0] sm:$0xf] %v874
    %939 = vst [vmem:[%s2 + $0xb4] sm:$0xf] %v875
    %940 = vst [vmem:[%s2 + $0xb8] sm:$0xf] %v876
    %941 = vst [vmem:[%s2 + $0xbc] sm:$0xf] %v877
    %942 = vst [vmem:[%s2 + $0xc0] sm:$0xf] %v878
    %943 = vst [vmem:[%s2 + $0xc4] sm:$0xf] %v879
    %944 = vst [vmem:[%s2 + $0xc8] sm:$0xf] %v880
    %945 = vst [vmem:[%s2 + $0xcc] sm:$0xf] %v881
    %946 = vst [vmem:[%s2 + $0xd0] sm:$0xf] %v882
    %947 = vst [vmem:[%s2 + $0xd4] sm:$0xf] %v883
    %948 = vst [vmem:[%s2 + $0xd8] sm:$0xf] %v884
    %949 = vst [vmem:[%s2 + $0xdc] sm:$0xf] %v885
    %950 = vst [vmem:[%s2 + $0xe0] sm:$0xf] %v886
    %951 = vst [vmem:[%s2 + $0xe4] sm:$0xf] %v887
    %952 = vst [vmem:[%s2 + $0xe8] sm:$0xf] %v888
    %953 = vst [vmem:[%s2 + $0xec] sm:$0xf] %v889
    %954 = vst [vmem:[%s2 + $0xf0] sm:$0xf] %v890
    %955 = vst [vmem:[%s2 + $0xf4] sm:$0xf] %v891
    %956 = vst [vmem:[%s2 + $0xf8] sm:$0xf] %v892
    %957 = vst [vmem:[%s2 + $0xfc] sm:$0xf] %v893
    %v958 = vadd.f32 %v766, %v767
    %v959 = vadd.f32 %v958, %v768
    %v960 = vadd.f32 %v959, %v769
    %v961 = vadd.f32 %v960, %v770
    %v962 = vadd.f32 %v961, %v771
    %v963 = vadd.f32 %v962, %v772
    %v964 = vadd.f32 %v963, %v773
    %v965 = vadd.f32 %v964, %v774
    %v966 = vadd.f32 %v965, %v775
    %v967 = vadd.f32 %v966, %v776
    %v968 = vadd.f32 %v967, %v777
    %v969 = vadd.f32 %v968, %v778
    %v970 = vadd.f32 %v969, %v779
    %v971 = vadd.f32 %v970, %v780
    %v972 = vadd.f32 %v971, %v781
    %v973 = vadd.f32 %v972, %v782
    %v974 = vadd.f32 %v973, %v783
    %v975 = vadd.f32 %v974, %v784
    %v976 = vadd.f32 %v975, %v785
    %v977 = vadd.f32 %v976, %v786
    %v978 = vadd.f32 %v977, %v787
    %v979 = vadd.f32 %v978, %v788
    %v980 = vadd.f32 %v979, %v789
    %v981 = vadd.f32 %v980, %v790
    %v982 = vadd.f32 %v981, %v791
    %v983 = vadd.f32 %v982, %v792
    %v984 = vadd.f32 %v983, %v793
    %v985 = vadd.f32 %v984, %v794
    %v986 = vadd.f32 %v985, %v795
    %v987 = vadd.f32 %v986, %v796
    %v988 = vadd.f32 %v987, %v797
    %v989 = vadd.f32 %v988, %v798
    %v990 = vadd.f32 %v989, %v799
    %v991 = vadd.f32 %v990, %v800
    %v992 = vadd.f32 %v991, %v801
    %v993 = vadd.f32 %v992, %v802
    %v994 = vadd.f32 %v993, %v803
    %v995 = vadd.f32 %v994, %v804
    %v996 = vadd.f32 %v995, %v805
    %v997 = vadd.f32 %v996, %v806
    %v998 = vadd.f32 %v997, %v807
    %v999 = vadd.f32 %v998, %v808
    %v1000 = vadd.f32 %v999, %v809
    %v1001 = vadd.f32 %v1000, %v810
    %v1002 = vadd.f32 %v1001, %v811
    %v1003 = vadd.f32 %v1002, %v812
    %v1004 = vadd.f32 %v1003, %v813
    %v1005 = vadd.f32 %v1004, %v814
    %v1006 = vadd.f32 %v1005, %v815
    %v1007 = vadd.f32 %v1006, %v816
    %v1008 = vadd.f32 %v1007, %v817
    %v1009 = vadd.f32 %v1008, %v818
    %v1010 = vadd.f32 %v1009, %v819
    %v1011 = vadd.f32 %v1010, %v820
    %v1012 = vadd.f32 %v1011, %v821
    %v1013 = vadd.f32 %v1012, %v822
    %v1014 = vadd.f32 %v1013, %v823
    %v1015 = vadd.f32 %v1014, %v824
    %v1016 = vadd.f32 %v1015, %v825
    %v1017 = vadd.f32 %v1016, %v826
    %v1018 = vadd.f32 %v1017, %v827
    %v1019 = vadd.f32 %v1018, %v828
    %v1020 = vadd.f32 %v1019, %v829
    %v1021 = vrot.slane %v1020, 4
    %v1022 = vadd.f32 %v1020, %v1021
    %v1023 = vrot.slane %v1022, 2
    %v1024 = vadd.f32 %v1022, %v1023
    %v1025 = vrot.slane %v1024, 1
    %v1026 = vadd.f32 %v1024, %v1025
    %v1027 = vmul.f32 %v766, %v766
    %v1028 = vmul.f32 %v767, %v767
    %v1029 = vmul.f32 %v768, %v768
    %v1030 = vmul.f32 %v769, %v769
    %v1031 = vmul.f32 %v770, %v770
    %v1032 = vmul.f32 %v771, %v771
    %v1033 = vmul.f32 %v772, %v772
    %v1034 = vmul.f32 %v773, %v773
    %v1035 = vmul.f32 %v774, %v774
    %v1036 = vmul.f32 %v775, %v775
    %v1037 = vmul.f32 %v776, %v776
    %v1038 = vmul.f32 %v777, %v777
    %v1039 = vmul.f32 %v778, %v778
    %v1040 = vmul.f32 %v779, %v779
    %v1041 = vmul.f32 %v780, %v780
    %v1042 = vmul.f32 %v781, %v781
    %v1043 = vmul.f32 %v782, %v782
    %v1044 = vmul.f32 %v783, %v783
    %v1045 = vmul.f32 %v784, %v784
    %v1046 = vmul.f32 %v785, %v785
    %v1047 = vmul.f32 %v786, %v786
    %v1048 = vmul.f32 %v787, %v787
    %v1049 = vmul.f32 %v788, %v788
    %v1050 = vmul.f32 %v789, %v789
    %v1051 = vmul.f32 %v790, %v790
    %v1052 = vmul.f32 %v791, %v791
    %v1053 = vmul.f32 %v792, %v792
    %v1054 = vmul.f32 %v793, %v793
    %v1055 = vmul.f32 %v794, %v794
    %v1056 = vmul.f32 %v795, %v795
    %v1057 = vmul.f32 %v796, %v796
    %v1058 = vmul.f32 %v797, %v797
    %v1059 = vmul.f32 %v798, %v798
    %v1060 = vmul.f32 %v799, %v799
    %v1061 = vmul.f32 %v800, %v800
    %v1062 = vmul.f32 %v801, %v801
    %v1063 = vmul.f32 %v802, %v802
    %v1064 = vmul.f32 %v803, %v803
    %v1065 = vmul.f32 %v804, %v804
    %v1066 = vmul.f32 %v805, %v805
    %v1067 = vmul.f32 %v806, %v806
    %v1068 = vmul.f32 %v807, %v807
    %v1069 = vmul.f32 %v808, %v808
    %v1070 = vmul.f32 %v809, %v809
    %v1071 = vmul.f32 %v810, %v810
    %v1072 = vmul.f32 %v811, %v811
    %v1073 = vmul.f32 %v812, %v812
    %v1074 = vmul.f32 %v813, %v813
    %v1075 = vmul.f32 %v814, %v814
    %v1076 = vmul.f32 %v815, %v815
    %v1077 = vmul.f32 %v816, %v816
    %v1078 = vmul.f32 %v817, %v817
    %v1079 = vmul.f32 %v818, %v818
    %v1080 = vmul.f32 %v819, %v819
    %v1081 = vmul.f32 %v820, %v820
    %v1082 = vmul.f32 %v821, %v821
    %v1083 = vmul.f32 %v822, %v822
    %v1084 = vmul.f32 %v823, %v823
    %v1085 = vmul.f32 %v824, %v824
    %v1086 = vmul.f32 %v825, %v825
    %v1087 = vmul.f32 %v826, %v826
    %v1088 = vmul.f32 %v827, %v827
    %v1089 = vmul.f32 %v828, %v828
    %v1090 = vmul.f32 %v829, %v829
    %v1091 = vadd.f32 %v1027, %v1028
    %v1092 = vadd.f32 %v1091, %v1029
    %v1093 = vadd.f32 %v1092, %v1030
    %v1094 = vadd.f32 %v1093, %v1031
    %v1095 = vadd.f32 %v1094, %v1032
    %v1096 = vadd.f32 %v1095, %v1033
    %v1097 = vadd.f32 %v1096, %v1034
    %v1098 = vadd.f32 %v1097, %v1035
    %v1099 = vadd.f32 %v1098, %v1036
    %v1100 = vadd.f32 %v1099, %v1037
    %v1101 = vadd.f32 %v1100, %v1038
    %v1102 = vadd.f32 %v1101, %v1039
    %v1103 = vadd.f32 %v1102, %v1040
    %v1104 = vadd.f32 %v1103, %v1041
    %v1105 = vadd.f32 %v1104, %v1042
    %v1106 = vadd.f32 %v1105, %v1043
    %v1107 = vadd.f32 %v1106, %v1044
    %v1108 = vadd.f32 %v1107, %v1045
    %v1109 = vadd.f32 %v1108, %v1046
    %v1110 = vadd.f32 %v1109, %v1047
    %v1111 = vadd.f32 %v1110, %v1048
    %v1112 = vadd.f32 %v1111, %v1049
    %v1113 = vadd.f32 %v1112, %v1050
    %v1114 = vadd.f32 %v1113, %v1051
    %v1115 = vadd.f32 %v1114, %v1052
    %v1116 = vadd.f32 %v1115, %v1053
    %v1117 = vadd.f32 %v1116, %v1054
    %v1118 = vadd.f32 %v1117, %v1055
    %v1119 = vadd.f32 %v1118, %v1056
    %v1120 = vadd.f32 %v1119, %v1057
    %v1121 = vadd.f32 %v1120, %v1058
    %v1122 = vadd.f32 %v1121, %v1059
    %v1123 = vadd.f32 %v1122, %v1060
    %v1124 = vadd.f32 %v1123, %v1061
    %v1125 = vadd.f32 %v1124, %v1062
    %v1126 = vadd.f32 %v1125, %v1063
    %v1127 = vadd.f32 %v1126, %v1064
    %v1128 = vadd.f32 %v1127, %v1065
    %v1129 = vadd.f32 %v1128, %v1066
    %v1130 = vadd.f32 %v1129, %v1067
    %v1131 = vadd.f32 %v1130, %v1068
    %v1132 = vadd.f32 %v1131, %v1069
    %v1133 = vadd.f32 %v1132, %v1070
    %v1134 = vadd.f32 %v1133, %v1071
    %v1135 = vadd.f32 %v1134, %v1072
    %v1136 = vadd.f32 %v1135, %v1073
    %v1137 = vadd.f32 %v1136, %v1074
    %v1138 = vadd.f32 %v1137, %v1075
    %v1139 = vadd.f32 %v1138, %v1076
    %v1140 = vadd.f32 %v1139, %v1077
    %v1141 = vadd.f32 %v1140, %v1078
    %v1142 = vadd.f32 %v1141, %v1079
    %v1143 = vadd.f32 %v1142, %v1080
    %v1144 = vadd.f32 %v1143, %v1081
    %v1145 = vadd.f32 %v1144, %v1082
    %v1146 = vadd.f32 %v1145, %v1083
    %v1147 = vadd.f32 %v1146, %v1084
    %v1148 = vadd.f32 %v1147, %v1085
    %v1149 = vadd.f32 %v1148, %v1086
    %v1150 = vadd.f32 %v1149, %v1087
    %v1151 = vadd.f32 %v1150, %v1088
    %v1152 = vadd.f32 %v1151, %v1089
    %v1153 = vadd.f32 %v1152, %v1090
    %v1154 = vrot.slane %v1153, 4
    %v1155 = vadd.f32 %v1153, %v1154
    %v1156 = vrot.slane %v1155, 2
    %v1157 = vadd.f32 %v1155, %v1156
    %v1158 = vrot.slane %v1157, 1
    %v1159 = vadd.f32 %v1157, %v1158
    %1160 = vst [vmem:[%s3] sm:$0xff] %v1026
    %1161 = vst [vmem:[%s4] sm:$0xff] %v1159
  $region17: #{_lambda_.9} parent=0 // pred_fallthru
    _
  // Predicated region
  $region18: #{_lambda_.9} parent=0 // pred_check
    _
  $region19: #{_lambda_.9} parent=0 // pred_check_branch
    %1163 = sbr.rel (0) target = $region21
  $region20: #{_lambda_.9} parent=0 // pred_region
    _
  $region21: #{_lambda_.9} parent=0 // pred_fallthru
    _
  // Predicated region
  $region22: #{_lambda_.9} parent=0 // pred_check
    _
  $region23: #{_lambda_.9} parent=0 // pred_check_branch
    %1165 = sbr.rel (0) target = $region25
  $region24: #{_lambda_.9} parent=0 // pred_region
    _
  $region25: #{_lambda_.9} parent=0 // pred_fallthru
    _
  // Predicated region
  $region26: #{_lambda_.9} parent=0 // pred_check
    _
  $region27: #{_lambda_.9} parent=0 // pred_check_branch
    %1167 = sbr.rel (0) target = $region29
  $region28: #{_lambda_.9} parent=0 // pred_region
    _
  $region29: #{_lambda_.9} parent=0 // pred_fallthru
    _
  // Predicated region
  $region30: #{_lambda_.9} parent=0 // pred_check
    _
  $region31: #{_lambda_.9} parent=0 // pred_check_branch
    %1169 = sbr.rel (0) target = $region33
  $region32: #{_lambda_.9} parent=0 // pred_region
    _
  $region33: #{_lambda_.9} parent=0 // pred_fallthru
    _
  // Predicated region
  $region34: #{_lambda_.9} parent=0 // pred_check
    _
  $region35: #{_lambda_.9} parent=0 // pred_check_branch
    %1171 = sbr.rel (0) target = $region37
  $region36: #{_lambda_.9} parent=0 // pred_region
    _
  $region37: #{_lambda_.9} parent=0 // pred_fallthru
    _
  // Predicated region
  $region38: #{_lambda_.9} parent=0 // pred_check
    _
  $region39: #{_lambda_.9} parent=0 // pred_check_branch
    %1173 = sbr.rel (0) target = $region41
  $region40: #{_lambda_.9} parent=0 // pred_region
    _
  $region41: #{_lambda_.9} parent=0 // pred_fallthru
    _

// kernel: _lambda_.10
$region0: #{_lambda_.10}
  #allocation0 [shape = 'u32[]', space=smem, size = 0x4, offset = 0x4, fixed_abs, tag = 'smem constant byte address 0x4 - core index']
  #allocation1 [shape = 'u32[72,128]{1,0:T(1,128)}', space=vmem, size = 0x9000, scoped, tag = 'internal scratch']
  %s0 = inlined_call_operand.vmem [shape: bf16[512,128], index: 0, kind: input, shape index: {}]
  %s1 = inlined_call_operand.vmem [shape: f32[1,128], index: 1, kind: input, shape index: {}]
  %s2 = inlined_call_operand.vmem [shape: f32[1,128], index: 2, kind: input, shape index: {}]
  %s3 = inlined_call_operand.vmem [shape: bf16[512,128], index: 3, kind: output, shape index: {}]
  %s4 = sld [smem:[#allocation0]]
  $region22: #{_lambda_.10} parent=0
    _
  %s6 = ssub.s32 1, %s4
  %s7 = scalar_select 0, %s6, %s4
  // Predicated region
  $region2: #{_lambda_.10} parent=0 // pred_check
    _
  $region3: #{_lambda_.10} parent=0 // pred_check_branch
    %9 = sbr.rel (0) target = $region5
  $region4: #{_lambda_.10} parent=0 // pred_region
    _
  $region5: #{_lambda_.10} parent=0 // pred_fallthru
    _
  // Predicated region
  $region6: #{_lambda_.10} parent=0 // pred_check
    _
  $region7: #{_lambda_.10} parent=0 // pred_check_branch
    %11 = sbr.rel (0) target = $region9
  $region8: #{_lambda_.10} parent=0 // pred_region
    _
  $region9: #{_lambda_.10} parent=0 // pred_fallthru
    _
  // Predicated region
  $region10: #{_lambda_.10} parent=0 // pred_check
    _
  $region11: #{_lambda_.10} parent=0 // pred_check_branch
    %13 = sbr.rel (0) target = $region13
  $region12: #{_lambda_.10} parent=0 // pred_region
    _
  $region13: #{_lambda_.10} parent=0 // pred_fallthru
    _
  %v14 = vld [vmem:[%s0] sm:$0xf]
  %v15 = vld [vmem:[%s0 + $0x4] sm:$0xf]
  %v16 = vld [vmem:[%s0 + $0x8] sm:$0xf]
  %v17 = vld [vmem:[%s0 + $0xc] sm:$0xf]
  %v18 = vld [vmem:[%s0 + $0x10] sm:$0xf]
  %v19 = vld [vmem:[%s0 + $0x14] sm:$0xf]
  %v20 = vld [vmem:[%s0 + $0x18] sm:$0xf]
  %v21 = vld [vmem:[%s0 + $0x1c] sm:$0xf]
  %v22 = vld [vmem:[%s0 + $0x20] sm:$0xf]
  %v23 = vld [vmem:[%s0 + $0x24] sm:$0xf]
  %v24 = vld [vmem:[%s0 + $0x28] sm:$0xf]
  %v25 = vld [vmem:[%s0 + $0x2c] sm:$0xf]
  %v26 = vld [vmem:[%s0 + $0x30] sm:$0xf]
  %v27 = vld [vmem:[%s0 + $0x34] sm:$0xf]
  %v28 = vld [vmem:[%s0 + $0x38] sm:$0xf]
  %v29 = vld [vmem:[%s0 + $0x3c] sm:$0xf]
  %v30 = vld [vmem:[%s0 + $0x40] sm:$0xf]
  %v31 = vld [vmem:[%s0 + $0x44] sm:$0xf]
  %v32 = vld [vmem:[%s0 + $0x48] sm:$0xf]
  %v33 = vld [vmem:[%s0 + $0x4c] sm:$0xf]
  %v34 = vld [vmem:[%s0 + $0x50] sm:$0xf]
  %v35 = vld [vmem:[%s0 + $0x54] sm:$0xf]
  %v36 = vld [vmem:[%s0 + $0x58] sm:$0xf]
  %v37 = vld [vmem:[%s0 + $0x5c] sm:$0xf]
  %v38 = vld [vmem:[%s0 + $0x60] sm:$0xf]
  %v39 = vld [vmem:[%s0 + $0x64] sm:$0xf]
  %v40 = vld [vmem:[%s0 + $0x68] sm:$0xf]
  %v41 = vld [vmem:[%s0 + $0x6c] sm:$0xf]
  %v42 = vld [vmem:[%s0 + $0x70] sm:$0xf]
  %v43 = vld [vmem:[%s0 + $0x74] sm:$0xf]
  %v44 = vld [vmem:[%s0 + $0x78] sm:$0xf]
  %v45 = vld [vmem:[%s0 + $0x7c] sm:$0xf]
  %v46 = vld [vmem:[%s0 + $0x80] sm:$0xf]
  %v47 = vld [vmem:[%s0 + $0x84] sm:$0xf]
  %v48 = vld [vmem:[%s0 + $0x88] sm:$0xf]
  %v49 = vld [vmem:[%s0 + $0x8c] sm:$0xf]
  %v50 = vld [vmem:[%s0 + $0x90] sm:$0xf]
  %v51 = vld [vmem:[%s0 + $0x94] sm:$0xf]
  %v52 = vld [vmem:[%s0 + $0x98] sm:$0xf]
  %v53 = vld [vmem:[%s0 + $0x9c] sm:$0xf]
  %v54 = vld [vmem:[%s0 + $0xa0] sm:$0xf]
  %v55 = vld [vmem:[%s0 + $0xa4] sm:$0xf]
  %v56 = vld [vmem:[%s0 + $0xa8] sm:$0xf]
  %v57 = vld [vmem:[%s0 + $0xac] sm:$0xf]
  %v58 = vld [vmem:[%s0 + $0xb0] sm:$0xf]
  %v59 = vld [vmem:[%s0 + $0xb4] sm:$0xf]
  %v60 = vld [vmem:[%s0 + $0xb8] sm:$0xf]
  %v61 = vld [vmem:[%s0 + $0xbc] sm:$0xf]
  %v62 = vld [vmem:[%s0 + $0xc0] sm:$0xf]
  %v63 = vld [vmem:[%s0 + $0xc4] sm:$0xf]
  %v64 = vld [vmem:[%s0 + $0xc8] sm:$0xf]
  %v65 = vld [vmem:[%s0 + $0xcc] sm:$0xf]
  %v66 = vld [vmem:[%s0 + $0xd0] sm:$0xf]
  %v67 = vld [vmem:[%s0 + $0xd4] sm:$0xf]
  %v68 = vld [vmem:[%s0 + $0xd8] sm:$0xf]
  %v69 = vld [vmem:[%s0 + $0xdc] sm:$0xf]
  %v70 = vld [vmem:[%s0 + $0xe0] sm:$0xf]
  %v71 = vld [vmem:[%s0 + $0xe4] sm:$0xf]
  %v72 = vld [vmem:[%s0 + $0xe8] sm:$0xf]
  %v73 = vld [vmem:[%s0 + $0xec] sm:$0xf]
  %v74 = vld [vmem:[%s0 + $0xf0] sm:$0xf]
  %v75 = vld [vmem:[%s0 + $0xf4] sm:$0xf]
  %v76 = vld [vmem:[%s0 + $0xf8] sm:$0xf]
  %v77 = vld [vmem:[%s0 + $0xfc] sm:$0xf]
  %v78 = vunpack.c.l.bf16 %v14
  %v79 = vunpack.c.l.bf16 %v15
  %v80 = vunpack.c.l.bf16 %v16
  %v81 = vunpack.c.l.bf16 %v17
  %v82 = vunpack.c.l.bf16 %v18
  %v83 = vunpack.c.l.bf16 %v19
  %v84 = vunpack.c.l.bf16 %v20
  %v85 = vunpack.c.l.bf16 %v21
  %v86 = vunpack.c.l.bf16 %v22
  %v87 = vunpack.c.l.bf16 %v23
  %v88 = vunpack.c.l.bf16 %v24
  %v89 = vunpack.c.l.bf16 %v25
  %v90 = vunpack.c.l.bf16 %v26
  %v91 = vunpack.c.l.bf16 %v27
  %v92 = vunpack.c.l.bf16 %v28
  %v93 = vunpack.c.l.bf16 %v29
  %v94 = vunpack.c.l.bf16 %v30
  %v95 = vunpack.c.l.bf16 %v31
  %v96 = vunpack.c.l.bf16 %v32
  %v97 = vunpack.c.l.bf16 %v33
  %v98 = vunpack.c.l.bf16 %v34
  %v99 = vunpack.c.l.bf16 %v35
  %v100 = vunpack.c.l.bf16 %v36
  %v101 = vunpack.c.l.bf16 %v37
  %v102 = vunpack.c.l.bf16 %v38
  %v103 = vunpack.c.l.bf16 %v39
  %v104 = vunpack.c.l.bf16 %v40
  %v105 = vunpack.c.l.bf16 %v41
  %v106 = vunpack.c.l.bf16 %v42
  %v107 = vunpack.c.l.bf16 %v43
  %v108 = vunpack.c.l.bf16 %v44
  %v109 = vunpack.c.l.bf16 %v45
  %v110 = vunpack.c.l.bf16 %v46
  %v111 = vunpack.c.l.bf16 %v47
  %v112 = vunpack.c.l.bf16 %v48
  %v113 = vunpack.c.l.bf16 %v49
  %v114 = vunpack.c.l.bf16 %v50
  %v115 = vunpack.c.l.bf16 %v51
  %v116 = vunpack.c.l.bf16 %v52
  %v117 = vunpack.c.l.bf16 %v53
  %v118 = vunpack.c.l.bf16 %v54
  %v119 = vunpack.c.l.bf16 %v55
  %v120 = vunpack.c.l.bf16 %v56
  %v121 = vunpack.c.l.bf16 %v57
  %v122 = vunpack.c.l.bf16 %v58
  %v123 = vunpack.c.l.bf16 %v59
  %v124 = vunpack.c.l.bf16 %v60
  %v125 = vunpack.c.l.bf16 %v61
  %v126 = vunpack.c.l.bf16 %v62
  %v127 = vunpack.c.l.bf16 %v63
  %v128 = vunpack.c.l.bf16 %v64
  %v129 = vunpack.c.l.bf16 %v65
  %v130 = vunpack.c.l.bf16 %v66
  %v131 = vunpack.c.l.bf16 %v67
  %v132 = vunpack.c.l.bf16 %v68
  %v133 = vunpack.c.l.bf16 %v69
  %v134 = vunpack.c.l.bf16 %v70
  %v135 = vunpack.c.l.bf16 %v71
  %v136 = vunpack.c.l.bf16 %v72
  %v137 = vunpack.c.l.bf16 %v73
  %v138 = vunpack.c.l.bf16 %v74
  %v139 = vunpack.c.l.bf16 %v75
  %v140 = vunpack.c.l.bf16 %v76
  %v141 = vunpack.c.l.bf16 %v77
  %v142 = vld [vmem:[%s1] sm:$0x1]
  %v144 = vperm.slane %v142, 0
  %v146 = vmul.f32 %v78, %v144
  %v147 = vmul.f32 %v79, %v144
  %v148 = vmul.f32 %v80, %v144
  %v149 = vmul.f32 %v81, %v144
  %v150 = vmul.f32 %v82, %v144
  %v151 = vmul.f32 %v83, %v144
  %v152 = vmul.f32 %v84, %v144
  %v153 = vmul.f32 %v85, %v144
  %v154 = vmul.f32 %v86, %v144
  %v155 = vmul.f32 %v87, %v144
  %v156 = vmul.f32 %v88, %v144
  %v157 = vmul.f32 %v89, %v144
  %v158 = vmul.f32 %v90, %v144
  %v159 = vmul.f32 %v91, %v144
  %v160 = vmul.f32 %v92, %v144
  %v161 = vmul.f32 %v93, %v144
  %v162 = vmul.f32 %v94, %v144
  %v163 = vmul.f32 %v95, %v144
  %v164 = vmul.f32 %v96, %v144
  %v165 = vmul.f32 %v97, %v144
  %v166 = vmul.f32 %v98, %v144
  %v167 = vmul.f32 %v99, %v144
  %v168 = vmul.f32 %v100, %v144
  %v169 = vmul.f32 %v101, %v144
  %v170 = vmul.f32 %v102, %v144
  %v171 = vmul.f32 %v103, %v144
  %v172 = vmul.f32 %v104, %v144
  %v173 = vmul.f32 %v105, %v144
  %v174 = vmul.f32 %v106, %v144
  %v175 = vmul.f32 %v107, %v144
  %v176 = vmul.f32 %v108, %v144
  %v177 = vmul.f32 %v109, %v144
  %v178 = vmul.f32 %v110, %v144
  %v179 = vmul.f32 %v111, %v144
  %v180 = vmul.f32 %v112, %v144
  %v181 = vmul.f32 %v113, %v144
  %v182 = vmul.f32 %v114, %v144
  %v183 = vmul.f32 %v115, %v144
  %v184 = vmul.f32 %v116, %v144
  %v185 = vmul.f32 %v117, %v144
  %v186 = vmul.f32 %v118, %v144
  %v187 = vmul.f32 %v119, %v144
  %v188 = vmul.f32 %v120, %v144
  %v189 = vmul.f32 %v121, %v144
  %v190 = vmul.f32 %v122, %v144
  %v191 = vmul.f32 %v123, %v144
  %v192 = vmul.f32 %v124, %v144
  %v193 = vmul.f32 %v125, %v144
  %v194 = vmul.f32 %v126, %v144
  %v195 = vmul.f32 %v127, %v144
  %v196 = vmul.f32 %v128, %v144
  %v197 = vmul.f32 %v129, %v144
  %v198 = vmul.f32 %v130, %v144
  %v199 = vmul.f32 %v131, %v144
  %v200 = vmul.f32 %v132, %v144
  %v201 = vmul.f32 %v133, %v144
  %v202 = vmul.f32 %v134, %v144
  %v203 = vmul.f32 %v135, %v144
  %v204 = vmul.f32 %v136, %v144
  %v205 = vmul.f32 %v137, %v144
  %v206 = vmul.f32 %v138, %v144
  %v207 = vmul.f32 %v139, %v144
  %v208 = vmul.f32 %v140, %v144
  %v209 = vmul.f32 %v141, %v144
  %v210 = vld [vmem:[%s2] sm:$0x1]
  %v212 = vperm.slane %v210, 0
  %v214 = vadd.f32 %v146, %v212
  %v215 = vadd.f32 %v147, %v212
  %v216 = vadd.f32 %v148, %v212
  %v217 = vadd.f32 %v149, %v212
  %v218 = vadd.f32 %v150, %v212
  %v219 = vadd.f32 %v151, %v212
  %v220 = vadd.f32 %v152, %v212
  %v221 = vadd.f32 %v153, %v212
  %v222 = vadd.f32 %v154, %v212
  %v223 = vadd.f32 %v155, %v212
  %v224 = vadd.f32 %v156, %v212
  %v225 = vadd.f32 %v157, %v212
  %v226 = vadd.f32 %v158, %v212
  %v227 = vadd.f32 %v159, %v212
  %v228 = vadd.f32 %v160, %v212
  %v229 = vadd.f32 %v161, %v212
  %v230 = vadd.f32 %v162, %v212
  %v231 = vadd.f32 %v163, %v212
  %v232 = vadd.f32 %v164, %v212
  %v233 = vadd.f32 %v165, %v212
  %v234 = vadd.f32 %v166, %v212
  %v235 = vadd.f32 %v167, %v212
  %v236 = vadd.f32 %v168, %v212
  %v237 = vadd.f32 %v169, %v212
  %v238 = vadd.f32 %v170, %v212
  %v239 = vadd.f32 %v171, %v212
  %v240 = vadd.f32 %v172, %v212
  %v241 = vadd.f32 %v173, %v212
  %v242 = vadd.f32 %v174, %v212
  %v243 = vadd.f32 %v175, %v212
  %v244 = vadd.f32 %v176, %v212
  %v245 = vadd.f32 %v177, %v212
  %v246 = vadd.f32 %v178, %v212
  %v247 = vadd.f32 %v179, %v212
  %v248 = vadd.f32 %v180, %v212
  %v249 = vadd.f32 %v181, %v212
  %v250 = vadd.f32 %v182, %v212
  %v251 = vadd.f32 %v183, %v212
  %v252 = vadd.f32 %v184, %v212
  %v253 = vadd.f32 %v185, %v212
  %v254 = vadd.f32 %v186, %v212
  %v255 = vadd.f32 %v187, %v212
  %v256 = vadd.f32 %v188, %v212
  %v257 = vadd.f32 %v189, %v212
  %v258 = vadd.f32 %v190, %v212
  %v259 = vadd.f32 %v191, %v212
  %v260 = vadd.f32 %v192, %v212
  %v261 = vadd.f32 %v193, %v212
  %v262 = vadd.f32 %v194, %v212
  %v263 = vadd.f32 %v195, %v212
  %v264 = vadd.f32 %v196, %v212
  %v265 = vadd.f32 %v197, %v212
  %v266 = vadd.f32 %v198, %v212
  %v267 = vadd.f32 %v199, %v212
  %v268 = vadd.f32 %v200, %v212
  %v269 = vadd.f32 %v201, %v212
  %v270 = vadd.f32 %v202, %v212
  %v271 = vadd.f32 %v203, %v212
  %v272 = vadd.f32 %v204, %v212
  %v273 = vadd.f32 %v205, %v212
  %v274 = vadd.f32 %v206, %v212
  %v275 = vadd.f32 %v207, %v212
  %v276 = vadd.f32 %v208, %v212
  %v277 = vadd.f32 %v209, %v212
  %vm278 = vcmp.ge.f32.partialorder %v214, 0.0
  %vm279 = vcmp.ge.f32.partialorder %v215, 0.0
  %vm280 = vcmp.ge.f32.partialorder %v216, 0.0
  %vm281 = vcmp.ge.f32.partialorder %v217, 0.0
  %vm282 = vcmp.ge.f32.partialorder %v218, 0.0
  %vm283 = vcmp.ge.f32.partialorder %v219, 0.0
  %vm284 = vcmp.ge.f32.partialorder %v220, 0.0
  %vm285 = vcmp.ge.f32.partialorder %v221, 0.0
  %vm286 = vcmp.ge.f32.partialorder %v222, 0.0
  %vm287 = vcmp.ge.f32.partialorder %v223, 0.0
  %vm288 = vcmp.ge.f32.partialorder %v224, 0.0
  %vm289 = vcmp.ge.f32.partialorder %v225, 0.0
  %vm290 = vcmp.ge.f32.partialorder %v226, 0.0
  %vm291 = vcmp.ge.f32.partialorder %v227, 0.0
  %vm292 = vcmp.ge.f32.partialorder %v228, 0.0
  %vm293 = vcmp.ge.f32.partialorder %v229, 0.0
  %vm294 = vcmp.ge.f32.partialorder %v230, 0.0
  %vm295 = vcmp.ge.f32.partialorder %v231, 0.0
  %vm296 = vcmp.ge.f32.partialorder %v232, 0.0
  %vm297 = vcmp.ge.f32.partialorder %v233, 0.0
  %vm298 = vcmp.ge.f32.partialorder %v234, 0.0
  %vm299 = vcmp.ge.f32.partialorder %v235, 0.0
  %vm300 = vcmp.ge.f32.partialorder %v236, 0.0
  %vm301 = vcmp.ge.f32.partialorder %v237, 0.0
  %vm302 = vcmp.ge.f32.partialorder %v238, 0.0
  %vm303 = vcmp.ge.f32.partialorder %v239, 0.0
  %vm304 = vcmp.ge.f32.partialorder %v240, 0.0
  %vm305 = vcmp.ge.f32.partialorder %v241, 0.0
  %vm306 = vcmp.ge.f32.partialorder %v242, 0.0
  %vm307 = vcmp.ge.f32.partialorder %v243, 0.0
  %vm308 = vcmp.ge.f32.partialorder %v244, 0.0
  %vm309 = vcmp.ge.f32.partialorder %v245, 0.0
  %vm310 = vcmp.ge.f32.partialorder %v246, 0.0
  %vm311 = vcmp.ge.f32.partialorder %v247, 0.0
  %vm312 = vcmp.ge.f32.partialorder %v248, 0.0
  %vm313 = vcmp.ge.f32.partialorder %v249, 0.0
  %vm314 = vcmp.ge.f32.partialorder %v250, 0.0
  %vm315 = vcmp.ge.f32.partialorder %v251, 0.0
  %vm316 = vcmp.ge.f32.partialorder %v252, 0.0
  %vm317 = vcmp.ge.f32.partialorder %v253, 0.0
  %vm318 = vcmp.ge.f32.partialorder %v254, 0.0
  %vm319 = vcmp.ge.f32.partialorder %v255, 0.0
  %vm320 = vcmp.ge.f32.partialorder %v256, 0.0
  %vm321 = vcmp.ge.f32.partialorder %v257, 0.0
  %vm322 = vcmp.ge.f32.partialorder %v258, 0.0
  %vm323 = vcmp.ge.f32.partialorder %v259, 0.0
  %vm324 = vcmp.ge.f32.partialorder %v260, 0.0
  %vm325 = vcmp.ge.f32.partialorder %v261, 0.0
  %vm326 = vcmp.ge.f32.partialorder %v262, 0.0
  %vm327 = vcmp.ge.f32.partialorder %v263, 0.0
  %vm328 = vcmp.ge.f32.partialorder %v264, 0.0
  %vm329 = vcmp.ge.f32.partialorder %v265, 0.0
  %vm330 = vcmp.ge.f32.partialorder %v266, 0.0
  %vm331 = vcmp.ge.f32.partialorder %v267, 0.0
  %vm332 = vcmp.ge.f32.partialorder %v268, 0.0
  %vm333 = vcmp.ge.f32.partialorder %v269, 0.0
  %vm334 = vcmp.ge.f32.partialorder %v270, 0.0
  %vm335 = vcmp.ge.f32.partialorder %v271, 0.0
  %vm336 = vcmp.ge.f32.partialorder %v272, 0.0
  %vm337 = vcmp.ge.f32.partialorder %v273, 0.0
  %vm338 = vcmp.ge.f32.partialorder %v274, 0.0
  %vm339 = vcmp.ge.f32.partialorder %v275, 0.0
  %vm340 = vcmp.ge.f32.partialorder %v276, 0.0
  %vm341 = vcmp.ge.f32.partialorder %v277, 0.0
  %v342 = vmul.f32 %v214, 0.2
  %v343 = vmul.f32 %v215, 0.2
  %v344 = vmul.f32 %v216, 0.2
  %v345 = vmul.f32 %v217, 0.2
  %v346 = vmul.f32 %v218, 0.2
  %v347 = vmul.f32 %v219, 0.2
  %v348 = vmul.f32 %v220, 0.2
  %v349 = vmul.f32 %v221, 0.2
  %v350 = vmul.f32 %v222, 0.2
  %v351 = vmul.f32 %v223, 0.2
  %v352 = vmul.f32 %v224, 0.2
  %v353 = vmul.f32 %v225, 0.2
  %v354 = vmul.f32 %v226, 0.2
  %v355 = vmul.f32 %v227, 0.2
  %v356 = vmul.f32 %v228, 0.2
  %v357 = vmul.f32 %v229, 0.2
  %v358 = vmul.f32 %v230, 0.2
  %v359 = vmul.f32 %v231, 0.2
  %v360 = vmul.f32 %v232, 0.2
  %v361 = vmul.f32 %v233, 0.2
  %v362 = vmul.f32 %v234, 0.2
  %v363 = vmul.f32 %v235, 0.2
  %v364 = vmul.f32 %v236, 0.2
  %v365 = vmul.f32 %v237, 0.2
  %v366 = vmul.f32 %v238, 0.2
  %v367 = vmul.f32 %v239, 0.2
  %v368 = vmul.f32 %v240, 0.2
  %v369 = vmul.f32 %v241, 0.2
  %v370 = vmul.f32 %v242, 0.2
  %v371 = vmul.f32 %v243, 0.2
  %v372 = vmul.f32 %v244, 0.2
  %v373 = vmul.f32 %v245, 0.2
  %v374 = vmul.f32 %v246, 0.2
  %v375 = vmul.f32 %v247, 0.2
  %v376 = vmul.f32 %v248, 0.2
  %v377 = vmul.f32 %v249, 0.2
  %v378 = vmul.f32 %v250, 0.2
  %v379 = vmul.f32 %v251, 0.2
  %v380 = vmul.f32 %v252, 0.2
  %v381 = vmul.f32 %v253, 0.2
  %v382 = vmul.f32 %v254, 0.2
  %v383 = vmul.f32 %v255, 0.2
  %v384 = vmul.f32 %v256, 0.2
  %v385 = vmul.f32 %v257, 0.2
  %v386 = vmul.f32 %v258, 0.2
  %v387 = vmul.f32 %v259, 0.2
  %v388 = vmul.f32 %v260, 0.2
  %v389 = vmul.f32 %v261, 0.2
  %v390 = vmul.f32 %v262, 0.2
  %v391 = vmul.f32 %v263, 0.2
  %v392 = vmul.f32 %v264, 0.2
  %v393 = vmul.f32 %v265, 0.2
  %v394 = vmul.f32 %v266, 0.2
  %v395 = vmul.f32 %v267, 0.2
  %v396 = vmul.f32 %v268, 0.2
  %v397 = vmul.f32 %v269, 0.2
  %v398 = vmul.f32 %v270, 0.2
  %v399 = vmul.f32 %v271, 0.2
  %v400 = vmul.f32 %v272, 0.2
  %v401 = vmul.f32 %v273, 0.2
  %v402 = vmul.f32 %v274, 0.2
  %v403 = vmul.f32 %v275, 0.2
  %v404 = vmul.f32 %v276, 0.2
  %v405 = vmul.f32 %v277, 0.2
  %v406 = vsel %vm278, %v214, %v342
  %v407 = vsel %vm279, %v215, %v343
  %v408 = vsel %vm280, %v216, %v344
  %v409 = vsel %vm281, %v217, %v345
  %v410 = vsel %vm282, %v218, %v346
  %v411 = vsel %vm283, %v219, %v347
  %v412 = vsel %vm284, %v220, %v348
  %v413 = vsel %vm285, %v221, %v349
  %v414 = vsel %vm286, %v222, %v350
  %v415 = vsel %vm287, %v223, %v351
  %v416 = vsel %vm288, %v224, %v352
  %v417 = vsel %vm289, %v225, %v353
  %v418 = vsel %vm290, %v226, %v354
  %v419 = vsel %vm291, %v227, %v355
  %v420 = vsel %vm292, %v228, %v356
  %v421 = vsel %vm293, %v229, %v357
  %v422 = vsel %vm294, %v230, %v358
  %v423 = vsel %vm295, %v231, %v359
  %v424 = vsel %vm296, %v232, %v360
  %v425 = vsel %vm297, %v233, %v361
  %v426 = vsel %vm298, %v234, %v362
  %v427 = vsel %vm299, %v235, %v363
  %v428 = vsel %vm300, %v236, %v364
  %v429 = vsel %vm301, %v237, %v365
  %v430 = vsel %vm302, %v238, %v366
  %v431 = vsel %vm303, %v239, %v367
  %v432 = vsel %vm304, %v240, %v368
  %v433 = vsel %vm305, %v241, %v369
  %v434 = vsel %vm306, %v242, %v370
  %v435 = vsel %vm307, %v243, %v371
  %v436 = vsel %vm308, %v244, %v372
  %v437 = vsel %vm309, %v245, %v373
  %v438 = vsel %vm310, %v246, %v374
  %v439 = vsel %vm311, %v247, %v375
  %v440 = vsel %vm312, %v248, %v376
  %v441 = vsel %vm313, %v249, %v377
  %v442 = vsel %vm314, %v250, %v378
  %v443 = vsel %vm315, %v251, %v379
  %v444 = vsel %vm316, %v252, %v380
  %v445 = vsel %vm317, %v253, %v381
  %v446 = vsel %vm318, %v254, %v382
  %v447 = vsel %vm319, %v255, %v383
  %v448 = vsel %vm320, %v256, %v384
  %v449 = vsel %vm321, %v257, %v385
  %v450 = vsel %vm322, %v258, %v386
  %v451 = vsel %vm323, %v259, %v387
  %v452 = vsel %vm324, %v260, %v388
  %v453 = vsel %vm325, %v261, %v389
  %v454 = vsel %vm326, %v262, %v390
  %v455 = vsel %vm327, %v263, %v391
  %v456 = vsel %vm328, %v264, %v392
  %v457 = vsel %vm329, %v265, %v393
  %v458 = vsel %vm330, %v266, %v394
  %v459 = vsel %vm331, %v267, %v395
  %v460 = vsel %vm332, %v268, %v396
  %v461 = vsel %vm333, %v269, %v397
  %v462 = vsel %vm334, %v270, %v398
  %v463 = vsel %vm335, %v271, %v399
  %v464 = vsel %vm336, %v272, %v400
  %v465 = vsel %vm337, %v273, %v401
  %v466 = vsel %vm338, %v274, %v402
  %v467 = vsel %vm339, %v275, %v403
  %v468 = vsel %vm340, %v276, %v404
  %v469 = vsel %vm341, %v277, %v405
  %v470 = vpack.c.bf16 %v406, %v406
  %v471 = vpack.c.bf16 %v407, %v407
  %v472 = vpack.c.bf16 %v408, %v408
  %v473 = vpack.c.bf16 %v409, %v409
  %v474 = vpack.c.bf16 %v410, %v410
  %v475 = vpack.c.bf16 %v411, %v411
  %v476 = vpack.c.bf16 %v412, %v412
  %v477 = vpack.c.bf16 %v413, %v413
  %v478 = vpack.c.bf16 %v414, %v414
  %v479 = vpack.c.bf16 %v415, %v415
  %v480 = vpack.c.bf16 %v416, %v416
  %v481 = vpack.c.bf16 %v417, %v417
  %v482 = vpack.c.bf16 %v418, %v418
  %v483 = vpack.c.bf16 %v419, %v419
  %v484 = vpack.c.bf16 %v420, %v420
  %v485 = vpack.c.bf16 %v421, %v421
  %v486 = vpack.c.bf16 %v422, %v422
  %v487 = vpack.c.bf16 %v423, %v423
  %v488 = vpack.c.bf16 %v424, %v424
  %v489 = vpack.c.bf16 %v425, %v425
  %v490 = vpack.c.bf16 %v426, %v426
  %v491 = vpack.c.bf16 %v427, %v427
  %v492 = vpack.c.bf16 %v428, %v428
  %v493 = vpack.c.bf16 %v429, %v429
  %v494 = vpack.c.bf16 %v430, %v430
  %v495 = vpack.c.bf16 %v431, %v431
  %v496 = vpack.c.bf16 %v432, %v432
  %v497 = vpack.c.bf16 %v433, %v433
  %v498 = vpack.c.bf16 %v434, %v434
  %v499 = vpack.c.bf16 %v435, %v435
  %v500 = vpack.c.bf16 %v436, %v436
  %v501 = vpack.c.bf16 %v437, %v437
  %v502 = vpack.c.bf16 %v438, %v438
  %v503 = vpack.c.bf16 %v439, %v439
  %v504 = vpack.c.bf16 %v440, %v440
  %v505 = vpack.c.bf16 %v441, %v441
  %v506 = vpack.c.bf16 %v442, %v442
  %v507 = vpack.c.bf16 %v443, %v443
  %v508 = vpack.c.bf16 %v444, %v444
  %v509 = vpack.c.bf16 %v445, %v445
  %v510 = vpack.c.bf16 %v446, %v446
  %v511 = vpack.c.bf16 %v447, %v447
  %v512 = vpack.c.bf16 %v448, %v448
  %v513 = vpack.c.bf16 %v449, %v449
  %v514 = vpack.c.bf16 %v450, %v450
  %v515 = vpack.c.bf16 %v451, %v451
  %v516 = vpack.c.bf16 %v452, %v452
  %v517 = vpack.c.bf16 %v453, %v453
  %v518 = vpack.c.bf16 %v454, %v454
  %v519 = vpack.c.bf16 %v455, %v455
  %v520 = vpack.c.bf16 %v456, %v456
  %v521 = vpack.c.bf16 %v457, %v457
  %v522 = vpack.c.bf16 %v458, %v458
  %v523 = vpack.c.bf16 %v459, %v459
  %v524 = vpack.c.bf16 %v460, %v460
  %v525 = vpack.c.bf16 %v461, %v461
  %v526 = vpack.c.bf16 %v462, %v462
  %v527 = vpack.c.bf16 %v463, %v463
  %v528 = vpack.c.bf16 %v464, %v464
  %v529 = vpack.c.bf16 %v465, %v465
  %v530 = vpack.c.bf16 %v466, %v466
  %v531 = vpack.c.bf16 %v467, %v467
  %v532 = vpack.c.bf16 %v468, %v468
  %v533 = vpack.c.bf16 %v469, %v469
  %534 = vst [vmem:[%s3] sm:$0xf] %v470
  %535 = vst [vmem:[%s3 + $0x4] sm:$0xf] %v471
  %536 = vst [vmem:[%s3 + $0x8] sm:$0xf] %v472
  %537 = vst [vmem:[%s3 + $0xc] sm:$0xf] %v473
  %538 = vst [vmem:[%s3 + $0x10] sm:$0xf] %v474
  %539 = vst [vmem:[%s3 + $0x14] sm:$0xf] %v475
  %540 = vst [vmem:[%s3 + $0x18] sm:$0xf] %v476
  %541 = vst [vmem:[%s3 + $0x1c] sm:$0xf] %v477
  %542 = vst [vmem:[%s3 + $0x20] sm:$0xf] %v478
  %543 = vst [vmem:[%s3 + $0x24] sm:$0xf] %v479
  %544 = vst [vmem:[%s3 + $0x28] sm:$0xf] %v480
  %545 = vst [vmem:[%s3 + $0x2c] sm:$0xf] %v481
  %546 = vst [vmem:[%s3 + $0x30] sm:$0xf] %v482
  %547 = vst [vmem:[%s3 + $0x34] sm:$0xf] %v483
  %548 = vst [vmem:[%s3 + $0x38] sm:$0xf] %v484
  %549 = vst [vmem:[%s3 + $0x3c] sm:$0xf] %v485
  %550 = vst [vmem:[%s3 + $0x40] sm:$0xf] %v486
  %551 = vst [vmem:[%s3 + $0x44] sm:$0xf] %v487
  %552 = vst [vmem:[%s3 + $0x48] sm:$0xf] %v488
  %553 = vst [vmem:[%s3 + $0x4c] sm:$0xf] %v489
  %554 = vst [vmem:[%s3 + $0x50] sm:$0xf] %v490
  %555 = vst [vmem:[%s3 + $0x54] sm:$0xf] %v491
  %556 = vst [vmem:[%s3 + $0x58] sm:$0xf] %v492
  %557 = vst [vmem:[%s3 + $0x5c] sm:$0xf] %v493
  %558 = vst [vmem:[%s3 + $0x60] sm:$0xf] %v494
  %559 = vst [vmem:[%s3 + $0x64] sm:$0xf] %v495
  %560 = vst [vmem:[%s3 + $0x68] sm:$0xf] %v496
  %561 = vst [vmem:[%s3 + $0x6c] sm:$0xf] %v497
  %562 = vst [vmem:[%s3 + $0x70] sm:$0xf] %v498
  %563 = vst [vmem:[%s3 + $0x74] sm:$0xf] %v499
  %564 = vst [vmem:[%s3 + $0x78] sm:$0xf] %v500
  %565 = vst [vmem:[%s3 + $0x7c] sm:$0xf] %v501
  %566 = vst [vmem:[%s3 + $0x80] sm:$0xf] %v502
  %567 = vst [vmem:[%s3 + $0x84] sm:$0xf] %v503
  %568 = vst [vmem:[%s3 + $0x88] sm:$0xf] %v504
  %569 = vst [vmem:[%s3 + $0x8c] sm:$0xf] %v505
  %570 = vst [vmem:[%s3 + $0x90] sm:$0xf] %v506
  %571 = vst [vmem:[%s3 + $0x94] sm:$0xf] %v507
  %572 = vst [vmem:[%s3 + $0x98] sm:$0xf] %v508
  %573 = vst [vmem:[%s3 + $0x9c] sm:$0xf] %v509
  %574 = vst [vmem:[%s3 + $0xa0] sm:$0xf] %v510
  %575 = vst [vmem:[%s3 + $0xa4] sm:$0xf] %v511
  %576 = vst [vmem:[%s3 + $0xa8] sm:$0xf] %v512
  %577 = vst [vmem:[%s3 + $0xac] sm:$0xf] %v513
  %578 = vst [vmem:[%s3 + $0xb0] sm:$0xf] %v514
  %579 = vst [vmem:[%s3 + $0xb4] sm:$0xf] %v515
  %580 = vst [vmem:[%s3 + $0xb8] sm:$0xf] %v516
  %581 = vst [vmem:[%s3 + $0xbc] sm:$0xf] %v517
  %582 = vst [vmem:[%s3 + $0xc0] sm:$0xf] %v518
  %583 = vst [vmem:[%s3 + $0xc4] sm:$0xf] %v519
  %584 = vst [vmem:[%s3 + $0xc8] sm:$0xf] %v520
  %585 = vst [vmem:[%s3 + $0xcc] sm:$0xf] %v521
  %586 = vst [vmem:[%s3 + $0xd0] sm:$0xf] %v522
  %587 = vst [vmem:[%s3 + $0xd4] sm:$0xf] %v523
  %588 = vst [vmem:[%s3 + $0xd8] sm:$0xf] %v524
  %589 = vst [vmem:[%s3 + $0xdc] sm:$0xf] %v525
  %590 = vst [vmem:[%s3 + $0xe0] sm:$0xf] %v526
  %591 = vst [vmem:[%s3 + $0xe4] sm:$0xf] %v527
  %592 = vst [vmem:[%s3 + $0xe8] sm:$0xf] %v528
  %593 = vst [vmem:[%s3 + $0xec] sm:$0xf] %v529
  %594 = vst [vmem:[%s3 + $0xf0] sm:$0xf] %v530
  %595 = vst [vmem:[%s3 + $0xf4] sm:$0xf] %v531
  %596 = vst [vmem:[%s3 + $0xf8] sm:$0xf] %v532
  %597 = vst [vmem:[%s3 + $0xfc] sm:$0xf] %v533
  // Predicated region
  $region14: #{_lambda_.10} parent=0 // pred_check
    _
  $region15: #{_lambda_.10} parent=0 // pred_check_branch
    %599 = sbr.rel (0) target = $region17
  $region16: #{_lambda_.10} parent=0 // pred_region
    _
  $region17: #{_lambda_.10} parent=0 // pred_fallthru
    _
  // Predicated region
  $region18: #{_lambda_.10} parent=0 // pred_check
    _
  $region19: #{_lambda_.10} parent=0 // pred_check_branch
    %601 = sbr.rel (0) target = $region21
  $region20: #{_lambda_.10} parent=0 // pred_region
    _
  $region21: #{_lambda_.10} parent=0 // pred_fallthru
    _

// kernel: _lambda_.11
$region0: #{_lambda_.11}
  #allocation0 [shape = 'u32[]', space=smem, size = 0x4, offset = 0x4, fixed_abs, tag = 'smem constant byte address 0x4 - core index']
  #allocation1 [shape = 'u32[72,128]{1,0:T(1,128)}', space=vmem, size = 0x9000, scoped, tag = 'internal scratch']
  #allocation2 [shape = 'f32[128,128]{1,0:T(8,128)}', space=vmem, size = 0x10000, scoped, tag = 'scratch operand']
  %s0 = inlined_call_operand.vmem [shape: bf16[128,256], index: 0, kind: input, shape index: {}]
  %s1 = inlined_call_operand.vmem [shape: bf16[256,128], index: 1, kind: input, shape index: {}]
  %s2 = inlined_call_operand.vmem [shape: bf16[128,128], index: 2, kind: output, shape index: {0}]
  %s3 = inlined_call_operand.vmem [shape: f32[8,128], index: 3, kind: output, shape index: {1}]
  %s4 = inlined_call_operand.vmem [shape: f32[8,128], index: 4, kind: output, shape index: {2}]
  %5 = xla_tuple %s2, %s3, %s4
  %s6 = sld [smem:[#allocation0]]
  $region42: #{_lambda_.11} parent=0
    _
  %s8 = ssub.s32 1, %s6
  %s9 = scalar_select 0, %s8, %s6
  // Predicated region
  $region2: #{_lambda_.11} parent=0 // pred_check
    _
  $region3: #{_lambda_.11} parent=0 // pred_check_branch
    %11 = sbr.rel (0) target = $region5
  $region4: #{_lambda_.11} parent=0 // pred_region
    _
  $region5: #{_lambda_.11} parent=0 // pred_fallthru
    _
  // Predicated region
  $region6: #{_lambda_.11} parent=0 // pred_check
    _
  $region7: #{_lambda_.11} parent=0 // pred_check_branch
    %13 = sbr.rel (0) target = $region9
  $region8: #{_lambda_.11} parent=0 // pred_region
    _
  $region9: #{_lambda_.11} parent=0 // pred_fallthru
    _
  %p14 = scmp.eq.s32.totalorder 0, 0
  // Predicated region
  $region10: #{_lambda_.11} parent=0 // pred_check
    %p15 = pneg %p14
  $region11: #{_lambda_.11} parent=0 // pred_check_branch
    %17 = sbr.rel (%p15) target = $region13
  $region12: #{_lambda_.11} parent=0 // pred_region
    %18 = vst [vmem:[#allocation2] sm:$0xff] 0.0
    %19 = vst [vmem:[#allocation2 + $0x8] sm:$0xff] 0.0
    %20 = vst [vmem:[#allocation2 + $0x10] sm:$0xff] 0.0
    %21 = vst [vmem:[#allocation2 + $0x18] sm:$0xff] 0.0
    %22 = vst [vmem:[#allocation2 + $0x20] sm:$0xff] 0.0
    %23 = vst [vmem:[#allocation2 + $0x28] sm:$0xff] 0.0
    %24 = vst [vmem:[#allocation2 + $0x30] sm:$0xff] 0.0
    %25 = vst [vmem:[#allocation2 + $0x38] sm:$0xff] 0.0
    %26 = vst [vmem:[#allocation2 + $0x40] sm:$0xff] 0.0
    %27 = vst [vmem:[#allocation2 + $0x48] sm:$0xff] 0.0
    %28 = vst [vmem:[#allocation2 + $0x50] sm:$0xff] 0.0
    %29 = vst [vmem:[#allocation2 + $0x58] sm:$0xff] 0.0
    %30 = vst [vmem:[#allocation2 + $0x60] sm:$0xff] 0.0
    %31 = vst [vmem:[#allocation2 + $0x68] sm:$0xff] 0.0
    %32 = vst [vmem:[#allocation2 + $0x70] sm:$0xff] 0.0
    %33 = vst [vmem:[#allocation2 + $0x78] sm:$0xff] 0.0
  $region13: #{_lambda_.11} parent=0 // pred_fallthru
    _
  %v34 = vld [vmem:[#allocation2] sm:$0xff]
  %v35 = vld [vmem:[#allocation2 + $0x8] sm:$0xff]
  %v36 = vld [vmem:[#allocation2 + $0x10] sm:$0xff]
  %v37 = vld [vmem:[#allocation2 + $0x18] sm:$0xff]
  %v38 = vld [vmem:[#allocation2 + $0x20] sm:$0xff]
  %v39 = vld [vmem:[#allocation2 + $0x28] sm:$0xff]
  %v40 = vld [vmem:[#allocation2 + $0x30] sm:$0xff]
  %v41 = vld [vmem:[#allocation2 + $0x38] sm:$0xff]
  %v42 = vld [vmem:[#allocation2 + $0x40] sm:$0xff]
  %v43 = vld [vmem:[#allocation2 + $0x48] sm:$0xff]
  %v44 = vld [vmem:[#allocation2 + $0x50] sm:$0xff]
  %v45 = vld [vmem:[#allocation2 + $0x58] sm:$0xff]
  %v46 = vld [vmem:[#allocation2 + $0x60] sm:$0xff]
  %v47 = vld [vmem:[#allocation2 + $0x68] sm:$0xff]
  %v48 = vld [vmem:[#allocation2 + $0x70] sm:$0xff]
  %v49 = vld [vmem:[#allocation2 + $0x78] sm:$0xff]
  %v50 = vld [vmem:[%s0] sm:$0xff]
  %v51 = vld [vmem:[%s0 + $0x8] sm:$0xff]
  %v52 = vld [vmem:[%s0 + $0x10] sm:$0xff]
  %v53 = vld [vmem:[%s0 + $0x18] sm:$0xff]
  %v54 = vld [vmem:[%s0 + $0x20] sm:$0xff]
  %v55 = vld [vmem:[%s0 + $0x28] sm:$0xff]
  %v56 = vld [vmem:[%s0 + $0x30] sm:$0xff]
  %v57 = vld [vmem:[%s0 + $0x38] sm:$0xff]
  %v58 = vld [vmem:[%s0 + $0x40] sm:$0xff]
  %v59 = vld [vmem:[%s0 + $0x48] sm:$0xff]
  %v60 = vld [vmem:[%s0 + $0x50] sm:$0xff]
  %v61 = vld [vmem:[%s0 + $0x58] sm:$0xff]
  %v62 = vld [vmem:[%s0 + $0x60] sm:$0xff]
  %v63 = vld [vmem:[%s0 + $0x68] sm:$0xff]
  %v64 = vld [vmem:[%s0 + $0x70] sm:$0xff]
  %v65 = vld [vmem:[%s0 + $0x78] sm:$0xff]
  %v66 = vld [vmem:[%s1] sm:$0xf]
  %v67 = vld [vmem:[%s1 + $0x4] sm:$0xf]
  %v68 = vld [vmem:[%s1 + $0x8] sm:$0xf]
  %v69 = vld [vmem:[%s1 + $0xc] sm:$0xf]
  %v70 = vld [vmem:[%s1 + $0x10] sm:$0xf]
  %v71 = vld [vmem:[%s1 + $0x14] sm:$0xf]
  %v72 = vld [vmem:[%s1 + $0x18] sm:$0xf]
  %v73 = vld [vmem:[%s1 + $0x1c] sm:$0xf]
  %v74 = vld [vmem:[%s1 + $0x20] sm:$0xf]
  %v75 = vld [vmem:[%s1 + $0x24] sm:$0xf]
  %v76 = vld [vmem:[%s1 + $0x28] sm:$0xf]
  %v77 = vld [vmem:[%s1 + $0x2c] sm:$0xf]
  %v78 = vld [vmem:[%s1 + $0x30] sm:$0xf]
  %v79 = vld [vmem:[%s1 + $0x34] sm:$0xf]
  %v80 = vld [vmem:[%s1 + $0x38] sm:$0xf]
  %v81 = vld [vmem:[%s1 + $0x3c] sm:$0xf]
  %v82 = vld [vmem:[%s1 + $0x40] sm:$0xf]
  %v83 = vld [vmem:[%s1 + $0x44] sm:$0xf]
  %v84 = vld [vmem:[%s1 + $0x48] sm:$0xf]
  %v85 = vld [vmem:[%s1 + $0x4c] sm:$0xf]
  %v86 = vld [vmem:[%s1 + $0x50] sm:$0xf]
  %v87 = vld [vmem:[%s1 + $0x54] sm:$0xf]
  %v88 = vld [vmem:[%s1 + $0x58] sm:$0xf]
  %v89 = vld [vmem:[%s1 + $0x5c] sm:$0xf]
  %v90 = vld [vmem:[%s1 + $0x60] sm:$0xf]
  %v91 = vld [vmem:[%s1 + $0x64] sm:$0xf]
  %v92 = vld [vmem:[%s1 + $0x68] sm:$0xf]
  %v93 = vld [vmem:[%s1 + $0x6c] sm:$0xf]
  %v94 = vld [vmem:[%s1 + $0x70] sm:$0xf]
  %v95 = vld [vmem:[%s1 + $0x74] sm:$0xf]
  %v96 = vld [vmem:[%s1 + $0x78] sm:$0xf]
  %v97 = vld [vmem:[%s1 + $0x7c] sm:$0xf]
  %v114 = vunpack.c.l.b16 %v50
  %v115 = vunpack.c.h.b16 %v50
  %v116 = vunpack.c.l.b16 %v51
  %v117 = vunpack.c.h.b16 %v51
  %v118 = vunpack.c.l.b16 %v52
  %v119 = vunpack.c.h.b16 %v52
  %v120 = vunpack.c.l.b16 %v53
  %v121 = vunpack.c.h.b16 %v53
  %v122 = vunpack.c.l.b16 %v54
  %v123 = vunpack.c.h.b16 %v54
  %v124 = vunpack.c.l.b16 %v55
  %v125 = vunpack.c.h.b16 %v55
  %v126 = vunpack.c.l.b16 %v56
  %v127 = vunpack.c.h.b16 %v56
  %v128 = vunpack.c.l.b16 %v57
  %v129 = vunpack.c.h.b16 %v57
  %v130 = vunpack.c.l.b16 %v58
  %v131 = vunpack.c.h.b16 %v58
  %v132 = vunpack.c.l.b16 %v59
  %v133 = vunpack.c.h.b16 %v59
  %v134 = vunpack.c.l.b16 %v60
  %v135 = vunpack.c.h.b16 %v60
  %v136 = vunpack.c.l.b16 %v61
  %v137 = vunpack.c.h.b16 %v61
  %v138 = vunpack.c.l.b16 %v62
  %v139 = vunpack.c.h.b16 %v62
  %v140 = vunpack.c.l.b16 %v63
  %v141 = vunpack.c.h.b16 %v63
  %v142 = vunpack.c.l.b16 %v64
  %v143 = vunpack.c.h.b16 %v64
  %v144 = vunpack.c.l.b16 %v65
  %v145 = vunpack.c.h.b16 %v65
  %v146 = vpack.c.b16 %v116, %v114
  %v147 = vpack.c.b16 %v117, %v115
  %v148 = vpack.c.b16 %v120, %v118
  %v149 = vpack.c.b16 %v121, %v119
  %v150 = vpack.c.b16 %v124, %v122
  %v151 = vpack.c.b16 %v125, %v123
  %v152 = vpack.c.b16 %v128, %v126
  %v153 = vpack.c.b16 %v129, %v127
  %v154 = vpack.c.b16 %v132, %v130
  %v155 = vpack.c.b16 %v133, %v131
  %v156 = vpack.c.b16 %v136, %v134
  %v157 = vpack.c.b16 %v137, %v135
  %v158 = vpack.c.b16 %v140, %v138
  %v159 = vpack.c.b16 %v141, %v139
  %v160 = vpack.c.b16 %v144, %v142
  %v161 = vpack.c.b16 %v145, %v143
  %v210 = vunpack.c.l.b16 %v66
  %v211 = vunpack.c.l.b16 %v67
  %v212 = vunpack.c.l.b16 %v68
  %v213 = vunpack.c.l.b16 %v69
  %v214 = vunpack.c.l.b16 %v70
  %v215 = vunpack.c.l.b16 %v71
  %v216 = vunpack.c.l.b16 %v72
  %v217 = vunpack.c.l.b16 %v73
  %v218 = vunpack.c.l.b16 %v74
  %v219 = vunpack.c.l.b16 %v75
  %v220 = vunpack.c.l.b16 %v76
  %v221 = vunpack.c.l.b16 %v77
  %v222 = vunpack.c.l.b16 %v78
  %v223 = vunpack.c.l.b16 %v79
  %v224 = vunpack.c.l.b16 %v80
  %v225 = vunpack.c.l.b16 %v81
  %v226 = vunpack.c.l.b16 %v82
  %v227 = vunpack.c.l.b16 %v83
  %v228 = vunpack.c.l.b16 %v84
  %v229 = vunpack.c.l.b16 %v85
  %v230 = vunpack.c.l.b16 %v86
  %v231 = vunpack.c.l.b16 %v87
  %v232 = vunpack.c.l.b16 %v88
  %v233 = vunpack.c.l.b16 %v89
  %v234 = vunpack.c.l.b16 %v90
  %v235 = vunpack.c.l.b16 %v91
  %v236 = vunpack.c.l.b16 %v92
  %v237 = vunpack.c.l.b16 %v93
  %v238 = vunpack.c.l.b16 %v94
  %v239 = vunpack.c.l.b16 %v95
  %v240 = vunpack.c.l.b16 %v96
  %v241 = vunpack.c.l.b16 %v97
  %v242 = vpack.c.b16 %v211, %v210
  %v243 = vpack.c.b16 %v213, %v212
  %v244 = vpack.c.b16 %v215, %v214
  %v245 = vpack.c.b16 %v217, %v216
  %v246 = vpack.c.b16 %v219, %v218
  %v247 = vpack.c.b16 %v221, %v220
  %v248 = vpack.c.b16 %v223, %v222
  %v249 = vpack.c.b16 %v225, %v224
  %v250 = vpack.c.b16 %v227, %v226
  %v251 = vpack.c.b16 %v229, %v228
  %v252 = vpack.c.b16 %v231, %v230
  %v253 = vpack.c.b16 %v233, %v232
  %v254 = vpack.c.b16 %v235, %v234
  %v255 = vpack.c.b16 %v237, %v236
  %v256 = vpack.c.b16 %v239, %v238
  %v257 = vpack.c.b16 %v241, %v240
  %274 = vmatpush.bf16.msra.mxu0 %v249
  %275 = vmatpush.bf16.msra.mxu0 %v248
  %276 = vmatpush.bf16.msra.mxu0 %v247
  %277 = vmatpush.bf16.msra.mxu0 %v246
  %278 = vmatpush.bf16.msra.mxu0 %v245
  %279 = vmatpush.bf16.msra.mxu0 %v244
  %280 = vmatpush.bf16.msra.mxu0 %v243
  %281 = vmatpush.bf16.msra.mxu0 %v242
  %282 = vmatmul.bf16.gmra.mxu0 %v146
  %v283 = vpop.f32.mrf.mxu0
  %v284 = vadd.f32 0.0, %v283
  %v285 = vpop.f32.mrf.mxu0
  %v286 = vadd.f32 0.0, %v285
  %287 = vmatmul.bf16.gmra.mxu0 %v148
  %v288 = vpop.f32.mrf.mxu0
  %v289 = vadd.f32 0.0, %v288
  %v290 = vpop.f32.mrf.mxu0
  %v291 = vadd.f32 0.0, %v290
  %292 = vmatmul.bf16.gmra.mxu0 %v150
  %v293 = vpop.f32.mrf.mxu0
  %v294 = vadd.f32 0.0, %v293
  %v295 = vpop.f32.mrf.mxu0
  %v296 = vadd.f32 0.0, %v295
  %297 = vmatmul.bf16.gmra.mxu0 %v152
  %v298 = vpop.f32.mrf.mxu0
  %v299 = vadd.f32 0.0, %v298
  %v300 = vpop.f32.mrf.mxu0
  %v301 = vadd.f32 0.0, %v300
  %302 = vmatmul.bf16.gmra.mxu0 %v154
  %v303 = vpop.f32.mrf.mxu0
  %v304 = vadd.f32 0.0, %v303
  %v305 = vpop.f32.mrf.mxu0
  %v306 = vadd.f32 0.0, %v305
  %307 = vmatmul.bf16.gmra.mxu0 %v156
  %v308 = vpop.f32.mrf.mxu0
  %v309 = vadd.f32 0.0, %v308
  %v310 = vpop.f32.mrf.mxu0
  %v311 = vadd.f32 0.0, %v310
  %312 = vmatmul.bf16.gmra.mxu0 %v158
  %v313 = vpop.f32.mrf.mxu0
  %v314 = vadd.f32 0.0, %v313
  %v315 = vpop.f32.mrf.mxu0
  %v316 = vadd.f32 0.0, %v315
  %317 = vmatmul.bf16.gmra.mxu0 %v160
  %v318 = vpop.f32.mrf.mxu0
  %v319 = vadd.f32 0.0, %v318
  %v320 = vpop.f32.mrf.mxu0
  %v321 = vadd.f32 0.0, %v320
  %322 = vdwg.mxu0
  %323 = vmatpush.bf16.msra.mxu0 %v257
  %324 = vmatpush.bf16.msra.mxu0 %v256
  %325 = vmatpush.bf16.msra.mxu0 %v255
  %326 = vmatpush.bf16.msra.mxu0 %v254
  %327 = vmatpush.bf16.msra.mxu0 %v253
  %328 = vmatpush.bf16.msra.mxu0 %v252
  %329 = vmatpush.bf16.msra.mxu0 %v251
  %330 = vmatpush.bf16.msra.mxu0 %v250
  %331 = vmatmul.bf16.gmra.mxu0 %v147
  %v332 = vpop.f32.mrf.mxu0
  %v333 = vadd.f32 %v284, %v332
  %v334 = vpop.f32.mrf.mxu0
  %v335 = vadd.f32 %v286, %v334
  %336 = vmatmul.bf16.gmra.mxu0 %v149
  %v337 = vpop.f32.mrf.mxu0
  %v338 = vadd.f32 %v289, %v337
  %v339 = vpop.f32.mrf.mxu0
  %v340 = vadd.f32 %v291, %v339
  %341 = vmatmul.bf16.gmra.mxu0 %v151
  %v342 = vpop.f32.mrf.mxu0
  %v343 = vadd.f32 %v294, %v342
  %v344 = vpop.f32.mrf.mxu0
  %v345 = vadd.f32 %v296, %v344
  %346 = vmatmul.bf16.gmra.mxu0 %v153
  %v347 = vpop.f32.mrf.mxu0
  %v348 = vadd.f32 %v299, %v347
  %v349 = vpop.f32.mrf.mxu0
  %v350 = vadd.f32 %v301, %v349
  %351 = vmatmul.bf16.gmra.mxu0 %v155
  %v352 = vpop.f32.mrf.mxu0
  %v353 = vadd.f32 %v304, %v352
  %v354 = vpop.f32.mrf.mxu0
  %v355 = vadd.f32 %v306, %v354
  %356 = vmatmul.bf16.gmra.mxu0 %v157
  %v357 = vpop.f32.mrf.mxu0
  %v358 = vadd.f32 %v309, %v357
  %v359 = vpop.f32.mrf.mxu0
  %v360 = vadd.f32 %v311, %v359
  %361 = vmatmul.bf16.gmra.mxu0 %v159
  %v362 = vpop.f32.mrf.mxu0
  %v363 = vadd.f32 %v314, %v362
  %v364 = vpop.f32.mrf.mxu0
  %v365 = vadd.f32 %v316, %v364
  %366 = vmatmul.bf16.gmra.mxu0 %v161
  %v367 = vpop.f32.mrf.mxu0
  %v368 = vadd.f32 %v319, %v367
  %v369 = vpop.f32.mrf.mxu0
  %v370 = vadd.f32 %v321, %v369
  %371 = vdwg.mxu0
  %v372 = vadd.f32 %v34, %v333
  %v373 = vadd.f32 %v35, %v335
  %v374 = vadd.f32 %v36, %v338
  %v375 = vadd.f32 %v37, %v340
  %v376 = vadd.f32 %v38, %v343
  %v377 = vadd.f32 %v39, %v345
  %v378 = vadd.f32 %v40, %v348
  %v379 = vadd.f32 %v41, %v350
  %v380 = vadd.f32 %v42, %v353
  %v381 = vadd.f32 %v43, %v355
  %v382 = vadd.f32 %v44, %v358
  %v383 = vadd.f32 %v45, %v360
  %v384 = vadd.f32 %v46, %v363
  %v385 = vadd.f32 %v47, %v365
  %v386 = vadd.f32 %v48, %v368
  %v387 = vadd.f32 %v49, %v370
  %388 = vst [vmem:[#allocation2] sm:$0xff] %v372
  %389 = vst [vmem:[#allocation2 + $0x8] sm:$0xff] %v373
  %390 = vst [vmem:[#allocation2 + $0x10] sm:$0xff] %v374
  %391 = vst [vmem:[#allocation2 + $0x18] sm:$0xff] %v375
  %392 = vst [vmem:[#allocation2 + $0x20] sm:$0xff] %v376
  %393 = vst [vmem:[#allocation2 + $0x28] sm:$0xff] %v377
  %394 = vst [vmem:[#allocation2 + $0x30] sm:$0xff] %v378
  %395 = vst [vmem:[#allocation2 + $0x38] sm:$0xff] %v379
  %396 = vst [vmem:[#allocation2 + $0x40] sm:$0xff] %v380
  %397 = vst [vmem:[#allocation2 + $0x48] sm:$0xff] %v381
  %398 = vst [vmem:[#allocation2 + $0x50] sm:$0xff] %v382
  %399 = vst [vmem:[#allocation2 + $0x58] sm:$0xff] %v383
  %400 = vst [vmem:[#allocation2 + $0x60] sm:$0xff] %v384
  %401 = vst [vmem:[#allocation2 + $0x68] sm:$0xff] %v385
  %402 = vst [vmem:[#allocation2 + $0x70] sm:$0xff] %v386
  %403 = vst [vmem:[#allocation2 + $0x78] sm:$0xff] %v387
  // Predicated region
  $region14: #{_lambda_.11} parent=0 // pred_check
    %p404 = pneg %p14
  $region15: #{_lambda_.11} parent=0 // pred_check_branch
    %406 = sbr.rel (%p404) target = $region17
  $region16: #{_lambda_.11} parent=0 // pred_region
    %v407 = vld [vmem:[#allocation2] sm:$0xff]
    %v408 = vld [vmem:[#allocation2 + $0x8] sm:$0xff]
    %v409 = vld [vmem:[#allocation2 + $0x10] sm:$0xff]
    %v410 = vld [vmem:[#allocation2 + $0x18] sm:$0xff]
    %v411 = vld [vmem:[#allocation2 + $0x20] sm:$0xff]
    %v412 = vld [vmem:[#allocation2 + $0x28] sm:$0xff]
    %v413 = vld [vmem:[#allocation2 + $0x30] sm:$0xff]
    %v414 = vld [vmem:[#allocation2 + $0x38] sm:$0xff]
    %v415 = vld [vmem:[#allocation2 + $0x40] sm:$0xff]
    %v416 = vld [vmem:[#allocation2 + $0x48] sm:$0xff]
    %v417 = vld [vmem:[#allocation2 + $0x50] sm:$0xff]
    %v418 = vld [vmem:[#allocation2 + $0x58] sm:$0xff]
    %v419 = vld [vmem:[#allocation2 + $0x60] sm:$0xff]
    %v420 = vld [vmem:[#allocation2 + $0x68] sm:$0xff]
    %v421 = vld [vmem:[#allocation2 + $0x70] sm:$0xff]
    %v422 = vld [vmem:[#allocation2 + $0x78] sm:$0xff]
    %v423 = vpack.c.bf16 %v407, %v407
    %v424 = vpack.c.bf16 %v408, %v408
    %v425 = vpack.c.bf16 %v409, %v409
    %v426 = vpack.c.bf16 %v410, %v410
    %v427 = vpack.c.bf16 %v411, %v411
    %v428 = vpack.c.bf16 %v412, %v412
    %v429 = vpack.c.bf16 %v413, %v413
    %v430 = vpack.c.bf16 %v414, %v414
    %v431 = vpack.c.bf16 %v415, %v415
    %v432 = vpack.c.bf16 %v416, %v416
    %v433 = vpack.c.bf16 %v417, %v417
    %v434 = vpack.c.bf16 %v418, %v418
    %v435 = vpack.c.bf16 %v419, %v419
    %v436 = vpack.c.bf16 %v420, %v420
    %v437 = vpack.c.bf16 %v421, %v421
    %v438 = vpack.c.bf16 %v422, %v422
    %439 = vst [vmem:[%s2] sm:$0xf] %v423
    %440 = vst [vmem:[%s2 + $0x4] sm:$0xf] %v424
    %441 = vst [vmem:[%s2 + $0x8] sm:$0xf] %v425
    %442 = vst [vmem:[%s2 + $0xc] sm:$0xf] %v426
    %443 = vst [vmem:[%s2 + $0x10] sm:$0xf] %v427
    %444 = vst [vmem:[%s2 + $0x14] sm:$0xf] %v428
    %445 = vst [vmem:[%s2 + $0x18] sm:$0xf] %v429
    %446 = vst [vmem:[%s2 + $0x1c] sm:$0xf] %v430
    %447 = vst [vmem:[%s2 + $0x20] sm:$0xf] %v431
    %448 = vst [vmem:[%s2 + $0x24] sm:$0xf] %v432
    %449 = vst [vmem:[%s2 + $0x28] sm:$0xf] %v433
    %450 = vst [vmem:[%s2 + $0x2c] sm:$0xf] %v434
    %451 = vst [vmem:[%s2 + $0x30] sm:$0xf] %v435
    %452 = vst [vmem:[%s2 + $0x34] sm:$0xf] %v436
    %453 = vst [vmem:[%s2 + $0x38] sm:$0xf] %v437
    %454 = vst [vmem:[%s2 + $0x3c] sm:$0xf] %v438
    %v455 = vadd.f32 %v407, %v408
    %v456 = vadd.f32 %v455, %v409
    %v457 = vadd.f32 %v456, %v410
    %v458 = vadd.f32 %v457, %v411
    %v459 = vadd.f32 %v458, %v412
    %v460 = vadd.f32 %v459, %v413
    %v461 = vadd.f32 %v460, %v414
    %v462 = vadd.f32 %v461, %v415
    %v463 = vadd.f32 %v462, %v416
    %v464 = vadd.f32 %v463, %v417
    %v465 = vadd.f32 %v464, %v418
    %v466 = vadd.f32 %v465, %v419
    %v467 = vadd.f32 %v466, %v420
    %v468 = vadd.f32 %v467, %v421
    %v469 = vadd.f32 %v468, %v422
    %v470 = vrot.slane %v469, 4
    %v471 = vadd.f32 %v469, %v470
    %v472 = vrot.slane %v471, 2
    %v473 = vadd.f32 %v471, %v472
    %v474 = vrot.slane %v473, 1
    %v475 = vadd.f32 %v473, %v474
    %v476 = vmul.f32 %v407, %v407
    %v477 = vmul.f32 %v408, %v408
    %v478 = vmul.f32 %v409, %v409
    %v479 = vmul.f32 %v410, %v410
    %v480 = vmul.f32 %v411, %v411
    %v481 = vmul.f32 %v412, %v412
    %v482 = vmul.f32 %v413, %v413
    %v483 = vmul.f32 %v414, %v414
    %v484 = vmul.f32 %v415, %v415
    %v485 = vmul.f32 %v416, %v416
    %v486 = vmul.f32 %v417, %v417
    %v487 = vmul.f32 %v418, %v418
    %v488 = vmul.f32 %v419, %v419
    %v489 = vmul.f32 %v420, %v420
    %v490 = vmul.f32 %v421, %v421
    %v491 = vmul.f32 %v422, %v422
    %v492 = vadd.f32 %v476, %v477
    %v493 = vadd.f32 %v492, %v478
    %v494 = vadd.f32 %v493, %v479
    %v495 = vadd.f32 %v494, %v480
    %v496 = vadd.f32 %v495, %v481
    %v497 = vadd.f32 %v496, %v482
    %v498 = vadd.f32 %v497, %v483
    %v499 = vadd.f32 %v498, %v484
    %v500 = vadd.f32 %v499, %v485
    %v501 = vadd.f32 %v500, %v486
    %v502 = vadd.f32 %v501, %v487
    %v503 = vadd.f32 %v502, %v488
    %v504 = vadd.f32 %v503, %v489
    %v505 = vadd.f32 %v504, %v490
    %v506 = vadd.f32 %v505, %v491
    %v507 = vrot.slane %v506, 4
    %v508 = vadd.f32 %v506, %v507
    %v509 = vrot.slane %v508, 2
    %v510 = vadd.f32 %v508, %v509
    %v511 = vrot.slane %v510, 1
    %v512 = vadd.f32 %v510, %v511
    %513 = vst [vmem:[%s3] sm:$0xff] %v475
    %514 = vst [vmem:[%s4] sm:$0xff] %v512
  $region17: #{_lambda_.11} parent=0 // pred_fallthru
    _
  // Predicated region
  $region18: #{_lambda_.11} parent=0 // pred_check
    _
  $region19: #{_lambda_.11} parent=0 // pred_check_branch
    %516 = sbr.rel (0) target = $region21
  $region20: #{_lambda_.11} parent=0 // pred_region
    _
  $region21: #{_lambda_.11} parent=0 // pred_fallthru
    _
  // Predicated region
  $region22: #{_lambda_.11} parent=0 // pred_check
    _
  $region23: #{_lambda_.11} parent=0 // pred_check_branch
    %518 = sbr.rel (0) target = $region25
  $region24: #{_lambda_.11} parent=0 // pred_region
    _
  $region25: #{_lambda_.11} parent=0 // pred_fallthru
    _
  // Predicated region
  $region26: #{_lambda_.11} parent=0 // pred_check
    _
  $region27: #{_lambda_.11} parent=0 // pred_check_branch
    %520 = sbr.rel (0) target = $region29
  $region28: #{_lambda_.11} parent=0 // pred_region
    _
  $region29: #{_lambda_.11} parent=0 // pred_fallthru
    _
  // Predicated region
  $region30: #{_lambda_.11} parent=0 // pred_check
    _
  $region31: #{_lambda_.11} parent=0 // pred_check_branch
    %522 = sbr.rel (0) target = $region33
  $region32: #{_lambda_.11} parent=0 // pred_region
    _
  $region33: #{_lambda_.11} parent=0 // pred_fallthru
    _
  // Predicated region
  $region34: #{_lambda_.11} parent=0 // pred_check
    _
  $region35: #{_lambda_.11} parent=0 // pred_check_branch
    %524 = sbr.rel (0) target = $region37
  $region36: #{_lambda_.11} parent=0 // pred_region
    _
  $region37: #{_lambda_.11} parent=0 // pred_fallthru
    _
  // Predicated region
  $region38: #{_lambda_.11} parent=0 // pred_check
    _
  $region39: #{_lambda_.11} parent=0 // pred_check_branch
    %526 = sbr.rel (0) target = $region41
  $region40: #{_lambda_.11} parent=0 // pred_region
    _
  $region41: #{_lambda_.11} parent=0 // pred_fallthru
    _

// kernel: _lambda_.12
$region0: #{_lambda_.12}
  #allocation0 [shape = 'u32[]', space=smem, size = 0x4, offset = 0x4, fixed_abs, tag = 'smem constant byte address 0x4 - core index']
  #allocation1 [shape = 'u32[72,128]{1,0:T(1,128)}', space=vmem, size = 0x9000, scoped, tag = 'internal scratch']
  %s0 = inlined_call_operand.vmem [shape: bf16[128,128], index: 0, kind: input, shape index: {}]
  %s1 = inlined_call_operand.vmem [shape: f32[1,128], index: 1, kind: input, shape index: {}]
  %s2 = inlined_call_operand.vmem [shape: f32[1,128], index: 2, kind: input, shape index: {}]
  %s3 = inlined_call_operand.vmem [shape: bf16[128,128], index: 3, kind: output, shape index: {}]
  %s4 = sld [smem:[#allocation0]]
  $region22: #{_lambda_.12} parent=0
    _
  %s6 = ssub.s32 1, %s4
  %s7 = scalar_select 0, %s6, %s4
  // Predicated region
  $region2: #{_lambda_.12} parent=0 // pred_check
    _
  $region3: #{_lambda_.12} parent=0 // pred_check_branch
    %9 = sbr.rel (0) target = $region5
  $region4: #{_lambda_.12} parent=0 // pred_region
    _
  $region5: #{_lambda_.12} parent=0 // pred_fallthru
    _
  // Predicated region
  $region6: #{_lambda_.12} parent=0 // pred_check
    _
  $region7: #{_lambda_.12} parent=0 // pred_check_branch
    %11 = sbr.rel (0) target = $region9
  $region8: #{_lambda_.12} parent=0 // pred_region
    _
  $region9: #{_lambda_.12} parent=0 // pred_fallthru
    _
  // Predicated region
  $region10: #{_lambda_.12} parent=0 // pred_check
    _
  $region11: #{_lambda_.12} parent=0 // pred_check_branch
    %13 = sbr.rel (0) target = $region13
  $region12: #{_lambda_.12} parent=0 // pred_region
    _
  $region13: #{_lambda_.12} parent=0 // pred_fallthru
    _
  %v14 = vld [vmem:[%s0] sm:$0xf]
  %v15 = vld [vmem:[%s0 + $0x4] sm:$0xf]
  %v16 = vld [vmem:[%s0 + $0x8] sm:$0xf]
  %v17 = vld [vmem:[%s0 + $0xc] sm:$0xf]
  %v18 = vld [vmem:[%s0 + $0x10] sm:$0xf]
  %v19 = vld [vmem:[%s0 + $0x14] sm:$0xf]
  %v20 = vld [vmem:[%s0 + $0x18] sm:$0xf]
  %v21 = vld [vmem:[%s0 + $0x1c] sm:$0xf]
  %v22 = vld [vmem:[%s0 + $0x20] sm:$0xf]
  %v23 = vld [vmem:[%s0 + $0x24] sm:$0xf]
  %v24 = vld [vmem:[%s0 + $0x28] sm:$0xf]
  %v25 = vld [vmem:[%s0 + $0x2c] sm:$0xf]
  %v26 = vld [vmem:[%s0 + $0x30] sm:$0xf]
  %v27 = vld [vmem:[%s0 + $0x34] sm:$0xf]
  %v28 = vld [vmem:[%s0 + $0x38] sm:$0xf]
  %v29 = vld [vmem:[%s0 + $0x3c] sm:$0xf]
  %v30 = vunpack.c.l.bf16 %v14
  %v31 = vunpack.c.l.bf16 %v15
  %v32 = vunpack.c.l.bf16 %v16
  %v33 = vunpack.c.l.bf16 %v17
  %v34 = vunpack.c.l.bf16 %v18
  %v35 = vunpack.c.l.bf16 %v19
  %v36 = vunpack.c.l.bf16 %v20
  %v37 = vunpack.c.l.bf16 %v21
  %v38 = vunpack.c.l.bf16 %v22
  %v39 = vunpack.c.l.bf16 %v23
  %v40 = vunpack.c.l.bf16 %v24
  %v41 = vunpack.c.l.bf16 %v25
  %v42 = vunpack.c.l.bf16 %v26
  %v43 = vunpack.c.l.bf16 %v27
  %v44 = vunpack.c.l.bf16 %v28
  %v45 = vunpack.c.l.bf16 %v29
  %v46 = vld [vmem:[%s1] sm:$0x1]
  %v48 = vperm.slane %v46, 0
  %v50 = vmul.f32 %v30, %v48
  %v51 = vmul.f32 %v31, %v48
  %v52 = vmul.f32 %v32, %v48
  %v53 = vmul.f32 %v33, %v48
  %v54 = vmul.f32 %v34, %v48
  %v55 = vmul.f32 %v35, %v48
  %v56 = vmul.f32 %v36, %v48
  %v57 = vmul.f32 %v37, %v48
  %v58 = vmul.f32 %v38, %v48
  %v59 = vmul.f32 %v39, %v48
  %v60 = vmul.f32 %v40, %v48
  %v61 = vmul.f32 %v41, %v48
  %v62 = vmul.f32 %v42, %v48
  %v63 = vmul.f32 %v43, %v48
  %v64 = vmul.f32 %v44, %v48
  %v65 = vmul.f32 %v45, %v48
  %v66 = vld [vmem:[%s2] sm:$0x1]
  %v68 = vperm.slane %v66, 0
  %v70 = vadd.f32 %v50, %v68
  %v71 = vadd.f32 %v51, %v68
  %v72 = vadd.f32 %v52, %v68
  %v73 = vadd.f32 %v53, %v68
  %v74 = vadd.f32 %v54, %v68
  %v75 = vadd.f32 %v55, %v68
  %v76 = vadd.f32 %v56, %v68
  %v77 = vadd.f32 %v57, %v68
  %v78 = vadd.f32 %v58, %v68
  %v79 = vadd.f32 %v59, %v68
  %v80 = vadd.f32 %v60, %v68
  %v81 = vadd.f32 %v61, %v68
  %v82 = vadd.f32 %v62, %v68
  %v83 = vadd.f32 %v63, %v68
  %v84 = vadd.f32 %v64, %v68
  %v85 = vadd.f32 %v65, %v68
  %vm86 = vcmp.ge.f32.partialorder %v70, 0.0
  %vm87 = vcmp.ge.f32.partialorder %v71, 0.0
  %vm88 = vcmp.ge.f32.partialorder %v72, 0.0
  %vm89 = vcmp.ge.f32.partialorder %v73, 0.0
  %vm90 = vcmp.ge.f32.partialorder %v74, 0.0
  %vm91 = vcmp.ge.f32.partialorder %v75, 0.0
  %vm92 = vcmp.ge.f32.partialorder %v76, 0.0
  %vm93 = vcmp.ge.f32.partialorder %v77, 0.0
  %vm94 = vcmp.ge.f32.partialorder %v78, 0.0
  %vm95 = vcmp.ge.f32.partialorder %v79, 0.0
  %vm96 = vcmp.ge.f32.partialorder %v80, 0.0
  %vm97 = vcmp.ge.f32.partialorder %v81, 0.0
  %vm98 = vcmp.ge.f32.partialorder %v82, 0.0
  %vm99 = vcmp.ge.f32.partialorder %v83, 0.0
  %vm100 = vcmp.ge.f32.partialorder %v84, 0.0
  %vm101 = vcmp.ge.f32.partialorder %v85, 0.0
  %v102 = vmul.f32 %v70, 0.2
  %v103 = vmul.f32 %v71, 0.2
  %v104 = vmul.f32 %v72, 0.2
  %v105 = vmul.f32 %v73, 0.2
  %v106 = vmul.f32 %v74, 0.2
  %v107 = vmul.f32 %v75, 0.2
  %v108 = vmul.f32 %v76, 0.2
  %v109 = vmul.f32 %v77, 0.2
  %v110 = vmul.f32 %v78, 0.2
  %v111 = vmul.f32 %v79, 0.2
  %v112 = vmul.f32 %v80, 0.2
  %v113 = vmul.f32 %v81, 0.2
  %v114 = vmul.f32 %v82, 0.2
  %v115 = vmul.f32 %v83, 0.2
  %v116 = vmul.f32 %v84, 0.2
  %v117 = vmul.f32 %v85, 0.2
  %v118 = vsel %vm86, %v70, %v102
  %v119 = vsel %vm87, %v71, %v103
  %v120 = vsel %vm88, %v72, %v104
  %v121 = vsel %vm89, %v73, %v105
  %v122 = vsel %vm90, %v74, %v106
  %v123 = vsel %vm91, %v75, %v107
  %v124 = vsel %vm92, %v76, %v108
  %v125 = vsel %vm93, %v77, %v109
  %v126 = vsel %vm94, %v78, %v110
  %v127 = vsel %vm95, %v79, %v111
  %v128 = vsel %vm96, %v80, %v112
  %v129 = vsel %vm97, %v81, %v113
  %v130 = vsel %vm98, %v82, %v114
  %v131 = vsel %vm99, %v83, %v115
  %v132 = vsel %vm100, %v84, %v116
  %v133 = vsel %vm101, %v85, %v117
  %v134 = vpack.c.bf16 %v118, %v118
  %v135 = vpack.c.bf16 %v119, %v119
  %v136 = vpack.c.bf16 %v120, %v120
  %v137 = vpack.c.bf16 %v121, %v121
  %v138 = vpack.c.bf16 %v122, %v122
  %v139 = vpack.c.bf16 %v123, %v123
  %v140 = vpack.c.bf16 %v124, %v124
  %v141 = vpack.c.bf16 %v125, %v125
  %v142 = vpack.c.bf16 %v126, %v126
  %v143 = vpack.c.bf16 %v127, %v127
  %v144 = vpack.c.bf16 %v128, %v128
  %v145 = vpack.c.bf16 %v129, %v129
  %v146 = vpack.c.bf16 %v130, %v130
  %v147 = vpack.c.bf16 %v131, %v131
  %v148 = vpack.c.bf16 %v132, %v132
  %v149 = vpack.c.bf16 %v133, %v133
  %150 = vst [vmem:[%s3] sm:$0xf] %v134
  %151 = vst [vmem:[%s3 + $0x4] sm:$0xf] %v135
  %152 = vst [vmem:[%s3 + $0x8] sm:$0xf] %v136
  %153 = vst [vmem:[%s3 + $0xc] sm:$0xf] %v137
  %154 = vst [vmem:[%s3 + $0x10] sm:$0xf] %v138
  %155 = vst [vmem:[%s3 + $0x14] sm:$0xf] %v139
  %156 = vst [vmem:[%s3 + $0x18] sm:$0xf] %v140
  %157 = vst [vmem:[%s3 + $0x1c] sm:$0xf] %v141
  %158 = vst [vmem:[%s3 + $0x20] sm:$0xf] %v142
  %159 = vst [vmem:[%s3 + $0x24] sm:$0xf] %v143
  %160 = vst [vmem:[%s3 + $0x28] sm:$0xf] %v144
  %161 = vst [vmem:[%s3 + $0x2c] sm:$0xf] %v145
  %162 = vst [vmem:[%s3 + $0x30] sm:$0xf] %v146
  %163 = vst [vmem:[%s3 + $0x34] sm:$0xf] %v147
  %164 = vst [vmem:[%s3 + $0x38] sm:$0xf] %v148
  %165 = vst [vmem:[%s3 + $0x3c] sm:$0xf] %v149
  // Predicated region
  $region14: #{_lambda_.12} parent=0 // pred_check
    _
  $region15: #{_lambda_.12} parent=0 // pred_check_branch
    %167 = sbr.rel (0) target = $region17
  $region16: #{_lambda_.12} parent=0 // pred_region
    _
  $region17: #{_lambda_.12} parent=0 // pred_fallthru
    _
  // Predicated region
  $region18: #{_lambda_.12} parent=0 // pred_check
    _
  $region19: #{_lambda_.12} parent=0 // pred_check_branch
    %169 = sbr.rel (0) target = $region21
  $region20: #{_lambda_.12} parent=0 // pred_region
    _
  $region21: #{_lambda_.12} parent=0 // pred_fallthru
    _

// kernel: _lambda_.14
$region0: #{_lambda_.14}
  #allocation0 [shape = 'u32[]', space=smem, size = 0x4, offset = 0x4, fixed_abs, tag = 'smem constant byte address 0x4 - core index']
  #allocation1 [shape = 'u32[72,128]{1,0:T(1,128)}', space=vmem, size = 0x9000, scoped, tag = 'internal scratch']
  %s0 = inlined_call_operand.vmem [shape: bf16[32,128], index: 0, kind: input, shape index: {}]
  %s1 = inlined_call_operand.vmem [shape: f32[1,128], index: 1, kind: input, shape index: {}]
  %s2 = inlined_call_operand.vmem [shape: f32[1,128], index: 2, kind: input, shape index: {}]
  %s3 = inlined_call_operand.vmem [shape: bf16[32,128], index: 3, kind: output, shape index: {}]
  %s4 = sld [smem:[#allocation0]]
  $region22: #{_lambda_.14} parent=0
    _
  %s6 = ssub.s32 1, %s4
  %s7 = scalar_select 0, %s6, %s4
  // Predicated region
  $region2: #{_lambda_.14} parent=0 // pred_check
    _
  $region3: #{_lambda_.14} parent=0 // pred_check_branch
    %9 = sbr.rel (0) target = $region5
  $region4: #{_lambda_.14} parent=0 // pred_region
    _
  $region5: #{_lambda_.14} parent=0 // pred_fallthru
    _
  // Predicated region
  $region6: #{_lambda_.14} parent=0 // pred_check
    _
  $region7: #{_lambda_.14} parent=0 // pred_check_branch
    %11 = sbr.rel (0) target = $region9
  $region8: #{_lambda_.14} parent=0 // pred_region
    _
  $region9: #{_lambda_.14} parent=0 // pred_fallthru
    _
  // Predicated region
  $region10: #{_lambda_.14} parent=0 // pred_check
    _
  $region11: #{_lambda_.14} parent=0 // pred_check_branch
    %13 = sbr.rel (0) target = $region13
  $region12: #{_lambda_.14} parent=0 // pred_region
    _
  $region13: #{_lambda_.14} parent=0 // pred_fallthru
    _
  %v14 = vld [vmem:[%s0] sm:$0xf]
  %v15 = vld [vmem:[%s0 + $0x4] sm:$0xf]
  %v16 = vld [vmem:[%s0 + $0x8] sm:$0xf]
  %v17 = vld [vmem:[%s0 + $0xc] sm:$0xf]
  %v18 = vunpack.c.l.bf16 %v14
  %v19 = vunpack.c.l.bf16 %v15
  %v20 = vunpack.c.l.bf16 %v16
  %v21 = vunpack.c.l.bf16 %v17
  %v22 = vld [vmem:[%s1] sm:$0x1]
  %v24 = vperm.slane %v22, 0
  %v26 = vmul.f32 %v18, %v24
  %v27 = vmul.f32 %v19, %v24
  %v28 = vmul.f32 %v20, %v24
  %v29 = vmul.f32 %v21, %v24
  %v30 = vld [vmem:[%s2] sm:$0x1]
  %v32 = vperm.slane %v30, 0
  %v34 = vadd.f32 %v26, %v32
  %v35 = vadd.f32 %v27, %v32
  %v36 = vadd.f32 %v28, %v32
  %v37 = vadd.f32 %v29, %v32
  %vm38 = vcmp.ge.f32.partialorder %v34, 0.0
  %vm39 = vcmp.ge.f32.partialorder %v35, 0.0
  %vm40 = vcmp.ge.f32.partialorder %v36, 0.0
  %vm41 = vcmp.ge.f32.partialorder %v37, 0.0
  %v42 = vmul.f32 %v34, 0.2
  %v43 = vmul.f32 %v35, 0.2
  %v44 = vmul.f32 %v36, 0.2
  %v45 = vmul.f32 %v37, 0.2
  %v46 = vsel %vm38, %v34, %v42
  %v47 = vsel %vm39, %v35, %v43
  %v48 = vsel %vm40, %v36, %v44
  %v49 = vsel %vm41, %v37, %v45
  %v50 = vpack.c.bf16 %v46, %v46
  %v51 = vpack.c.bf16 %v47, %v47
  %v52 = vpack.c.bf16 %v48, %v48
  %v53 = vpack.c.bf16 %v49, %v49
  %54 = vst [vmem:[%s3] sm:$0xf] %v50
  %55 = vst [vmem:[%s3 + $0x4] sm:$0xf] %v51
  %56 = vst [vmem:[%s3 + $0x8] sm:$0xf] %v52
  %57 = vst [vmem:[%s3 + $0xc] sm:$0xf] %v53
  // Predicated region
  $region14: #{_lambda_.14} parent=0 // pred_check
    _
  $region15: #{_lambda_.14} parent=0 // pred_check_branch
    %59 = sbr.rel (0) target = $region17
  $region16: #{_lambda_.14} parent=0 // pred_region
    _
  $region17: #{_lambda_.14} parent=0 // pred_fallthru
    _
  // Predicated region
  $region18: #{_lambda_.14} parent=0 // pred_check
    _
  $region19: #{_lambda_.14} parent=0 // pred_check_branch
    %61 = sbr.rel (0) target = $region21
  $region20: #{_lambda_.14} parent=0 // pred_region
    _
  $region21: #{_lambda_.14} parent=0 // pred_fallthru
    _

// kernel: _lambda_.13
$region0: #{_lambda_.13}
  #allocation0 [shape = 'u32[]', space=smem, size = 0x4, offset = 0x4, fixed_abs, tag = 'smem constant byte address 0x4 - core index']
  #allocation1 [shape = 'u32[72,128]{1,0:T(1,128)}', space=vmem, size = 0x9000, scoped, tag = 'internal scratch']
  #allocation2 [shape = 'f32[32,128]{1,0:T(8,128)}', space=vmem, size = 0x4000, scoped, tag = 'scratch operand']
  %s0 = inlined_call_operand.vmem [shape: bf16[32,512], index: 0, kind: input, shape index: {}]
  %s1 = inlined_call_operand.vmem [shape: bf16[512,128], index: 1, kind: input, shape index: {}]
  %s2 = inlined_call_operand.vmem [shape: bf16[32,128], index: 2, kind: output, shape index: {0}]
  %s3 = inlined_call_operand.vmem [shape: f32[8,128], index: 3, kind: output, shape index: {1}]
  %s4 = inlined_call_operand.vmem [shape: f32[8,128], index: 4, kind: output, shape index: {2}]
  %5 = xla_tuple %s2, %s3, %s4
  %s6 = sld [smem:[#allocation0]]
  $region42: #{_lambda_.13} parent=0
    _
  %s8 = ssub.s32 1, %s6
  %s9 = scalar_select 0, %s8, %s6
  // Predicated region
  $region2: #{_lambda_.13} parent=0 // pred_check
    _
  $region3: #{_lambda_.13} parent=0 // pred_check_branch
    %11 = sbr.rel (0) target = $region5
  $region4: #{_lambda_.13} parent=0 // pred_region
    _
  $region5: #{_lambda_.13} parent=0 // pred_fallthru
    _
  // Predicated region
  $region6: #{_lambda_.13} parent=0 // pred_check
    _
  $region7: #{_lambda_.13} parent=0 // pred_check_branch
    %13 = sbr.rel (0) target = $region9
  $region8: #{_lambda_.13} parent=0 // pred_region
    _
  $region9: #{_lambda_.13} parent=0 // pred_fallthru
    _
  %p14 = scmp.eq.s32.totalorder 0, 0
  // Predicated region
  $region10: #{_lambda_.13} parent=0 // pred_check
    %p15 = pneg %p14
  $region11: #{_lambda_.13} parent=0 // pred_check_branch
    %17 = sbr.rel (%p15) target = $region13
  $region12: #{_lambda_.13} parent=0 // pred_region
    %18 = vst [vmem:[#allocation2] sm:$0xff] 0.0
    %19 = vst [vmem:[#allocation2 + $0x8] sm:$0xff] 0.0
    %20 = vst [vmem:[#allocation2 + $0x10] sm:$0xff] 0.0
    %21 = vst [vmem:[#allocation2 + $0x18] sm:$0xff] 0.0
  $region13: #{_lambda_.13} parent=0 // pred_fallthru
    _
  %v22 = vld [vmem:[#allocation2] sm:$0xff]
  %v23 = vld [vmem:[#allocation2 + $0x8] sm:$0xff]
  %v24 = vld [vmem:[#allocation2 + $0x10] sm:$0xff]
  %v25 = vld [vmem:[#allocation2 + $0x18] sm:$0xff]
  %v26 = vld [vmem:[%s0] sm:$0xff]
  %v27 = vld [vmem:[%s0 + $0x8] sm:$0xff]
  %v28 = vld [vmem:[%s0 + $0x10] sm:$0xff]
  %v29 = vld [vmem:[%s0 + $0x18] sm:$0xff]
  %v30 = vld [vmem:[%s0 + $0x20] sm:$0xff]
  %v31 = vld [vmem:[%s0 + $0x28] sm:$0xff]
  %v32 = vld [vmem:[%s0 + $0x30] sm:$0xff]
  %v33 = vld [vmem:[%s0 + $0x38] sm:$0xff]
  %v34 = vld [vmem:[%s1] sm:$0xf]
  %v35 = vld [vmem:[%s1 + $0x4] sm:$0xf]
  %v36 = vld [vmem:[%s1 + $0x8] sm:$0xf]
  %v37 = vld [vmem:[%s1 + $0xc] sm:$0xf]
  %v38 = vld [vmem:[%s1 + $0x10] sm:$0xf]
  %v39 = vld [vmem:[%s1 + $0x14] sm:$0xf]
  %v40 = vld [vmem:[%s1 + $0x18] sm:$0xf]
  %v41 = vld [vmem:[%s1 + $0x1c] sm:$0xf]
  %v42 = vld [vmem:[%s1 + $0x20] sm:$0xf]
  %v43 = vld [vmem:[%s1 + $0x24] sm:$0xf]
  %v44 = vld [vmem:[%s1 + $0x28] sm:$0xf]
  %v45 = vld [vmem:[%s1 + $0x2c] sm:$0xf]
  %v46 = vld [vmem:[%s1 + $0x30] sm:$0xf]
  %v47 = vld [vmem:[%s1 + $0x34] sm:$0xf]
  %v48 = vld [vmem:[%s1 + $0x38] sm:$0xf]
  %v49 = vld [vmem:[%s1 + $0x3c] sm:$0xf]
  %v50 = vld [vmem:[%s1 + $0x40] sm:$0xf]
  %v51 = vld [vmem:[%s1 + $0x44] sm:$0xf]
  %v52 = vld [vmem:[%s1 + $0x48] sm:$0xf]
  %v53 = vld [vmem:[%s1 + $0x4c] sm:$0xf]
  %v54 = vld [vmem:[%s1 + $0x50] sm:$0xf]
  %v55 = vld [vmem:[%s1 + $0x54] sm:$0xf]
  %v56 = vld [vmem:[%s1 + $0x58] sm:$0xf]
  %v57 = vld [vmem:[%s1 + $0x5c] sm:$0xf]
  %v58 = vld [vmem:[%s1 + $0x60] sm:$0xf]
  %v59 = vld [vmem:[%s1 + $0x64] sm:$0xf]
  %v60 = vld [vmem:[%s1 + $0x68] sm:$0xf]
  %v61 = vld [vmem:[%s1 + $0x6c] sm:$0xf]
  %v62 = vld [vmem:[%s1 + $0x70] sm:$0xf]
  %v63 = vld [vmem:[%s1 + $0x74] sm:$0xf]
  %v64 = vld [vmem:[%s1 + $0x78] sm:$0xf]
  %v65 = vld [vmem:[%s1 + $0x7c] sm:$0xf]
  %v66 = vld [vmem:[%s1 + $0x80] sm:$0xf]
  %v67 = vld [vmem:[%s1 + $0x84] sm:$0xf]
  %v68 = vld [vmem:[%s1 + $0x88] sm:$0xf]
  %v69 = vld [vmem:[%s1 + $0x8c] sm:$0xf]
  %v70 = vld [vmem:[%s1 + $0x90] sm:$0xf]
  %v71 = vld [vmem:[%s1 + $0x94] sm:$0xf]
  %v72 = vld [vmem:[%s1 + $0x98] sm:$0xf]
  %v73 = vld [vmem:[%s1 + $0x9c] sm:$0xf]
  %v74 = vld [vmem:[%s1 + $0xa0] sm:$0xf]
  %v75 = vld [vmem:[%s1 + $0xa4] sm:$0xf]
  %v76 = vld [vmem:[%s1 + $0xa8] sm:$0xf]
  %v77 = vld [vmem:[%s1 + $0xac] sm:$0xf]
  %v78 = vld [vmem:[%s1 + $0xb0] sm:$0xf]
  %v79 = vld [vmem:[%s1 + $0xb4] sm:$0xf]
  %v80 = vld [vmem:[%s1 + $0xb8] sm:$0xf]
  %v81 = vld [vmem:[%s1 + $0xbc] sm:$0xf]
  %v82 = vld [vmem:[%s1 + $0xc0] sm:$0xf]
  %v83 = vld [vmem:[%s1 + $0xc4] sm:$0xf]
  %v84 = vld [vmem:[%s1 + $0xc8] sm:$0xf]
  %v85 = vld [vmem:[%s1 + $0xcc] sm:$0xf]
  %v86 = vld [vmem:[%s1 + $0xd0] sm:$0xf]
  %v87 = vld [vmem:[%s1 + $0xd4] sm:$0xf]
  %v88 = vld [vmem:[%s1 + $0xd8] sm:$0xf]
  %v89 = vld [vmem:[%s1 + $0xdc] sm:$0xf]
  %v90 = vld [vmem:[%s1 + $0xe0] sm:$0xf]
  %v91 = vld [vmem:[%s1 + $0xe4] sm:$0xf]
  %v92 = vld [vmem:[%s1 + $0xe8] sm:$0xf]
  %v93 = vld [vmem:[%s1 + $0xec] sm:$0xf]
  %v94 = vld [vmem:[%s1 + $0xf0] sm:$0xf]
  %v95 = vld [vmem:[%s1 + $0xf4] sm:$0xf]
  %v96 = vld [vmem:[%s1 + $0xf8] sm:$0xf]
  %v97 = vld [vmem:[%s1 + $0xfc] sm:$0xf]
  %v106 = vunpack.c.l.b16 %v26
  %v107 = vunpack.c.h.b16 %v26
  %v108 = vunpack.c.l.b16 %v27
  %v109 = vunpack.c.h.b16 %v27
  %v110 = vunpack.c.l.b16 %v28
  %v111 = vunpack.c.h.b16 %v28
  %v112 = vunpack.c.l.b16 %v29
  %v113 = vunpack.c.h.b16 %v29
  %v114 = vunpack.c.l.b16 %v30
  %v115 = vunpack.c.h.b16 %v30
  %v116 = vunpack.c.l.b16 %v31
  %v117 = vunpack.c.h.b16 %v31
  %v118 = vunpack.c.l.b16 %v32
  %v119 = vunpack.c.h.b16 %v32
  %v120 = vunpack.c.l.b16 %v33
  %v121 = vunpack.c.h.b16 %v33
  %v122 = vpack.c.b16 %v110, %v106
  %v123 = vpack.c.b16 %v111, %v107
  %v124 = vpack.c.b16 %v112, %v108
  %v125 = vpack.c.b16 %v113, %v109
  %v126 = vpack.c.b16 %v118, %v114
  %v127 = vpack.c.b16 %v119, %v115
  %v128 = vpack.c.b16 %v120, %v116
  %v129 = vpack.c.b16 %v121, %v117
  %v202 = vunpack.c.l.b16 %v34
  %v203 = vunpack.c.l.b16 %v35
  %v204 = vunpack.c.l.b16 %v36
  %v205 = vunpack.c.l.b16 %v37
  %v206 = vunpack.c.l.b16 %v38
  %v207 = vunpack.c.l.b16 %v39
  %v208 = vunpack.c.l.b16 %v40
  %v209 = vunpack.c.l.b16 %v41
  %v210 = vunpack.c.l.b16 %v42
  %v211 = vunpack.c.l.b16 %v43
  %v212 = vunpack.c.l.b16 %v44
  %v213 = vunpack.c.l.b16 %v45
  %v214 = vunpack.c.l.b16 %v46
  %v215 = vunpack.c.l.b16 %v47
  %v216 = vunpack.c.l.b16 %v48
  %v217 = vunpack.c.l.b16 %v49
  %v218 = vunpack.c.l.b16 %v50
  %v219 = vunpack.c.l.b16 %v51
  %v220 = vunpack.c.l.b16 %v52
  %v221 = vunpack.c.l.b16 %v53
  %v222 = vunpack.c.l.b16 %v54
  %v223 = vunpack.c.l.b16 %v55
  %v224 = vunpack.c.l.b16 %v56
  %v225 = vunpack.c.l.b16 %v57
  %v226 = vunpack.c.l.b16 %v58
  %v227 = vunpack.c.l.b16 %v59
  %v228 = vunpack.c.l.b16 %v60
  %v229 = vunpack.c.l.b16 %v61
  %v230 = vunpack.c.l.b16 %v62
  %v231 = vunpack.c.l.b16 %v63
  %v232 = vunpack.c.l.b16 %v64
  %v233 = vunpack.c.l.b16 %v65
  %v234 = vunpack.c.l.b16 %v66
  %v235 = vunpack.c.l.b16 %v67
  %v236 = vunpack.c.l.b16 %v68
  %v237 = vunpack.c.l.b16 %v69
  %v238 = vunpack.c.l.b16 %v70
  %v239 = vunpack.c.l.b16 %v71
  %v240 = vunpack.c.l.b16 %v72
  %v241 = vunpack.c.l.b16 %v73
  %v242 = vunpack.c.l.b16 %v74
  %v243 = vunpack.c.l.b16 %v75
  %v244 = vunpack.c.l.b16 %v76
  %v245 = vunpack.c.l.b16 %v77
  %v246 = vunpack.c.l.b16 %v78
  %v247 = vunpack.c.l.b16 %v79
  %v248 = vunpack.c.l.b16 %v80
  %v249 = vunpack.c.l.b16 %v81
  %v250 = vunpack.c.l.b16 %v82
  %v251 = vunpack.c.l.b16 %v83
  %v252 = vunpack.c.l.b16 %v84
  %v253 = vunpack.c.l.b16 %v85
  %v254 = vunpack.c.l.b16 %v86
  %v255 = vunpack.c.l.b16 %v87
  %v256 = vunpack.c.l.b16 %v88
  %v257 = vunpack.c.l.b16 %v89
  %v258 = vunpack.c.l.b16 %v90
  %v259 = vunpack.c.l.b16 %v91
  %v260 = vunpack.c.l.b16 %v92
  %v261 = vunpack.c.l.b16 %v93
  %v262 = vunpack.c.l.b16 %v94
  %v263 = vunpack.c.l.b16 %v95
  %v264 = vunpack.c.l.b16 %v96
  %v265 = vunpack.c.l.b16 %v97
  %v266 = vpack.c.b16 %v203, %v202
  %v267 = vpack.c.b16 %v205, %v204
  %v268 = vpack.c.b16 %v207, %v206
  %v269 = vpack.c.b16 %v209, %v208
  %v270 = vpack.c.b16 %v211, %v210
  %v271 = vpack.c.b16 %v213, %v212
  %v272 = vpack.c.b16 %v215, %v214
  %v273 = vpack.c.b16 %v217, %v216
  %v274 = vpack.c.b16 %v219, %v218
  %v275 = vpack.c.b16 %v221, %v220
  %v276 = vpack.c.b16 %v223, %v222
  %v277 = vpack.c.b16 %v225, %v224
  %v278 = vpack.c.b16 %v227, %v226
  %v279 = vpack.c.b16 %v229, %v228
  %v280 = vpack.c.b16 %v231, %v230
  %v281 = vpack.c.b16 %v233, %v232
  %v282 = vpack.c.b16 %v235, %v234
  %v283 = vpack.c.b16 %v237, %v236
  %v284 = vpack.c.b16 %v239, %v238
  %v285 = vpack.c.b16 %v241, %v240
  %v286 = vpack.c.b16 %v243, %v242
  %v287 = vpack.c.b16 %v245, %v244
  %v288 = vpack.c.b16 %v247, %v246
  %v289 = vpack.c.b16 %v249, %v248
  %v290 = vpack.c.b16 %v251, %v250
  %v291 = vpack.c.b16 %v253, %v252
  %v292 = vpack.c.b16 %v255, %v254
  %v293 = vpack.c.b16 %v257, %v256
  %v294 = vpack.c.b16 %v259, %v258
  %v295 = vpack.c.b16 %v261, %v260
  %v296 = vpack.c.b16 %v263, %v262
  %v297 = vpack.c.b16 %v265, %v264
  %330 = vmatpush.bf16.msra.mxu0 %v273
  %331 = vmatpush.bf16.msra.mxu0 %v272
  %332 = vmatpush.bf16.msra.mxu0 %v271
  %333 = vmatpush.bf16.msra.mxu0 %v270
  %334 = vmatpush.bf16.msra.mxu0 %v269
  %335 = vmatpush.bf16.msra.mxu0 %v268
  %336 = vmatpush.bf16.msra.mxu0 %v267
  %337 = vmatpush.bf16.msra.mxu0 %v266
  %338 = vmatmul.bf16.gmra.mxu0 %v122
  %v339 = vpop.f32.mrf.mxu0
  %v340 = vadd.f32 0.0, %v339
  %v341 = vpop.f32.mrf.mxu0
  %v342 = vadd.f32 0.0, %v341
  %343 = vmatmul.bf16.gmra.mxu0 %v126
  %v344 = vpop.f32.mrf.mxu0
  %v345 = vadd.f32 0.0, %v344
  %v346 = vpop.f32.mrf.mxu0
  %v347 = vadd.f32 0.0, %v346
  %348 = vdwg.mxu0
  %349 = vmatpush.bf16.msra.mxu0 %v281
  %350 = vmatpush.bf16.msra.mxu0 %v280
  %351 = vmatpush.bf16.msra.mxu0 %v279
  %352 = vmatpush.bf16.msra.mxu0 %v278
  %353 = vmatpush.bf16.msra.mxu0 %v277
  %354 = vmatpush.bf16.msra.mxu0 %v276
  %355 = vmatpush.bf16.msra.mxu0 %v275
  %356 = vmatpush.bf16.msra.mxu0 %v274
  %357 = vmatmul.bf16.gmra.mxu0 %v123
  %v358 = vpop.f32.mrf.mxu0
  %v359 = vadd.f32 %v340, %v358
  %v360 = vpop.f32.mrf.mxu0
  %v361 = vadd.f32 %v342, %v360
  %362 = vmatmul.bf16.gmra.mxu0 %v127
  %v363 = vpop.f32.mrf.mxu0
  %v364 = vadd.f32 %v345, %v363
  %v365 = vpop.f32.mrf.mxu0
  %v366 = vadd.f32 %v347, %v365
  %367 = vdwg.mxu0
  %368 = vmatpush.bf16.msra.mxu0 %v289
  %369 = vmatpush.bf16.msra.mxu0 %v288
  %370 = vmatpush.bf16.msra.mxu0 %v287
  %371 = vmatpush.bf16.msra.mxu0 %v286
  %372 = vmatpush.bf16.msra.mxu0 %v285
  %373 = vmatpush.bf16.msra.mxu0 %v284
  %374 = vmatpush.bf16.msra.mxu0 %v283
  %375 = vmatpush.bf16.msra.mxu0 %v282
  %376 = vmatmul.bf16.gmra.mxu0 %v124
  %v377 = vpop.f32.mrf.mxu0
  %v378 = vadd.f32 %v359, %v377
  %v379 = vpop.f32.mrf.mxu0
  %v380 = vadd.f32 %v361, %v379
  %381 = vmatmul.bf16.gmra.mxu0 %v128
  %v382 = vpop.f32.mrf.mxu0
  %v383 = vadd.f32 %v364, %v382
  %v384 = vpop.f32.mrf.mxu0
  %v385 = vadd.f32 %v366, %v384
  %386 = vdwg.mxu0
  %387 = vmatpush.bf16.msra.mxu0 %v297
  %388 = vmatpush.bf16.msra.mxu0 %v296
  %389 = vmatpush.bf16.msra.mxu0 %v295
  %390 = vmatpush.bf16.msra.mxu0 %v294
  %391 = vmatpush.bf16.msra.mxu0 %v293
  %392 = vmatpush.bf16.msra.mxu0 %v292
  %393 = vmatpush.bf16.msra.mxu0 %v291
  %394 = vmatpush.bf16.msra.mxu0 %v290
  %395 = vmatmul.bf16.gmra.mxu0 %v125
  %v396 = vpop.f32.mrf.mxu0
  %v397 = vadd.f32 %v378, %v396
  %v398 = vpop.f32.mrf.mxu0
  %v399 = vadd.f32 %v380, %v398
  %400 = vmatmul.bf16.gmra.mxu0 %v129
  %v401 = vpop.f32.mrf.mxu0
  %v402 = vadd.f32 %v383, %v401
  %v403 = vpop.f32.mrf.mxu0
  %v404 = vadd.f32 %v385, %v403
  %405 = vdwg.mxu0
  %v406 = vadd.f32 %v22, %v397
  %v407 = vadd.f32 %v23, %v399
  %v408 = vadd.f32 %v24, %v402
  %v409 = vadd.f32 %v25, %v404
  %410 = vst [vmem:[#allocation2] sm:$0xff] %v406
  %411 = vst [vmem:[#allocation2 + $0x8] sm:$0xff] %v407
  %412 = vst [vmem:[#allocation2 + $0x10] sm:$0xff] %v408
  %413 = vst [vmem:[#allocation2 + $0x18] sm:$0xff] %v409
  // Predicated region
  $region14: #{_lambda_.13} parent=0 // pred_check
    %p414 = pneg %p14
  $region15: #{_lambda_.13} parent=0 // pred_check_branch
    %416 = sbr.rel (%p414) target = $region17
  $region16: #{_lambda_.13} parent=0 // pred_region
    %v417 = vld [vmem:[#allocation2] sm:$0xff]
    %v418 = vld [vmem:[#allocation2 + $0x8] sm:$0xff]
    %v419 = vld [vmem:[#allocation2 + $0x10] sm:$0xff]
    %v420 = vld [vmem:[#allocation2 + $0x18] sm:$0xff]
    %v421 = vpack.c.bf16 %v417, %v417
    %v422 = vpack.c.bf16 %v418, %v418
    %v423 = vpack.c.bf16 %v419, %v419
    %v424 = vpack.c.bf16 %v420, %v420
    %425 = vst [vmem:[%s2] sm:$0xf] %v421
    %426 = vst [vmem:[%s2 + $0x4] sm:$0xf] %v422
    %427 = vst [vmem:[%s2 + $0x8] sm:$0xf] %v423
    %428 = vst [vmem:[%s2 + $0xc] sm:$0xf] %v424
    %v429 = vadd.f32 %v417, %v418
    %v430 = vadd.f32 %v429, %v419
    %v431 = vadd.f32 %v430, %v420
    %v432 = vrot.slane %v431, 4
    %v433 = vadd.f32 %v431, %v432
    %v434 = vrot.slane %v433, 2
    %v435 = vadd.f32 %v433, %v434
    %v436 = vrot.slane %v435, 1
    %v437 = vadd.f32 %v435, %v436
    %v438 = vmul.f32 %v417, %v417
    %v439 = vmul.f32 %v418, %v418
    %v440 = vmul.f32 %v419, %v419
    %v441 = vmul.f32 %v420, %v420
    %v442 = vadd.f32 %v438, %v439
    %v443 = vadd.f32 %v442, %v440
    %v444 = vadd.f32 %v443, %v441
    %v445 = vrot.slane %v444, 4
    %v446 = vadd.f32 %v444, %v445
    %v447 = vrot.slane %v446, 2
    %v448 = vadd.f32 %v446, %v447
    %v449 = vrot.slane %v448, 1
    %v450 = vadd.f32 %v448, %v449
    %451 = vst [vmem:[%s3] sm:$0xff] %v437
    %452 = vst [vmem:[%s4] sm:$0xff] %v450
  $region17: #{_lambda_.13} parent=0 // pred_fallthru
    _
  // Predicated region
  $region18: #{_lambda_.13} parent=0 // pred_check
    _
  $region19: #{_lambda_.13} parent=0 // pred_check_branch
    %454 = sbr.rel (0) target = $region21
  $region20: #{_lambda_.13} parent=0 // pred_region
    _
  $region21: #{_lambda_.13} parent=0 // pred_fallthru
    _
  // Predicated region
  $region22: #{_lambda_.13} parent=0 // pred_check
    _
  $region23: #{_lambda_.13} parent=0 // pred_check_branch
    %456 = sbr.rel (0) target = $region25
  $region24: #{_lambda_.13} parent=0 // pred_region
    _
  $region25: #{_lambda_.13} parent=0 // pred_fallthru
    _
  // Predicated region
  $region26: #{_lambda_.13} parent=0 // pred_check
    _
  $region27: #{_lambda_.13} parent=0 // pred_check_branch
    %458 = sbr.rel (0) target = $region29
  $region28: #{_lambda_.13} parent=0 // pred_region
    _
  $region29: #{_lambda_.13} parent=0 // pred_fallthru
    _
  // Predicated region
  $region30: #{_lambda_.13} parent=0 // pred_check
    _
  $region31: #{_lambda_.13} parent=0 // pred_check_branch
    %460 = sbr.rel (0) target = $region33
  $region32: #{_lambda_.13} parent=0 // pred_region
    _
  $region33: #{_lambda_.13} parent=0 // pred_fallthru
    _
  // Predicated region
  $region34: #{_lambda_.13} parent=0 // pred_check
    _
  $region35: #{_lambda_.13} parent=0 // pred_check_branch
    %462 = sbr.rel (0) target = $region37
  $region36: #{_lambda_.13} parent=0 // pred_region
    _
  $region37: #{_lambda_.13} parent=0 // pred_fallthru
    _
  // Predicated region
  $region38: #{_lambda_.13} parent=0 // pred_check
    _
  $region39: #{_lambda_.13} parent=0 // pred_check_branch
    %464 = sbr.rel (0) target = $region41
  $region40: #{_lambda_.13} parent=0 // pred_region
    _
  $region41: #{_lambda_.13} parent=0 // pred_fallthru
    _

// kernel: _lambda_.15
$region0: #{_lambda_.15}
  #allocation0 [shape = 'u32[]', space=smem, size = 0x4, offset = 0x4, fixed_abs, tag = 'smem constant byte address 0x4 - core index']
  #allocation1 [shape = 'u32[72,128]{1,0:T(1,128)}', space=vmem, size = 0x9000, scoped, tag = 'internal scratch']
  #allocation2 [shape = 'f32[8,128]{1,0:T(8,128)}', space=vmem, size = 0x1000, scoped, tag = 'scratch operand']
  %s0 = inlined_call_operand.vmem [shape: bf16[8,1024], index: 0, kind: input, shape index: {}]
  %s1 = inlined_call_operand.vmem [shape: bf16[1024,128], index: 1, kind: input, shape index: {}]
  %s2 = inlined_call_operand.vmem [shape: f32[1,128], index: 2, kind: input, shape index: {}]
  %s3 = inlined_call_operand.vmem [shape: f32[8,128], index: 3, kind: output, shape index: {}]
  %s4 = sld [smem:[#allocation0]]
  $region30: #{_lambda_.15} parent=0
    _
  %s6 = ssub.s32 1, %s4
  %s7 = scalar_select 0, %s6, %s4
  // Predicated region
  $region2: #{_lambda_.15} parent=0 // pred_check
    _
  $region3: #{_lambda_.15} parent=0 // pred_check_branch
    %9 = sbr.rel (0) target = $region5
  $region4: #{_lambda_.15} parent=0 // pred_region
    _
  $region5: #{_lambda_.15} parent=0 // pred_fallthru
    _
  // Predicated region
  $region6: #{_lambda_.15} parent=0 // pred_check
    _
  $region7: #{_lambda_.15} parent=0 // pred_check_branch
    %11 = sbr.rel (0) target = $region9
  $region8: #{_lambda_.15} parent=0 // pred_region
    _
  $region9: #{_lambda_.15} parent=0 // pred_fallthru
    _
  // Predicated region
  $region10: #{_lambda_.15} parent=0 // pred_check
    _
  $region11: #{_lambda_.15} parent=0 // pred_check_branch
    %13 = sbr.rel (0) target = $region13
  $region12: #{_lambda_.15} parent=0 // pred_region
    _
  $region13: #{_lambda_.15} parent=0 // pred_fallthru
    _
  %p14 = scmp.eq.s32.totalorder 0, 0
  // Predicated region
  $region14: #{_lambda_.15} parent=0 // pred_check
    %p15 = pneg %p14
  $region15: #{_lambda_.15} parent=0 // pred_check_branch
    %17 = sbr.rel (%p15) target = $region17
  $region16: #{_lambda_.15} parent=0 // pred_region
    %18 = vst [vmem:[#allocation2] sm:$0xff] 0.0
  $region17: #{_lambda_.15} parent=0 // pred_fallthru
    _
  %v19 = vld [vmem:[#allocation2] sm:$0xff]
  %v20 = vld [vmem:[%s0] sm:$0xff]
  %v21 = vld [vmem:[%s0 + $0x8] sm:$0xff]
  %v22 = vld [vmem:[%s0 + $0x10] sm:$0xff]
  %v23 = vld [vmem:[%s0 + $0x18] sm:$0xff]
  %v24 = vld [vmem:[%s1] sm:$0xf]
  %v25 = vld [vmem:[%s1 + $0x4] sm:$0xf]
  %v26 = vld [vmem:[%s1 + $0x8] sm:$0xf]
  %v27 = vld [vmem:[%s1 + $0xc] sm:$0xf]
  %v28 = vld [vmem:[%s1 + $0x10] sm:$0xf]
  %v29 = vld [vmem:[%s1 + $0x14] sm:$0xf]
  %v30 = vld [vmem:[%s1 + $0x18] sm:$0xf]
  %v31 = vld [vmem:[%s1 + $0x1c] sm:$0xf]
  %v32 = vld [vmem:[%s1 + $0x20] sm:$0xf]
  %v33 = vld [vmem:[%s1 + $0x24] sm:$0xf]
  %v34 = vld [vmem:[%s1 + $0x28] sm:$0xf]
  %v35 = vld [vmem:[%s1 + $0x2c] sm:$0xf]
  %v36 = vld [vmem:[%s1 + $0x30] sm:$0xf]
  %v37 = vld [vmem:[%s1 + $0x34] sm:$0xf]
  %v38 = vld [vmem:[%s1 + $0x38] sm:$0xf]
  %v39 = vld [vmem:[%s1 + $0x3c] sm:$0xf]
  %v40 = vld [vmem:[%s1 + $0x40] sm:$0xf]
  %v41 = vld [vmem:[%s1 + $0x44] sm:$0xf]
  %v42 = vld [vmem:[%s1 + $0x48] sm:$0xf]
  %v43 = vld [vmem:[%s1 + $0x4c] sm:$0xf]
  %v44 = vld [vmem:[%s1 + $0x50] sm:$0xf]
  %v45 = vld [vmem:[%s1 + $0x54] sm:$0xf]
  %v46 = vld [vmem:[%s1 + $0x58] sm:$0xf]
  %v47 = vld [vmem:[%s1 + $0x5c] sm:$0xf]
  %v48 = vld [vmem:[%s1 + $0x60] sm:$0xf]
  %v49 = vld [vmem:[%s1 + $0x64] sm:$0xf]
  %v50 = vld [vmem:[%s1 + $0x68] sm:$0xf]
  %v51 = vld [vmem:[%s1 + $0x6c] sm:$0xf]
  %v52 = vld [vmem:[%s1 + $0x70] sm:$0xf]
  %v53 = vld [vmem:[%s1 + $0x74] sm:$0xf]
  %v54 = vld [vmem:[%s1 + $0x78] sm:$0xf]
  %v55 = vld [vmem:[%s1 + $0x7c] sm:$0xf]
  %v56 = vld [vmem:[%s1 + $0x80] sm:$0xf]
  %v57 = vld [vmem:[%s1 + $0x84] sm:$0xf]
  %v58 = vld [vmem:[%s1 + $0x88] sm:$0xf]
  %v59 = vld [vmem:[%s1 + $0x8c] sm:$0xf]
  %v60 = vld [vmem:[%s1 + $0x90] sm:$0xf]
  %v61 = vld [vmem:[%s1 + $0x94] sm:$0xf]
  %v62 = vld [vmem:[%s1 + $0x98] sm:$0xf]
  %v63 = vld [vmem:[%s1 + $0x9c] sm:$0xf]
  %v64 = vld [vmem:[%s1 + $0xa0] sm:$0xf]
  %v65 = vld [vmem:[%s1 + $0xa4] sm:$0xf]
  %v66 = vld [vmem:[%s1 + $0xa8] sm:$0xf]
  %v67 = vld [vmem:[%s1 + $0xac] sm:$0xf]
  %v68 = vld [vmem:[%s1 + $0xb0] sm:$0xf]
  %v69 = vld [vmem:[%s1 + $0xb4] sm:$0xf]
  %v70 = vld [vmem:[%s1 + $0xb8] sm:$0xf]
  %v71 = vld [vmem:[%s1 + $0xbc] sm:$0xf]
  %v72 = vld [vmem:[%s1 + $0xc0] sm:$0xf]
  %v73 = vld [vmem:[%s1 + $0xc4] sm:$0xf]
  %v74 = vld [vmem:[%s1 + $0xc8] sm:$0xf]
  %v75 = vld [vmem:[%s1 + $0xcc] sm:$0xf]
  %v76 = vld [vmem:[%s1 + $0xd0] sm:$0xf]
  %v77 = vld [vmem:[%s1 + $0xd4] sm:$0xf]
  %v78 = vld [vmem:[%s1 + $0xd8] sm:$0xf]
  %v79 = vld [vmem:[%s1 + $0xdc] sm:$0xf]
  %v80 = vld [vmem:[%s1 + $0xe0] sm:$0xf]
  %v81 = vld [vmem:[%s1 + $0xe4] sm:$0xf]
  %v82 = vld [vmem:[%s1 + $0xe8] sm:$0xf]
  %v83 = vld [vmem:[%s1 + $0xec] sm:$0xf]
  %v84 = vld [vmem:[%s1 + $0xf0] sm:$0xf]
  %v85 = vld [vmem:[%s1 + $0xf4] sm:$0xf]
  %v86 = vld [vmem:[%s1 + $0xf8] sm:$0xf]
  %v87 = vld [vmem:[%s1 + $0xfc] sm:$0xf]
  %v88 = vld [vmem:[%s1 + $0x100] sm:$0xf]
  %v89 = vld [vmem:[%s1 + $0x104] sm:$0xf]
  %v90 = vld [vmem:[%s1 + $0x108] sm:$0xf]
  %v91 = vld [vmem:[%s1 + $0x10c] sm:$0xf]
  %v92 = vld [vmem:[%s1 + $0x110] sm:$0xf]
  %v93 = vld [vmem:[%s1 + $0x114] sm:$0xf]
  %v94 = vld [vmem:[%s1 + $0x118] sm:$0xf]
  %v95 = vld [vmem:[%s1 + $0x11c] sm:$0xf]
  %v96 = vld [vmem:[%s1 + $0x120] sm:$0xf]
  %v97 = vld [vmem:[%s1 + $0x124] sm:$0xf]
  %v98 = vld [vmem:[%s1 + $0x128] sm:$0xf]
  %v99 = vld [vmem:[%s1 + $0x12c] sm:$0xf]
  %v100 = vld [vmem:[%s1 + $0x130] sm:$0xf]
  %v101 = vld [vmem:[%s1 + $0x134] sm:$0xf]
  %v102 = vld [vmem:[%s1 + $0x138] sm:$0xf]
  %v103 = vld [vmem:[%s1 + $0x13c] sm:$0xf]
  %v104 = vld [vmem:[%s1 + $0x140] sm:$0xf]
  %v105 = vld [vmem:[%s1 + $0x144] sm:$0xf]
  %v106 = vld [vmem:[%s1 + $0x148] sm:$0xf]
  %v107 = vld [vmem:[%s1 + $0x14c] sm:$0xf]
  %v108 = vld [vmem:[%s1 + $0x150] sm:$0xf]
  %v109 = vld [vmem:[%s1 + $0x154] sm:$0xf]
  %v110 = vld [vmem:[%s1 + $0x158] sm:$0xf]
  %v111 = vld [vmem:[%s1 + $0x15c] sm:$0xf]
  %v112 = vld [vmem:[%s1 + $0x160] sm:$0xf]
  %v113 = vld [vmem:[%s1 + $0x164] sm:$0xf]
  %v114 = vld [vmem:[%s1 + $0x168] sm:$0xf]
  %v115 = vld [vmem:[%s1 + $0x16c] sm:$0xf]
  %v116 = vld [vmem:[%s1 + $0x170] sm:$0xf]
  %v117 = vld [vmem:[%s1 + $0x174] sm:$0xf]
  %v118 = vld [vmem:[%s1 + $0x178] sm:$0xf]
  %v119 = vld [vmem:[%s1 + $0x17c] sm:$0xf]
  %v120 = vld [vmem:[%s1 + $0x180] sm:$0xf]
  %v121 = vld [vmem:[%s1 + $0x184] sm:$0xf]
  %v122 = vld [vmem:[%s1 + $0x188] sm:$0xf]
  %v123 = vld [vmem:[%s1 + $0x18c] sm:$0xf]
  %v124 = vld [vmem:[%s1 + $0x190] sm:$0xf]
  %v125 = vld [vmem:[%s1 + $0x194] sm:$0xf]
  %v126 = vld [vmem:[%s1 + $0x198] sm:$0xf]
  %v127 = vld [vmem:[%s1 + $0x19c] sm:$0xf]
  %v128 = vld [vmem:[%s1 + $0x1a0] sm:$0xf]
  %v129 = vld [vmem:[%s1 + $0x1a4] sm:$0xf]
  %v130 = vld [vmem:[%s1 + $0x1a8] sm:$0xf]
  %v131 = vld [vmem:[%s1 + $0x1ac] sm:$0xf]
  %v132 = vld [vmem:[%s1 + $0x1b0] sm:$0xf]
  %v133 = vld [vmem:[%s1 + $0x1b4] sm:$0xf]
  %v134 = vld [vmem:[%s1 + $0x1b8] sm:$0xf]
  %v135 = vld [vmem:[%s1 + $0x1bc] sm:$0xf]
  %v136 = vld [vmem:[%s1 + $0x1c0] sm:$0xf]
  %v137 = vld [vmem:[%s1 + $0x1c4] sm:$0xf]
  %v138 = vld [vmem:[%s1 + $0x1c8] sm:$0xf]
  %v139 = vld [vmem:[%s1 + $0x1cc] sm:$0xf]
  %v140 = vld [vmem:[%s1 + $0x1d0] sm:$0xf]
  %v141 = vld [vmem:[%s1 + $0x1d4] sm:$0xf]
  %v142 = vld [vmem:[%s1 + $0x1d8] sm:$0xf]
  %v143 = vld [vmem:[%s1 + $0x1dc] sm:$0xf]
  %v144 = vld [vmem:[%s1 + $0x1e0] sm:$0xf]
  %v145 = vld [vmem:[%s1 + $0x1e4] sm:$0xf]
  %v146 = vld [vmem:[%s1 + $0x1e8] sm:$0xf]
  %v147 = vld [vmem:[%s1 + $0x1ec] sm:$0xf]
  %v148 = vld [vmem:[%s1 + $0x1f0] sm:$0xf]
  %v149 = vld [vmem:[%s1 + $0x1f4] sm:$0xf]
  %v150 = vld [vmem:[%s1 + $0x1f8] sm:$0xf]
  %v151 = vld [vmem:[%s1 + $0x1fc] sm:$0xf]
  %v156 = vunpack.c.l.b16 %v20
  %v157 = vunpack.c.h.b16 %v20
  %v158 = vunpack.c.l.b16 %v21
  %v159 = vunpack.c.h.b16 %v21
  %v160 = vunpack.c.l.b16 %v22
  %v161 = vunpack.c.h.b16 %v22
  %v162 = vunpack.c.l.b16 %v23
  %v163 = vunpack.c.h.b16 %v23
  %v164 = vpack.c.b16 %v156, %v156
  %v165 = vpack.c.b16 %v157, %v157
  %v166 = vpack.c.b16 %v158, %v158
  %v167 = vpack.c.b16 %v159, %v159
  %v168 = vpack.c.b16 %v160, %v160
  %v169 = vpack.c.b16 %v161, %v161
  %v170 = vpack.c.b16 %v162, %v162
  %v171 = vpack.c.b16 %v163, %v163
  %v308 = vunpack.c.l.b16 %v24
  %v309 = vunpack.c.l.b16 %v25
  %v310 = vunpack.c.l.b16 %v26
  %v311 = vunpack.c.l.b16 %v27
  %v312 = vunpack.c.l.b16 %v28
  %v313 = vunpack.c.l.b16 %v29
  %v314 = vunpack.c.l.b16 %v30
  %v315 = vunpack.c.l.b16 %v31
  %v316 = vunpack.c.l.b16 %v32
  %v317 = vunpack.c.l.b16 %v33
  %v318 = vunpack.c.l.b16 %v34
  %v319 = vunpack.c.l.b16 %v35
  %v320 = vunpack.c.l.b16 %v36
  %v321 = vunpack.c.l.b16 %v37
  %v322 = vunpack.c.l.b16 %v38
  %v323 = vunpack.c.l.b16 %v39
  %v324 = vunpack.c.l.b16 %v40
  %v325 = vunpack.c.l.b16 %v41
  %v326 = vunpack.c.l.b16 %v42
  %v327 = vunpack.c.l.b16 %v43
  %v328 = vunpack.c.l.b16 %v44
  %v329 = vunpack.c.l.b16 %v45
  %v330 = vunpack.c.l.b16 %v46
  %v331 = vunpack.c.l.b16 %v47
  %v332 = vunpack.c.l.b16 %v48
  %v333 = vunpack.c.l.b16 %v49
  %v334 = vunpack.c.l.b16 %v50
  %v335 = vunpack.c.l.b16 %v51
  %v336 = vunpack.c.l.b16 %v52
  %v337 = vunpack.c.l.b16 %v53
  %v338 = vunpack.c.l.b16 %v54
  %v339 = vunpack.c.l.b16 %v55
  %v340 = vunpack.c.l.b16 %v56
  %v341 = vunpack.c.l.b16 %v57
  %v342 = vunpack.c.l.b16 %v58
  %v343 = vunpack.c.l.b16 %v59
  %v344 = vunpack.c.l.b16 %v60
  %v345 = vunpack.c.l.b16 %v61
  %v346 = vunpack.c.l.b16 %v62
  %v347 = vunpack.c.l.b16 %v63
  %v348 = vunpack.c.l.b16 %v64
  %v349 = vunpack.c.l.b16 %v65
  %v350 = vunpack.c.l.b16 %v66
  %v351 = vunpack.c.l.b16 %v67
  %v352 = vunpack.c.l.b16 %v68
  %v353 = vunpack.c.l.b16 %v69
  %v354 = vunpack.c.l.b16 %v70
  %v355 = vunpack.c.l.b16 %v71
  %v356 = vunpack.c.l.b16 %v72
  %v357 = vunpack.c.l.b16 %v73
  %v358 = vunpack.c.l.b16 %v74
  %v359 = vunpack.c.l.b16 %v75
  %v360 = vunpack.c.l.b16 %v76
  %v361 = vunpack.c.l.b16 %v77
  %v362 = vunpack.c.l.b16 %v78
  %v363 = vunpack.c.l.b16 %v79
  %v364 = vunpack.c.l.b16 %v80
  %v365 = vunpack.c.l.b16 %v81
  %v366 = vunpack.c.l.b16 %v82
  %v367 = vunpack.c.l.b16 %v83
  %v368 = vunpack.c.l.b16 %v84
  %v369 = vunpack.c.l.b16 %v85
  %v370 = vunpack.c.l.b16 %v86
  %v371 = vunpack.c.l.b16 %v87
  %v372 = vunpack.c.l.b16 %v88
  %v373 = vunpack.c.l.b16 %v89
  %v374 = vunpack.c.l.b16 %v90
  %v375 = vunpack.c.l.b16 %v91
  %v376 = vunpack.c.l.b16 %v92
  %v377 = vunpack.c.l.b16 %v93
  %v378 = vunpack.c.l.b16 %v94
  %v379 = vunpack.c.l.b16 %v95
  %v380 = vunpack.c.l.b16 %v96
  %v381 = vunpack.c.l.b16 %v97
  %v382 = vunpack.c.l.b16 %v98
  %v383 = vunpack.c.l.b16 %v99
  %v384 = vunpack.c.l.b16 %v100
  %v385 = vunpack.c.l.b16 %v101
  %v386 = vunpack.c.l.b16 %v102
  %v387 = vunpack.c.l.b16 %v103
  %v388 = vunpack.c.l.b16 %v104
  %v389 = vunpack.c.l.b16 %v105
  %v390 = vunpack.c.l.b16 %v106
  %v391 = vunpack.c.l.b16 %v107
  %v392 = vunpack.c.l.b16 %v108
  %v393 = vunpack.c.l.b16 %v109
  %v394 = vunpack.c.l.b16 %v110
  %v395 = vunpack.c.l.b16 %v111
  %v396 = vunpack.c.l.b16 %v112
  %v397 = vunpack.c.l.b16 %v113
  %v398 = vunpack.c.l.b16 %v114
  %v399 = vunpack.c.l.b16 %v115
  %v400 = vunpack.c.l.b16 %v116
  %v401 = vunpack.c.l.b16 %v117
  %v402 = vunpack.c.l.b16 %v118
  %v403 = vunpack.c.l.b16 %v119
  %v404 = vunpack.c.l.b16 %v120
  %v405 = vunpack.c.l.b16 %v121
  %v406 = vunpack.c.l.b16 %v122
  %v407 = vunpack.c.l.b16 %v123
  %v408 = vunpack.c.l.b16 %v124
  %v409 = vunpack.c.l.b16 %v125
  %v410 = vunpack.c.l.b16 %v126
  %v411 = vunpack.c.l.b16 %v127
  %v412 = vunpack.c.l.b16 %v128
  %v413 = vunpack.c.l.b16 %v129
  %v414 = vunpack.c.l.b16 %v130
  %v415 = vunpack.c.l.b16 %v131
  %v416 = vunpack.c.l.b16 %v132
  %v417 = vunpack.c.l.b16 %v133
  %v418 = vunpack.c.l.b16 %v134
  %v419 = vunpack.c.l.b16 %v135
  %v420 = vunpack.c.l.b16 %v136
  %v421 = vunpack.c.l.b16 %v137
  %v422 = vunpack.c.l.b16 %v138
  %v423 = vunpack.c.l.b16 %v139
  %v424 = vunpack.c.l.b16 %v140
  %v425 = vunpack.c.l.b16 %v141
  %v426 = vunpack.c.l.b16 %v142
  %v427 = vunpack.c.l.b16 %v143
  %v428 = vunpack.c.l.b16 %v144
  %v429 = vunpack.c.l.b16 %v145
  %v430 = vunpack.c.l.b16 %v146
  %v431 = vunpack.c.l.b16 %v147
  %v432 = vunpack.c.l.b16 %v148
  %v433 = vunpack.c.l.b16 %v149
  %v434 = vunpack.c.l.b16 %v150
  %v435 = vunpack.c.l.b16 %v151
  %v436 = vpack.c.b16 %v309, %v308
  %v437 = vpack.c.b16 %v311, %v310
  %v438 = vpack.c.b16 %v313, %v312
  %v439 = vpack.c.b16 %v315, %v314
  %v440 = vpack.c.b16 %v317, %v316
  %v441 = vpack.c.b16 %v319, %v318
  %v442 = vpack.c.b16 %v321, %v320
  %v443 = vpack.c.b16 %v323, %v322
  %v444 = vpack.c.b16 %v325, %v324
  %v445 = vpack.c.b16 %v327, %v326
  %v446 = vpack.c.b16 %v329, %v328
  %v447 = vpack.c.b16 %v331, %v330
  %v448 = vpack.c.b16 %v333, %v332
  %v449 = vpack.c.b16 %v335, %v334
  %v450 = vpack.c.b16 %v337, %v336
  %v451 = vpack.c.b16 %v339, %v338
  %v452 = vpack.c.b16 %v341, %v340
  %v453 = vpack.c.b16 %v343, %v342
  %v454 = vpack.c.b16 %v345, %v344
  %v455 = vpack.c.b16 %v347, %v346
  %v456 = vpack.c.b16 %v349, %v348
  %v457 = vpack.c.b16 %v351, %v350
  %v458 = vpack.c.b16 %v353, %v352
  %v459 = vpack.c.b16 %v355, %v354
  %v460 = vpack.c.b16 %v357, %v356
  %v461 = vpack.c.b16 %v359, %v358
  %v462 = vpack.c.b16 %v361, %v360
  %v463 = vpack.c.b16 %v363, %v362
  %v464 = vpack.c.b16 %v365, %v364
  %v465 = vpack.c.b16 %v367, %v366
  %v466 = vpack.c.b16 %v369, %v368
  %v467 = vpack.c.b16 %v371, %v370
  %v468 = vpack.c.b16 %v373, %v372
  %v469 = vpack.c.b16 %v375, %v374
  %v470 = vpack.c.b16 %v377, %v376
  %v471 = vpack.c.b16 %v379, %v378
  %v472 = vpack.c.b16 %v381, %v380
  %v473 = vpack.c.b16 %v383, %v382
  %v474 = vpack.c.b16 %v385, %v384
  %v475 = vpack.c.b16 %v387, %v386
  %v476 = vpack.c.b16 %v389, %v388
  %v477 = vpack.c.b16 %v391, %v390
  %v478 = vpack.c.b16 %v393, %v392
  %v479 = vpack.c.b16 %v395, %v394
  %v480 = vpack.c.b16 %v397, %v396
  %v481 = vpack.c.b16 %v399, %v398
  %v482 = vpack.c.b16 %v401, %v400
  %v483 = vpack.c.b16 %v403, %v402
  %v484 = vpack.c.b16 %v405, %v404
  %v485 = vpack.c.b16 %v407, %v406
  %v486 = vpack.c.b16 %v409, %v408
  %v487 = vpack.c.b16 %v411, %v410
  %v488 = vpack.c.b16 %v413, %v412
  %v489 = vpack.c.b16 %v415, %v414
  %v490 = vpack.c.b16 %v417, %v416
  %v491 = vpack.c.b16 %v419, %v418
  %v492 = vpack.c.b16 %v421, %v420
  %v493 = vpack.c.b16 %v423, %v422
  %v494 = vpack.c.b16 %v425, %v424
  %v495 = vpack.c.b16 %v427, %v426
  %v496 = vpack.c.b16 %v429, %v428
  %v497 = vpack.c.b16 %v431, %v430
  %v498 = vpack.c.b16 %v433, %v432
  %v499 = vpack.c.b16 %v435, %v434
  %564 = vmatpush.bf16.msra.mxu0 %v443
  %565 = vmatpush.bf16.msra.mxu0 %v442
  %566 = vmatpush.bf16.msra.mxu0 %v441
  %567 = vmatpush.bf16.msra.mxu0 %v440
  %568 = vmatpush.bf16.msra.mxu0 %v439
  %569 = vmatpush.bf16.msra.mxu0 %v438
  %570 = vmatpush.bf16.msra.mxu0 %v437
  %571 = vmatpush.bf16.msra.mxu0 %v436
  %572 = vmatmul.bf16.gmra.mxu0 %v164
  %v573 = vpop.f32.mrf.mxu0
  %v574 = vadd.f32 0.0, %v573
  %v575 = vpop.f32.mrf.mxu0
  %576 = vdwg.mxu0
  %577 = vmatpush.bf16.msra.mxu0 %v451
  %578 = vmatpush.bf16.msra.mxu0 %v450
  %579 = vmatpush.bf16.msra.mxu0 %v449
  %580 = vmatpush.bf16.msra.mxu0 %v448
  %581 = vmatpush.bf16.msra.mxu0 %v447
  %582 = vmatpush.bf16.msra.mxu0 %v446
  %583 = vmatpush.bf16.msra.mxu0 %v445
  %584 = vmatpush.bf16.msra.mxu0 %v444
  %585 = vmatmul.bf16.gmra.mxu0 %v165
  %v586 = vpop.f32.mrf.mxu0
  %v587 = vadd.f32 %v574, %v586
  %v588 = vpop.f32.mrf.mxu0
  %589 = vdwg.mxu0
  %590 = vmatpush.bf16.msra.mxu0 %v459
  %591 = vmatpush.bf16.msra.mxu0 %v458
  %592 = vmatpush.bf16.msra.mxu0 %v457
  %593 = vmatpush.bf16.msra.mxu0 %v456
  %594 = vmatpush.bf16.msra.mxu0 %v455
  %595 = vmatpush.bf16.msra.mxu0 %v454
  %596 = vmatpush.bf16.msra.mxu0 %v453
  %597 = vmatpush.bf16.msra.mxu0 %v452
  %598 = vmatmul.bf16.gmra.mxu0 %v166
  %v599 = vpop.f32.mrf.mxu0
  %v600 = vadd.f32 %v587, %v599
  %v601 = vpop.f32.mrf.mxu0
  %602 = vdwg.mxu0
  %603 = vmatpush.bf16.msra.mxu0 %v467
  %604 = vmatpush.bf16.msra.mxu0 %v466
  %605 = vmatpush.bf16.msra.mxu0 %v465
  %606 = vmatpush.bf16.msra.mxu0 %v464
  %607 = vmatpush.bf16.msra.mxu0 %v463
  %608 = vmatpush.bf16.msra.mxu0 %v462
  %609 = vmatpush.bf16.msra.mxu0 %v461
  %610 = vmatpush.bf16.msra.mxu0 %v460
  %611 = vmatmul.bf16.gmra.mxu0 %v167
  %v612 = vpop.f32.mrf.mxu0
  %v613 = vadd.f32 %v600, %v612
  %v614 = vpop.f32.mrf.mxu0
  %615 = vdwg.mxu0
  %616 = vmatpush.bf16.msra.mxu0 %v475
  %617 = vmatpush.bf16.msra.mxu0 %v474
  %618 = vmatpush.bf16.msra.mxu0 %v473
  %619 = vmatpush.bf16.msra.mxu0 %v472
  %620 = vmatpush.bf16.msra.mxu0 %v471
  %621 = vmatpush.bf16.msra.mxu0 %v470
  %622 = vmatpush.bf16.msra.mxu0 %v469
  %623 = vmatpush.bf16.msra.mxu0 %v468
  %624 = vmatmul.bf16.gmra.mxu0 %v168
  %v625 = vpop.f32.mrf.mxu0
  %v626 = vadd.f32 %v613, %v625
  %v627 = vpop.f32.mrf.mxu0
  %628 = vdwg.mxu0
  %629 = vmatpush.bf16.msra.mxu0 %v483
  %630 = vmatpush.bf16.msra.mxu0 %v482
  %631 = vmatpush.bf16.msra.mxu0 %v481
  %632 = vmatpush.bf16.msra.mxu0 %v480
  %633 = vmatpush.bf16.msra.mxu0 %v479
  %634 = vmatpush.bf16.msra.mxu0 %v478
  %635 = vmatpush.bf16.msra.mxu0 %v477
  %636 = vmatpush.bf16.msra.mxu0 %v476
  %637 = vmatmul.bf16.gmra.mxu0 %v169
  %v638 = vpop.f32.mrf.mxu0
  %v639 = vadd.f32 %v626, %v638
  %v640 = vpop.f32.mrf.mxu0
  %641 = vdwg.mxu0
  %642 = vmatpush.bf16.msra.mxu0 %v491
  %643 = vmatpush.bf16.msra.mxu0 %v490
  %644 = vmatpush.bf16.msra.mxu0 %v489
  %645 = vmatpush.bf16.msra.mxu0 %v488
  %646 = vmatpush.bf16.msra.mxu0 %v487
  %647 = vmatpush.bf16.msra.mxu0 %v486
  %648 = vmatpush.bf16.msra.mxu0 %v485
  %649 = vmatpush.bf16.msra.mxu0 %v484
  %650 = vmatmul.bf16.gmra.mxu0 %v170
  %v651 = vpop.f32.mrf.mxu0
  %v652 = vadd.f32 %v639, %v651
  %v653 = vpop.f32.mrf.mxu0
  %654 = vdwg.mxu0
  %655 = vmatpush.bf16.msra.mxu0 %v499
  %656 = vmatpush.bf16.msra.mxu0 %v498
  %657 = vmatpush.bf16.msra.mxu0 %v497
  %658 = vmatpush.bf16.msra.mxu0 %v496
  %659 = vmatpush.bf16.msra.mxu0 %v495
  %660 = vmatpush.bf16.msra.mxu0 %v494
  %661 = vmatpush.bf16.msra.mxu0 %v493
  %662 = vmatpush.bf16.msra.mxu0 %v492
  %663 = vmatmul.bf16.gmra.mxu0 %v171
  %v664 = vpop.f32.mrf.mxu0
  %v665 = vadd.f32 %v652, %v664
  %v666 = vpop.f32.mrf.mxu0
  %667 = vdwg.mxu0
  %v668 = vadd.f32 %v19, %v665
  %669 = vst [vmem:[#allocation2] sm:$0xff] %v668
  // Predicated region
  $region18: #{_lambda_.15} parent=0 // pred_check
    %p670 = pneg %p14
  $region19: #{_lambda_.15} parent=0 // pred_check_branch
    %672 = sbr.rel (%p670) target = $region21
  $region20: #{_lambda_.15} parent=0 // pred_region
    %v673 = vld [vmem:[#allocation2] sm:$0xff]
    %v674 = vld [vmem:[%s2] sm:$0x1]
    %v676 = vperm.slane %v674, 0
    %v678 = vadd.f32 %v673, %v676
    %v679 = vmul.f32 %v678, 0.5
    %v680 = vtanh.pop %v679
    %v681 = vadd.f32 %v680, 1.0
    %v682 = vmul.f32 %v681, 0.5
    %683 = vst [vmem:[%s3] sm:$0xff] %v682
  $region21: #{_lambda_.15} parent=0 // pred_fallthru
    _
  // Predicated region
  $region22: #{_lambda_.15} parent=0 // pred_check
    _
  $region23: #{_lambda_.15} parent=0 // pred_check_branch
    %685 = sbr.rel (0) target = $region25
  $region24: #{_lambda_.15} parent=0 // pred_region
    _
  $region25: #{_lambda_.15} parent=0 // pred_fallthru
    _
  // Predicated region
  $region26: #{_lambda_.15} parent=0 // pred_check
    _
  $region27: #{_lambda_.15} parent=0 // pred_check_branch
    %687 = sbr.rel (0) target = $region29
  $region28: #{_lambda_.15} parent=0 // pred_region
    _
  $region29: #{_lambda_.15} parent=0 // pred_fallthru
    _

</llo_original>
